<compile_context>
chip_gen: v7x
topology: tpu7x:2x2x1
jax: 0.10.0
libtpu: 0.0.40
codegen_flags: <defaults>
</compile_context>

<pallas_src>
import math
from functools import partial

import jax
import jax.numpy as jnp
from jax.experimental import pallas as pl
from jax.experimental.pallas import tpu as pltpu


# ----------------------------- Pallas kernels ------------------------------

def _attn_block_kernel(x_ref, kv_ref, m_ref, wq_ref, bq_ref, wkv_ref, bkv_ref,
                       wo_ref, bo_ref, g_ref, beta_ref, *out_refs,
                       num_heads, scale, return_weights, mxu_dtype):
    """Fused attention sub-layer for ONE batch element:

        y = LayerNorm(x + MultiHeadAttn(x, kv, mask) @ Wo + bo)

    All heads are handled inside the kernel; projections run at full D / 2D
    lane width on the MXU, only the tiny per-head score matmuls run at head
    width.  Optionally also writes the (H, Tq, Tk) attention weights.
    """
    y_ref = out_refs[0]
    w_ref = out_refs[1] if return_weights else None

    x = x_ref[0]          # (Tq, D)  query / residual stream (f32)
    kv = kv_ref[0]        # (Tk, D)  key/value source
    m = m_ref[0]          # (Tq, Tk) 1.0 = attend, 0.0 = masked

    D = x.shape[-1]
    Tq = x.shape[0]
    dh = D // num_heads

    # Fused projections: one (D,D) matmul for Q, one (D,2D) matmul for K|V.
    q = jnp.dot(x.astype(mxu_dtype), wq_ref[...].astype(mxu_dtype),
                preferred_element_type=jnp.float32) + bq_ref[...]
    kvp = jnp.dot(kv.astype(mxu_dtype), wkv_ref[...].astype(mxu_dtype),
                  preferred_element_type=jnp.float32) + bkv_ref[...]
    k = kvp[:, :D]
    v = kvp[:, D:]
    q = q * scale          # fold 1/sqrt(dh) into q instead of scaling scores

    out = jnp.zeros((Tq, D), jnp.float32)
    for h in range(num_heads):                      # static unroll over heads
        lo, hi = h * dh, (h + 1) * dh
        qh = q[:, lo:hi]                            # (Tq, dh)
        kh = k[:, lo:hi]                            # (Tk, dh)
        vh = v[:, lo:hi]                            # (Tk, dh)
        s = jnp.dot(qh.astype(mxu_dtype), kh.astype(mxu_dtype).T,
                    preferred_element_type=jnp.float32)          # (Tq, Tk)
        s = jnp.where(m > 0.0, s, -1e9)
        s = s - jnp.max(s, axis=-1, keepdims=True)
        e = jnp.exp(s)                                           # f32 softmax
        p = e * pl.reciprocal(jnp.sum(e, axis=-1, keepdims=True), approx=True)
        if return_weights:
            w_ref[0, h] = p
        oh = jnp.dot(p.astype(mxu_dtype), vh.astype(mxu_dtype),
                     preferred_element_type=jnp.float32)         # (Tq, dh)
        # Output projection accumulated per head: oh @ Wo[h*dh:(h+1)*dh, :]
        out = out + jnp.dot(oh.astype(mxu_dtype),
                            wo_ref[lo:hi, :].astype(mxu_dtype),
                            preferred_element_type=jnp.float32)
    out = out + bo_ref[...]

    # Residual + LayerNorm (biased variance, eps=1e-5, like torch.nn.LayerNorm)
    y = x + out
    mu = jnp.mean(y, axis=-1, keepdims=True)
    var = jnp.mean((y - mu) ** 2, axis=-1, keepdims=True)
    y_ref[0] = (y - mu) * jax.lax.rsqrt(var + 1e-5) * g_ref[...] + beta_ref[...]


def _ffn_ln_kernel(x_ref, w1_ref, b1_ref, w2_ref, b2_ref, g_ref, beta_ref,
                   o_ref, *, mxu_dtype):
    """Fused FFN sub-layer on a tile of rows:

        y = LayerNorm(x + ReLU(x W1 + b1) W2 + b2)
    """
    x = x_ref[...]                                               # (tm, D) f32
    h = jnp.dot(x.astype(mxu_dtype), w1_ref[...].astype(mxu_dtype),
                preferred_element_type=jnp.float32) + b1_ref[...]
    h = jnp.maximum(h, 0.0)                                      # ReLU (f32)
    y = x + jnp.dot(h.astype(mxu_dtype), w2_ref[...].astype(mxu_dtype),
                    preferred_element_type=jnp.float32) + b2_ref[...]
    mu = jnp.mean(y, axis=-1, keepdims=True)
    var = jnp.mean((y - mu) ** 2, axis=-1, keepdims=True)
    o_ref[...] = (y - mu) * jax.lax.rsqrt(var + 1e-5) * g_ref[...] + beta_ref[...]


# ----------------------------- kernel wrappers ------------------------------

def _pick_row_tile(M):
    """Largest convenient row tile that divides M (keeps stores unmasked)."""
    for tm in (512, 256, 128, 64, 32, 16, 8):
        if M % tm == 0:
            return tm
    return M


def attention_block(p, x, kv, mask, num_heads, return_weights, mxu_dtype):
    """x: (B, Tq, D) query/residual source, kv: (B, Tk, D), mask: (B, Tq, Tk)."""
    B, Tq, D = x.shape
    Tk = kv.shape[1]
    assert D % num_heads == 0
    dh = D // num_heads
    scale = 1.0 / math.sqrt(dh)

    kernel = partial(_attn_block_kernel, num_heads=num_heads, scale=scale,
                     return_weights=return_weights, mxu_dtype=mxu_dtype)

    in_specs = [
        pl.BlockSpec((1, Tq, D), lambda b: (b, 0, 0)),       # x
        pl.BlockSpec((1, Tk, D), lambda b: (b, 0, 0)),       # kv
        pl.BlockSpec((1, Tq, Tk), lambda b: (b, 0, 0)),      # mask
        pl.BlockSpec((D, D), lambda b: (0, 0)),              # Wq
        pl.BlockSpec((1, D), lambda b: (0, 0)),              # bq
        pl.BlockSpec((D, 2 * D), lambda b: (0, 0)),          # Wkv (fused K|V)
        pl.BlockSpec((1, 2 * D), lambda b: (0, 0)),          # bkv
        pl.BlockSpec((D, D), lambda b: (0, 0)),              # Wo
        pl.BlockSpec((1, D), lambda b: (0, 0)),              # bo
        pl.BlockSpec((1, D), lambda b: (0, 0)),              # ln gamma
        pl.BlockSpec((1, D), lambda b: (0, 0)),              # ln beta
    ]

    if return_weights:
        out_specs = [
            pl.BlockSpec((1, Tq, D), lambda b: (b, 0, 0)),
            pl.BlockSpec((1, num_heads, Tq, Tk), lambda b: (b, 0, 0, 0)),
        ]
        out_shape = [
            jax.ShapeDtypeStruct((B, Tq, D), jnp.float32),
            jax.ShapeDtypeStruct((B, num_heads, Tq, Tk), jnp.float32),
        ]
    else:
        out_specs = pl.BlockSpec((1, Tq, D), lambda b: (b, 0, 0))
        out_shape = jax.ShapeDtypeStruct((B, Tq, D), jnp.float32)

    res = pl.pallas_call(
        kernel,
        grid=(B,),
        in_specs=in_specs,
        out_specs=out_specs,
        out_shape=out_shape,
        compiler_params=pltpu.CompilerParams(dimension_semantics=("parallel",)),
    )(x, kv, mask, p["wq"], p["bq"], p["wkv"], p["bkv"], p["wo"], p["bo"],
      p["ln_g"], p["ln_b"])

    if return_weights:
        y, w = res
        return y, w
    return res, None


def ffn_ln_block(p, x, mxu_dtype):
    """Fused FFN + residual + LayerNorm over (B, T, D); grid tiles B*T rows."""
    B, T, D = x.shape
    M = B * T
    ff_d = p["w1"].shape[1]
    x2 = x.reshape(M, D)
    tm = _pick_row_tile(M)

    kernel = partial(_ffn_ln_kernel, mxu_dtype=mxu_dtype)
    out = pl.pallas_call(
        kernel,
        grid=(M // tm,),
        in_specs=[
            pl.BlockSpec((tm, D), lambda i: (i, 0)),          # x rows
            pl.BlockSpec((D, ff_d), lambda i: (0, 0)),        # W1
            pl.BlockSpec((1, ff_d), lambda i: (0, 0)),        # b1
            pl.BlockSpec((ff_d, D), lambda i: (0, 0)),        # W2
            pl.BlockSpec((1, D), lambda i: (0, 0)),           # b2
            pl.BlockSpec((1, D), lambda i: (0, 0)),           # ln gamma
            pl.BlockSpec((1, D), lambda i: (0, 0)),           # ln beta
        ],
        out_specs=pl.BlockSpec((tm, D), lambda i: (i, 0)),
        out_shape=jax.ShapeDtypeStruct((M, D), jnp.float32),
        compiler_params=pltpu.CompilerParams(dimension_semantics=("parallel",)),
    )(x2, p["w1"], p["b1"], p["w2"], p["b2"], p["ln3_g"], p["ln3_b"])
    return out.reshape(B, T, D)


# ----------------------------- model glue ----------------------------------

def decoder_layer(p, x, enc, trg_mask, src_mask, num_heads, return_weights,
                  mxu_dtype):
    x, self_w = attention_block(p["self_attn"], x, x, trg_mask, num_heads,
                                return_weights, mxu_dtype)
    x, cross_w = attention_block(p["cross_attn"], x, enc, src_mask, num_heads,
                                 return_weights, mxu_dtype)
    x = ffn_ln_block(p, x, mxu_dtype)
    return x, self_w, cross_w


def decoder_forward(params, x_tokens, encoder_outputs, trg_mask, src_mask,
                    num_heads, mxu_dtype=jnp.float32):
    # embedding lookup (gather) + sinusoidal positional encoding: plain-JAX glue
    emb = params["embedding"][x_tokens]                       # (B, T, D)
    B, T = x_tokens.shape
    S = encoder_outputs.shape[1]
    h = emb + params["pos_enc"][:T][None, :, :]
    # dropout omitted (eval-mode forward)

    # Compact per-batch masks (B, Tq, Tk); heads share the mask inside the
    # kernel, so no (B*H, Tq, Tk) broadcast ever touches HBM.
    trg_m = jnp.broadcast_to(trg_mask[:, 0].astype(jnp.float32), (B, T, T))
    src_m = jnp.broadcast_to(src_mask[:, 0].astype(jnp.float32), (B, T, S))

    n_layers = len(params["layers"])
    attn_w = cross_w = None
    for li, lp in enumerate(params["layers"]):
        last = li == n_layers - 1          # only the last layer's weights are
        h, aw, cw = decoder_layer(          # consumed by the caller
            lp, h, encoder_outputs, trg_m, src_m, num_heads,
            return_weights=last, mxu_dtype=mxu_dtype)
        if last:
            attn_w, cross_w = aw, cw
    return h, attn_w, cross_w


# ----------------------------- params init ---------------------------------

def sinusoidal_pe(max_seq_len, d_model):
    pos = jnp.arange(max_seq_len, dtype=jnp.float32)[:, None]
    i = jnp.arange(0, d_model, 2, dtype=jnp.float32)
    angle = pos / jnp.power(10000.0, i / d_model)
    pe = jnp.zeros((max_seq_len, d_model), jnp.float32)
    pe = pe.at[:, 0::2].set(jnp.sin(angle))
    pe = pe.at[:, 1::2].set(jnp.cos(angle))
    return pe


def init_attn_params(key, d_model):
    ks = jax.random.split(key, 4)
    std = 1.0 / math.sqrt(d_model)
    mk = lambda k: (jax.random.normal(k, (d_model, d_model), jnp.float32) * std)
    wk, wv = mk(ks[1]), mk(ks[2])
    return {
        "wq": mk(ks[0]), "bq": jnp.zeros((1, d_model), jnp.float32),
        # K and V weights concatenated -> single (D, 2D) MXU matmul in-kernel.
        "wkv": jnp.concatenate([wk, wv], axis=1),
        "bkv": jnp.zeros((1, 2 * d_model), jnp.float32),
        "wo": mk(ks[3]), "bo": jnp.zeros((1, d_model), jnp.float32),
        "ln_g": jnp.ones((1, d_model), jnp.float32),
        "ln_b": jnp.zeros((1, d_model), jnp.float32),
    }


def init_layer_params(key, d_model, ff_d):
    ks = jax.random.split(key, 4)
    return {
        "self_attn": init_attn_params(ks[0], d_model),
        "cross_attn": init_attn_params(ks[1], d_model),
        "w1": jax.random.normal(ks[2], (d_model, ff_d), jnp.float32) / math.sqrt(d_model),
        "b1": jnp.zeros((1, ff_d), jnp.float32),
        "w2": jax.random.normal(ks[3], (ff_d, d_model), jnp.float32) / math.sqrt(ff_d),
        "b2": jnp.zeros((1, d_model), jnp.float32),
        "ln3_g": jnp.ones((1, d_model), jnp.float32),
        "ln3_b": jnp.zeros((1, d_model), jnp.float32),
    }


def init_decoder_params(key, vocab, d_model, ff_d, max_seq_len, num_layers):
    ks = jax.random.split(key, num_layers + 1)
    return {
        "embedding": jax.random.normal(ks[0], (vocab, d_model), jnp.float32) * 0.02,
        "pos_enc": sinusoidal_pe(max_seq_len, d_model),
        "layers": [init_layer_params(ks[1 + i], d_model, ff_d) for i in range(num_layers)],
    }


# --------------------------------- main -------------------------------------

if __name__ == "__main__":
    B, T, S = 2, 8, 10
    d_model, num_heads, ff_d, num_layers = 32, 4, 64, 2
    vocab, max_seq_len = 50, 16

    key = jax.random.PRNGKey(0)
    kp, kx, ke = jax.random.split(key, 3)

    params = init_decoder_params(kp, vocab, d_model, ff_d, max_seq_len, num_layers)

    x_tokens = jax.random.randint(kx, (B, T), 0, vocab, dtype=jnp.int32)
    encoder_outputs = jax.random.normal(ke, (B, S, d_model), jnp.float32)
    trg_mask = jnp.broadcast_to(jnp.tril(jnp.ones((T, T), jnp.float32))[None, None],
                                (B, 1, T, T))                     # causal
    src_mask = jnp.ones((B, 1, 1, S), jnp.float32)                # attend to all enc positions

    # mxu_dtype defaults to f32 for fidelity at these tiny shapes; pass
    # mxu_dtype=jnp.bfloat16 on v6e/v7x for the MXU fast path (f32 accumulate).
    fwd = jax.jit(partial(decoder_forward, num_heads=num_heads))
    encoding, masked_attn_w, enc_dec_attn_w = fwd(params, x_tokens, encoder_outputs,
                                                  trg_mask, src_mask)
    jax.block_until_ready((encoding, masked_attn_w, enc_dec_attn_w))

    assert encoding.shape == (B, T, d_model)
    assert masked_attn_w.shape == (B, num_heads, T, T)
    assert enc_dec_attn_w.shape == (B, num_heads, T, S)
    print("KERNEL_OK")
</pallas_src>

<mosaic_0001>
module attributes {stable_mosaic.version = 11 : i64} {
  func.func @_attn_block_kernel(%arg0: i32, %arg1: memref<1x8x32xf32, #tpu.memory_space<vmem>>, %arg2: memref<1x8x32xf32, #tpu.memory_space<vmem>>, %arg3: memref<1x8x8xf32, #tpu.memory_space<vmem>>, %arg4: memref<32x32xf32, #tpu.memory_space<vmem>>, %arg5: memref<1x32xf32, #tpu.memory_space<vmem>>, %arg6: memref<32x64xf32, #tpu.memory_space<vmem>>, %arg7: memref<1x64xf32, #tpu.memory_space<vmem>>, %arg8: memref<32x32xf32, #tpu.memory_space<vmem>>, %arg9: memref<1x32xf32, #tpu.memory_space<vmem>>, %arg10: memref<1x32xf32, #tpu.memory_space<vmem>>, %arg11: memref<1x32xf32, #tpu.memory_space<vmem>>, %arg12: memref<1x8x32xf32, #tpu.memory_space<vmem>>) attributes {dimension_semantics = [#tpu.dimension_semantics<parallel>], iteration_bounds = array<i64: 2>, scalar_prefetch = 0 : i64, scratch_operands = 0 : i64, tpu.core_type = #tpu.core_type<tc>, window_params = [{transform_indices = @transform_0, window_bounds = array<i64: 1, 8, 32>}, {transform_indices = @transform_1, window_bounds = array<i64: 1, 8, 32>}, {transform_indices = @transform_2, window_bounds = array<i64: 1, 8, 8>}, {pipeline_mode = #tpu.pipeline_mode<synchronous>, transform_indices = @transform_3, window_bounds = array<i64: 32, 32>}, {pipeline_mode = #tpu.pipeline_mode<synchronous>, transform_indices = @transform_4, window_bounds = array<i64: 1, 32>}, {pipeline_mode = #tpu.pipeline_mode<synchronous>, transform_indices = @transform_5, window_bounds = array<i64: 32, 64>}, {pipeline_mode = #tpu.pipeline_mode<synchronous>, transform_indices = @transform_6, window_bounds = array<i64: 1, 64>}, {pipeline_mode = #tpu.pipeline_mode<synchronous>, transform_indices = @transform_7, window_bounds = array<i64: 32, 32>}, {pipeline_mode = #tpu.pipeline_mode<synchronous>, transform_indices = @transform_8, window_bounds = array<i64: 1, 32>}, {pipeline_mode = #tpu.pipeline_mode<synchronous>, transform_indices = @transform_9, window_bounds = array<i64: 1, 32>}, {pipeline_mode = #tpu.pipeline_mode<synchronous>, transform_indices = @transform_10, window_bounds = array<i64: 1, 32>}, {transform_indices = @transform_11, window_bounds = array<i64: 1, 8, 32>}]} {
    %c0 = arith.constant 0 : index
    %c0_0 = arith.constant 0 : index
    %c0_1 = arith.constant 0 : index
    %0 = vector.load %arg1[%c0, %c0_0, %c0_1] : memref<1x8x32xf32, #tpu.memory_space<vmem>>, vector<1x8x32xf32>
    %1 = vector.shape_cast %0 : vector<1x8x32xf32> to vector<8x32xf32>
    %c0_2 = arith.constant 0 : index
    %c0_3 = arith.constant 0 : index
    %c0_4 = arith.constant 0 : index
    %2 = vector.load %arg2[%c0_2, %c0_3, %c0_4] : memref<1x8x32xf32, #tpu.memory_space<vmem>>, vector<1x8x32xf32>
    %3 = vector.shape_cast %2 : vector<1x8x32xf32> to vector<8x32xf32>
    %c0_5 = arith.constant 0 : index
    %c0_6 = arith.constant 0 : index
    %c0_7 = arith.constant 0 : index
    %4 = vector.load %arg3[%c0_5, %c0_6, %c0_7] : memref<1x8x8xf32, #tpu.memory_space<vmem>>, vector<1x8x8xf32>
    %5 = vector.shape_cast %4 : vector<1x8x8xf32> to vector<8x8xf32>
    %c0_8 = arith.constant 0 : index
    %c0_9 = arith.constant 0 : index
    %6 = vector.load %arg4[%c0_8, %c0_9] : memref<32x32xf32, #tpu.memory_space<vmem>>, vector<32x32xf32>
    %cst = arith.constant dense<0.000000e+00> : vector<8x32xf32>
    %7 = tpu.matmul %1, %6, %cst {dimension_numbers = #tpu.dot_dimension_numbers<[1], [0], [0], [1], [0, 0, 1, 1], [], []>} : vector<8x32xf32>, vector<32x32xf32>, vector<8x32xf32> -> vector<8x32xf32>
    %c0_10 = arith.constant 0 : index
    %c0_11 = arith.constant 0 : index
    %8 = vector.load %arg5[%c0_10, %c0_11] : memref<1x32xf32, #tpu.memory_space<vmem>>, vector<1x32xf32>
    %9 = vector.broadcast %8 : vector<1x32xf32> to vector<8x32xf32>
    %10 = arith.addf %7, %9 : vector<8x32xf32>
    %c0_12 = arith.constant 0 : index
    %c0_13 = arith.constant 0 : index
    %11 = vector.load %arg6[%c0_12, %c0_13] : memref<32x64xf32, #tpu.memory_space<vmem>>, vector<32x64xf32>
    %cst_14 = arith.constant dense<0.000000e+00> : vector<8x64xf32>
    %12 = tpu.matmul %3, %11, %cst_14 {dimension_numbers = #tpu.dot_dimension_numbers<[1], [0], [0], [1], [0, 0, 1, 1], [], []>} : vector<8x32xf32>, vector<32x64xf32>, vector<8x64xf32> -> vector<8x64xf32>
    %c0_15 = arith.constant 0 : index
    %c0_16 = arith.constant 0 : index
    %13 = vector.load %arg7[%c0_15, %c0_16] : memref<1x64xf32, #tpu.memory_space<vmem>>, vector<1x64xf32>
    %14 = vector.broadcast %13 : vector<1x64xf32> to vector<8x64xf32>
    %15 = arith.addf %12, %14 : vector<8x64xf32>
    %16 = vector.extract_strided_slice %15 {offsets = [0, 0], sizes = [8, 32], strides = [1, 1]} : vector<8x64xf32> to vector<8x32xf32>
    %17 = vector.extract_strided_slice %15 {offsets = [0, 32], sizes = [8, 32], strides = [1, 1]} : vector<8x64xf32> to vector<8x32xf32>
    %cst_17 = arith.constant 0.353553385 : f32
    %18 = vector.broadcast %cst_17 : f32 to vector<8x32xf32>
    %19 = arith.mulf %10, %18 : vector<8x32xf32>
    %cst_18 = arith.constant 0.000000e+00 : f32
    %20 = vector.broadcast %cst_18 : f32 to vector<8x32xf32>
    %21 = vector.extract_strided_slice %19 {offsets = [0, 0], sizes = [8, 8], strides = [1, 1]} : vector<8x32xf32> to vector<8x8xf32>
    %22 = vector.extract_strided_slice %16 {offsets = [0, 0], sizes = [8, 8], strides = [1, 1]} : vector<8x32xf32> to vector<8x8xf32>
    %23 = vector.extract_strided_slice %17 {offsets = [0, 0], sizes = [8, 8], strides = [1, 1]} : vector<8x32xf32> to vector<8x8xf32>
    %24 = tpu.transpose %22, [1, 0] : vector<8x8xf32> -> vector<8x8xf32>
    %cst_19 = arith.constant dense<0.000000e+00> : vector<8x8xf32>
    %25 = tpu.matmul %21, %24, %cst_19 {dimension_numbers = #tpu.dot_dimension_numbers<[1], [0], [0], [1], [0, 0, 1, 1], [], []>} : vector<8x8xf32>, vector<8x8xf32>, vector<8x8xf32> -> vector<8x8xf32>
    %cst_20 = arith.constant 0.000000e+00 : f32
    %26 = vector.broadcast %cst_20 : f32 to vector<8x8xf32>
    %27 = arith.cmpf ogt, %5, %26 : vector<8x8xf32>
    %cst_21 = arith.constant -1.000000e+09 : f32
    %28 = vector.broadcast %cst_21 : f32 to vector<8x8xf32>
    %29 = arith.select %27, %25, %28 : vector<8x8xi1>, vector<8x8xf32>
    %cst_22 = arith.constant dense<0xFF800000> : vector<8xf32>
    %30 = vector.multi_reduction <maximumf>, %29, %cst_22 [1] : vector<8x8xf32> to vector<8xf32>
    %31 = vector.shape_cast %30 : vector<8xf32> to vector<8x1xf32>
    %32 = vector.broadcast %31 : vector<8x1xf32> to vector<8x8xf32>
    %33 = arith.subf %29, %32 : vector<8x8xf32>
    %34 = math.exp %33 : vector<8x8xf32>
    %cst_23 = arith.constant dense<0.000000e+00> : vector<8xf32>
    %35 = vector.multi_reduction <add>, %34, %cst_23 [1] : vector<8x8xf32> to vector<8xf32>
    %36 = vector.shape_cast %35 : vector<8xf32> to vector<8x1xf32>
    %37 = tpu.reciprocal %36 {approx = true} : vector<8x1xf32> -> vector<8x1xf32>
    %38 = vector.broadcast %37 : vector<8x1xf32> to vector<8x8xf32>
    %39 = arith.mulf %34, %38 : vector<8x8xf32>
    %cst_24 = arith.constant dense<0.000000e+00> : vector<8x8xf32>
    %40 = tpu.matmul %39, %23, %cst_24 {dimension_numbers = #tpu.dot_dimension_numbers<[1], [0], [0], [1], [0, 0, 1, 1], [], []>} : vector<8x8xf32>, vector<8x8xf32>, vector<8x8xf32> -> vector<8x8xf32>
    %c0_25 = arith.constant 0 : index
    %c0_26 = arith.constant 0 : index
    %41 = vector.load %arg8[%c0_25, %c0_26] : memref<32x32xf32, #tpu.memory_space<vmem>>, vector<8x32xf32>
    %cst_27 = arith.constant dense<0.000000e+00> : vector<8x32xf32>
    %42 = tpu.matmul %40, %41, %cst_27 {dimension_numbers = #tpu.dot_dimension_numbers<[1], [0], [0], [1], [0, 0, 1, 1], [], []>} : vector<8x8xf32>, vector<8x32xf32>, vector<8x32xf32> -> vector<8x32xf32>
    %43 = arith.addf %20, %42 : vector<8x32xf32>
    %44 = vector.extract_strided_slice %19 {offsets = [0, 8], sizes = [8, 8], strides = [1, 1]} : vector<8x32xf32> to vector<8x8xf32>
    %45 = vector.extract_strided_slice %16 {offsets = [0, 8], sizes = [8, 8], strides = [1, 1]} : vector<8x32xf32> to vector<8x8xf32>
    %46 = vector.extract_strided_slice %17 {offsets = [0, 8], sizes = [8, 8], strides = [1, 1]} : vector<8x32xf32> to vector<8x8xf32>
    %47 = tpu.transpose %45, [1, 0] : vector<8x8xf32> -> vector<8x8xf32>
    %cst_28 = arith.constant dense<0.000000e+00> : vector<8x8xf32>
    %48 = tpu.matmul %44, %47, %cst_28 {dimension_numbers = #tpu.dot_dimension_numbers<[1], [0], [0], [1], [0, 0, 1, 1], [], []>} : vector<8x8xf32>, vector<8x8xf32>, vector<8x8xf32> -> vector<8x8xf32>
    %cst_29 = arith.constant 0.000000e+00 : f32
    %49 = vector.broadcast %cst_29 : f32 to vector<8x8xf32>
    %50 = arith.cmpf ogt, %5, %49 : vector<8x8xf32>
    %cst_30 = arith.constant -1.000000e+09 : f32
    %51 = vector.broadcast %cst_30 : f32 to vector<8x8xf32>
    %52 = arith.select %50, %48, %51 : vector<8x8xi1>, vector<8x8xf32>
    %cst_31 = arith.constant dense<0xFF800000> : vector<8xf32>
    %53 = vector.multi_reduction <maximumf>, %52, %cst_31 [1] : vector<8x8xf32> to vector<8xf32>
    %54 = vector.shape_cast %53 : vector<8xf32> to vector<8x1xf32>
    %55 = vector.broadcast %54 : vector<8x1xf32> to vector<8x8xf32>
    %56 = arith.subf %52, %55 : vector<8x8xf32>
    %57 = math.exp %56 : vector<8x8xf32>
    %cst_32 = arith.constant dense<0.000000e+00> : vector<8xf32>
    %58 = vector.multi_reduction <add>, %57, %cst_32 [1] : vector<8x8xf32> to vector<8xf32>
    %59 = vector.shape_cast %58 : vector<8xf32> to vector<8x1xf32>
    %60 = tpu.reciprocal %59 {approx = true} : vector<8x1xf32> -> vector<8x1xf32>
    %61 = vector.broadcast %60 : vector<8x1xf32> to vector<8x8xf32>
    %62 = arith.mulf %57, %61 : vector<8x8xf32>
    %cst_33 = arith.constant dense<0.000000e+00> : vector<8x8xf32>
    %63 = tpu.matmul %62, %46, %cst_33 {dimension_numbers = #tpu.dot_dimension_numbers<[1], [0], [0], [1], [0, 0, 1, 1], [], []>} : vector<8x8xf32>, vector<8x8xf32>, vector<8x8xf32> -> vector<8x8xf32>
    %c8 = arith.constant 8 : index
    %c0_34 = arith.constant 0 : index
    %64 = vector.load %arg8[%c8, %c0_34] : memref<32x32xf32, #tpu.memory_space<vmem>>, vector<8x32xf32>
    %cst_35 = arith.constant dense<0.000000e+00> : vector<8x32xf32>
    %65 = tpu.matmul %63, %64, %cst_35 {dimension_numbers = #tpu.dot_dimension_numbers<[1], [0], [0], [1], [0, 0, 1, 1], [], []>} : vector<8x8xf32>, vector<8x32xf32>, vector<8x32xf32> -> vector<8x32xf32>
    %66 = arith.addf %43, %65 : vector<8x32xf32>
    %67 = vector.extract_strided_slice %19 {offsets = [0, 16], sizes = [8, 8], strides = [1, 1]} : vector<8x32xf32> to vector<8x8xf32>
    %68 = vector.extract_strided_slice %16 {offsets = [0, 16], sizes = [8, 8], strides = [1, 1]} : vector<8x32xf32> to vector<8x8xf32>
    %69 = vector.extract_strided_slice %17 {offsets = [0, 16], sizes = [8, 8], strides = [1, 1]} : vector<8x32xf32> to vector<8x8xf32>
    %70 = tpu.transpose %68, [1, 0] : vector<8x8xf32> -> vector<8x8xf32>
    %cst_36 = arith.constant dense<0.000000e+00> : vector<8x8xf32>
    %71 = tpu.matmul %67, %70, %cst_36 {dimension_numbers = #tpu.dot_dimension_numbers<[1], [0], [0], [1], [0, 0, 1, 1], [], []>} : vector<8x8xf32>, vector<8x8xf32>, vector<8x8xf32> -> vector<8x8xf32>
    %cst_37 = arith.constant 0.000000e+00 : f32
    %72 = vector.broadcast %cst_37 : f32 to vector<8x8xf32>
    %73 = arith.cmpf ogt, %5, %72 : vector<8x8xf32>
    %cst_38 = arith.constant -1.000000e+09 : f32
    %74 = vector.broadcast %cst_38 : f32 to vector<8x8xf32>
    %75 = arith.select %73, %71, %74 : vector<8x8xi1>, vector<8x8xf32>
    %cst_39 = arith.constant dense<0xFF800000> : vector<8xf32>
    %76 = vector.multi_reduction <maximumf>, %75, %cst_39 [1] : vector<8x8xf32> to vector<8xf32>
    %77 = vector.shape_cast %76 : vector<8xf32> to vector<8x1xf32>
    %78 = vector.broadcast %77 : vector<8x1xf32> to vector<8x8xf32>
    %79 = arith.subf %75, %78 : vector<8x8xf32>
    %80 = math.exp %79 : vector<8x8xf32>
    %cst_40 = arith.constant dense<0.000000e+00> : vector<8xf32>
    %81 = vector.multi_reduction <add>, %80, %cst_40 [1] : vector<8x8xf32> to vector<8xf32>
    %82 = vector.shape_cast %81 : vector<8xf32> to vector<8x1xf32>
    %83 = tpu.reciprocal %82 {approx = true} : vector<8x1xf32> -> vector<8x1xf32>
    %84 = vector.broadcast %83 : vector<8x1xf32> to vector<8x8xf32>
    %85 = arith.mulf %80, %84 : vector<8x8xf32>
    %cst_41 = arith.constant dense<0.000000e+00> : vector<8x8xf32>
    %86 = tpu.matmul %85, %69, %cst_41 {dimension_numbers = #tpu.dot_dimension_numbers<[1], [0], [0], [1], [0, 0, 1, 1], [], []>} : vector<8x8xf32>, vector<8x8xf32>, vector<8x8xf32> -> vector<8x8xf32>
    %c16 = arith.constant 16 : index
    %c0_42 = arith.constant 0 : index
    %87 = vector.load %arg8[%c16, %c0_42] : memref<32x32xf32, #tpu.memory_space<vmem>>, vector<8x32xf32>
    %cst_43 = arith.constant dense<0.000000e+00> : vector<8x32xf32>
    %88 = tpu.matmul %86, %87, %cst_43 {dimension_numbers = #tpu.dot_dimension_numbers<[1], [0], [0], [1], [0, 0, 1, 1], [], []>} : vector<8x8xf32>, vector<8x32xf32>, vector<8x32xf32> -> vector<8x32xf32>
    %89 = arith.addf %66, %88 : vector<8x32xf32>
    %90 = vector.extract_strided_slice %19 {offsets = [0, 24], sizes = [8, 8], strides = [1, 1]} : vector<8x32xf32> to vector<8x8xf32>
    %91 = vector.extract_strided_slice %16 {offsets = [0, 24], sizes = [8, 8], strides = [1, 1]} : vector<8x32xf32> to vector<8x8xf32>
    %92 = vector.extract_strided_slice %17 {offsets = [0, 24], sizes = [8, 8], strides = [1, 1]} : vector<8x32xf32> to vector<8x8xf32>
    %93 = tpu.transpose %91, [1, 0] : vector<8x8xf32> -> vector<8x8xf32>
    %cst_44 = arith.constant dense<0.000000e+00> : vector<8x8xf32>
    %94 = tpu.matmul %90, %93, %cst_44 {dimension_numbers = #tpu.dot_dimension_numbers<[1], [0], [0], [1], [0, 0, 1, 1], [], []>} : vector<8x8xf32>, vector<8x8xf32>, vector<8x8xf32> -> vector<8x8xf32>
    %cst_45 = arith.constant 0.000000e+00 : f32
    %95 = vector.broadcast %cst_45 : f32 to vector<8x8xf32>
    %96 = arith.cmpf ogt, %5, %95 : vector<8x8xf32>
    %cst_46 = arith.constant -1.000000e+09 : f32
    %97 = vector.broadcast %cst_46 : f32 to vector<8x8xf32>
    %98 = arith.select %96, %94, %97 : vector<8x8xi1>, vector<8x8xf32>
    %cst_47 = arith.constant dense<0xFF800000> : vector<8xf32>
    %99 = vector.multi_reduction <maximumf>, %98, %cst_47 [1] : vector<8x8xf32> to vector<8xf32>
    %100 = vector.shape_cast %99 : vector<8xf32> to vector<8x1xf32>
    %101 = vector.broadcast %100 : vector<8x1xf32> to vector<8x8xf32>
    %102 = arith.subf %98, %101 : vector<8x8xf32>
    %103 = math.exp %102 : vector<8x8xf32>
    %cst_48 = arith.constant dense<0.000000e+00> : vector<8xf32>
    %104 = vector.multi_reduction <add>, %103, %cst_48 [1] : vector<8x8xf32> to vector<8xf32>
    %105 = vector.shape_cast %104 : vector<8xf32> to vector<8x1xf32>
    %106 = tpu.reciprocal %105 {approx = true} : vector<8x1xf32> -> vector<8x1xf32>
    %107 = vector.broadcast %106 : vector<8x1xf32> to vector<8x8xf32>
    %108 = arith.mulf %103, %107 : vector<8x8xf32>
    %cst_49 = arith.constant dense<0.000000e+00> : vector<8x8xf32>
    %109 = tpu.matmul %108, %92, %cst_49 {dimension_numbers = #tpu.dot_dimension_numbers<[1], [0], [0], [1], [0, 0, 1, 1], [], []>} : vector<8x8xf32>, vector<8x8xf32>, vector<8x8xf32> -> vector<8x8xf32>
    %c24 = arith.constant 24 : index
    %c0_50 = arith.constant 0 : index
    %110 = vector.load %arg8[%c24, %c0_50] : memref<32x32xf32, #tpu.memory_space<vmem>>, vector<8x32xf32>
    %cst_51 = arith.constant dense<0.000000e+00> : vector<8x32xf32>
    %111 = tpu.matmul %109, %110, %cst_51 {dimension_numbers = #tpu.dot_dimension_numbers<[1], [0], [0], [1], [0, 0, 1, 1], [], []>} : vector<8x8xf32>, vector<8x32xf32>, vector<8x32xf32> -> vector<8x32xf32>
    %112 = arith.addf %89, %111 : vector<8x32xf32>
    %c0_52 = arith.constant 0 : index
    %c0_53 = arith.constant 0 : index
    %113 = vector.load %arg9[%c0_52, %c0_53] : memref<1x32xf32, #tpu.memory_space<vmem>>, vector<1x32xf32>
    %114 = vector.broadcast %113 : vector<1x32xf32> to vector<8x32xf32>
    %115 = arith.addf %112, %114 : vector<8x32xf32>
    %116 = arith.addf %1, %115 : vector<8x32xf32>
    %cst_54 = arith.constant dense<0.000000e+00> : vector<8xf32>
    %117 = vector.multi_reduction <add>, %116, %cst_54 [1] : vector<8x32xf32> to vector<8xf32>
    %118 = vector.shape_cast %117 : vector<8xf32> to vector<8x1xf32>
    %cst_55 = arith.constant 3.200000e+01 : f32
    %119 = vector.broadcast %cst_55 : f32 to vector<8x1xf32>
    %120 = arith.divf %118, %119 : vector<8x1xf32>
    %121 = vector.broadcast %120 : vector<8x1xf32> to vector<8x32xf32>
    %122 = arith.subf %116, %121 : vector<8x32xf32>
    %123 = arith.mulf %122, %122 : vector<8x32xf32>
    %cst_56 = arith.constant dense<0.000000e+00> : vector<8xf32>
    %124 = vector.multi_reduction <add>, %123, %cst_56 [1] : vector<8x32xf32> to vector<8xf32>
    %125 = vector.shape_cast %124 : vector<8xf32> to vector<8x1xf32>
    %cst_57 = arith.constant 3.200000e+01 : f32
    %126 = vector.broadcast %cst_57 : f32 to vector<8x1xf32>
    %127 = arith.divf %125, %126 : vector<8x1xf32>
    %128 = vector.broadcast %120 : vector<8x1xf32> to vector<8x32xf32>
    %129 = arith.subf %116, %128 : vector<8x32xf32>
    %cst_58 = arith.constant 9.99999974E-6 : f32
    %130 = vector.broadcast %cst_58 : f32 to vector<8x1xf32>
    %131 = arith.addf %127, %130 : vector<8x1xf32>
    %132 = math.rsqrt %131 : vector<8x1xf32>
    %133 = vector.broadcast %132 : vector<8x1xf32> to vector<8x32xf32>
    %134 = arith.mulf %129, %133 : vector<8x32xf32>
    %c0_59 = arith.constant 0 : index
    %c0_60 = arith.constant 0 : index
    %135 = vector.load %arg10[%c0_59, %c0_60] : memref<1x32xf32, #tpu.memory_space<vmem>>, vector<1x32xf32>
    %136 = vector.broadcast %135 : vector<1x32xf32> to vector<8x32xf32>
    %137 = arith.mulf %134, %136 : vector<8x32xf32>
    %c0_61 = arith.constant 0 : index
    %c0_62 = arith.constant 0 : index
    %138 = vector.load %arg11[%c0_61, %c0_62] : memref<1x32xf32, #tpu.memory_space<vmem>>, vector<1x32xf32>
    %139 = vector.broadcast %138 : vector<1x32xf32> to vector<8x32xf32>
    %140 = arith.addf %137, %139 : vector<8x32xf32>
    %c0_63 = arith.constant 0 : index
    %c0_64 = arith.constant 0 : index
    %c0_65 = arith.constant 0 : index
    %141 = vector.load %arg12[%c0_63, %c0_64, %c0_65] : memref<1x8x32xf32, #tpu.memory_space<vmem>>, vector<1x8x32xf32>
    %142 = vector.shape_cast %141 : vector<1x8x32xf32> to vector<8x32xf32>
    %143 = vector.shape_cast %140 : vector<8x32xf32> to vector<1x8x32xf32>
    tpu.vector_store %arg12[%c0_63, %c0_64, %c0_65], %143 {strides = array<i32>} : memref<1x8x32xf32, #tpu.memory_space<vmem>>, vector<1x8x32xf32>,
    return
  }
  func.func @transform_0(%arg0: i32) -> (i32, i32, i32) {
    %c0_i32 = arith.constant 0 : i32
    %c0_i32_0 = arith.constant 0 : i32
    %c0_i32_1 = arith.constant 0 : i32
    return %arg0, %c0_i32, %c0_i32_0 : i32, i32, i32
  }
  func.func @transform_1(%arg0: i32) -> (i32, i32, i32) {
    %c0_i32 = arith.constant 0 : i32
    %c0_i32_0 = arith.constant 0 : i32
    %c0_i32_1 = arith.constant 0 : i32
    return %arg0, %c0_i32, %c0_i32_0 : i32, i32, i32
  }
  func.func @transform_2(%arg0: i32) -> (i32, i32, i32) {
    %c0_i32 = arith.constant 0 : i32
    %c0_i32_0 = arith.constant 0 : i32
    %c0_i32_1 = arith.constant 0 : i32
    return %arg0, %c0_i32, %c0_i32_0 : i32, i32, i32
  }
  func.func @transform_3(%arg0: i32) -> (i32, i32) {
    %c0_i32 = arith.constant 0 : i32
    %c0_i32_0 = arith.constant 0 : i32
    %c0_i32_1 = arith.constant 0 : i32
    return %c0_i32, %c0_i32_0 : i32, i32
  }
  func.func @transform_4(%arg0: i32) -> (i32, i32) {
    %c0_i32 = arith.constant 0 : i32
    %c0_i32_0 = arith.constant 0 : i32
    %c0_i32_1 = arith.constant 0 : i32
    return %c0_i32, %c0_i32_0 : i32, i32
  }
  func.func @transform_5(%arg0: i32) -> (i32, i32) {
    %c0_i32 = arith.constant 0 : i32
    %c0_i32_0 = arith.constant 0 : i32
    %c0_i32_1 = arith.constant 0 : i32
    return %c0_i32, %c0_i32_0 : i32, i32
  }
  func.func @transform_6(%arg0: i32) -> (i32, i32) {
    %c0_i32 = arith.constant 0 : i32
    %c0_i32_0 = arith.constant 0 : i32
    %c0_i32_1 = arith.constant 0 : i32
    return %c0_i32, %c0_i32_0 : i32, i32
  }
  func.func @transform_7(%arg0: i32) -> (i32, i32) {
    %c0_i32 = arith.constant 0 : i32
    %c0_i32_0 = arith.constant 0 : i32
    %c0_i32_1 = arith.constant 0 : i32
    return %c0_i32, %c0_i32_0 : i32, i32
  }
  func.func @transform_8(%arg0: i32) -> (i32, i32) {
    %c0_i32 = arith.constant 0 : i32
    %c0_i32_0 = arith.constant 0 : i32
    %c0_i32_1 = arith.constant 0 : i32
    return %c0_i32, %c0_i32_0 : i32, i32
  }
  func.func @transform_9(%arg0: i32) -> (i32, i32) {
    %c0_i32 = arith.constant 0 : i32
    %c0_i32_0 = arith.constant 0 : i32
    %c0_i32_1 = arith.constant 0 : i32
    return %c0_i32, %c0_i32_0 : i32, i32
  }
  func.func @transform_10(%arg0: i32) -> (i32, i32) {
    %c0_i32 = arith.constant 0 : i32
    %c0_i32_0 = arith.constant 0 : i32
    %c0_i32_1 = arith.constant 0 : i32
    return %c0_i32, %c0_i32_0 : i32, i32
  }
  func.func @transform_11(%arg0: i32) -> (i32, i32, i32) {
    %c0_i32 = arith.constant 0 : i32
    %c0_i32_0 = arith.constant 0 : i32
    %c0_i32_1 = arith.constant 0 : i32
    return %arg0, %c0_i32, %c0_i32_0 : i32, i32, i32
  }
}

module attributes {stable_mosaic.version = 11 : i64} {
  func.func @_ffn_ln_kernel(%arg0: i32, %arg1: memref<16x32xf32, #tpu.memory_space<vmem>>, %arg2: memref<32x64xf32, #tpu.memory_space<vmem>>, %arg3: memref<1x64xf32, #tpu.memory_space<vmem>>, %arg4: memref<64x32xf32, #tpu.memory_space<vmem>>, %arg5: memref<1x32xf32, #tpu.memory_space<vmem>>, %arg6: memref<1x32xf32, #tpu.memory_space<vmem>>, %arg7: memref<1x32xf32, #tpu.memory_space<vmem>>, %arg8: memref<16x32xf32, #tpu.memory_space<vmem>>) attributes {dimension_semantics = [#tpu.dimension_semantics<parallel>], iteration_bounds = array<i64: 1>, scalar_prefetch = 0 : i64, scratch_operands = 0 : i64, tpu.core_type = #tpu.core_type<tc>, window_params = [{transform_indices = @transform_0, window_bounds = array<i64: 16, 32>}, {pipeline_mode = #tpu.pipeline_mode<synchronous>, transform_indices = @transform_1, window_bounds = array<i64: 32, 64>}, {pipeline_mode = #tpu.pipeline_mode<synchronous>, transform_indices = @transform_2, window_bounds = array<i64: 1, 64>}, {pipeline_mode = #tpu.pipeline_mode<synchronous>, transform_indices = @transform_3, window_bounds = array<i64: 64, 32>}, {pipeline_mode = #tpu.pipeline_mode<synchronous>, transform_indices = @transform_4, window_bounds = array<i64: 1, 32>}, {pipeline_mode = #tpu.pipeline_mode<synchronous>, transform_indices = @transform_5, window_bounds = array<i64: 1, 32>}, {pipeline_mode = #tpu.pipeline_mode<synchronous>, transform_indices = @transform_6, window_bounds = array<i64: 1, 32>}, {transform_indices = @transform_7, window_bounds = array<i64: 16, 32>}]} {
    %c0 = arith.constant 0 : index
    %c0_0 = arith.constant 0 : index
    %0 = vector.load %arg1[%c0, %c0_0] : memref<16x32xf32, #tpu.memory_space<vmem>>, vector<16x32xf32>
    %c0_1 = arith.constant 0 : index
    %c0_2 = arith.constant 0 : index
    %1 = vector.load %arg2[%c0_1, %c0_2] : memref<32x64xf32, #tpu.memory_space<vmem>>, vector<32x64xf32>
    %cst = arith.constant dense<0.000000e+00> : vector<16x64xf32>
    %2 = tpu.matmul %0, %1, %cst {dimension_numbers = #tpu.dot_dimension_numbers<[1], [0], [0], [1], [0, 0, 1, 1], [], []>} : vector<16x32xf32>, vector<32x64xf32>, vector<16x64xf32> -> vector<16x64xf32>
    %c0_3 = arith.constant 0 : index
    %c0_4 = arith.constant 0 : index
    %3 = vector.load %arg3[%c0_3, %c0_4] : memref<1x64xf32, #tpu.memory_space<vmem>>, vector<1x64xf32>
    %4 = vector.broadcast %3 : vector<1x64xf32> to vector<16x64xf32>
    %5 = arith.addf %2, %4 : vector<16x64xf32>
    %cst_5 = arith.constant 0.000000e+00 : f32
    %6 = vector.broadcast %cst_5 : f32 to vector<16x64xf32>
    %7 = arith.maximumf %5, %6 : vector<16x64xf32>
    %c0_6 = arith.constant 0 : index
    %c0_7 = arith.constant 0 : index
    %8 = vector.load %arg4[%c0_6, %c0_7] : memref<64x32xf32, #tpu.memory_space<vmem>>, vector<64x32xf32>
    %cst_8 = arith.constant dense<0.000000e+00> : vector<16x32xf32>
    %9 = tpu.matmul %7, %8, %cst_8 {dimension_numbers = #tpu.dot_dimension_numbers<[1], [0], [0], [1], [0, 0, 1, 1], [], []>} : vector<16x64xf32>, vector<64x32xf32>, vector<16x32xf32> -> vector<16x32xf32>
    %10 = arith.addf %0, %9 : vector<16x32xf32>
    %c0_9 = arith.constant 0 : index
    %c0_10 = arith.constant 0 : index
    %11 = vector.load %arg5[%c0_9, %c0_10] : memref<1x32xf32, #tpu.memory_space<vmem>>, vector<1x32xf32>
    %12 = vector.broadcast %11 : vector<1x32xf32> to vector<16x32xf32>
    %13 = arith.addf %10, %12 : vector<16x32xf32>
    %cst_11 = arith.constant dense<0.000000e+00> : vector<16xf32>
    %14 = vector.multi_reduction <add>, %13, %cst_11 [1] : vector<16x32xf32> to vector<16xf32>
    %15 = vector.shape_cast %14 : vector<16xf32> to vector<16x1xf32>
    %cst_12 = arith.constant 3.200000e+01 : f32
    %16 = vector.broadcast %cst_12 : f32 to vector<16x1xf32>
    %17 = arith.divf %15, %16 : vector<16x1xf32>
    %18 = vector.broadcast %17 : vector<16x1xf32> to vector<16x32xf32>
    %19 = arith.subf %13, %18 : vector<16x32xf32>
    %20 = arith.mulf %19, %19 : vector<16x32xf32>
    %cst_13 = arith.constant dense<0.000000e+00> : vector<16xf32>
    %21 = vector.multi_reduction <add>, %20, %cst_13 [1] : vector<16x32xf32> to vector<16xf32>
    %22 = vector.shape_cast %21 : vector<16xf32> to vector<16x1xf32>
    %cst_14 = arith.constant 3.200000e+01 : f32
    %23 = vector.broadcast %cst_14 : f32 to vector<16x1xf32>
    %24 = arith.divf %22, %23 : vector<16x1xf32>
    %25 = vector.broadcast %17 : vector<16x1xf32> to vector<16x32xf32>
    %26 = arith.subf %13, %25 : vector<16x32xf32>
    %cst_15 = arith.constant 9.99999974E-6 : f32
    %27 = vector.broadcast %cst_15 : f32 to vector<16x1xf32>
    %28 = arith.addf %24, %27 : vector<16x1xf32>
    %29 = math.rsqrt %28 : vector<16x1xf32>
    %30 = vector.broadcast %29 : vector<16x1xf32> to vector<16x32xf32>
    %31 = arith.mulf %26, %30 : vector<16x32xf32>
    %c0_16 = arith.constant 0 : index
    %c0_17 = arith.constant 0 : index
    %32 = vector.load %arg6[%c0_16, %c0_17] : memref<1x32xf32, #tpu.memory_space<vmem>>, vector<1x32xf32>
    %33 = vector.broadcast %32 : vector<1x32xf32> to vector<16x32xf32>
    %34 = arith.mulf %31, %33 : vector<16x32xf32>
    %c0_18 = arith.constant 0 : index
    %c0_19 = arith.constant 0 : index
    %35 = vector.load %arg7[%c0_18, %c0_19] : memref<1x32xf32, #tpu.memory_space<vmem>>, vector<1x32xf32>
    %36 = vector.broadcast %35 : vector<1x32xf32> to vector<16x32xf32>
    %37 = arith.addf %34, %36 : vector<16x32xf32>
    %c0_20 = arith.constant 0 : index
    %c0_21 = arith.constant 0 : index
    %38 = vector.load %arg8[%c0_20, %c0_21] : memref<16x32xf32, #tpu.memory_space<vmem>>, vector<16x32xf32>
    tpu.vector_store %arg8[%c0_20, %c0_21], %37 {strides = array<i32>} : memref<16x32xf32, #tpu.memory_space<vmem>>, vector<16x32xf32>,
    return
  }
  func.func @transform_0(%arg0: i32) -> (i32, i32) {
    %c0_i32 = arith.constant 0 : i32
    %c0_i32_0 = arith.constant 0 : i32
    return %arg0, %c0_i32 : i32, i32
  }
  func.func @transform_1(%arg0: i32) -> (i32, i32) {
    %c0_i32 = arith.constant 0 : i32
    %c0_i32_0 = arith.constant 0 : i32
    %c0_i32_1 = arith.constant 0 : i32
    return %c0_i32, %c0_i32_0 : i32, i32
  }
  func.func @transform_2(%arg0: i32) -> (i32, i32) {
    %c0_i32 = arith.constant 0 : i32
    %c0_i32_0 = arith.constant 0 : i32
    %c0_i32_1 = arith.constant 0 : i32
    return %c0_i32, %c0_i32_0 : i32, i32
  }
  func.func @transform_3(%arg0: i32) -> (i32, i32) {
    %c0_i32 = arith.constant 0 : i32
    %c0_i32_0 = arith.constant 0 : i32
    %c0_i32_1 = arith.constant 0 : i32
    return %c0_i32, %c0_i32_0 : i32, i32
  }
  func.func @transform_4(%arg0: i32) -> (i32, i32) {
    %c0_i32 = arith.constant 0 : i32
    %c0_i32_0 = arith.constant 0 : i32
    %c0_i32_1 = arith.constant 0 : i32
    return %c0_i32, %c0_i32_0 : i32, i32
  }
  func.func @transform_5(%arg0: i32) -> (i32, i32) {
    %c0_i32 = arith.constant 0 : i32
    %c0_i32_0 = arith.constant 0 : i32
    %c0_i32_1 = arith.constant 0 : i32
    return %c0_i32, %c0_i32_0 : i32, i32
  }
  func.func @transform_6(%arg0: i32) -> (i32, i32) {
    %c0_i32 = arith.constant 0 : i32
    %c0_i32_0 = arith.constant 0 : i32
    %c0_i32_1 = arith.constant 0 : i32
    return %c0_i32, %c0_i32_0 : i32, i32
  }
  func.func @transform_7(%arg0: i32) -> (i32, i32) {
    %c0_i32 = arith.constant 0 : i32
    %c0_i32_0 = arith.constant 0 : i32
    return %arg0, %c0_i32 : i32, i32
  }
}

module attributes {stable_mosaic.version = 11 : i64} {
  func.func @_attn_block_kernel(%arg0: i32, %arg1: memref<1x8x32xf32, #tpu.memory_space<vmem>>, %arg2: memref<1x10x32xf32, #tpu.memory_space<vmem>>, %arg3: memref<1x8x10xf32, #tpu.memory_space<vmem>>, %arg4: memref<32x32xf32, #tpu.memory_space<vmem>>, %arg5: memref<1x32xf32, #tpu.memory_space<vmem>>, %arg6: memref<32x64xf32, #tpu.memory_space<vmem>>, %arg7: memref<1x64xf32, #tpu.memory_space<vmem>>, %arg8: memref<32x32xf32, #tpu.memory_space<vmem>>, %arg9: memref<1x32xf32, #tpu.memory_space<vmem>>, %arg10: memref<1x32xf32, #tpu.memory_space<vmem>>, %arg11: memref<1x32xf32, #tpu.memory_space<vmem>>, %arg12: memref<1x8x32xf32, #tpu.memory_space<vmem>>) attributes {dimension_semantics = [#tpu.dimension_semantics<parallel>], iteration_bounds = array<i64: 2>, scalar_prefetch = 0 : i64, scratch_operands = 0 : i64, tpu.core_type = #tpu.core_type<tc>, window_params = [{transform_indices = @transform_0, window_bounds = array<i64: 1, 8, 32>}, {transform_indices = @transform_1, window_bounds = array<i64: 1, 10, 32>}, {transform_indices = @transform_2, window_bounds = array<i64: 1, 8, 10>}, {pipeline_mode = #tpu.pipeline_mode<synchronous>, transform_indices = @transform_3, window_bounds = array<i64: 32, 32>}, {pipeline_mode = #tpu.pipeline_mode<synchronous>, transform_indices = @transform_4, window_bounds = array<i64: 1, 32>}, {pipeline_mode = #tpu.pipeline_mode<synchronous>, transform_indices = @transform_5, window_bounds = array<i64: 32, 64>}, {pipeline_mode = #tpu.pipeline_mode<synchronous>, transform_indices = @transform_6, window_bounds = array<i64: 1, 64>}, {pipeline_mode = #tpu.pipeline_mode<synchronous>, transform_indices = @transform_7, window_bounds = array<i64: 32, 32>}, {pipeline_mode = #tpu.pipeline_mode<synchronous>, transform_indices = @transform_8, window_bounds = array<i64: 1, 32>}, {pipeline_mode = #tpu.pipeline_mode<synchronous>, transform_indices = @transform_9, window_bounds = array<i64: 1, 32>}, {pipeline_mode = #tpu.pipeline_mode<synchronous>, transform_indices = @transform_10, window_bounds = array<i64: 1, 32>}, {transform_indices = @transform_11, window_bounds = array<i64: 1, 8, 32>}]} {
    %c0 = arith.constant 0 : index
    %c0_0 = arith.constant 0 : index
    %c0_1 = arith.constant 0 : index
    %0 = vector.load %arg1[%c0, %c0_0, %c0_1] : memref<1x8x32xf32, #tpu.memory_space<vmem>>, vector<1x8x32xf32>
    %1 = vector.shape_cast %0 : vector<1x8x32xf32> to vector<8x32xf32>
    %c0_2 = arith.constant 0 : index
    %c0_3 = arith.constant 0 : index
    %c0_4 = arith.constant 0 : index
    %2 = vector.load %arg2[%c0_2, %c0_3, %c0_4] : memref<1x10x32xf32, #tpu.memory_space<vmem>>, vector<1x10x32xf32>
    %3 = vector.shape_cast %2 : vector<1x10x32xf32> to vector<10x32xf32>
    %c0_5 = arith.constant 0 : index
    %c0_6 = arith.constant 0 : index
    %c0_7 = arith.constant 0 : index
    %4 = vector.load %arg3[%c0_5, %c0_6, %c0_7] : memref<1x8x10xf32, #tpu.memory_space<vmem>>, vector<1x8x10xf32>
    %5 = vector.shape_cast %4 : vector<1x8x10xf32> to vector<8x10xf32>
    %c0_8 = arith.constant 0 : index
    %c0_9 = arith.constant 0 : index
    %6 = vector.load %arg4[%c0_8, %c0_9] : memref<32x32xf32, #tpu.memory_space<vmem>>, vector<32x32xf32>
    %cst = arith.constant dense<0.000000e+00> : vector<8x32xf32>
    %7 = tpu.matmul %1, %6, %cst {dimension_numbers = #tpu.dot_dimension_numbers<[1], [0], [0], [1], [0, 0, 1, 1], [], []>} : vector<8x32xf32>, vector<32x32xf32>, vector<8x32xf32> -> vector<8x32xf32>
    %c0_10 = arith.constant 0 : index
    %c0_11 = arith.constant 0 : index
    %8 = vector.load %arg5[%c0_10, %c0_11] : memref<1x32xf32, #tpu.memory_space<vmem>>, vector<1x32xf32>
    %9 = vector.broadcast %8 : vector<1x32xf32> to vector<8x32xf32>
    %10 = arith.addf %7, %9 : vector<8x32xf32>
    %c0_12 = arith.constant 0 : index
    %c0_13 = arith.constant 0 : index
    %11 = vector.load %arg6[%c0_12, %c0_13] : memref<32x64xf32, #tpu.memory_space<vmem>>, vector<32x64xf32>
    %cst_14 = arith.constant dense<0.000000e+00> : vector<10x64xf32>
    %12 = tpu.matmul %3, %11, %cst_14 {dimension_numbers = #tpu.dot_dimension_numbers<[1], [0], [0], [1], [0, 0, 1, 1], [], []>} : vector<10x32xf32>, vector<32x64xf32>, vector<10x64xf32> -> vector<10x64xf32>
    %c0_15 = arith.constant 0 : index
    %c0_16 = arith.constant 0 : index
    %13 = vector.load %arg7[%c0_15, %c0_16] : memref<1x64xf32, #tpu.memory_space<vmem>>, vector<1x64xf32>
    %14 = vector.broadcast %13 : vector<1x64xf32> to vector<10x64xf32>
    %15 = arith.addf %12, %14 : vector<10x64xf32>
    %16 = vector.extract_strided_slice %15 {offsets = [0, 0], sizes = [10, 32], strides = [1, 1]} : vector<10x64xf32> to vector<10x32xf32>
    %17 = vector.extract_strided_slice %15 {offsets = [0, 32], sizes = [10, 32], strides = [1, 1]} : vector<10x64xf32> to vector<10x32xf32>
    %cst_17 = arith.constant 0.353553385 : f32
    %18 = vector.broadcast %cst_17 : f32 to vector<8x32xf32>
    %19 = arith.mulf %10, %18 : vector<8x32xf32>
    %cst_18 = arith.constant 0.000000e+00 : f32
    %20 = vector.broadcast %cst_18 : f32 to vector<8x32xf32>
    %21 = vector.extract_strided_slice %19 {offsets = [0, 0], sizes = [8, 8], strides = [1, 1]} : vector<8x32xf32> to vector<8x8xf32>
    %22 = vector.extract_strided_slice %16 {offsets = [0, 0], sizes = [10, 8], strides = [1, 1]} : vector<10x32xf32> to vector<10x8xf32>
    %23 = vector.extract_strided_slice %17 {offsets = [0, 0], sizes = [10, 8], strides = [1, 1]} : vector<10x32xf32> to vector<10x8xf32>
    %24 = tpu.transpose %22, [1, 0] : vector<10x8xf32> -> vector<8x10xf32>
    %cst_19 = arith.constant dense<0.000000e+00> : vector<8x10xf32>
    %25 = tpu.matmul %21, %24, %cst_19 {dimension_numbers = #tpu.dot_dimension_numbers<[1], [0], [0], [1], [0, 0, 1, 1], [], []>} : vector<8x8xf32>, vector<8x10xf32>, vector<8x10xf32> -> vector<8x10xf32>
    %cst_20 = arith.constant 0.000000e+00 : f32
    %26 = vector.broadcast %cst_20 : f32 to vector<8x10xf32>
    %27 = arith.cmpf ogt, %5, %26 : vector<8x10xf32>
    %cst_21 = arith.constant -1.000000e+09 : f32
    %28 = vector.broadcast %cst_21 : f32 to vector<8x10xf32>
    %29 = arith.select %27, %25, %28 : vector<8x10xi1>, vector<8x10xf32>
    %cst_22 = arith.constant dense<0xFF800000> : vector<8xf32>
    %30 = vector.multi_reduction <maximumf>, %29, %cst_22 [1] : vector<8x10xf32> to vector<8xf32>
    %31 = vector.shape_cast %30 : vector<8xf32> to vector<8x1xf32>
    %32 = vector.broadcast %31 : vector<8x1xf32> to vector<8x10xf32>
    %33 = arith.subf %29, %32 : vector<8x10xf32>
    %34 = math.exp %33 : vector<8x10xf32>
    %cst_23 = arith.constant dense<0.000000e+00> : vector<8xf32>
    %35 = vector.multi_reduction <add>, %34, %cst_23 [1] : vector<8x10xf32> to vector<8xf32>
    %36 = vector.shape_cast %35 : vector<8xf32> to vector<8x1xf32>
    %37 = tpu.reciprocal %36 {approx = true} : vector<8x1xf32> -> vector<8x1xf32>
    %38 = vector.broadcast %37 : vector<8x1xf32> to vector<8x10xf32>
    %39 = arith.mulf %34, %38 : vector<8x10xf32>
    %cst_24 = arith.constant dense<0.000000e+00> : vector<8x8xf32>
    %40 = tpu.matmul %39, %23, %cst_24 {dimension_numbers = #tpu.dot_dimension_numbers<[1], [0], [0], [1], [0, 0, 1, 1], [], []>} : vector<8x10xf32>, vector<10x8xf32>, vector<8x8xf32> -> vector<8x8xf32>
    %c0_25 = arith.constant 0 : index
    %c0_26 = arith.constant 0 : index
    %41 = vector.load %arg8[%c0_25, %c0_26] : memref<32x32xf32, #tpu.memory_space<vmem>>, vector<8x32xf32>
    %cst_27 = arith.constant dense<0.000000e+00> : vector<8x32xf32>
    %42 = tpu.matmul %40, %41, %cst_27 {dimension_numbers = #tpu.dot_dimension_numbers<[1], [0], [0], [1], [0, 0, 1, 1], [], []>} : vector<8x8xf32>, vector<8x32xf32>, vector<8x32xf32> -> vector<8x32xf32>
    %43 = arith.addf %20, %42 : vector<8x32xf32>
    %44 = vector.extract_strided_slice %19 {offsets = [0, 8], sizes = [8, 8], strides = [1, 1]} : vector<8x32xf32> to vector<8x8xf32>
    %45 = vector.extract_strided_slice %16 {offsets = [0, 8], sizes = [10, 8], strides = [1, 1]} : vector<10x32xf32> to vector<10x8xf32>
    %46 = vector.extract_strided_slice %17 {offsets = [0, 8], sizes = [10, 8], strides = [1, 1]} : vector<10x32xf32> to vector<10x8xf32>
    %47 = tpu.transpose %45, [1, 0] : vector<10x8xf32> -> vector<8x10xf32>
    %cst_28 = arith.constant dense<0.000000e+00> : vector<8x10xf32>
    %48 = tpu.matmul %44, %47, %cst_28 {dimension_numbers = #tpu.dot_dimension_numbers<[1], [0], [0], [1], [0, 0, 1, 1], [], []>} : vector<8x8xf32>, vector<8x10xf32>, vector<8x10xf32> -> vector<8x10xf32>
    %cst_29 = arith.constant 0.000000e+00 : f32
    %49 = vector.broadcast %cst_29 : f32 to vector<8x10xf32>
    %50 = arith.cmpf ogt, %5, %49 : vector<8x10xf32>
    %cst_30 = arith.constant -1.000000e+09 : f32
    %51 = vector.broadcast %cst_30 : f32 to vector<8x10xf32>
    %52 = arith.select %50, %48, %51 : vector<8x10xi1>, vector<8x10xf32>
    %cst_31 = arith.constant dense<0xFF800000> : vector<8xf32>
    %53 = vector.multi_reduction <maximumf>, %52, %cst_31 [1] : vector<8x10xf32> to vector<8xf32>
    %54 = vector.shape_cast %53 : vector<8xf32> to vector<8x1xf32>
    %55 = vector.broadcast %54 : vector<8x1xf32> to vector<8x10xf32>
    %56 = arith.subf %52, %55 : vector<8x10xf32>
    %57 = math.exp %56 : vector<8x10xf32>
    %cst_32 = arith.constant dense<0.000000e+00> : vector<8xf32>
    %58 = vector.multi_reduction <add>, %57, %cst_32 [1] : vector<8x10xf32> to vector<8xf32>
    %59 = vector.shape_cast %58 : vector<8xf32> to vector<8x1xf32>
    %60 = tpu.reciprocal %59 {approx = true} : vector<8x1xf32> -> vector<8x1xf32>
    %61 = vector.broadcast %60 : vector<8x1xf32> to vector<8x10xf32>
    %62 = arith.mulf %57, %61 : vector<8x10xf32>
    %cst_33 = arith.constant dense<0.000000e+00> : vector<8x8xf32>
    %63 = tpu.matmul %62, %46, %cst_33 {dimension_numbers = #tpu.dot_dimension_numbers<[1], [0], [0], [1], [0, 0, 1, 1], [], []>} : vector<8x10xf32>, vector<10x8xf32>, vector<8x8xf32> -> vector<8x8xf32>
    %c8 = arith.constant 8 : index
    %c0_34 = arith.constant 0 : index
    %64 = vector.load %arg8[%c8, %c0_34] : memref<32x32xf32, #tpu.memory_space<vmem>>, vector<8x32xf32>
    %cst_35 = arith.constant dense<0.000000e+00> : vector<8x32xf32>
    %65 = tpu.matmul %63, %64, %cst_35 {dimension_numbers = #tpu.dot_dimension_numbers<[1], [0], [0], [1], [0, 0, 1, 1], [], []>} : vector<8x8xf32>, vector<8x32xf32>, vector<8x32xf32> -> vector<8x32xf32>
    %66 = arith.addf %43, %65 : vector<8x32xf32>
    %67 = vector.extract_strided_slice %19 {offsets = [0, 16], sizes = [8, 8], strides = [1, 1]} : vector<8x32xf32> to vector<8x8xf32>
    %68 = vector.extract_strided_slice %16 {offsets = [0, 16], sizes = [10, 8], strides = [1, 1]} : vector<10x32xf32> to vector<10x8xf32>
    %69 = vector.extract_strided_slice %17 {offsets = [0, 16], sizes = [10, 8], strides = [1, 1]} : vector<10x32xf32> to vector<10x8xf32>
    %70 = tpu.transpose %68, [1, 0] : vector<10x8xf32> -> vector<8x10xf32>
    %cst_36 = arith.constant dense<0.000000e+00> : vector<8x10xf32>
    %71 = tpu.matmul %67, %70, %cst_36 {dimension_numbers = #tpu.dot_dimension_numbers<[1], [0], [0], [1], [0, 0, 1, 1], [], []>} : vector<8x8xf32>, vector<8x10xf32>, vector<8x10xf32> -> vector<8x10xf32>
    %cst_37 = arith.constant 0.000000e+00 : f32
    %72 = vector.broadcast %cst_37 : f32 to vector<8x10xf32>
    %73 = arith.cmpf ogt, %5, %72 : vector<8x10xf32>
    %cst_38 = arith.constant -1.000000e+09 : f32
    %74 = vector.broadcast %cst_38 : f32 to vector<8x10xf32>
    %75 = arith.select %73, %71, %74 : vector<8x10xi1>, vector<8x10xf32>
    %cst_39 = arith.constant dense<0xFF800000> : vector<8xf32>
    %76 = vector.multi_reduction <maximumf>, %75, %cst_39 [1] : vector<8x10xf32> to vector<8xf32>
    %77 = vector.shape_cast %76 : vector<8xf32> to vector<8x1xf32>
    %78 = vector.broadcast %77 : vector<8x1xf32> to vector<8x10xf32>
    %79 = arith.subf %75, %78 : vector<8x10xf32>
    %80 = math.exp %79 : vector<8x10xf32>
    %cst_40 = arith.constant dense<0.000000e+00> : vector<8xf32>
    %81 = vector.multi_reduction <add>, %80, %cst_40 [1] : vector<8x10xf32> to vector<8xf32>
    %82 = vector.shape_cast %81 : vector<8xf32> to vector<8x1xf32>
    %83 = tpu.reciprocal %82 {approx = true} : vector<8x1xf32> -> vector<8x1xf32>
    %84 = vector.broadcast %83 : vector<8x1xf32> to vector<8x10xf32>
    %85 = arith.mulf %80, %84 : vector<8x10xf32>
    %cst_41 = arith.constant dense<0.000000e+00> : vector<8x8xf32>
    %86 = tpu.matmul %85, %69, %cst_41 {dimension_numbers = #tpu.dot_dimension_numbers<[1], [0], [0], [1], [0, 0, 1, 1], [], []>} : vector<8x10xf32>, vector<10x8xf32>, vector<8x8xf32> -> vector<8x8xf32>
    %c16 = arith.constant 16 : index
    %c0_42 = arith.constant 0 : index
    %87 = vector.load %arg8[%c16, %c0_42] : memref<32x32xf32, #tpu.memory_space<vmem>>, vector<8x32xf32>
    %cst_43 = arith.constant dense<0.000000e+00> : vector<8x32xf32>
    %88 = tpu.matmul %86, %87, %cst_43 {dimension_numbers = #tpu.dot_dimension_numbers<[1], [0], [0], [1], [0, 0, 1, 1], [], []>} : vector<8x8xf32>, vector<8x32xf32>, vector<8x32xf32> -> vector<8x32xf32>
    %89 = arith.addf %66, %88 : vector<8x32xf32>
    %90 = vector.extract_strided_slice %19 {offsets = [0, 24], sizes = [8, 8], strides = [1, 1]} : vector<8x32xf32> to vector<8x8xf32>
    %91 = vector.extract_strided_slice %16 {offsets = [0, 24], sizes = [10, 8], strides = [1, 1]} : vector<10x32xf32> to vector<10x8xf32>
    %92 = vector.extract_strided_slice %17 {offsets = [0, 24], sizes = [10, 8], strides = [1, 1]} : vector<10x32xf32> to vector<10x8xf32>
    %93 = tpu.transpose %91, [1, 0] : vector<10x8xf32> -> vector<8x10xf32>
    %cst_44 = arith.constant dense<0.000000e+00> : vector<8x10xf32>
    %94 = tpu.matmul %90, %93, %cst_44 {dimension_numbers = #tpu.dot_dimension_numbers<[1], [0], [0], [1], [0, 0, 1, 1], [], []>} : vector<8x8xf32>, vector<8x10xf32>, vector<8x10xf32> -> vector<8x10xf32>
    %cst_45 = arith.constant 0.000000e+00 : f32
    %95 = vector.broadcast %cst_45 : f32 to vector<8x10xf32>
    %96 = arith.cmpf ogt, %5, %95 : vector<8x10xf32>
    %cst_46 = arith.constant -1.000000e+09 : f32
    %97 = vector.broadcast %cst_46 : f32 to vector<8x10xf32>
    %98 = arith.select %96, %94, %97 : vector<8x10xi1>, vector<8x10xf32>
    %cst_47 = arith.constant dense<0xFF800000> : vector<8xf32>
    %99 = vector.multi_reduction <maximumf>, %98, %cst_47 [1] : vector<8x10xf32> to vector<8xf32>
    %100 = vector.shape_cast %99 : vector<8xf32> to vector<8x1xf32>
    %101 = vector.broadcast %100 : vector<8x1xf32> to vector<8x10xf32>
    %102 = arith.subf %98, %101 : vector<8x10xf32>
    %103 = math.exp %102 : vector<8x10xf32>
    %cst_48 = arith.constant dense<0.000000e+00> : vector<8xf32>
    %104 = vector.multi_reduction <add>, %103, %cst_48 [1] : vector<8x10xf32> to vector<8xf32>
    %105 = vector.shape_cast %104 : vector<8xf32> to vector<8x1xf32>
    %106 = tpu.reciprocal %105 {approx = true} : vector<8x1xf32> -> vector<8x1xf32>
    %107 = vector.broadcast %106 : vector<8x1xf32> to vector<8x10xf32>
    %108 = arith.mulf %103, %107 : vector<8x10xf32>
    %cst_49 = arith.constant dense<0.000000e+00> : vector<8x8xf32>
    %109 = tpu.matmul %108, %92, %cst_49 {dimension_numbers = #tpu.dot_dimension_numbers<[1], [0], [0], [1], [0, 0, 1, 1], [], []>} : vector<8x10xf32>, vector<10x8xf32>, vector<8x8xf32> -> vector<8x8xf32>
    %c24 = arith.constant 24 : index
    %c0_50 = arith.constant 0 : index
    %110 = vector.load %arg8[%c24, %c0_50] : memref<32x32xf32, #tpu.memory_space<vmem>>, vector<8x32xf32>
    %cst_51 = arith.constant dense<0.000000e+00> : vector<8x32xf32>
    %111 = tpu.matmul %109, %110, %cst_51 {dimension_numbers = #tpu.dot_dimension_numbers<[1], [0], [0], [1], [0, 0, 1, 1], [], []>} : vector<8x8xf32>, vector<8x32xf32>, vector<8x32xf32> -> vector<8x32xf32>
    %112 = arith.addf %89, %111 : vector<8x32xf32>
    %c0_52 = arith.constant 0 : index
    %c0_53 = arith.constant 0 : index
    %113 = vector.load %arg9[%c0_52, %c0_53] : memref<1x32xf32, #tpu.memory_space<vmem>>, vector<1x32xf32>
    %114 = vector.broadcast %113 : vector<1x32xf32> to vector<8x32xf32>
    %115 = arith.addf %112, %114 : vector<8x32xf32>
    %116 = arith.addf %1, %115 : vector<8x32xf32>
    %cst_54 = arith.constant dense<0.000000e+00> : vector<8xf32>
    %117 = vector.multi_reduction <add>, %116, %cst_54 [1] : vector<8x32xf32> to vector<8xf32>
    %118 = vector.shape_cast %117 : vector<8xf32> to vector<8x1xf32>
    %cst_55 = arith.constant 3.200000e+01 : f32
    %119 = vector.broadcast %cst_55 : f32 to vector<8x1xf32>
    %120 = arith.divf %118, %119 : vector<8x1xf32>
    %121 = vector.broadcast %120 : vector<8x1xf32> to vector<8x32xf32>
    %122 = arith.subf %116, %121 : vector<8x32xf32>
    %123 = arith.mulf %122, %122 : vector<8x32xf32>
    %cst_56 = arith.constant dense<0.000000e+00> : vector<8xf32>
    %124 = vector.multi_reduction <add>, %123, %cst_56 [1] : vector<8x32xf32> to vector<8xf32>
    %125 = vector.shape_cast %124 : vector<8xf32> to vector<8x1xf32>
    %cst_57 = arith.constant 3.200000e+01 : f32
    %126 = vector.broadcast %cst_57 : f32 to vector<8x1xf32>
    %127 = arith.divf %125, %126 : vector<8x1xf32>
    %128 = vector.broadcast %120 : vector<8x1xf32> to vector<8x32xf32>
    %129 = arith.subf %116, %128 : vector<8x32xf32>
    %cst_58 = arith.constant 9.99999974E-6 : f32
    %130 = vector.broadcast %cst_58 : f32 to vector<8x1xf32>
    %131 = arith.addf %127, %130 : vector<8x1xf32>
    %132 = math.rsqrt %131 : vector<8x1xf32>
    %133 = vector.broadcast %132 : vector<8x1xf32> to vector<8x32xf32>
    %134 = arith.mulf %129, %133 : vector<8x32xf32>
    %c0_59 = arith.constant 0 : index
    %c0_60 = arith.constant 0 : index
    %135 = vector.load %arg10[%c0_59, %c0_60] : memref<1x32xf32, #tpu.memory_space<vmem>>, vector<1x32xf32>
    %136 = vector.broadcast %135 : vector<1x32xf32> to vector<8x32xf32>
    %137 = arith.mulf %134, %136 : vector<8x32xf32>
    %c0_61 = arith.constant 0 : index
    %c0_62 = arith.constant 0 : index
    %138 = vector.load %arg11[%c0_61, %c0_62] : memref<1x32xf32, #tpu.memory_space<vmem>>, vector<1x32xf32>
    %139 = vector.broadcast %138 : vector<1x32xf32> to vector<8x32xf32>
    %140 = arith.addf %137, %139 : vector<8x32xf32>
    %c0_63 = arith.constant 0 : index
    %c0_64 = arith.constant 0 : index
    %c0_65 = arith.constant 0 : index
    %141 = vector.load %arg12[%c0_63, %c0_64, %c0_65] : memref<1x8x32xf32, #tpu.memory_space<vmem>>, vector<1x8x32xf32>
    %142 = vector.shape_cast %141 : vector<1x8x32xf32> to vector<8x32xf32>
    %143 = vector.shape_cast %140 : vector<8x32xf32> to vector<1x8x32xf32>
    tpu.vector_store %arg12[%c0_63, %c0_64, %c0_65], %143 {strides = array<i32>} : memref<1x8x32xf32, #tpu.memory_space<vmem>>, vector<1x8x32xf32>,
    return
  }
  func.func @transform_0(%arg0: i32) -> (i32, i32, i32) {
    %c0_i32 = arith.constant 0 : i32
    %c0_i32_0 = arith.constant 0 : i32
    %c0_i32_1 = arith.constant 0 : i32
    return %arg0, %c0_i32, %c0_i32_0 : i32, i32, i32
  }
  func.func @transform_1(%arg0: i32) -> (i32, i32, i32) {
    %c0_i32 = arith.constant 0 : i32
    %c0_i32_0 = arith.constant 0 : i32
    %c0_i32_1 = arith.constant 0 : i32
    return %arg0, %c0_i32, %c0_i32_0 : i32, i32, i32
  }
  func.func @transform_2(%arg0: i32) -> (i32, i32, i32) {
    %c0_i32 = arith.constant 0 : i32
    %c0_i32_0 = arith.constant 0 : i32
    %c0_i32_1 = arith.constant 0 : i32
    return %arg0, %c0_i32, %c0_i32_0 : i32, i32, i32
  }
  func.func @transform_3(%arg0: i32) -> (i32, i32) {
    %c0_i32 = arith.constant 0 : i32
    %c0_i32_0 = arith.constant 0 : i32
    %c0_i32_1 = arith.constant 0 : i32
    return %c0_i32, %c0_i32_0 : i32, i32
  }
  func.func @transform_4(%arg0: i32) -> (i32, i32) {
    %c0_i32 = arith.constant 0 : i32
    %c0_i32_0 = arith.constant 0 : i32
    %c0_i32_1 = arith.constant 0 : i32
    return %c0_i32, %c0_i32_0 : i32, i32
  }
  func.func @transform_5(%arg0: i32) -> (i32, i32) {
    %c0_i32 = arith.constant 0 : i32
    %c0_i32_0 = arith.constant 0 : i32
    %c0_i32_1 = arith.constant 0 : i32
    return %c0_i32, %c0_i32_0 : i32, i32
  }
  func.func @transform_6(%arg0: i32) -> (i32, i32) {
    %c0_i32 = arith.constant 0 : i32
    %c0_i32_0 = arith.constant 0 : i32
    %c0_i32_1 = arith.constant 0 : i32
    return %c0_i32, %c0_i32_0 : i32, i32
  }
  func.func @transform_7(%arg0: i32) -> (i32, i32) {
    %c0_i32 = arith.constant 0 : i32
    %c0_i32_0 = arith.constant 0 : i32
    %c0_i32_1 = arith.constant 0 : i32
    return %c0_i32, %c0_i32_0 : i32, i32
  }
  func.func @transform_8(%arg0: i32) -> (i32, i32) {
    %c0_i32 = arith.constant 0 : i32
    %c0_i32_0 = arith.constant 0 : i32
    %c0_i32_1 = arith.constant 0 : i32
    return %c0_i32, %c0_i32_0 : i32, i32
  }
  func.func @transform_9(%arg0: i32) -> (i32, i32) {
    %c0_i32 = arith.constant 0 : i32
    %c0_i32_0 = arith.constant 0 : i32
    %c0_i32_1 = arith.constant 0 : i32
    return %c0_i32, %c0_i32_0 : i32, i32
  }
  func.func @transform_10(%arg0: i32) -> (i32, i32) {
    %c0_i32 = arith.constant 0 : i32
    %c0_i32_0 = arith.constant 0 : i32
    %c0_i32_1 = arith.constant 0 : i32
    return %c0_i32, %c0_i32_0 : i32, i32
  }
  func.func @transform_11(%arg0: i32) -> (i32, i32, i32) {
    %c0_i32 = arith.constant 0 : i32
    %c0_i32_0 = arith.constant 0 : i32
    %c0_i32_1 = arith.constant 0 : i32
    return %arg0, %c0_i32, %c0_i32_0 : i32, i32, i32
  }
}

module attributes {stable_mosaic.version = 11 : i64} {
  func.func @_attn_block_kernel(%arg0: i32, %arg1: memref<1x8x32xf32, #tpu.memory_space<vmem>>, %arg2: memref<1x8x32xf32, #tpu.memory_space<vmem>>, %arg3: memref<1x8x8xf32, #tpu.memory_space<vmem>>, %arg4: memref<32x32xf32, #tpu.memory_space<vmem>>, %arg5: memref<1x32xf32, #tpu.memory_space<vmem>>, %arg6: memref<32x64xf32, #tpu.memory_space<vmem>>, %arg7: memref<1x64xf32, #tpu.memory_space<vmem>>, %arg8: memref<32x32xf32, #tpu.memory_space<vmem>>, %arg9: memref<1x32xf32, #tpu.memory_space<vmem>>, %arg10: memref<1x32xf32, #tpu.memory_space<vmem>>, %arg11: memref<1x32xf32, #tpu.memory_space<vmem>>, %arg12: memref<1x8x32xf32, #tpu.memory_space<vmem>>, %arg13: memref<1x4x8x8xf32, #tpu.memory_space<vmem>>) attributes {dimension_semantics = [#tpu.dimension_semantics<parallel>], iteration_bounds = array<i64: 2>, scalar_prefetch = 0 : i64, scratch_operands = 0 : i64, tpu.core_type = #tpu.core_type<tc>, window_params = [{transform_indices = @transform_0, window_bounds = array<i64: 1, 8, 32>}, {transform_indices = @transform_1, window_bounds = array<i64: 1, 8, 32>}, {transform_indices = @transform_2, window_bounds = array<i64: 1, 8, 8>}, {pipeline_mode = #tpu.pipeline_mode<synchronous>, transform_indices = @transform_3, window_bounds = array<i64: 32, 32>}, {pipeline_mode = #tpu.pipeline_mode<synchronous>, transform_indices = @transform_4, window_bounds = array<i64: 1, 32>}, {pipeline_mode = #tpu.pipeline_mode<synchronous>, transform_indices = @transform_5, window_bounds = array<i64: 32, 64>}, {pipeline_mode = #tpu.pipeline_mode<synchronous>, transform_indices = @transform_6, window_bounds = array<i64: 1, 64>}, {pipeline_mode = #tpu.pipeline_mode<synchronous>, transform_indices = @transform_7, window_bounds = array<i64: 32, 32>}, {pipeline_mode = #tpu.pipeline_mode<synchronous>, transform_indices = @transform_8, window_bounds = array<i64: 1, 32>}, {pipeline_mode = #tpu.pipeline_mode<synchronous>, transform_indices = @transform_9, window_bounds = array<i64: 1, 32>}, {pipeline_mode = #tpu.pipeline_mode<synchronous>, transform_indices = @transform_10, window_bounds = array<i64: 1, 32>}, {transform_indices = @transform_11, window_bounds = array<i64: 1, 8, 32>}, {transform_indices = @transform_12, window_bounds = array<i64: 1, 4, 8, 8>}]} {
    %c0 = arith.constant 0 : index
    %c0_0 = arith.constant 0 : index
    %c0_1 = arith.constant 0 : index
    %0 = vector.load %arg1[%c0, %c0_0, %c0_1] : memref<1x8x32xf32, #tpu.memory_space<vmem>>, vector<1x8x32xf32>
    %1 = vector.shape_cast %0 : vector<1x8x32xf32> to vector<8x32xf32>
    %c0_2 = arith.constant 0 : index
    %c0_3 = arith.constant 0 : index
    %c0_4 = arith.constant 0 : index
    %2 = vector.load %arg2[%c0_2, %c0_3, %c0_4] : memref<1x8x32xf32, #tpu.memory_space<vmem>>, vector<1x8x32xf32>
    %3 = vector.shape_cast %2 : vector<1x8x32xf32> to vector<8x32xf32>
    %c0_5 = arith.constant 0 : index
    %c0_6 = arith.constant 0 : index
    %c0_7 = arith.constant 0 : index
    %4 = vector.load %arg3[%c0_5, %c0_6, %c0_7] : memref<1x8x8xf32, #tpu.memory_space<vmem>>, vector<1x8x8xf32>
    %5 = vector.shape_cast %4 : vector<1x8x8xf32> to vector<8x8xf32>
    %c0_8 = arith.constant 0 : index
    %c0_9 = arith.constant 0 : index
    %6 = vector.load %arg4[%c0_8, %c0_9] : memref<32x32xf32, #tpu.memory_space<vmem>>, vector<32x32xf32>
    %cst = arith.constant dense<0.000000e+00> : vector<8x32xf32>
    %7 = tpu.matmul %1, %6, %cst {dimension_numbers = #tpu.dot_dimension_numbers<[1], [0], [0], [1], [0, 0, 1, 1], [], []>} : vector<8x32xf32>, vector<32x32xf32>, vector<8x32xf32> -> vector<8x32xf32>
    %c0_10 = arith.constant 0 : index
    %c0_11 = arith.constant 0 : index
    %8 = vector.load %arg5[%c0_10, %c0_11] : memref<1x32xf32, #tpu.memory_space<vmem>>, vector<1x32xf32>
    %9 = vector.broadcast %8 : vector<1x32xf32> to vector<8x32xf32>
    %10 = arith.addf %7, %9 : vector<8x32xf32>
    %c0_12 = arith.constant 0 : index
    %c0_13 = arith.constant 0 : index
    %11 = vector.load %arg6[%c0_12, %c0_13] : memref<32x64xf32, #tpu.memory_space<vmem>>, vector<32x64xf32>
    %cst_14 = arith.constant dense<0.000000e+00> : vector<8x64xf32>
    %12 = tpu.matmul %3, %11, %cst_14 {dimension_numbers = #tpu.dot_dimension_numbers<[1], [0], [0], [1], [0, 0, 1, 1], [], []>} : vector<8x32xf32>, vector<32x64xf32>, vector<8x64xf32> -> vector<8x64xf32>
    %c0_15 = arith.constant 0 : index
    %c0_16 = arith.constant 0 : index
    %13 = vector.load %arg7[%c0_15, %c0_16] : memref<1x64xf32, #tpu.memory_space<vmem>>, vector<1x64xf32>
    %14 = vector.broadcast %13 : vector<1x64xf32> to vector<8x64xf32>
    %15 = arith.addf %12, %14 : vector<8x64xf32>
    %16 = vector.extract_strided_slice %15 {offsets = [0, 0], sizes = [8, 32], strides = [1, 1]} : vector<8x64xf32> to vector<8x32xf32>
    %17 = vector.extract_strided_slice %15 {offsets = [0, 32], sizes = [8, 32], strides = [1, 1]} : vector<8x64xf32> to vector<8x32xf32>
    %cst_17 = arith.constant 0.353553385 : f32
    %18 = vector.broadcast %cst_17 : f32 to vector<8x32xf32>
    %19 = arith.mulf %10, %18 : vector<8x32xf32>
    %cst_18 = arith.constant 0.000000e+00 : f32
    %20 = vector.broadcast %cst_18 : f32 to vector<8x32xf32>
    %21 = vector.extract_strided_slice %19 {offsets = [0, 0], sizes = [8, 8], strides = [1, 1]} : vector<8x32xf32> to vector<8x8xf32>
    %22 = vector.extract_strided_slice %16 {offsets = [0, 0], sizes = [8, 8], strides = [1, 1]} : vector<8x32xf32> to vector<8x8xf32>
    %23 = vector.extract_strided_slice %17 {offsets = [0, 0], sizes = [8, 8], strides = [1, 1]} : vector<8x32xf32> to vector<8x8xf32>
    %24 = tpu.transpose %22, [1, 0] : vector<8x8xf32> -> vector<8x8xf32>
    %cst_19 = arith.constant dense<0.000000e+00> : vector<8x8xf32>
    %25 = tpu.matmul %21, %24, %cst_19 {dimension_numbers = #tpu.dot_dimension_numbers<[1], [0], [0], [1], [0, 0, 1, 1], [], []>} : vector<8x8xf32>, vector<8x8xf32>, vector<8x8xf32> -> vector<8x8xf32>
    %cst_20 = arith.constant 0.000000e+00 : f32
    %26 = vector.broadcast %cst_20 : f32 to vector<8x8xf32>
    %27 = arith.cmpf ogt, %5, %26 : vector<8x8xf32>
    %cst_21 = arith.constant -1.000000e+09 : f32
    %28 = vector.broadcast %cst_21 : f32 to vector<8x8xf32>
    %29 = arith.select %27, %25, %28 : vector<8x8xi1>, vector<8x8xf32>
    %cst_22 = arith.constant dense<0xFF800000> : vector<8xf32>
    %30 = vector.multi_reduction <maximumf>, %29, %cst_22 [1] : vector<8x8xf32> to vector<8xf32>
    %31 = vector.shape_cast %30 : vector<8xf32> to vector<8x1xf32>
    %32 = vector.broadcast %31 : vector<8x1xf32> to vector<8x8xf32>
    %33 = arith.subf %29, %32 : vector<8x8xf32>
    %34 = math.exp %33 : vector<8x8xf32>
    %cst_23 = arith.constant dense<0.000000e+00> : vector<8xf32>
    %35 = vector.multi_reduction <add>, %34, %cst_23 [1] : vector<8x8xf32> to vector<8xf32>
    %36 = vector.shape_cast %35 : vector<8xf32> to vector<8x1xf32>
    %37 = tpu.reciprocal %36 {approx = true} : vector<8x1xf32> -> vector<8x1xf32>
    %38 = vector.broadcast %37 : vector<8x1xf32> to vector<8x8xf32>
    %39 = arith.mulf %34, %38 : vector<8x8xf32>
    %c0_24 = arith.constant 0 : index
    %c0_25 = arith.constant 0 : index
    %c0_26 = arith.constant 0 : index
    %c0_27 = arith.constant 0 : index
    %40 = vector.load %arg13[%c0_24, %c0_25, %c0_26, %c0_27] : memref<1x4x8x8xf32, #tpu.memory_space<vmem>>, vector<1x1x8x8xf32>
    %41 = vector.shape_cast %40 : vector<1x1x8x8xf32> to vector<8x8xf32>
    %42 = vector.shape_cast %39 : vector<8x8xf32> to vector<1x1x8x8xf32>
    tpu.vector_store %arg13[%c0_24, %c0_25, %c0_26, %c0_27], %42 {strides = array<i32>} : memref<1x4x8x8xf32, #tpu.memory_space<vmem>>, vector<1x1x8x8xf32>,
    %cst_28 = arith.constant dense<0.000000e+00> : vector<8x8xf32>
    %43 = tpu.matmul %39, %23, %cst_28 {dimension_numbers = #tpu.dot_dimension_numbers<[1], [0], [0], [1], [0, 0, 1, 1], [], []>} : vector<8x8xf32>, vector<8x8xf32>, vector<8x8xf32> -> vector<8x8xf32>
    %c0_29 = arith.constant 0 : index
    %c0_30 = arith.constant 0 : index
    %44 = vector.load %arg8[%c0_29, %c0_30] : memref<32x32xf32, #tpu.memory_space<vmem>>, vector<8x32xf32>
    %cst_31 = arith.constant dense<0.000000e+00> : vector<8x32xf32>
    %45 = tpu.matmul %43, %44, %cst_31 {dimension_numbers = #tpu.dot_dimension_numbers<[1], [0], [0], [1], [0, 0, 1, 1], [], []>} : vector<8x8xf32>, vector<8x32xf32>, vector<8x32xf32> -> vector<8x32xf32>
    %46 = arith.addf %20, %45 : vector<8x32xf32>
    %47 = vector.extract_strided_slice %19 {offsets = [0, 8], sizes = [8, 8], strides = [1, 1]} : vector<8x32xf32> to vector<8x8xf32>
    %48 = vector.extract_strided_slice %16 {offsets = [0, 8], sizes = [8, 8], strides = [1, 1]} : vector<8x32xf32> to vector<8x8xf32>
    %49 = vector.extract_strided_slice %17 {offsets = [0, 8], sizes = [8, 8], strides = [1, 1]} : vector<8x32xf32> to vector<8x8xf32>
    %50 = tpu.transpose %48, [1, 0] : vector<8x8xf32> -> vector<8x8xf32>
    %cst_32 = arith.constant dense<0.000000e+00> : vector<8x8xf32>
    %51 = tpu.matmul %47, %50, %cst_32 {dimension_numbers = #tpu.dot_dimension_numbers<[1], [0], [0], [1], [0, 0, 1, 1], [], []>} : vector<8x8xf32>, vector<8x8xf32>, vector<8x8xf32> -> vector<8x8xf32>
    %cst_33 = arith.constant 0.000000e+00 : f32
    %52 = vector.broadcast %cst_33 : f32 to vector<8x8xf32>
    %53 = arith.cmpf ogt, %5, %52 : vector<8x8xf32>
    %cst_34 = arith.constant -1.000000e+09 : f32
    %54 = vector.broadcast %cst_34 : f32 to vector<8x8xf32>
    %55 = arith.select %53, %51, %54 : vector<8x8xi1>, vector<8x8xf32>
    %cst_35 = arith.constant dense<0xFF800000> : vector<8xf32>
    %56 = vector.multi_reduction <maximumf>, %55, %cst_35 [1] : vector<8x8xf32> to vector<8xf32>
    %57 = vector.shape_cast %56 : vector<8xf32> to vector<8x1xf32>
    %58 = vector.broadcast %57 : vector<8x1xf32> to vector<8x8xf32>
    %59 = arith.subf %55, %58 : vector<8x8xf32>
    %60 = math.exp %59 : vector<8x8xf32>
    %cst_36 = arith.constant dense<0.000000e+00> : vector<8xf32>
    %61 = vector.multi_reduction <add>, %60, %cst_36 [1] : vector<8x8xf32> to vector<8xf32>
    %62 = vector.shape_cast %61 : vector<8xf32> to vector<8x1xf32>
    %63 = tpu.reciprocal %62 {approx = true} : vector<8x1xf32> -> vector<8x1xf32>
    %64 = vector.broadcast %63 : vector<8x1xf32> to vector<8x8xf32>
    %65 = arith.mulf %60, %64 : vector<8x8xf32>
    %c0_37 = arith.constant 0 : index
    %c1 = arith.constant 1 : index
    %c0_38 = arith.constant 0 : index
    %c0_39 = arith.constant 0 : index
    %66 = vector.load %arg13[%c0_37, %c1, %c0_38, %c0_39] : memref<1x4x8x8xf32, #tpu.memory_space<vmem>>, vector<1x1x8x8xf32>
    %67 = vector.shape_cast %66 : vector<1x1x8x8xf32> to vector<8x8xf32>
    %68 = vector.shape_cast %65 : vector<8x8xf32> to vector<1x1x8x8xf32>
    tpu.vector_store %arg13[%c0_37, %c1, %c0_38, %c0_39], %68 {strides = array<i32>} : memref<1x4x8x8xf32, #tpu.memory_space<vmem>>, vector<1x1x8x8xf32>,
    %cst_40 = arith.constant dense<0.000000e+00> : vector<8x8xf32>
    %69 = tpu.matmul %65, %49, %cst_40 {dimension_numbers = #tpu.dot_dimension_numbers<[1], [0], [0], [1], [0, 0, 1, 1], [], []>} : vector<8x8xf32>, vector<8x8xf32>, vector<8x8xf32> -> vector<8x8xf32>
    %c8 = arith.constant 8 : index
    %c0_41 = arith.constant 0 : index
    %70 = vector.load %arg8[%c8, %c0_41] : memref<32x32xf32, #tpu.memory_space<vmem>>, vector<8x32xf32>
    %cst_42 = arith.constant dense<0.000000e+00> : vector<8x32xf32>
    %71 = tpu.matmul %69, %70, %cst_42 {dimension_numbers = #tpu.dot_dimension_numbers<[1], [0], [0], [1], [0, 0, 1, 1], [], []>} : vector<8x8xf32>, vector<8x32xf32>, vector<8x32xf32> -> vector<8x32xf32>
    %72 = arith.addf %46, %71 : vector<8x32xf32>
    %73 = vector.extract_strided_slice %19 {offsets = [0, 16], sizes = [8, 8], strides = [1, 1]} : vector<8x32xf32> to vector<8x8xf32>
    %74 = vector.extract_strided_slice %16 {offsets = [0, 16], sizes = [8, 8], strides = [1, 1]} : vector<8x32xf32> to vector<8x8xf32>
    %75 = vector.extract_strided_slice %17 {offsets = [0, 16], sizes = [8, 8], strides = [1, 1]} : vector<8x32xf32> to vector<8x8xf32>
    %76 = tpu.transpose %74, [1, 0] : vector<8x8xf32> -> vector<8x8xf32>
    %cst_43 = arith.constant dense<0.000000e+00> : vector<8x8xf32>
    %77 = tpu.matmul %73, %76, %cst_43 {dimension_numbers = #tpu.dot_dimension_numbers<[1], [0], [0], [1], [0, 0, 1, 1], [], []>} : vector<8x8xf32>, vector<8x8xf32>, vector<8x8xf32> -> vector<8x8xf32>
    %cst_44 = arith.constant 0.000000e+00 : f32
    %78 = vector.broadcast %cst_44 : f32 to vector<8x8xf32>
    %79 = arith.cmpf ogt, %5, %78 : vector<8x8xf32>
    %cst_45 = arith.constant -1.000000e+09 : f32
    %80 = vector.broadcast %cst_45 : f32 to vector<8x8xf32>
    %81 = arith.select %79, %77, %80 : vector<8x8xi1>, vector<8x8xf32>
    %cst_46 = arith.constant dense<0xFF800000> : vector<8xf32>
    %82 = vector.multi_reduction <maximumf>, %81, %cst_46 [1] : vector<8x8xf32> to vector<8xf32>
    %83 = vector.shape_cast %82 : vector<8xf32> to vector<8x1xf32>
    %84 = vector.broadcast %83 : vector<8x1xf32> to vector<8x8xf32>
    %85 = arith.subf %81, %84 : vector<8x8xf32>
    %86 = math.exp %85 : vector<8x8xf32>
    %cst_47 = arith.constant dense<0.000000e+00> : vector<8xf32>
    %87 = vector.multi_reduction <add>, %86, %cst_47 [1] : vector<8x8xf32> to vector<8xf32>
    %88 = vector.shape_cast %87 : vector<8xf32> to vector<8x1xf32>
    %89 = tpu.reciprocal %88 {approx = true} : vector<8x1xf32> -> vector<8x1xf32>
    %90 = vector.broadcast %89 : vector<8x1xf32> to vector<8x8xf32>
    %91 = arith.mulf %86, %90 : vector<8x8xf32>
    %c0_48 = arith.constant 0 : index
    %c2 = arith.constant 2 : index
    %c0_49 = arith.constant 0 : index
    %c0_50 = arith.constant 0 : index
    %92 = vector.load %arg13[%c0_48, %c2, %c0_49, %c0_50] : memref<1x4x8x8xf32, #tpu.memory_space<vmem>>, vector<1x1x8x8xf32>
    %93 = vector.shape_cast %92 : vector<1x1x8x8xf32> to vector<8x8xf32>
    %94 = vector.shape_cast %91 : vector<8x8xf32> to vector<1x1x8x8xf32>
    tpu.vector_store %arg13[%c0_48, %c2, %c0_49, %c0_50], %94 {strides = array<i32>} : memref<1x4x8x8xf32, #tpu.memory_space<vmem>>, vector<1x1x8x8xf32>,
    %cst_51 = arith.constant dense<0.000000e+00> : vector<8x8xf32>
    %95 = tpu.matmul %91, %75, %cst_51 {dimension_numbers = #tpu.dot_dimension_numbers<[1], [0], [0], [1], [0, 0, 1, 1], [], []>} : vector<8x8xf32>, vector<8x8xf32>, vector<8x8xf32> -> vector<8x8xf32>
    %c16 = arith.constant 16 : index
    %c0_52 = arith.constant 0 : index
    %96 = vector.load %arg8[%c16, %c0_52] : memref<32x32xf32, #tpu.memory_space<vmem>>, vector<8x32xf32>
    %cst_53 = arith.constant dense<0.000000e+00> : vector<8x32xf32>
    %97 = tpu.matmul %95, %96, %cst_53 {dimension_numbers = #tpu.dot_dimension_numbers<[1], [0], [0], [1], [0, 0, 1, 1], [], []>} : vector<8x8xf32>, vector<8x32xf32>, vector<8x32xf32> -> vector<8x32xf32>
    %98 = arith.addf %72, %97 : vector<8x32xf32>
    %99 = vector.extract_strided_slice %19 {offsets = [0, 24], sizes = [8, 8], strides = [1, 1]} : vector<8x32xf32> to vector<8x8xf32>
    %100 = vector.extract_strided_slice %16 {offsets = [0, 24], sizes = [8, 8], strides = [1, 1]} : vector<8x32xf32> to vector<8x8xf32>
    %101 = vector.extract_strided_slice %17 {offsets = [0, 24], sizes = [8, 8], strides = [1, 1]} : vector<8x32xf32> to vector<8x8xf32>
    %102 = tpu.transpose %100, [1, 0] : vector<8x8xf32> -> vector<8x8xf32>
    %cst_54 = arith.constant dense<0.000000e+00> : vector<8x8xf32>
    %103 = tpu.matmul %99, %102, %cst_54 {dimension_numbers = #tpu.dot_dimension_numbers<[1], [0], [0], [1], [0, 0, 1, 1], [], []>} : vector<8x8xf32>, vector<8x8xf32>, vector<8x8xf32> -> vector<8x8xf32>
    %cst_55 = arith.constant 0.000000e+00 : f32
    %104 = vector.broadcast %cst_55 : f32 to vector<8x8xf32>
    %105 = arith.cmpf ogt, %5, %104 : vector<8x8xf32>
    %cst_56 = arith.constant -1.000000e+09 : f32
    %106 = vector.broadcast %cst_56 : f32 to vector<8x8xf32>
    %107 = arith.select %105, %103, %106 : vector<8x8xi1>, vector<8x8xf32>
    %cst_57 = arith.constant dense<0xFF800000> : vector<8xf32>
    %108 = vector.multi_reduction <maximumf>, %107, %cst_57 [1] : vector<8x8xf32> to vector<8xf32>
    %109 = vector.shape_cast %108 : vector<8xf32> to vector<8x1xf32>
    %110 = vector.broadcast %109 : vector<8x1xf32> to vector<8x8xf32>
    %111 = arith.subf %107, %110 : vector<8x8xf32>
    %112 = math.exp %111 : vector<8x8xf32>
    %cst_58 = arith.constant dense<0.000000e+00> : vector<8xf32>
    %113 = vector.multi_reduction <add>, %112, %cst_58 [1] : vector<8x8xf32> to vector<8xf32>
    %114 = vector.shape_cast %113 : vector<8xf32> to vector<8x1xf32>
    %115 = tpu.reciprocal %114 {approx = true} : vector<8x1xf32> -> vector<8x1xf32>
    %116 = vector.broadcast %115 : vector<8x1xf32> to vector<8x8xf32>
    %117 = arith.mulf %112, %116 : vector<8x8xf32>
    %c0_59 = arith.constant 0 : index
    %c3 = arith.constant 3 : index
    %c0_60 = arith.constant 0 : index
    %c0_61 = arith.constant 0 : index
    %118 = vector.load %arg13[%c0_59, %c3, %c0_60, %c0_61] : memref<1x4x8x8xf32, #tpu.memory_space<vmem>>, vector<1x1x8x8xf32>
    %119 = vector.shape_cast %118 : vector<1x1x8x8xf32> to vector<8x8xf32>
    %120 = vector.shape_cast %117 : vector<8x8xf32> to vector<1x1x8x8xf32>
    tpu.vector_store %arg13[%c0_59, %c3, %c0_60, %c0_61], %120 {strides = array<i32>} : memref<1x4x8x8xf32, #tpu.memory_space<vmem>>, vector<1x1x8x8xf32>,
    %cst_62 = arith.constant dense<0.000000e+00> : vector<8x8xf32>
    %121 = tpu.matmul %117, %101, %cst_62 {dimension_numbers = #tpu.dot_dimension_numbers<[1], [0], [0], [1], [0, 0, 1, 1], [], []>} : vector<8x8xf32>, vector<8x8xf32>, vector<8x8xf32> -> vector<8x8xf32>
    %c24 = arith.constant 24 : index
    %c0_63 = arith.constant 0 : index
    %122 = vector.load %arg8[%c24, %c0_63] : memref<32x32xf32, #tpu.memory_space<vmem>>, vector<8x32xf32>
    %cst_64 = arith.constant dense<0.000000e+00> : vector<8x32xf32>
    %123 = tpu.matmul %121, %122, %cst_64 {dimension_numbers = #tpu.dot_dimension_numbers<[1], [0], [0], [1], [0, 0, 1, 1], [], []>} : vector<8x8xf32>, vector<8x32xf32>, vector<8x32xf32> -> vector<8x32xf32>
    %124 = arith.addf %98, %123 : vector<8x32xf32>
    %c0_65 = arith.constant 0 : index
    %c0_66 = arith.constant 0 : index
    %125 = vector.load %arg9[%c0_65, %c0_66] : memref<1x32xf32, #tpu.memory_space<vmem>>, vector<1x32xf32>
    %126 = vector.broadcast %125 : vector<1x32xf32> to vector<8x32xf32>
    %127 = arith.addf %124, %126 : vector<8x32xf32>
    %128 = arith.addf %1, %127 : vector<8x32xf32>
    %cst_67 = arith.constant dense<0.000000e+00> : vector<8xf32>
    %129 = vector.multi_reduction <add>, %128, %cst_67 [1] : vector<8x32xf32> to vector<8xf32>
    %130 = vector.shape_cast %129 : vector<8xf32> to vector<8x1xf32>
    %cst_68 = arith.constant 3.200000e+01 : f32
    %131 = vector.broadcast %cst_68 : f32 to vector<8x1xf32>
    %132 = arith.divf %130, %131 : vector<8x1xf32>
    %133 = vector.broadcast %132 : vector<8x1xf32> to vector<8x32xf32>
    %134 = arith.subf %128, %133 : vector<8x32xf32>
    %135 = arith.mulf %134, %134 : vector<8x32xf32>
    %cst_69 = arith.constant dense<0.000000e+00> : vector<8xf32>
    %136 = vector.multi_reduction <add>, %135, %cst_69 [1] : vector<8x32xf32> to vector<8xf32>
    %137 = vector.shape_cast %136 : vector<8xf32> to vector<8x1xf32>
    %cst_70 = arith.constant 3.200000e+01 : f32
    %138 = vector.broadcast %cst_70 : f32 to vector<8x1xf32>
    %139 = arith.divf %137, %138 : vector<8x1xf32>
    %140 = vector.broadcast %132 : vector<8x1xf32> to vector<8x32xf32>
    %141 = arith.subf %128, %140 : vector<8x32xf32>
    %cst_71 = arith.constant 9.99999974E-6 : f32
    %142 = vector.broadcast %cst_71 : f32 to vector<8x1xf32>
    %143 = arith.addf %139, %142 : vector<8x1xf32>
    %144 = math.rsqrt %143 : vector<8x1xf32>
    %145 = vector.broadcast %144 : vector<8x1xf32> to vector<8x32xf32>
    %146 = arith.mulf %141, %145 : vector<8x32xf32>
    %c0_72 = arith.constant 0 : index
    %c0_73 = arith.constant 0 : index
    %147 = vector.load %arg10[%c0_72, %c0_73] : memref<1x32xf32, #tpu.memory_space<vmem>>, vector<1x32xf32>
    %148 = vector.broadcast %147 : vector<1x32xf32> to vector<8x32xf32>
    %149 = arith.mulf %146, %148 : vector<8x32xf32>
    %c0_74 = arith.constant 0 : index
    %c0_75 = arith.constant 0 : index
    %150 = vector.load %arg11[%c0_74, %c0_75] : memref<1x32xf32, #tpu.memory_space<vmem>>, vector<1x32xf32>
    %151 = vector.broadcast %150 : vector<1x32xf32> to vector<8x32xf32>
    %152 = arith.addf %149, %151 : vector<8x32xf32>
    %c0_76 = arith.constant 0 : index
    %c0_77 = arith.constant 0 : index
    %c0_78 = arith.constant 0 : index
    %153 = vector.load %arg12[%c0_76, %c0_77, %c0_78] : memref<1x8x32xf32, #tpu.memory_space<vmem>>, vector<1x8x32xf32>
    %154 = vector.shape_cast %153 : vector<1x8x32xf32> to vector<8x32xf32>
    %155 = vector.shape_cast %152 : vector<8x32xf32> to vector<1x8x32xf32>
    tpu.vector_store %arg12[%c0_76, %c0_77, %c0_78], %155 {strides = array<i32>} : memref<1x8x32xf32, #tpu.memory_space<vmem>>, vector<1x8x32xf32>,
    return
  }
  func.func @transform_0(%arg0: i32) -> (i32, i32, i32) {
    %c0_i32 = arith.constant 0 : i32
    %c0_i32_0 = arith.constant 0 : i32
    %c0_i32_1 = arith.constant 0 : i32
    return %arg0, %c0_i32, %c0_i32_0 : i32, i32, i32
  }
  func.func @transform_1(%arg0: i32) -> (i32, i32, i32) {
    %c0_i32 = arith.constant 0 : i32
    %c0_i32_0 = arith.constant 0 : i32
    %c0_i32_1 = arith.constant 0 : i32
    return %arg0, %c0_i32, %c0_i32_0 : i32, i32, i32
  }
  func.func @transform_2(%arg0: i32) -> (i32, i32, i32) {
    %c0_i32 = arith.constant 0 : i32
    %c0_i32_0 = arith.constant 0 : i32
    %c0_i32_1 = arith.constant 0 : i32
    return %arg0, %c0_i32, %c0_i32_0 : i32, i32, i32
  }
  func.func @transform_3(%arg0: i32) -> (i32, i32) {
    %c0_i32 = arith.constant 0 : i32
    %c0_i32_0 = arith.constant 0 : i32
    %c0_i32_1 = arith.constant 0 : i32
    return %c0_i32, %c0_i32_0 : i32, i32
  }
  func.func @transform_4(%arg0: i32) -> (i32, i32) {
    %c0_i32 = arith.constant 0 : i32
    %c0_i32_0 = arith.constant 0 : i32
    %c0_i32_1 = arith.constant 0 : i32
    return %c0_i32, %c0_i32_0 : i32, i32
  }
  func.func @transform_5(%arg0: i32) -> (i32, i32) {
    %c0_i32 = arith.constant 0 : i32
    %c0_i32_0 = arith.constant 0 : i32
    %c0_i32_1 = arith.constant 0 : i32
    return %c0_i32, %c0_i32_0 : i32, i32
  }
  func.func @transform_6(%arg0: i32) -> (i32, i32) {
    %c0_i32 = arith.constant 0 : i32
    %c0_i32_0 = arith.constant 0 : i32
    %c0_i32_1 = arith.constant 0 : i32
    return %c0_i32, %c0_i32_0 : i32, i32
  }
  func.func @transform_7(%arg0: i32) -> (i32, i32) {
    %c0_i32 = arith.constant 0 : i32
    %c0_i32_0 = arith.constant 0 : i32
    %c0_i32_1 = arith.constant 0 : i32
    return %c0_i32, %c0_i32_0 : i32, i32
  }
  func.func @transform_8(%arg0: i32) -> (i32, i32) {
    %c0_i32 = arith.constant 0 : i32
    %c0_i32_0 = arith.constant 0 : i32
    %c0_i32_1 = arith.constant 0 : i32
    return %c0_i32, %c0_i32_0 : i32, i32
  }
  func.func @transform_9(%arg0: i32) -> (i32, i32) {
    %c0_i32 = arith.constant 0 : i32
    %c0_i32_0 = arith.constant 0 : i32
    %c0_i32_1 = arith.constant 0 : i32
    return %c0_i32, %c0_i32_0 : i32, i32
  }
  func.func @transform_10(%arg0: i32) -> (i32, i32) {
    %c0_i32 = arith.constant 0 : i32
    %c0_i32_0 = arith.constant 0 : i32
    %c0_i32_1 = arith.constant 0 : i32
    return %c0_i32, %c0_i32_0 : i32, i32
  }
  func.func @transform_11(%arg0: i32) -> (i32, i32, i32) {
    %c0_i32 = arith.constant 0 : i32
    %c0_i32_0 = arith.constant 0 : i32
    %c0_i32_1 = arith.constant 0 : i32
    return %arg0, %c0_i32, %c0_i32_0 : i32, i32, i32
  }
  func.func @transform_12(%arg0: i32) -> (i32, i32, i32, i32) {
    %c0_i32 = arith.constant 0 : i32
    %c0_i32_0 = arith.constant 0 : i32
    %c0_i32_1 = arith.constant 0 : i32
    %c0_i32_2 = arith.constant 0 : i32
    return %arg0, %c0_i32, %c0_i32_0, %c0_i32_1 : i32, i32, i32, i32
  }
}

module attributes {stable_mosaic.version = 11 : i64} {
  func.func @_attn_block_kernel(%arg0: i32, %arg1: memref<1x8x32xf32, #tpu.memory_space<vmem>>, %arg2: memref<1x10x32xf32, #tpu.memory_space<vmem>>, %arg3: memref<1x8x10xf32, #tpu.memory_space<vmem>>, %arg4: memref<32x32xf32, #tpu.memory_space<vmem>>, %arg5: memref<1x32xf32, #tpu.memory_space<vmem>>, %arg6: memref<32x64xf32, #tpu.memory_space<vmem>>, %arg7: memref<1x64xf32, #tpu.memory_space<vmem>>, %arg8: memref<32x32xf32, #tpu.memory_space<vmem>>, %arg9: memref<1x32xf32, #tpu.memory_space<vmem>>, %arg10: memref<1x32xf32, #tpu.memory_space<vmem>>, %arg11: memref<1x32xf32, #tpu.memory_space<vmem>>, %arg12: memref<1x8x32xf32, #tpu.memory_space<vmem>>, %arg13: memref<1x4x8x10xf32, #tpu.memory_space<vmem>>) attributes {dimension_semantics = [#tpu.dimension_semantics<parallel>], iteration_bounds = array<i64: 2>, scalar_prefetch = 0 : i64, scratch_operands = 0 : i64, tpu.core_type = #tpu.core_type<tc>, window_params = [{transform_indices = @transform_0, window_bounds = array<i64: 1, 8, 32>}, {transform_indices = @transform_1, window_bounds = array<i64: 1, 10, 32>}, {transform_indices = @transform_2, window_bounds = array<i64: 1, 8, 10>}, {pipeline_mode = #tpu.pipeline_mode<synchronous>, transform_indices = @transform_3, window_bounds = array<i64: 32, 32>}, {pipeline_mode = #tpu.pipeline_mode<synchronous>, transform_indices = @transform_4, window_bounds = array<i64: 1, 32>}, {pipeline_mode = #tpu.pipeline_mode<synchronous>, transform_indices = @transform_5, window_bounds = array<i64: 32, 64>}, {pipeline_mode = #tpu.pipeline_mode<synchronous>, transform_indices = @transform_6, window_bounds = array<i64: 1, 64>}, {pipeline_mode = #tpu.pipeline_mode<synchronous>, transform_indices = @transform_7, window_bounds = array<i64: 32, 32>}, {pipeline_mode = #tpu.pipeline_mode<synchronous>, transform_indices = @transform_8, window_bounds = array<i64: 1, 32>}, {pipeline_mode = #tpu.pipeline_mode<synchronous>, transform_indices = @transform_9, window_bounds = array<i64: 1, 32>}, {pipeline_mode = #tpu.pipeline_mode<synchronous>, transform_indices = @transform_10, window_bounds = array<i64: 1, 32>}, {transform_indices = @transform_11, window_bounds = array<i64: 1, 8, 32>}, {transform_indices = @transform_12, window_bounds = array<i64: 1, 4, 8, 10>}]} {
    %c0 = arith.constant 0 : index
    %c0_0 = arith.constant 0 : index
    %c0_1 = arith.constant 0 : index
    %0 = vector.load %arg1[%c0, %c0_0, %c0_1] : memref<1x8x32xf32, #tpu.memory_space<vmem>>, vector<1x8x32xf32>
    %1 = vector.shape_cast %0 : vector<1x8x32xf32> to vector<8x32xf32>
    %c0_2 = arith.constant 0 : index
    %c0_3 = arith.constant 0 : index
    %c0_4 = arith.constant 0 : index
    %2 = vector.load %arg2[%c0_2, %c0_3, %c0_4] : memref<1x10x32xf32, #tpu.memory_space<vmem>>, vector<1x10x32xf32>
    %3 = vector.shape_cast %2 : vector<1x10x32xf32> to vector<10x32xf32>
    %c0_5 = arith.constant 0 : index
    %c0_6 = arith.constant 0 : index
    %c0_7 = arith.constant 0 : index
    %4 = vector.load %arg3[%c0_5, %c0_6, %c0_7] : memref<1x8x10xf32, #tpu.memory_space<vmem>>, vector<1x8x10xf32>
    %5 = vector.shape_cast %4 : vector<1x8x10xf32> to vector<8x10xf32>
    %c0_8 = arith.constant 0 : index
    %c0_9 = arith.constant 0 : index
    %6 = vector.load %arg4[%c0_8, %c0_9] : memref<32x32xf32, #tpu.memory_space<vmem>>, vector<32x32xf32>
    %cst = arith.constant dense<0.000000e+00> : vector<8x32xf32>
    %7 = tpu.matmul %1, %6, %cst {dimension_numbers = #tpu.dot_dimension_numbers<[1], [0], [0], [1], [0, 0, 1, 1], [], []>} : vector<8x32xf32>, vector<32x32xf32>, vector<8x32xf32> -> vector<8x32xf32>
    %c0_10 = arith.constant 0 : index
    %c0_11 = arith.constant 0 : index
    %8 = vector.load %arg5[%c0_10, %c0_11] : memref<1x32xf32, #tpu.memory_space<vmem>>, vector<1x32xf32>
    %9 = vector.broadcast %8 : vector<1x32xf32> to vector<8x32xf32>
    %10 = arith.addf %7, %9 : vector<8x32xf32>
    %c0_12 = arith.constant 0 : index
    %c0_13 = arith.constant 0 : index
    %11 = vector.load %arg6[%c0_12, %c0_13] : memref<32x64xf32, #tpu.memory_space<vmem>>, vector<32x64xf32>
    %cst_14 = arith.constant dense<0.000000e+00> : vector<10x64xf32>
    %12 = tpu.matmul %3, %11, %cst_14 {dimension_numbers = #tpu.dot_dimension_numbers<[1], [0], [0], [1], [0, 0, 1, 1], [], []>} : vector<10x32xf32>, vector<32x64xf32>, vector<10x64xf32> -> vector<10x64xf32>
    %c0_15 = arith.constant 0 : index
    %c0_16 = arith.constant 0 : index
    %13 = vector.load %arg7[%c0_15, %c0_16] : memref<1x64xf32, #tpu.memory_space<vmem>>, vector<1x64xf32>
    %14 = vector.broadcast %13 : vector<1x64xf32> to vector<10x64xf32>
    %15 = arith.addf %12, %14 : vector<10x64xf32>
    %16 = vector.extract_strided_slice %15 {offsets = [0, 0], sizes = [10, 32], strides = [1, 1]} : vector<10x64xf32> to vector<10x32xf32>
    %17 = vector.extract_strided_slice %15 {offsets = [0, 32], sizes = [10, 32], strides = [1, 1]} : vector<10x64xf32> to vector<10x32xf32>
    %cst_17 = arith.constant 0.353553385 : f32
    %18 = vector.broadcast %cst_17 : f32 to vector<8x32xf32>
    %19 = arith.mulf %10, %18 : vector<8x32xf32>
    %cst_18 = arith.constant 0.000000e+00 : f32
    %20 = vector.broadcast %cst_18 : f32 to vector<8x32xf32>
    %21 = vector.extract_strided_slice %19 {offsets = [0, 0], sizes = [8, 8], strides = [1, 1]} : vector<8x32xf32> to vector<8x8xf32>
    %22 = vector.extract_strided_slice %16 {offsets = [0, 0], sizes = [10, 8], strides = [1, 1]} : vector<10x32xf32> to vector<10x8xf32>
    %23 = vector.extract_strided_slice %17 {offsets = [0, 0], sizes = [10, 8], strides = [1, 1]} : vector<10x32xf32> to vector<10x8xf32>
    %24 = tpu.transpose %22, [1, 0] : vector<10x8xf32> -> vector<8x10xf32>
    %cst_19 = arith.constant dense<0.000000e+00> : vector<8x10xf32>
    %25 = tpu.matmul %21, %24, %cst_19 {dimension_numbers = #tpu.dot_dimension_numbers<[1], [0], [0], [1], [0, 0, 1, 1], [], []>} : vector<8x8xf32>, vector<8x10xf32>, vector<8x10xf32> -> vector<8x10xf32>
    %cst_20 = arith.constant 0.000000e+00 : f32
    %26 = vector.broadcast %cst_20 : f32 to vector<8x10xf32>
    %27 = arith.cmpf ogt, %5, %26 : vector<8x10xf32>
    %cst_21 = arith.constant -1.000000e+09 : f32
    %28 = vector.broadcast %cst_21 : f32 to vector<8x10xf32>
    %29 = arith.select %27, %25, %28 : vector<8x10xi1>, vector<8x10xf32>
    %cst_22 = arith.constant dense<0xFF800000> : vector<8xf32>
    %30 = vector.multi_reduction <maximumf>, %29, %cst_22 [1] : vector<8x10xf32> to vector<8xf32>
    %31 = vector.shape_cast %30 : vector<8xf32> to vector<8x1xf32>
    %32 = vector.broadcast %31 : vector<8x1xf32> to vector<8x10xf32>
    %33 = arith.subf %29, %32 : vector<8x10xf32>
    %34 = math.exp %33 : vector<8x10xf32>
    %cst_23 = arith.constant dense<0.000000e+00> : vector<8xf32>
    %35 = vector.multi_reduction <add>, %34, %cst_23 [1] : vector<8x10xf32> to vector<8xf32>
    %36 = vector.shape_cast %35 : vector<8xf32> to vector<8x1xf32>
    %37 = tpu.reciprocal %36 {approx = true} : vector<8x1xf32> -> vector<8x1xf32>
    %38 = vector.broadcast %37 : vector<8x1xf32> to vector<8x10xf32>
    %39 = arith.mulf %34, %38 : vector<8x10xf32>
    %c0_24 = arith.constant 0 : index
    %c0_25 = arith.constant 0 : index
    %c0_26 = arith.constant 0 : index
    %c0_27 = arith.constant 0 : index
    %40 = vector.load %arg13[%c0_24, %c0_25, %c0_26, %c0_27] : memref<1x4x8x10xf32, #tpu.memory_space<vmem>>, vector<1x1x8x10xf32>
    %41 = vector.shape_cast %40 : vector<1x1x8x10xf32> to vector<8x10xf32>
    %42 = vector.shape_cast %39 : vector<8x10xf32> to vector<1x1x8x10xf32>
    tpu.vector_store %arg13[%c0_24, %c0_25, %c0_26, %c0_27], %42 {strides = array<i32>} : memref<1x4x8x10xf32, #tpu.memory_space<vmem>>, vector<1x1x8x10xf32>,
    %cst_28 = arith.constant dense<0.000000e+00> : vector<8x8xf32>
    %43 = tpu.matmul %39, %23, %cst_28 {dimension_numbers = #tpu.dot_dimension_numbers<[1], [0], [0], [1], [0, 0, 1, 1], [], []>} : vector<8x10xf32>, vector<10x8xf32>, vector<8x8xf32> -> vector<8x8xf32>
    %c0_29 = arith.constant 0 : index
    %c0_30 = arith.constant 0 : index
    %44 = vector.load %arg8[%c0_29, %c0_30] : memref<32x32xf32, #tpu.memory_space<vmem>>, vector<8x32xf32>
    %cst_31 = arith.constant dense<0.000000e+00> : vector<8x32xf32>
    %45 = tpu.matmul %43, %44, %cst_31 {dimension_numbers = #tpu.dot_dimension_numbers<[1], [0], [0], [1], [0, 0, 1, 1], [], []>} : vector<8x8xf32>, vector<8x32xf32>, vector<8x32xf32> -> vector<8x32xf32>
    %46 = arith.addf %20, %45 : vector<8x32xf32>
    %47 = vector.extract_strided_slice %19 {offsets = [0, 8], sizes = [8, 8], strides = [1, 1]} : vector<8x32xf32> to vector<8x8xf32>
    %48 = vector.extract_strided_slice %16 {offsets = [0, 8], sizes = [10, 8], strides = [1, 1]} : vector<10x32xf32> to vector<10x8xf32>
    %49 = vector.extract_strided_slice %17 {offsets = [0, 8], sizes = [10, 8], strides = [1, 1]} : vector<10x32xf32> to vector<10x8xf32>
    %50 = tpu.transpose %48, [1, 0] : vector<10x8xf32> -> vector<8x10xf32>
    %cst_32 = arith.constant dense<0.000000e+00> : vector<8x10xf32>
    %51 = tpu.matmul %47, %50, %cst_32 {dimension_numbers = #tpu.dot_dimension_numbers<[1], [0], [0], [1], [0, 0, 1, 1], [], []>} : vector<8x8xf32>, vector<8x10xf32>, vector<8x10xf32> -> vector<8x10xf32>
    %cst_33 = arith.constant 0.000000e+00 : f32
    %52 = vector.broadcast %cst_33 : f32 to vector<8x10xf32>
    %53 = arith.cmpf ogt, %5, %52 : vector<8x10xf32>
    %cst_34 = arith.constant -1.000000e+09 : f32
    %54 = vector.broadcast %cst_34 : f32 to vector<8x10xf32>
    %55 = arith.select %53, %51, %54 : vector<8x10xi1>, vector<8x10xf32>
    %cst_35 = arith.constant dense<0xFF800000> : vector<8xf32>
    %56 = vector.multi_reduction <maximumf>, %55, %cst_35 [1] : vector<8x10xf32> to vector<8xf32>
    %57 = vector.shape_cast %56 : vector<8xf32> to vector<8x1xf32>
    %58 = vector.broadcast %57 : vector<8x1xf32> to vector<8x10xf32>
    %59 = arith.subf %55, %58 : vector<8x10xf32>
    %60 = math.exp %59 : vector<8x10xf32>
    %cst_36 = arith.constant dense<0.000000e+00> : vector<8xf32>
    %61 = vector.multi_reduction <add>, %60, %cst_36 [1] : vector<8x10xf32> to vector<8xf32>
    %62 = vector.shape_cast %61 : vector<8xf32> to vector<8x1xf32>
    %63 = tpu.reciprocal %62 {approx = true} : vector<8x1xf32> -> vector<8x1xf32>
    %64 = vector.broadcast %63 : vector<8x1xf32> to vector<8x10xf32>
    %65 = arith.mulf %60, %64 : vector<8x10xf32>
    %c0_37 = arith.constant 0 : index
    %c1 = arith.constant 1 : index
    %c0_38 = arith.constant 0 : index
    %c0_39 = arith.constant 0 : index
    %66 = vector.load %arg13[%c0_37, %c1, %c0_38, %c0_39] : memref<1x4x8x10xf32, #tpu.memory_space<vmem>>, vector<1x1x8x10xf32>
    %67 = vector.shape_cast %66 : vector<1x1x8x10xf32> to vector<8x10xf32>
    %68 = vector.shape_cast %65 : vector<8x10xf32> to vector<1x1x8x10xf32>
    tpu.vector_store %arg13[%c0_37, %c1, %c0_38, %c0_39], %68 {strides = array<i32>} : memref<1x4x8x10xf32, #tpu.memory_space<vmem>>, vector<1x1x8x10xf32>,
    %cst_40 = arith.constant dense<0.000000e+00> : vector<8x8xf32>
    %69 = tpu.matmul %65, %49, %cst_40 {dimension_numbers = #tpu.dot_dimension_numbers<[1], [0], [0], [1], [0, 0, 1, 1], [], []>} : vector<8x10xf32>, vector<10x8xf32>, vector<8x8xf32> -> vector<8x8xf32>
    %c8 = arith.constant 8 : index
    %c0_41 = arith.constant 0 : index
    %70 = vector.load %arg8[%c8, %c0_41] : memref<32x32xf32, #tpu.memory_space<vmem>>, vector<8x32xf32>
    %cst_42 = arith.constant dense<0.000000e+00> : vector<8x32xf32>
    %71 = tpu.matmul %69, %70, %cst_42 {dimension_numbers = #tpu.dot_dimension_numbers<[1], [0], [0], [1], [0, 0, 1, 1], [], []>} : vector<8x8xf32>, vector<8x32xf32>, vector<8x32xf32> -> vector<8x32xf32>
    %72 = arith.addf %46, %71 : vector<8x32xf32>
    %73 = vector.extract_strided_slice %19 {offsets = [0, 16], sizes = [8, 8], strides = [1, 1]} : vector<8x32xf32> to vector<8x8xf32>
    %74 = vector.extract_strided_slice %16 {offsets = [0, 16], sizes = [10, 8], strides = [1, 1]} : vector<10x32xf32> to vector<10x8xf32>
    %75 = vector.extract_strided_slice %17 {offsets = [0, 16], sizes = [10, 8], strides = [1, 1]} : vector<10x32xf32> to vector<10x8xf32>
    %76 = tpu.transpose %74, [1, 0] : vector<10x8xf32> -> vector<8x10xf32>
    %cst_43 = arith.constant dense<0.000000e+00> : vector<8x10xf32>
    %77 = tpu.matmul %73, %76, %cst_43 {dimension_numbers = #tpu.dot_dimension_numbers<[1], [0], [0], [1], [0, 0, 1, 1], [], []>} : vector<8x8xf32>, vector<8x10xf32>, vector<8x10xf32> -> vector<8x10xf32>
    %cst_44 = arith.constant 0.000000e+00 : f32
    %78 = vector.broadcast %cst_44 : f32 to vector<8x10xf32>
    %79 = arith.cmpf ogt, %5, %78 : vector<8x10xf32>
    %cst_45 = arith.constant -1.000000e+09 : f32
    %80 = vector.broadcast %cst_45 : f32 to vector<8x10xf32>
    %81 = arith.select %79, %77, %80 : vector<8x10xi1>, vector<8x10xf32>
    %cst_46 = arith.constant dense<0xFF800000> : vector<8xf32>
    %82 = vector.multi_reduction <maximumf>, %81, %cst_46 [1] : vector<8x10xf32> to vector<8xf32>
    %83 = vector.shape_cast %82 : vector<8xf32> to vector<8x1xf32>
    %84 = vector.broadcast %83 : vector<8x1xf32> to vector<8x10xf32>
    %85 = arith.subf %81, %84 : vector<8x10xf32>
    %86 = math.exp %85 : vector<8x10xf32>
    %cst_47 = arith.constant dense<0.000000e+00> : vector<8xf32>
    %87 = vector.multi_reduction <add>, %86, %cst_47 [1] : vector<8x10xf32> to vector<8xf32>
    %88 = vector.shape_cast %87 : vector<8xf32> to vector<8x1xf32>
    %89 = tpu.reciprocal %88 {approx = true} : vector<8x1xf32> -> vector<8x1xf32>
    %90 = vector.broadcast %89 : vector<8x1xf32> to vector<8x10xf32>
    %91 = arith.mulf %86, %90 : vector<8x10xf32>
    %c0_48 = arith.constant 0 : index
    %c2 = arith.constant 2 : index
    %c0_49 = arith.constant 0 : index
    %c0_50 = arith.constant 0 : index
    %92 = vector.load %arg13[%c0_48, %c2, %c0_49, %c0_50] : memref<1x4x8x10xf32, #tpu.memory_space<vmem>>, vector<1x1x8x10xf32>
    %93 = vector.shape_cast %92 : vector<1x1x8x10xf32> to vector<8x10xf32>
    %94 = vector.shape_cast %91 : vector<8x10xf32> to vector<1x1x8x10xf32>
    tpu.vector_store %arg13[%c0_48, %c2, %c0_49, %c0_50], %94 {strides = array<i32>} : memref<1x4x8x10xf32, #tpu.memory_space<vmem>>, vector<1x1x8x10xf32>,
    %cst_51 = arith.constant dense<0.000000e+00> : vector<8x8xf32>
    %95 = tpu.matmul %91, %75, %cst_51 {dimension_numbers = #tpu.dot_dimension_numbers<[1], [0], [0], [1], [0, 0, 1, 1], [], []>} : vector<8x10xf32>, vector<10x8xf32>, vector<8x8xf32> -> vector<8x8xf32>
    %c16 = arith.constant 16 : index
    %c0_52 = arith.constant 0 : index
    %96 = vector.load %arg8[%c16, %c0_52] : memref<32x32xf32, #tpu.memory_space<vmem>>, vector<8x32xf32>
    %cst_53 = arith.constant dense<0.000000e+00> : vector<8x32xf32>
    %97 = tpu.matmul %95, %96, %cst_53 {dimension_numbers = #tpu.dot_dimension_numbers<[1], [0], [0], [1], [0, 0, 1, 1], [], []>} : vector<8x8xf32>, vector<8x32xf32>, vector<8x32xf32> -> vector<8x32xf32>
    %98 = arith.addf %72, %97 : vector<8x32xf32>
    %99 = vector.extract_strided_slice %19 {offsets = [0, 24], sizes = [8, 8], strides = [1, 1]} : vector<8x32xf32> to vector<8x8xf32>
    %100 = vector.extract_strided_slice %16 {offsets = [0, 24], sizes = [10, 8], strides = [1, 1]} : vector<10x32xf32> to vector<10x8xf32>
    %101 = vector.extract_strided_slice %17 {offsets = [0, 24], sizes = [10, 8], strides = [1, 1]} : vector<10x32xf32> to vector<10x8xf32>
    %102 = tpu.transpose %100, [1, 0] : vector<10x8xf32> -> vector<8x10xf32>
    %cst_54 = arith.constant dense<0.000000e+00> : vector<8x10xf32>
    %103 = tpu.matmul %99, %102, %cst_54 {dimension_numbers = #tpu.dot_dimension_numbers<[1], [0], [0], [1], [0, 0, 1, 1], [], []>} : vector<8x8xf32>, vector<8x10xf32>, vector<8x10xf32> -> vector<8x10xf32>
    %cst_55 = arith.constant 0.000000e+00 : f32
    %104 = vector.broadcast %cst_55 : f32 to vector<8x10xf32>
    %105 = arith.cmpf ogt, %5, %104 : vector<8x10xf32>
    %cst_56 = arith.constant -1.000000e+09 : f32
    %106 = vector.broadcast %cst_56 : f32 to vector<8x10xf32>
    %107 = arith.select %105, %103, %106 : vector<8x10xi1>, vector<8x10xf32>
    %cst_57 = arith.constant dense<0xFF800000> : vector<8xf32>
    %108 = vector.multi_reduction <maximumf>, %107, %cst_57 [1] : vector<8x10xf32> to vector<8xf32>
    %109 = vector.shape_cast %108 : vector<8xf32> to vector<8x1xf32>
    %110 = vector.broadcast %109 : vector<8x1xf32> to vector<8x10xf32>
    %111 = arith.subf %107, %110 : vector<8x10xf32>
    %112 = math.exp %111 : vector<8x10xf32>
    %cst_58 = arith.constant dense<0.000000e+00> : vector<8xf32>
    %113 = vector.multi_reduction <add>, %112, %cst_58 [1] : vector<8x10xf32> to vector<8xf32>
    %114 = vector.shape_cast %113 : vector<8xf32> to vector<8x1xf32>
    %115 = tpu.reciprocal %114 {approx = true} : vector<8x1xf32> -> vector<8x1xf32>
    %116 = vector.broadcast %115 : vector<8x1xf32> to vector<8x10xf32>
    %117 = arith.mulf %112, %116 : vector<8x10xf32>
    %c0_59 = arith.constant 0 : index
    %c3 = arith.constant 3 : index
    %c0_60 = arith.constant 0 : index
    %c0_61 = arith.constant 0 : index
    %118 = vector.load %arg13[%c0_59, %c3, %c0_60, %c0_61] : memref<1x4x8x10xf32, #tpu.memory_space<vmem>>, vector<1x1x8x10xf32>
    %119 = vector.shape_cast %118 : vector<1x1x8x10xf32> to vector<8x10xf32>
    %120 = vector.shape_cast %117 : vector<8x10xf32> to vector<1x1x8x10xf32>
    tpu.vector_store %arg13[%c0_59, %c3, %c0_60, %c0_61], %120 {strides = array<i32>} : memref<1x4x8x10xf32, #tpu.memory_space<vmem>>, vector<1x1x8x10xf32>,
    %cst_62 = arith.constant dense<0.000000e+00> : vector<8x8xf32>
    %121 = tpu.matmul %117, %101, %cst_62 {dimension_numbers = #tpu.dot_dimension_numbers<[1], [0], [0], [1], [0, 0, 1, 1], [], []>} : vector<8x10xf32>, vector<10x8xf32>, vector<8x8xf32> -> vector<8x8xf32>
    %c24 = arith.constant 24 : index
    %c0_63 = arith.constant 0 : index
    %122 = vector.load %arg8[%c24, %c0_63] : memref<32x32xf32, #tpu.memory_space<vmem>>, vector<8x32xf32>
    %cst_64 = arith.constant dense<0.000000e+00> : vector<8x32xf32>
    %123 = tpu.matmul %121, %122, %cst_64 {dimension_numbers = #tpu.dot_dimension_numbers<[1], [0], [0], [1], [0, 0, 1, 1], [], []>} : vector<8x8xf32>, vector<8x32xf32>, vector<8x32xf32> -> vector<8x32xf32>
    %124 = arith.addf %98, %123 : vector<8x32xf32>
    %c0_65 = arith.constant 0 : index
    %c0_66 = arith.constant 0 : index
    %125 = vector.load %arg9[%c0_65, %c0_66] : memref<1x32xf32, #tpu.memory_space<vmem>>, vector<1x32xf32>
    %126 = vector.broadcast %125 : vector<1x32xf32> to vector<8x32xf32>
    %127 = arith.addf %124, %126 : vector<8x32xf32>
    %128 = arith.addf %1, %127 : vector<8x32xf32>
    %cst_67 = arith.constant dense<0.000000e+00> : vector<8xf32>
    %129 = vector.multi_reduction <add>, %128, %cst_67 [1] : vector<8x32xf32> to vector<8xf32>
    %130 = vector.shape_cast %129 : vector<8xf32> to vector<8x1xf32>
    %cst_68 = arith.constant 3.200000e+01 : f32
    %131 = vector.broadcast %cst_68 : f32 to vector<8x1xf32>
    %132 = arith.divf %130, %131 : vector<8x1xf32>
    %133 = vector.broadcast %132 : vector<8x1xf32> to vector<8x32xf32>
    %134 = arith.subf %128, %133 : vector<8x32xf32>
    %135 = arith.mulf %134, %134 : vector<8x32xf32>
    %cst_69 = arith.constant dense<0.000000e+00> : vector<8xf32>
    %136 = vector.multi_reduction <add>, %135, %cst_69 [1] : vector<8x32xf32> to vector<8xf32>
    %137 = vector.shape_cast %136 : vector<8xf32> to vector<8x1xf32>
    %cst_70 = arith.constant 3.200000e+01 : f32
    %138 = vector.broadcast %cst_70 : f32 to vector<8x1xf32>
    %139 = arith.divf %137, %138 : vector<8x1xf32>
    %140 = vector.broadcast %132 : vector<8x1xf32> to vector<8x32xf32>
    %141 = arith.subf %128, %140 : vector<8x32xf32>
    %cst_71 = arith.constant 9.99999974E-6 : f32
    %142 = vector.broadcast %cst_71 : f32 to vector<8x1xf32>
    %143 = arith.addf %139, %142 : vector<8x1xf32>
    %144 = math.rsqrt %143 : vector<8x1xf32>
    %145 = vector.broadcast %144 : vector<8x1xf32> to vector<8x32xf32>
    %146 = arith.mulf %141, %145 : vector<8x32xf32>
    %c0_72 = arith.constant 0 : index
    %c0_73 = arith.constant 0 : index
    %147 = vector.load %arg10[%c0_72, %c0_73] : memref<1x32xf32, #tpu.memory_space<vmem>>, vector<1x32xf32>
    %148 = vector.broadcast %147 : vector<1x32xf32> to vector<8x32xf32>
    %149 = arith.mulf %146, %148 : vector<8x32xf32>
    %c0_74 = arith.constant 0 : index
    %c0_75 = arith.constant 0 : index
    %150 = vector.load %arg11[%c0_74, %c0_75] : memref<1x32xf32, #tpu.memory_space<vmem>>, vector<1x32xf32>
    %151 = vector.broadcast %150 : vector<1x32xf32> to vector<8x32xf32>
    %152 = arith.addf %149, %151 : vector<8x32xf32>
    %c0_76 = arith.constant 0 : index
    %c0_77 = arith.constant 0 : index
    %c0_78 = arith.constant 0 : index
    %153 = vector.load %arg12[%c0_76, %c0_77, %c0_78] : memref<1x8x32xf32, #tpu.memory_space<vmem>>, vector<1x8x32xf32>
    %154 = vector.shape_cast %153 : vector<1x8x32xf32> to vector<8x32xf32>
    %155 = vector.shape_cast %152 : vector<8x32xf32> to vector<1x8x32xf32>
    tpu.vector_store %arg12[%c0_76, %c0_77, %c0_78], %155 {strides = array<i32>} : memref<1x8x32xf32, #tpu.memory_space<vmem>>, vector<1x8x32xf32>,
    return
  }
  func.func @transform_0(%arg0: i32) -> (i32, i32, i32) {
    %c0_i32 = arith.constant 0 : i32
    %c0_i32_0 = arith.constant 0 : i32
    %c0_i32_1 = arith.constant 0 : i32
    return %arg0, %c0_i32, %c0_i32_0 : i32, i32, i32
  }
  func.func @transform_1(%arg0: i32) -> (i32, i32, i32) {
    %c0_i32 = arith.constant 0 : i32
    %c0_i32_0 = arith.constant 0 : i32
    %c0_i32_1 = arith.constant 0 : i32
    return %arg0, %c0_i32, %c0_i32_0 : i32, i32, i32
  }
  func.func @transform_2(%arg0: i32) -> (i32, i32, i32) {
    %c0_i32 = arith.constant 0 : i32
    %c0_i32_0 = arith.constant 0 : i32
    %c0_i32_1 = arith.constant 0 : i32
    return %arg0, %c0_i32, %c0_i32_0 : i32, i32, i32
  }
  func.func @transform_3(%arg0: i32) -> (i32, i32) {
    %c0_i32 = arith.constant 0 : i32
    %c0_i32_0 = arith.constant 0 : i32
    %c0_i32_1 = arith.constant 0 : i32
    return %c0_i32, %c0_i32_0 : i32, i32
  }
  func.func @transform_4(%arg0: i32) -> (i32, i32) {
    %c0_i32 = arith.constant 0 : i32
    %c0_i32_0 = arith.constant 0 : i32
    %c0_i32_1 = arith.constant 0 : i32
    return %c0_i32, %c0_i32_0 : i32, i32
  }
  func.func @transform_5(%arg0: i32) -> (i32, i32) {
    %c0_i32 = arith.constant 0 : i32
    %c0_i32_0 = arith.constant 0 : i32
    %c0_i32_1 = arith.constant 0 : i32
    return %c0_i32, %c0_i32_0 : i32, i32
  }
  func.func @transform_6(%arg0: i32) -> (i32, i32) {
    %c0_i32 = arith.constant 0 : i32
    %c0_i32_0 = arith.constant 0 : i32
    %c0_i32_1 = arith.constant 0 : i32
    return %c0_i32, %c0_i32_0 : i32, i32
  }
  func.func @transform_7(%arg0: i32) -> (i32, i32) {
    %c0_i32 = arith.constant 0 : i32
    %c0_i32_0 = arith.constant 0 : i32
    %c0_i32_1 = arith.constant 0 : i32
    return %c0_i32, %c0_i32_0 : i32, i32
  }
  func.func @transform_8(%arg0: i32) -> (i32, i32) {
    %c0_i32 = arith.constant 0 : i32
    %c0_i32_0 = arith.constant 0 : i32
    %c0_i32_1 = arith.constant 0 : i32
    return %c0_i32, %c0_i32_0 : i32, i32
  }
  func.func @transform_9(%arg0: i32) -> (i32, i32) {
    %c0_i32 = arith.constant 0 : i32
    %c0_i32_0 = arith.constant 0 : i32
    %c0_i32_1 = arith.constant 0 : i32
    return %c0_i32, %c0_i32_0 : i32, i32
  }
  func.func @transform_10(%arg0: i32) -> (i32, i32) {
    %c0_i32 = arith.constant 0 : i32
    %c0_i32_0 = arith.constant 0 : i32
    %c0_i32_1 = arith.constant 0 : i32
    return %c0_i32, %c0_i32_0 : i32, i32
  }
  func.func @transform_11(%arg0: i32) -> (i32, i32, i32) {
    %c0_i32 = arith.constant 0 : i32
    %c0_i32_0 = arith.constant 0 : i32
    %c0_i32_1 = arith.constant 0 : i32
    return %arg0, %c0_i32, %c0_i32_0 : i32, i32, i32
  }
  func.func @transform_12(%arg0: i32) -> (i32, i32, i32, i32) {
    %c0_i32 = arith.constant 0 : i32
    %c0_i32_0 = arith.constant 0 : i32
    %c0_i32_1 = arith.constant 0 : i32
    %c0_i32_2 = arith.constant 0 : i32
    return %arg0, %c0_i32, %c0_i32_0, %c0_i32_1 : i32, i32, i32, i32
  }
}

module attributes {stable_mosaic.version = 11 : i64} {
  func.func @_ffn_ln_kernel(%arg0: i32, %arg1: memref<16x32xf32, #tpu.memory_space<vmem>>, %arg2: memref<32x64xf32, #tpu.memory_space<vmem>>, %arg3: memref<1x64xf32, #tpu.memory_space<vmem>>, %arg4: memref<64x32xf32, #tpu.memory_space<vmem>>, %arg5: memref<1x32xf32, #tpu.memory_space<vmem>>, %arg6: memref<1x32xf32, #tpu.memory_space<vmem>>, %arg7: memref<1x32xf32, #tpu.memory_space<vmem>>, %arg8: memref<16x32xf32, #tpu.memory_space<vmem>>) attributes {dimension_semantics = [#tpu.dimension_semantics<parallel>], iteration_bounds = array<i64: 1>, scalar_prefetch = 0 : i64, scratch_operands = 0 : i64, tpu.core_type = #tpu.core_type<tc>, window_params = [{transform_indices = @transform_0, window_bounds = array<i64: 16, 32>}, {pipeline_mode = #tpu.pipeline_mode<synchronous>, transform_indices = @transform_1, window_bounds = array<i64: 32, 64>}, {pipeline_mode = #tpu.pipeline_mode<synchronous>, transform_indices = @transform_2, window_bounds = array<i64: 1, 64>}, {pipeline_mode = #tpu.pipeline_mode<synchronous>, transform_indices = @transform_3, window_bounds = array<i64: 64, 32>}, {pipeline_mode = #tpu.pipeline_mode<synchronous>, transform_indices = @transform_4, window_bounds = array<i64: 1, 32>}, {pipeline_mode = #tpu.pipeline_mode<synchronous>, transform_indices = @transform_5, window_bounds = array<i64: 1, 32>}, {pipeline_mode = #tpu.pipeline_mode<synchronous>, transform_indices = @transform_6, window_bounds = array<i64: 1, 32>}, {transform_indices = @transform_7, window_bounds = array<i64: 16, 32>}]} {
    %c0 = arith.constant 0 : index
    %c0_0 = arith.constant 0 : index
    %0 = vector.load %arg1[%c0, %c0_0] : memref<16x32xf32, #tpu.memory_space<vmem>>, vector<16x32xf32>
    %c0_1 = arith.constant 0 : index
    %c0_2 = arith.constant 0 : index
    %1 = vector.load %arg2[%c0_1, %c0_2] : memref<32x64xf32, #tpu.memory_space<vmem>>, vector<32x64xf32>
    %cst = arith.constant dense<0.000000e+00> : vector<16x64xf32>
    %2 = tpu.matmul %0, %1, %cst {dimension_numbers = #tpu.dot_dimension_numbers<[1], [0], [0], [1], [0, 0, 1, 1], [], []>} : vector<16x32xf32>, vector<32x64xf32>, vector<16x64xf32> -> vector<16x64xf32>
    %c0_3 = arith.constant 0 : index
    %c0_4 = arith.constant 0 : index
    %3 = vector.load %arg3[%c0_3, %c0_4] : memref<1x64xf32, #tpu.memory_space<vmem>>, vector<1x64xf32>
    %4 = vector.broadcast %3 : vector<1x64xf32> to vector<16x64xf32>
    %5 = arith.addf %2, %4 : vector<16x64xf32>
    %cst_5 = arith.constant 0.000000e+00 : f32
    %6 = vector.broadcast %cst_5 : f32 to vector<16x64xf32>
    %7 = arith.maximumf %5, %6 : vector<16x64xf32>
    %c0_6 = arith.constant 0 : index
    %c0_7 = arith.constant 0 : index
    %8 = vector.load %arg4[%c0_6, %c0_7] : memref<64x32xf32, #tpu.memory_space<vmem>>, vector<64x32xf32>
    %cst_8 = arith.constant dense<0.000000e+00> : vector<16x32xf32>
    %9 = tpu.matmul %7, %8, %cst_8 {dimension_numbers = #tpu.dot_dimension_numbers<[1], [0], [0], [1], [0, 0, 1, 1], [], []>} : vector<16x64xf32>, vector<64x32xf32>, vector<16x32xf32> -> vector<16x32xf32>
    %10 = arith.addf %0, %9 : vector<16x32xf32>
    %c0_9 = arith.constant 0 : index
    %c0_10 = arith.constant 0 : index
    %11 = vector.load %arg5[%c0_9, %c0_10] : memref<1x32xf32, #tpu.memory_space<vmem>>, vector<1x32xf32>
    %12 = vector.broadcast %11 : vector<1x32xf32> to vector<16x32xf32>
    %13 = arith.addf %10, %12 : vector<16x32xf32>
    %cst_11 = arith.constant dense<0.000000e+00> : vector<16xf32>
    %14 = vector.multi_reduction <add>, %13, %cst_11 [1] : vector<16x32xf32> to vector<16xf32>
    %15 = vector.shape_cast %14 : vector<16xf32> to vector<16x1xf32>
    %cst_12 = arith.constant 3.200000e+01 : f32
    %16 = vector.broadcast %cst_12 : f32 to vector<16x1xf32>
    %17 = arith.divf %15, %16 : vector<16x1xf32>
    %18 = vector.broadcast %17 : vector<16x1xf32> to vector<16x32xf32>
    %19 = arith.subf %13, %18 : vector<16x32xf32>
    %20 = arith.mulf %19, %19 : vector<16x32xf32>
    %cst_13 = arith.constant dense<0.000000e+00> : vector<16xf32>
    %21 = vector.multi_reduction <add>, %20, %cst_13 [1] : vector<16x32xf32> to vector<16xf32>
    %22 = vector.shape_cast %21 : vector<16xf32> to vector<16x1xf32>
    %cst_14 = arith.constant 3.200000e+01 : f32
    %23 = vector.broadcast %cst_14 : f32 to vector<16x1xf32>
    %24 = arith.divf %22, %23 : vector<16x1xf32>
    %25 = vector.broadcast %17 : vector<16x1xf32> to vector<16x32xf32>
    %26 = arith.subf %13, %25 : vector<16x32xf32>
    %cst_15 = arith.constant 9.99999974E-6 : f32
    %27 = vector.broadcast %cst_15 : f32 to vector<16x1xf32>
    %28 = arith.addf %24, %27 : vector<16x1xf32>
    %29 = math.rsqrt %28 : vector<16x1xf32>
    %30 = vector.broadcast %29 : vector<16x1xf32> to vector<16x32xf32>
    %31 = arith.mulf %26, %30 : vector<16x32xf32>
    %c0_16 = arith.constant 0 : index
    %c0_17 = arith.constant 0 : index
    %32 = vector.load %arg6[%c0_16, %c0_17] : memref<1x32xf32, #tpu.memory_space<vmem>>, vector<1x32xf32>
    %33 = vector.broadcast %32 : vector<1x32xf32> to vector<16x32xf32>
    %34 = arith.mulf %31, %33 : vector<16x32xf32>
    %c0_18 = arith.constant 0 : index
    %c0_19 = arith.constant 0 : index
    %35 = vector.load %arg7[%c0_18, %c0_19] : memref<1x32xf32, #tpu.memory_space<vmem>>, vector<1x32xf32>
    %36 = vector.broadcast %35 : vector<1x32xf32> to vector<16x32xf32>
    %37 = arith.addf %34, %36 : vector<16x32xf32>
    %c0_20 = arith.constant 0 : index
    %c0_21 = arith.constant 0 : index
    %38 = vector.load %arg8[%c0_20, %c0_21] : memref<16x32xf32, #tpu.memory_space<vmem>>, vector<16x32xf32>
    tpu.vector_store %arg8[%c0_20, %c0_21], %37 {strides = array<i32>} : memref<16x32xf32, #tpu.memory_space<vmem>>, vector<16x32xf32>,
    return
  }
  func.func @transform_0(%arg0: i32) -> (i32, i32) {
    %c0_i32 = arith.constant 0 : i32
    %c0_i32_0 = arith.constant 0 : i32
    return %arg0, %c0_i32 : i32, i32
  }
  func.func @transform_1(%arg0: i32) -> (i32, i32) {
    %c0_i32 = arith.constant 0 : i32
    %c0_i32_0 = arith.constant 0 : i32
    %c0_i32_1 = arith.constant 0 : i32
    return %c0_i32, %c0_i32_0 : i32, i32
  }
  func.func @transform_2(%arg0: i32) -> (i32, i32) {
    %c0_i32 = arith.constant 0 : i32
    %c0_i32_0 = arith.constant 0 : i32
    %c0_i32_1 = arith.constant 0 : i32
    return %c0_i32, %c0_i32_0 : i32, i32
  }
  func.func @transform_3(%arg0: i32) -> (i32, i32) {
    %c0_i32 = arith.constant 0 : i32
    %c0_i32_0 = arith.constant 0 : i32
    %c0_i32_1 = arith.constant 0 : i32
    return %c0_i32, %c0_i32_0 : i32, i32
  }
  func.func @transform_4(%arg0: i32) -> (i32, i32) {
    %c0_i32 = arith.constant 0 : i32
    %c0_i32_0 = arith.constant 0 : i32
    %c0_i32_1 = arith.constant 0 : i32
    return %c0_i32, %c0_i32_0 : i32, i32
  }
  func.func @transform_5(%arg0: i32) -> (i32, i32) {
    %c0_i32 = arith.constant 0 : i32
    %c0_i32_0 = arith.constant 0 : i32
    %c0_i32_1 = arith.constant 0 : i32
    return %c0_i32, %c0_i32_0 : i32, i32
  }
  func.func @transform_6(%arg0: i32) -> (i32, i32) {
    %c0_i32 = arith.constant 0 : i32
    %c0_i32_0 = arith.constant 0 : i32
    %c0_i32_1 = arith.constant 0 : i32
    return %c0_i32, %c0_i32_0 : i32, i32
  }
  func.func @transform_7(%arg0: i32) -> (i32, i32) {
    %c0_i32 = arith.constant 0 : i32
    %c0_i32_0 = arith.constant 0 : i32
    return %arg0, %c0_i32 : i32, i32
  }
}

</mosaic_0001>

<llo_original>
// kernel: decoder_forward.8
$region0: #{decoder_forward.8}
  #allocation0 [shape = 'u32[]', space=smem, size = 0x4, offset = 0x4, fixed_abs, tag = 'smem constant byte address 0x4 - core index']
  #allocation1 [shape = 'u32[144,128]{1,0:T(1,128)}', space=vmem, size = 0x12000, scoped, tag = 'internal scratch']
  %s0 = inlined_call_operand.vmem [shape: f32[16,32], index: 0, kind: input, shape index: {}]
  %s1 = inlined_call_operand.vmem [shape: f32[32,64], index: 1, kind: input, shape index: {}]
  %s2 = inlined_call_operand.vmem [shape: f32[1,64], index: 2, kind: input, shape index: {}]
  %s3 = inlined_call_operand.vmem [shape: f32[64,32], index: 3, kind: input, shape index: {}]
  %s4 = inlined_call_operand.vmem [shape: f32[1,32], index: 4, kind: input, shape index: {}]
  %s5 = inlined_call_operand.vmem [shape: f32[1,32], index: 5, kind: input, shape index: {}]
  %s6 = inlined_call_operand.vmem [shape: f32[1,32], index: 6, kind: input, shape index: {}]
  %s7 = inlined_call_operand.vmem [shape: f32[16,32], index: 7, kind: output, shape index: {}]
  %s8 = sld [smem:[#allocation0]]
  $region38: #{decoder_forward.8} parent=0
    _
  %s10 = ssub.s32 1, %s8
  %s11 = scalar_select 0, %s10, %s8
  // Predicated region
  $region2: #{decoder_forward.8} parent=0 // pred_check
    _
  $region3: #{decoder_forward.8} parent=0 // pred_check_branch
    %13 = sbr.rel (0) target = $region5
  $region4: #{decoder_forward.8} parent=0 // pred_region
    _
  $region5: #{decoder_forward.8} parent=0 // pred_fallthru
    _
  // Predicated region
  $region6: #{decoder_forward.8} parent=0 // pred_check
    _
  $region7: #{decoder_forward.8} parent=0 // pred_check_branch
    %15 = sbr.rel (0) target = $region9
  $region8: #{decoder_forward.8} parent=0 // pred_region
    _
  $region9: #{decoder_forward.8} parent=0 // pred_fallthru
    _
  // Predicated region
  $region10: #{decoder_forward.8} parent=0 // pred_check
    _
  $region11: #{decoder_forward.8} parent=0 // pred_check_branch
    %17 = sbr.rel (0) target = $region13
  $region12: #{decoder_forward.8} parent=0 // pred_region
    _
  $region13: #{decoder_forward.8} parent=0 // pred_fallthru
    _
  // Predicated region
  $region14: #{decoder_forward.8} parent=0 // pred_check
    _
  $region15: #{decoder_forward.8} parent=0 // pred_check_branch
    %19 = sbr.rel (0) target = $region17
  $region16: #{decoder_forward.8} parent=0 // pred_region
    _
  $region17: #{decoder_forward.8} parent=0 // pred_fallthru
    _
  // Predicated region
  $region18: #{decoder_forward.8} parent=0 // pred_check
    _
  $region19: #{decoder_forward.8} parent=0 // pred_check_branch
    %21 = sbr.rel (0) target = $region21
  $region20: #{decoder_forward.8} parent=0 // pred_region
    _
  $region21: #{decoder_forward.8} parent=0 // pred_fallthru
    _
  // Predicated region
  $region22: #{decoder_forward.8} parent=0 // pred_check
    _
  $region23: #{decoder_forward.8} parent=0 // pred_check_branch
    %23 = sbr.rel (0) target = $region25
  $region24: #{decoder_forward.8} parent=0 // pred_region
    _
  $region25: #{decoder_forward.8} parent=0 // pred_fallthru
    _
  // Predicated region
  $region26: #{decoder_forward.8} parent=0 // pred_check
    _
  $region27: #{decoder_forward.8} parent=0 // pred_check_branch
    %25 = sbr.rel (0) target = $region29
  $region28: #{decoder_forward.8} parent=0 // pred_region
    _
  $region29: #{decoder_forward.8} parent=0 // pred_fallthru
    _
  %v26 = vld [vmem:[%s0] sm:$0xff]
  %v27 = vld [vmem:[%s0 + $0x8] sm:$0xff]
  %v28 = vld [vmem:[%s1] sm:$0xff]
  %v29 = vld [vmem:[%s1 + $0x8] sm:$0xff]
  %v30 = vld [vmem:[%s1 + $0x10] sm:$0xff]
  %v31 = vld [vmem:[%s1 + $0x18] sm:$0xff]
  %v32 = vld [vmem:[%s2] sm:$0x1]
  %v34 = vlaneseq
  %v35 = vshrl.u32 %v34, 7
  %v36 = vsub.s32 0, %v35
  %v37 = vrot.slane %v32, %v36
  %vm39 = vcmask 261120
  %v41 = vsel %vm39, %v26, 0
  %v44 = vsel %vm39, %v27, 0
  %46 = vmatprep.subr.mxu0 0.0
  %47 = vmatpush1.msra.mxu0 %v28
  %48 = vmatprep.subr.mxu0 0.0
  %49 = vmatpush1.msra.mxu0 %v29
  %50 = vmatprep.subr.mxu0 0.0
  %51 = vmatpush1.msra.mxu0 %v30
  %52 = vmatprep.subr.mxu0 0.0
  %53 = vmatpush1.msra.mxu0 %v31
  %54 = vmatprep.subr.mxu0 0.0
  %55 = vmatpush1.msra.mxu0 0.0
  %56 = vmatprep.subr.mxu0 0.0
  %57 = vmatpush1.msra.mxu0 0.0
  %58 = vmatprep.subr.mxu0 0.0
  %59 = vmatpush1.msra.mxu0 0.0
  %60 = vmatprep.subr.mxu0 0.0
  %61 = vmatpush1.msra.mxu0 0.0
  %62 = vmatprep.subr.mxu0 0.0
  %63 = vmatpush1.msra.mxu0 0.0
  %64 = vmatprep.subr.mxu0 0.0
  %65 = vmatpush1.msra.mxu0 0.0
  %66 = vmatprep.subr.mxu0 0.0
  %67 = vmatpush1.msra.mxu0 0.0
  %68 = vmatprep.subr.mxu0 0.0
  %69 = vmatpush1.msra.mxu0 0.0
  %70 = vmatprep.subr.mxu0 0.0
  %71 = vmatpush1.msra.mxu0 0.0
  %72 = vmatprep.subr.mxu0 0.0
  %73 = vmatpush1.msra.mxu0 0.0
  %74 = vmatprep.subr.mxu0 0.0
  %75 = vmatpush1.msra.mxu0 0.0
  %76 = vmatprep.subr.mxu0 0.0
  %77 = vmatpush1.msra.mxu0 0.0
  %78 = vmatprep.subr.mxu0 0.0
  %79 = vmatpush1.msra.mxu0 0.0
  %80 = vmatprep.subr.mxu0 0.0
  %81 = vmatpush1.msra.mxu0 0.0
  %82 = vmatprep.subr.mxu0 0.0
  %83 = vmatpush1.msra.mxu0 0.0
  %84 = vmatprep.subr.mxu0 0.0
  %85 = vmatpush1.msra.mxu0 0.0
  %86 = vmatprep.subr.mxu0 0.0
  %87 = vmatpush1.msra.mxu0 0.0
  %88 = vmatprep.subr.mxu0 0.0
  %89 = vmatpush1.msra.mxu0 0.0
  %90 = vmatprep.subr.mxu0 0.0
  %91 = vmatpush1.msra.mxu0 0.0
  %92 = vmatprep.subr.mxu0 0.0
  %93 = vmatpush1.msra.mxu0 0.0
  %94 = vmatprep.subr.mxu0 0.0
  %95 = vmatpush1.msra.mxu0 0.0
  %96 = vmatprep.subr.mxu0 0.0
  %97 = vmatpush1.msra.mxu0 0.0
  %98 = vmatprep.subr.mxu0 0.0
  %99 = vmatpush1.msra.mxu0 0.0
  %100 = vmatprep.subr.mxu0 0.0
  %101 = vmatpush1.msra.mxu0 0.0
  %102 = vmatprep.subr.mxu0 0.0
  %103 = vmatpush1.msra.mxu0 0.0
  %104 = vmatprep.subr.mxu0 0.0
  %105 = vmatpush1.msra.mxu0 0.0
  %106 = vmatprep.subr.mxu0 0.0
  %107 = vmatpush1.msra.mxu0 0.0
  %108 = vmatprep.subr.mxu0 0.0
  %109 = vmatpush1.msra.mxu0 0.0
  %110 = vmatprep.mubr.f32.mxu0 0.0
  %111 = vmatmul.mubr.f32.gmra.mrb[0].mxu0 %v41
  %v112 = vpop.f32.mrb[0].mxu0
  %v113 = vadd.f32 %v37, %v112
  %v114 = vpop.f32.mrb[0].mxu0
  %115 = vmatprep.mubr.f32.mxu0 0.0
  %116 = vmatmul.mubr.f32.gmra.mrb[0].mxu0 %v44
  %v117 = vpop.f32.mrb[0].mxu0
  %v118 = vadd.f32 %v37, %v117
  %v119 = vpop.f32.mrb[0].mxu0
  %120 = vdwg.mxu0
  %v121 = vmax.f32 %v113, 0.0
  %v122 = vmax.f32 %v118, 0.0
  %v123 = vld [vmem:[%s3] sm:$0xff]
  %v124 = vld [vmem:[%s3 + $0x8] sm:$0xff]
  %v125 = vld [vmem:[%s3 + $0x10] sm:$0xff]
  %v126 = vld [vmem:[%s3 + $0x18] sm:$0xff]
  %v127 = vld [vmem:[%s3 + $0x20] sm:$0xff]
  %v128 = vld [vmem:[%s3 + $0x28] sm:$0xff]
  %v129 = vld [vmem:[%s3 + $0x30] sm:$0xff]
  %v130 = vld [vmem:[%s3 + $0x38] sm:$0xff]
  %vm131 = vcmask 523264
  %v133 = vsel %vm131, %v121, 0
  %v136 = vsel %vm131, %v122, 0
  %138 = vmatprep.subr.mxu0 0.0
  %139 = vmatpush1.msra.mxu0 %v123
  %140 = vmatprep.subr.mxu0 0.0
  %141 = vmatpush1.msra.mxu0 %v124
  %142 = vmatprep.subr.mxu0 0.0
  %143 = vmatpush1.msra.mxu0 %v125
  %144 = vmatprep.subr.mxu0 0.0
  %145 = vmatpush1.msra.mxu0 %v126
  %146 = vmatprep.subr.mxu0 0.0
  %147 = vmatpush1.msra.mxu0 %v127
  %148 = vmatprep.subr.mxu0 0.0
  %149 = vmatpush1.msra.mxu0 %v128
  %150 = vmatprep.subr.mxu0 0.0
  %151 = vmatpush1.msra.mxu0 %v129
  %152 = vmatprep.subr.mxu0 0.0
  %153 = vmatpush1.msra.mxu0 %v130
  %154 = vmatprep.subr.mxu0 0.0
  %155 = vmatpush1.msra.mxu0 0.0
  %156 = vmatprep.subr.mxu0 0.0
  %157 = vmatpush1.msra.mxu0 0.0
  %158 = vmatprep.subr.mxu0 0.0
  %159 = vmatpush1.msra.mxu0 0.0
  %160 = vmatprep.subr.mxu0 0.0
  %161 = vmatpush1.msra.mxu0 0.0
  %162 = vmatprep.subr.mxu0 0.0
  %163 = vmatpush1.msra.mxu0 0.0
  %164 = vmatprep.subr.mxu0 0.0
  %165 = vmatpush1.msra.mxu0 0.0
  %166 = vmatprep.subr.mxu0 0.0
  %167 = vmatpush1.msra.mxu0 0.0
  %168 = vmatprep.subr.mxu0 0.0
  %169 = vmatpush1.msra.mxu0 0.0
  %170 = vmatprep.subr.mxu0 0.0
  %171 = vmatpush1.msra.mxu0 0.0
  %172 = vmatprep.subr.mxu0 0.0
  %173 = vmatpush1.msra.mxu0 0.0
  %174 = vmatprep.subr.mxu0 0.0
  %175 = vmatpush1.msra.mxu0 0.0
  %176 = vmatprep.subr.mxu0 0.0
  %177 = vmatpush1.msra.mxu0 0.0
  %178 = vmatprep.subr.mxu0 0.0
  %179 = vmatpush1.msra.mxu0 0.0
  %180 = vmatprep.subr.mxu0 0.0
  %181 = vmatpush1.msra.mxu0 0.0
  %182 = vmatprep.subr.mxu0 0.0
  %183 = vmatpush1.msra.mxu0 0.0
  %184 = vmatprep.subr.mxu0 0.0
  %185 = vmatpush1.msra.mxu0 0.0
  %186 = vmatprep.subr.mxu0 0.0
  %187 = vmatpush1.msra.mxu0 0.0
  %188 = vmatprep.subr.mxu0 0.0
  %189 = vmatpush1.msra.mxu0 0.0
  %190 = vmatprep.subr.mxu0 0.0
  %191 = vmatpush1.msra.mxu0 0.0
  %192 = vmatprep.subr.mxu0 0.0
  %193 = vmatpush1.msra.mxu0 0.0
  %194 = vmatprep.subr.mxu0 0.0
  %195 = vmatpush1.msra.mxu0 0.0
  %196 = vmatprep.subr.mxu0 0.0
  %197 = vmatpush1.msra.mxu0 0.0
  %198 = vmatprep.subr.mxu0 0.0
  %199 = vmatpush1.msra.mxu0 0.0
  %200 = vmatprep.subr.mxu0 0.0
  %201 = vmatpush1.msra.mxu0 0.0
  %202 = vmatprep.mubr.f32.mxu0 0.0
  %203 = vmatmul.mubr.f32.gmra.mrb[0].mxu0 %v133
  %v204 = vpop.f32.mrb[0].mxu0
  %v205 = vadd.f32 0.0, %v204
  %v206 = vpop.f32.mrb[0].mxu0
  %207 = vmatprep.mubr.f32.mxu0 0.0
  %208 = vmatmul.mubr.f32.gmra.mrb[0].mxu0 %v136
  %v209 = vpop.f32.mrb[0].mxu0
  %v210 = vadd.f32 0.0, %v209
  %v211 = vpop.f32.mrb[0].mxu0
  %212 = vdwg.mxu0
  %v213 = vadd.f32 %v26, %v205
  %v214 = vadd.f32 %v27, %v210
  %v215 = vld [vmem:[%s4] sm:$0x1]
  %v217 = vlaneseq
  %v218 = vshrl.u32 %v217, 7
  %v219 = vsub.s32 0, %v218
  %v220 = vrot.slane %v215, %v219
  %v222 = vadd.f32 %v213, %v220
  %v223 = vadd.f32 %v214, %v220
  %v224 = vsel %vm39, %v222, 0.0
  %225 = vadd.xlane.f32.xlu0 %v224
  %v226 = vpop.xlane.xlu0 %225
  %v227 = vsel %vm39, %v223, 0.0
  %228 = vadd.xlane.f32.xlu0 %v227
  %v229 = vpop.xlane.xlu0 %228
  %v230 = vrcp.pop 32.0
  %v231 = vmul.f32 %v226, %v230
  %v232 = vmul.f32 %v229, %v230
  %v233 = vsub.f32 %v222, %v231
  %v234 = vsub.f32 %v223, %v232
  %v235 = vmul.f32 %v233, %v233
  %v236 = vmul.f32 %v234, %v234
  %v237 = vsel %vm39, %v235, 0.0
  %238 = vadd.xlane.f32.xlu0 %v237
  %v239 = vpop.xlane.xlu0 %238
  %v240 = vsel %vm39, %v236, 0.0
  %241 = vadd.xlane.f32.xlu0 %v240
  %v242 = vpop.xlane.xlu0 %241
  %v243 = vmul.f32 %v239, %v230
  %v244 = vmul.f32 %v242, %v230
  %v245 = vadd.f32 %v243, 1e-05
  %v246 = vadd.f32 %v244, 1e-05
  %v247 = vrsqrt.pop %v245
  %v248 = vrsqrt.pop %v246
  %v249 = vmul.f32 %v233, %v247
  %v250 = vmul.f32 %v234, %v248
  %v251 = vld [vmem:[%s5] sm:$0x1]
  %v253 = vlaneseq
  %v254 = vshrl.u32 %v253, 7
  %v255 = vsub.s32 0, %v254
  %v256 = vrot.slane %v251, %v255
  %v258 = vmul.f32 %v249, %v256
  %v259 = vmul.f32 %v250, %v256
  %v260 = vld [vmem:[%s6] sm:$0x1]
  %v262 = vlaneseq
  %v263 = vshrl.u32 %v262, 7
  %v264 = vsub.s32 0, %v263
  %v265 = vrot.slane %v260, %v264
  %v267 = vadd.f32 %v258, %v265
  %v268 = vadd.f32 %v259, %v265
  %269 = vst.msk [vmem:[%s7] sm:$0xff] %vm39, %v267
  %270 = vst.msk [vmem:[%s7 + $0x8] sm:$0xff] %vm39, %v268
  // Predicated region
  $region30: #{decoder_forward.8} parent=0 // pred_check
    _
  $region31: #{decoder_forward.8} parent=0 // pred_check_branch
    %272 = sbr.rel (0) target = $region33
  $region32: #{decoder_forward.8} parent=0 // pred_region
    _
  $region33: #{decoder_forward.8} parent=0 // pred_fallthru
    _
  // Predicated region
  $region34: #{decoder_forward.8} parent=0 // pred_check
    _
  $region35: #{decoder_forward.8} parent=0 // pred_check_branch
    %274 = sbr.rel (0) target = $region37
  $region36: #{decoder_forward.8} parent=0 // pred_region
    _
  $region37: #{decoder_forward.8} parent=0 // pred_fallthru
    _

// kernel: decoder_forward.7
$region0: #{decoder_forward.7}
  #allocation0 [shape = 'u32[]', space=smem, size = 0x4, offset = 0x4, fixed_abs, tag = 'smem constant byte address 0x4 - core index']
  #allocation1 [shape = 'u32[144,128]{1,0:T(1,128)}', space=vmem, size = 0x12000, scoped, tag = 'internal scratch']
  %s0 = inlined_call_operand.vmem [shape: f32[2,8,32], index: 0, kind: input, shape index: {}]
  %s1 = inlined_call_operand.vmem [shape: f32[2,10,32], index: 1, kind: input, shape index: {}]
  %s2 = inlined_call_operand.vmem [shape: f32[2,8,10], index: 2, kind: input, shape index: {}]
  %s3 = inlined_call_operand.vmem [shape: f32[32,32], index: 3, kind: input, shape index: {}]
  %s4 = inlined_call_operand.vmem [shape: f32[1,32], index: 4, kind: input, shape index: {}]
  %s5 = inlined_call_operand.vmem [shape: f32[32,64], index: 5, kind: input, shape index: {}]
  %s6 = inlined_call_operand.vmem [shape: f32[1,64], index: 6, kind: input, shape index: {}]
  %s7 = inlined_call_operand.vmem [shape: f32[32,32], index: 7, kind: input, shape index: {}]
  %s8 = inlined_call_operand.vmem [shape: f32[1,32], index: 8, kind: input, shape index: {}]
  %s9 = inlined_call_operand.vmem [shape: f32[1,32], index: 9, kind: input, shape index: {}]
  %s10 = inlined_call_operand.vmem [shape: f32[1,32], index: 10, kind: input, shape index: {}]
  %s11 = inlined_call_operand.vmem [shape: f32[2,8,32], index: 11, kind: output, shape index: {}]
  %s12 = sld [smem:[#allocation0]]
  $region77: #{decoder_forward.7} parent=0
    _
  %s14 = ssub.s32 1, %s12
  %s15 = scalar_select 0, %s14, %s12
  loop: start=0, step=1, limit=4
  $region2: #{decoder_forward.7} parent=0 // loop_pre_header
    _
  $region3: #{decoder_forward.7} parent=0 // loop_header
    %s17 = sphi 0, %s21
    %p18 = scmp.ge.s32.totalorder %s17, 4
    %s27 = sphi 0, %s29
    %s30 = sphi 0, %s27
    %s31 = sphi 0, %s30
    %s47 = sphi 0, %s31
    %s53 = sphi 0, %s55
    %s56 = sphi 0, %s53
    %s57 = sphi 0, %s56
    %s73 = sphi 0, %s57
    %s79 = sphi 0, %s81
    %s82 = sphi 0, %s79
    %s83 = sphi 0, %s82
    %s99 = sphi 0, %s83
    %s103 = sphi 0, %s103
    %s105 = sphi 0, %s103
    %s106 = sphi 0, %s105
    %s120 = sphi 0, %s106
    %s124 = sphi 0, %s124
    %s126 = sphi 0, %s124
    %s127 = sphi 0, %s126
    %s141 = sphi 0, %s127
    %s145 = sphi 0, %s145
    %s147 = sphi 0, %s145
    %s148 = sphi 0, %s147
    %s162 = sphi 0, %s148
    %s166 = sphi 0, %s166
    %s168 = sphi 0, %s166
    %s169 = sphi 0, %s168
    %s183 = sphi 0, %s169
    %s187 = sphi 0, %s187
    %s189 = sphi 0, %s187
    %s190 = sphi 0, %s189
    %s204 = sphi 0, %s190
    %s208 = sphi 0, %s208
    %s210 = sphi 0, %s208
    %s211 = sphi 0, %s210
    %s225 = sphi 0, %s211
    %s229 = sphi 0, %s229
    %s231 = sphi 0, %s229
    %s232 = sphi 0, %s231
    %s246 = sphi 0, %s232
    %s250 = sphi 0, %s250
    %s252 = sphi 0, %s250
    %s253 = sphi 0, %s252
    %s267 = sphi 0, %s253
    %s273 = sphi 0, %s275
    %s276 = sphi 0, %s273
    %s277 = sphi 0, %s276
    %s293 = sphi 0, %s277
  $region4: #{decoder_forward.7} parent=0 // loop_header_branch
    %20 = sbr.rel (%p18) target = $region8
  $region5: #{decoder_forward.7} parent=0 // loop_body
    %s22 = ssub.s32 %s17, 1
    %s23 = ssub.s32 %s17, 2
    %s24 = sadd.s32 %s17, 1
    %s25 = ssub.s32 %s17, %s24
    %p26 = scmp.eq.s32.totalorder %s25, 0
    %s28 = sadd.s32 %s27, 1
    %s29 = scalar_select %p26, %s27, %s28
    %p32 = pneg %p26
    %p33 = scmp.eq.s32.totalorder %s17, 1
    %p34 = por %p32, %p33
    %p35 = scmp.ne.s32.totalorder %s27, %s30
    %p36 = scmp.eq.s32.totalorder %s17, 0
    %p37 = por %p35, %p36
    %p38 = scmp.ne.s32.totalorder %s27, %s30
    %p39 = scmp.eq.s32.totalorder %s22, 1
    %p40 = por %p38, %p39
    %p41 = scmp.ne.s32.totalorder %s30, %s31
    %p42 = scmp.eq.s32.totalorder %s22, 0
    %p43 = por %p41, %p42
    %p44 = scmp.ne.s32.totalorder %s30, %s31
    %p45 = scmp.eq.s32.totalorder %s23, 1
    %p46 = por %p44, %p45
    %p48 = scmp.ne.s32.totalorder %s31, %s47
    %p49 = scmp.eq.s32.totalorder %s23, 0
    %p50 = por %p48, %p49
    %s51 = ssub.s32 %s17, %s24
    %p52 = scmp.eq.s32.totalorder %s51, 0
    %s54 = sadd.s32 %s53, 1
    %s55 = scalar_select %p52, %s53, %s54
    %p58 = pneg %p52
    %p59 = scmp.eq.s32.totalorder %s17, 1
    %p60 = por %p58, %p59
    %p61 = scmp.ne.s32.totalorder %s53, %s56
    %p62 = scmp.eq.s32.totalorder %s17, 0
    %p63 = por %p61, %p62
    %p64 = scmp.ne.s32.totalorder %s53, %s56
    %p65 = scmp.eq.s32.totalorder %s22, 1
    %p66 = por %p64, %p65
    %p67 = scmp.ne.s32.totalorder %s56, %s57
    %p68 = scmp.eq.s32.totalorder %s22, 0
    %p69 = por %p67, %p68
    %p70 = scmp.ne.s32.totalorder %s56, %s57
    %p71 = scmp.eq.s32.totalorder %s23, 1
    %p72 = por %p70, %p71
    %p74 = scmp.ne.s32.totalorder %s57, %s73
    %p75 = scmp.eq.s32.totalorder %s23, 0
    %p76 = por %p74, %p75
    %s77 = ssub.s32 %s17, %s24
    %p78 = scmp.eq.s32.totalorder %s77, 0
    %s80 = sadd.s32 %s79, 1
    %s81 = scalar_select %p78, %s79, %s80
    %p84 = pneg %p78
    %p85 = scmp.eq.s32.totalorder %s17, 1
    %p86 = por %p84, %p85
    %p87 = scmp.ne.s32.totalorder %s79, %s82
    %p88 = scmp.eq.s32.totalorder %s17, 0
    %p89 = por %p87, %p88
    %p90 = scmp.ne.s32.totalorder %s79, %s82
    %p91 = scmp.eq.s32.totalorder %s22, 1
    %p92 = por %p90, %p91
    %p93 = scmp.ne.s32.totalorder %s82, %s83
    %p94 = scmp.eq.s32.totalorder %s22, 0
    %p95 = por %p93, %p94
    %p96 = scmp.ne.s32.totalorder %s82, %s83
    %p97 = scmp.eq.s32.totalorder %s23, 1
    %p98 = por %p96, %p97
    %p100 = scmp.ne.s32.totalorder %s83, %s99
    %p101 = scmp.eq.s32.totalorder %s23, 0
    %p102 = por %p100, %p101
    %s104 = sadd.s32 %s103, 1
    %p107 = scmp.eq.s32.totalorder %s17, 1
    %p108 = scmp.ne.s32.totalorder %s103, %s105
    %p109 = scmp.eq.s32.totalorder %s17, 0
    %p110 = por %p108, %p109
    %p111 = scmp.ne.s32.totalorder %s103, %s105
    %p112 = scmp.eq.s32.totalorder %s22, 1
    %p113 = por %p111, %p112
    %p114 = scmp.ne.s32.totalorder %s105, %s106
    %p115 = scmp.eq.s32.totalorder %s22, 0
    %p116 = por %p114, %p115
    %p117 = scmp.ne.s32.totalorder %s105, %s106
    %p118 = scmp.eq.s32.totalorder %s23, 1
    %p119 = por %p117, %p118
    %p121 = scmp.ne.s32.totalorder %s106, %s120
    %p122 = scmp.eq.s32.totalorder %s23, 0
    %p123 = por %p121, %p122
    %s125 = sadd.s32 %s124, 1
    %p128 = scmp.eq.s32.totalorder %s17, 1
    %p129 = scmp.ne.s32.totalorder %s124, %s126
    %p130 = scmp.eq.s32.totalorder %s17, 0
    %p131 = por %p129, %p130
    %p132 = scmp.ne.s32.totalorder %s124, %s126
    %p133 = scmp.eq.s32.totalorder %s22, 1
    %p134 = por %p132, %p133
    %p135 = scmp.ne.s32.totalorder %s126, %s127
    %p136 = scmp.eq.s32.totalorder %s22, 0
    %p137 = por %p135, %p136
    %p138 = scmp.ne.s32.totalorder %s126, %s127
    %p139 = scmp.eq.s32.totalorder %s23, 1
    %p140 = por %p138, %p139
    %p142 = scmp.ne.s32.totalorder %s127, %s141
    %p143 = scmp.eq.s32.totalorder %s23, 0
    %p144 = por %p142, %p143
    %s146 = sadd.s32 %s145, 1
    %p149 = scmp.eq.s32.totalorder %s17, 1
    %p150 = scmp.ne.s32.totalorder %s145, %s147
    %p151 = scmp.eq.s32.totalorder %s17, 0
    %p152 = por %p150, %p151
    %p153 = scmp.ne.s32.totalorder %s145, %s147
    %p154 = scmp.eq.s32.totalorder %s22, 1
    %p155 = por %p153, %p154
    %p156 = scmp.ne.s32.totalorder %s147, %s148
    %p157 = scmp.eq.s32.totalorder %s22, 0
    %p158 = por %p156, %p157
    %p159 = scmp.ne.s32.totalorder %s147, %s148
    %p160 = scmp.eq.s32.totalorder %s23, 1
    %p161 = por %p159, %p160
    %p163 = scmp.ne.s32.totalorder %s148, %s162
    %p164 = scmp.eq.s32.totalorder %s23, 0
    %p165 = por %p163, %p164
    %s167 = sadd.s32 %s166, 1
    %p170 = scmp.eq.s32.totalorder %s17, 1
    %p171 = scmp.ne.s32.totalorder %s166, %s168
    %p172 = scmp.eq.s32.totalorder %s17, 0
    %p173 = por %p171, %p172
    %p174 = scmp.ne.s32.totalorder %s166, %s168
    %p175 = scmp.eq.s32.totalorder %s22, 1
    %p176 = por %p174, %p175
    %p177 = scmp.ne.s32.totalorder %s168, %s169
    %p178 = scmp.eq.s32.totalorder %s22, 0
    %p179 = por %p177, %p178
    %p180 = scmp.ne.s32.totalorder %s168, %s169
    %p181 = scmp.eq.s32.totalorder %s23, 1
    %p182 = por %p180, %p181
    %p184 = scmp.ne.s32.totalorder %s169, %s183
    %p185 = scmp.eq.s32.totalorder %s23, 0
    %p186 = por %p184, %p185
    %s188 = sadd.s32 %s187, 1
    %p191 = scmp.eq.s32.totalorder %s17, 1
    %p192 = scmp.ne.s32.totalorder %s187, %s189
    %p193 = scmp.eq.s32.totalorder %s17, 0
    %p194 = por %p192, %p193
    %p195 = scmp.ne.s32.totalorder %s187, %s189
    %p196 = scmp.eq.s32.totalorder %s22, 1
    %p197 = por %p195, %p196
    %p198 = scmp.ne.s32.totalorder %s189, %s190
    %p199 = scmp.eq.s32.totalorder %s22, 0
    %p200 = por %p198, %p199
    %p201 = scmp.ne.s32.totalorder %s189, %s190
    %p202 = scmp.eq.s32.totalorder %s23, 1
    %p203 = por %p201, %p202
    %p205 = scmp.ne.s32.totalorder %s190, %s204
    %p206 = scmp.eq.s32.totalorder %s23, 0
    %p207 = por %p205, %p206
    %s209 = sadd.s32 %s208, 1
    %p212 = scmp.eq.s32.totalorder %s17, 1
    %p213 = scmp.ne.s32.totalorder %s208, %s210
    %p214 = scmp.eq.s32.totalorder %s17, 0
    %p215 = por %p213, %p214
    %p216 = scmp.ne.s32.totalorder %s208, %s210
    %p217 = scmp.eq.s32.totalorder %s22, 1
    %p218 = por %p216, %p217
    %p219 = scmp.ne.s32.totalorder %s210, %s211
    %p220 = scmp.eq.s32.totalorder %s22, 0
    %p221 = por %p219, %p220
    %p222 = scmp.ne.s32.totalorder %s210, %s211
    %p223 = scmp.eq.s32.totalorder %s23, 1
    %p224 = por %p222, %p223
    %p226 = scmp.ne.s32.totalorder %s211, %s225
    %p227 = scmp.eq.s32.totalorder %s23, 0
    %p228 = por %p226, %p227
    %s230 = sadd.s32 %s229, 1
    %p233 = scmp.eq.s32.totalorder %s17, 1
    %p234 = scmp.ne.s32.totalorder %s229, %s231
    %p235 = scmp.eq.s32.totalorder %s17, 0
    %p236 = por %p234, %p235
    %p237 = scmp.ne.s32.totalorder %s229, %s231
    %p238 = scmp.eq.s32.totalorder %s22, 1
    %p239 = por %p237, %p238
    %p240 = scmp.ne.s32.totalorder %s231, %s232
    %p241 = scmp.eq.s32.totalorder %s22, 0
    %p242 = por %p240, %p241
    %p243 = scmp.ne.s32.totalorder %s231, %s232
    %p244 = scmp.eq.s32.totalorder %s23, 1
    %p245 = por %p243, %p244
    %p247 = scmp.ne.s32.totalorder %s232, %s246
    %p248 = scmp.eq.s32.totalorder %s23, 0
    %p249 = por %p247, %p248
    %s251 = sadd.s32 %s250, 1
    %p254 = scmp.eq.s32.totalorder %s17, 1
    %p255 = scmp.ne.s32.totalorder %s250, %s252
    %p256 = scmp.eq.s32.totalorder %s17, 0
    %p257 = por %p255, %p256
    %p258 = scmp.ne.s32.totalorder %s250, %s252
    %p259 = scmp.eq.s32.totalorder %s22, 1
    %p260 = por %p258, %p259
    %p261 = scmp.ne.s32.totalorder %s252, %s253
    %p262 = scmp.eq.s32.totalorder %s22, 0
    %p263 = por %p261, %p262
    %p264 = scmp.ne.s32.totalorder %s252, %s253
    %p265 = scmp.eq.s32.totalorder %s23, 1
    %p266 = por %p264, %p265
    %p268 = scmp.ne.s32.totalorder %s253, %s267
    %p269 = scmp.eq.s32.totalorder %s23, 0
    %p270 = por %p268, %p269
    %s271 = ssub.s32 %s17, %s24
    %p272 = scmp.eq.s32.totalorder %s271, 0
    %s274 = sadd.s32 %s273, 1
    %s275 = scalar_select %p272, %s273, %s274
    %p278 = pneg %p272
    %p279 = scmp.eq.s32.totalorder %s17, 1
    %p280 = por %p278, %p279
    %p281 = scmp.ne.s32.totalorder %s273, %s276
    %p282 = scmp.eq.s32.totalorder %s17, 0
    %p283 = por %p281, %p282
    %p284 = scmp.ne.s32.totalorder %s273, %s276
    %p285 = scmp.eq.s32.totalorder %s22, 1
    %p286 = por %p284, %p285
    %p287 = scmp.ne.s32.totalorder %s276, %s277
    %p288 = scmp.eq.s32.totalorder %s22, 0
    %p289 = por %p287, %p288
    %p290 = scmp.ne.s32.totalorder %s276, %s277
    %p291 = scmp.eq.s32.totalorder %s23, 1
    %p292 = por %p290, %p291
    %p294 = scmp.ne.s32.totalorder %s277, %s293
    %p295 = scmp.eq.s32.totalorder %s23, 0
    %p296 = por %p294, %p295
    %p297 = scmp.le.s32.totalorder 1, %s17
    %p298 = scmp.lt.s32.totalorder %s17, 3
    %p299 = pnand %p297, %p298
    %p300 = pneg %p299
    // Predicated region
    $region9: #{decoder_forward.7} parent=5 // pred_check
      _
    $region10: #{decoder_forward.7} parent=5 // pred_check_branch
      %302 = sbr.rel (%p299) target = $region12
    $region11: #{decoder_forward.7} parent=5 // pred_region
      %s303 = ssub.s32 %s17, 1
      // Predicated region
      $region13: #{decoder_forward.7} parent=11 // pred_check
        %p304 = pneg %p116
      $region14: #{decoder_forward.7} parent=11 // pred_check_branch
        %306 = sbr.rel (%p304) target = $region16
      $region15: #{decoder_forward.7} parent=11 // pred_region
        _
      $region16: #{decoder_forward.7} parent=11 // pred_fallthru
        _
      // Predicated region
      $region17: #{decoder_forward.7} parent=11 // pred_check
        %p307 = pneg %p137
      $region18: #{decoder_forward.7} parent=11 // pred_check_branch
        %309 = sbr.rel (%p307) target = $region20
      $region19: #{decoder_forward.7} parent=11 // pred_region
        _
      $region20: #{decoder_forward.7} parent=11 // pred_fallthru
        _
      // Predicated region
      $region21: #{decoder_forward.7} parent=11 // pred_check
        %p310 = pneg %p158
      $region22: #{decoder_forward.7} parent=11 // pred_check_branch
        %312 = sbr.rel (%p310) target = $region24
      $region23: #{decoder_forward.7} parent=11 // pred_region
        _
      $region24: #{decoder_forward.7} parent=11 // pred_fallthru
        _
      // Predicated region
      $region25: #{decoder_forward.7} parent=11 // pred_check
        %p313 = pneg %p179
      $region26: #{decoder_forward.7} parent=11 // pred_check_branch
        %315 = sbr.rel (%p313) target = $region28
      $region27: #{decoder_forward.7} parent=11 // pred_region
        _
      $region28: #{decoder_forward.7} parent=11 // pred_fallthru
        _
      // Predicated region
      $region29: #{decoder_forward.7} parent=11 // pred_check
        %p316 = pneg %p200
      $region30: #{decoder_forward.7} parent=11 // pred_check_branch
        %318 = sbr.rel (%p316) target = $region32
      $region31: #{decoder_forward.7} parent=11 // pred_region
        _
      $region32: #{decoder_forward.7} parent=11 // pred_fallthru
        _
      // Predicated region
      $region33: #{decoder_forward.7} parent=11 // pred_check
        %p319 = pneg %p221
      $region34: #{decoder_forward.7} parent=11 // pred_check_branch
        %321 = sbr.rel (%p319) target = $region36
      $region35: #{decoder_forward.7} parent=11 // pred_region
        _
      $region36: #{decoder_forward.7} parent=11 // pred_fallthru
        _
      // Predicated region
      $region37: #{decoder_forward.7} parent=11 // pred_check
        %p322 = pneg %p242
      $region38: #{decoder_forward.7} parent=11 // pred_check_branch
        %324 = sbr.rel (%p322) target = $region40
      $region39: #{decoder_forward.7} parent=11 // pred_region
        _
      $region40: #{decoder_forward.7} parent=11 // pred_fallthru
        _
      // Predicated region
      $region41: #{decoder_forward.7} parent=11 // pred_check
        %p325 = pneg %p263
      $region42: #{decoder_forward.7} parent=11 // pred_check_branch
        %327 = sbr.rel (%p325) target = $region44
      $region43: #{decoder_forward.7} parent=11 // pred_region
        _
      $region44: #{decoder_forward.7} parent=11 // pred_fallthru
        _
    $region12: #{decoder_forward.7} parent=5 // pred_fallthru
      _
    %p328 = scmp.lt.s32.totalorder %s17, 2
    // Predicated region
    $region45: #{decoder_forward.7} parent=5 // pred_check
      %p329 = pneg %p328
    $region46: #{decoder_forward.7} parent=5 // pred_check_branch
      %331 = sbr.rel (%p329) target = $region48
    $region47: #{decoder_forward.7} parent=5 // pred_region
      // Predicated region
      $region49: #{decoder_forward.7} parent=47 // pred_check
        %p332 = pneg %p37
      $region50: #{decoder_forward.7} parent=47 // pred_check_branch
        %334 = sbr.rel (%p332) target = $region52
      $region51: #{decoder_forward.7} parent=47 // pred_region
        %p335 = scmp.lt.s32.totalorder %s17, 1
        %s336 = scalar_select %p335, %s17, 1
        %s337 = smul.addr %s336, 8
        %s338 = scalar_lea.vmem %s0, %s337
      $region52: #{decoder_forward.7} parent=47 // pred_fallthru
        _
      // Predicated region
      $region53: #{decoder_forward.7} parent=47 // pred_check
        %p339 = pneg %p63
      $region54: #{decoder_forward.7} parent=47 // pred_check_branch
        %341 = sbr.rel (%p339) target = $region56
      $region55: #{decoder_forward.7} parent=47 // pred_region
        %p342 = scmp.lt.s32.totalorder %s17, 1
        %s343 = scalar_select %p342, %s17, 1
        %s344 = smul.addr %s343, 2
        %s345 = smul.addr %s344, 8
        %s346 = scalar_lea.vmem %s1, %s345
      $region56: #{decoder_forward.7} parent=47 // pred_fallthru
        _
      // Predicated region
      $region57: #{decoder_forward.7} parent=47 // pred_check
        %p347 = pneg %p89
      $region58: #{decoder_forward.7} parent=47 // pred_check_branch
        %349 = sbr.rel (%p347) target = $region60
      $region59: #{decoder_forward.7} parent=47 // pred_region
        %p350 = scmp.lt.s32.totalorder %s17, 1
        %s351 = scalar_select %p350, %s17, 1
        %s352 = smul.addr %s351, 8
        %s353 = scalar_lea.vmem %s2, %s352
      $region60: #{decoder_forward.7} parent=47 // pred_fallthru
        _
    $region48: #{decoder_forward.7} parent=5 // pred_fallthru
      _
    %p354 = scmp.le.s32.totalorder 1, %s17
    %p355 = scmp.lt.s32.totalorder %s17, 3
    %p356 = pnand %p354, %p355
    %p357 = pneg %p356
    // Predicated region
    $region61: #{decoder_forward.7} parent=5 // pred_check
      _
    $region62: #{decoder_forward.7} parent=5 // pred_check_branch
      %359 = sbr.rel (%p356) target = $region64
    $region63: #{decoder_forward.7} parent=5 // pred_region
      %s360 = ssub.s32 %s17, 1
      %p361 = scmp.lt.s32.totalorder %s22, 1
      %s362 = scalar_select %p361, %s22, 1
      %s363 = smul.addr %s362, 8
      %s364 = scalar_lea.vmem %s0, %s363
      %p365 = pneg %p43
      %p366 = pneg %p40
      %p367 = scmp.lt.s32.totalorder %s22, 1
      %s368 = scalar_select %p367, %s22, 1
      %s369 = smul.addr %s368, 2
      %s370 = smul.addr %s369, 8
      %s371 = scalar_lea.vmem %s1, %s370
      %p372 = pneg %p69
      %p373 = pneg %p66
      %p374 = scmp.lt.s32.totalorder %s22, 1
      %s375 = scalar_select %p374, %s22, 1
      %s376 = smul.addr %s375, 8
      %s377 = scalar_lea.vmem %s2, %s376
      %p378 = pneg %p95
      %p379 = pneg %p92
      %p380 = pneg %p116
      %p381 = pneg %p113
      %p382 = pneg %p137
      %p383 = pneg %p134
      %p384 = pneg %p158
      %p385 = pneg %p155
      %p386 = pneg %p179
      %p387 = pneg %p176
      %p388 = pneg %p200
      %p389 = pneg %p197
      %p390 = pneg %p221
      %p391 = pneg %p218
      %p392 = pneg %p242
      %p393 = pneg %p239
      %p394 = pneg %p263
      %p395 = pneg %p260
      %p396 = pneg %p289
      %p397 = pneg %p286
      %p398 = scmp.lt.s32.totalorder %s22, 1
      %s399 = scalar_select %p398, %s22, 1
      %s400 = smul.addr %s399, 8
      %s401 = scalar_lea.vmem %s11, %s400
      %p402 = scmp.lt.s32.totalorder %s22, 1
      %s403 = scalar_select %p402, %s22, 1
      %s404 = smul.addr %s403, 8
      %s405 = scalar_lea.vmem %s0, %s404
      %p406 = scmp.lt.s32.totalorder %s22, 1
      %s407 = scalar_select %p406, %s22, 1
      %s408 = smul.addr %s407, 2
      %s409 = smul.addr %s408, 8
      %s410 = scalar_lea.vmem %s1, %s409
      %p411 = scmp.lt.s32.totalorder %s22, 1
      %s412 = scalar_select %p411, %s22, 1
      %s413 = smul.addr %s412, 8
      %s414 = scalar_lea.vmem %s2, %s413
      %p415 = scmp.lt.s32.totalorder %s22, 1
      %s416 = scalar_select %p415, %s22, 1
      %s417 = smul.addr %s416, 8
      %s418 = scalar_lea.vmem %s11, %s417
      %v419 = vld [vmem:[%s405] sm:$0xff]
      %v420 = vld [vmem:[%s410] sm:$0xff]
      %v421 = vld [vmem:[%s410 + $0x8] sm:$0x3]
      %v422 = vld [vmem:[%s414] sm:$0xff]
      %v423 = vld [vmem:[%s3] sm:$0xff]
      %v424 = vld [vmem:[%s3 + $0x8] sm:$0xff]
      %v425 = vld [vmem:[%s3 + $0x10] sm:$0xff]
      %v426 = vld [vmem:[%s3 + $0x18] sm:$0xff]
      %v427 = vld [vmem:[%s4] sm:$0x1]
      %v429 = vlaneseq
      %v430 = vshrl.u32 %v429, 7
      %v431 = vsub.s32 0, %v430
      %v432 = vrot.slane %v427, %v431
      %vm434 = vcmask 261120
      %v436 = vsel %vm434, %v419, 0
      %438 = vmatprep.subr.mxu0 0.0
      %439 = vmatpush1.msra.mxu0 %v423
      %440 = vmatprep.subr.mxu0 0.0
      %441 = vmatpush1.msra.mxu0 %v424
      %442 = vmatprep.subr.mxu0 0.0
      %443 = vmatpush1.msra.mxu0 %v425
      %444 = vmatprep.subr.mxu0 0.0
      %445 = vmatpush1.msra.mxu0 %v426
      %446 = vmatprep.subr.mxu0 0.0
      %447 = vmatpush1.msra.mxu0 0.0
      %448 = vmatprep.subr.mxu0 0.0
      %449 = vmatpush1.msra.mxu0 0.0
      %450 = vmatprep.subr.mxu0 0.0
      %451 = vmatpush1.msra.mxu0 0.0
      %452 = vmatprep.subr.mxu0 0.0
      %453 = vmatpush1.msra.mxu0 0.0
      %454 = vmatprep.subr.mxu0 0.0
      %455 = vmatpush1.msra.mxu0 0.0
      %456 = vmatprep.subr.mxu0 0.0
      %457 = vmatpush1.msra.mxu0 0.0
      %458 = vmatprep.subr.mxu0 0.0
      %459 = vmatpush1.msra.mxu0 0.0
      %460 = vmatprep.subr.mxu0 0.0
      %461 = vmatpush1.msra.mxu0 0.0
      %462 = vmatprep.subr.mxu0 0.0
      %463 = vmatpush1.msra.mxu0 0.0
      %464 = vmatprep.subr.mxu0 0.0
      %465 = vmatpush1.msra.mxu0 0.0
      %466 = vmatprep.subr.mxu0 0.0
      %467 = vmatpush1.msra.mxu0 0.0
      %468 = vmatprep.subr.mxu0 0.0
      %469 = vmatpush1.msra.mxu0 0.0
      %470 = vmatprep.subr.mxu0 0.0
      %471 = vmatpush1.msra.mxu0 0.0
      %472 = vmatprep.subr.mxu0 0.0
      %473 = vmatpush1.msra.mxu0 0.0
      %474 = vmatprep.subr.mxu0 0.0
      %475 = vmatpush1.msra.mxu0 0.0
      %476 = vmatprep.subr.mxu0 0.0
      %477 = vmatpush1.msra.mxu0 0.0
      %478 = vmatprep.subr.mxu0 0.0
      %479 = vmatpush1.msra.mxu0 0.0
      %480 = vmatprep.subr.mxu0 0.0
      %481 = vmatpush1.msra.mxu0 0.0
      %482 = vmatprep.subr.mxu0 0.0
      %483 = vmatpush1.msra.mxu0 0.0
      %484 = vmatprep.subr.mxu0 0.0
      %485 = vmatpush1.msra.mxu0 0.0
      %486 = vmatprep.subr.mxu0 0.0
      %487 = vmatpush1.msra.mxu0 0.0
      %488 = vmatprep.subr.mxu0 0.0
      %489 = vmatpush1.msra.mxu0 0.0
      %490 = vmatprep.subr.mxu0 0.0
      %491 = vmatpush1.msra.mxu0 0.0
      %492 = vmatprep.subr.mxu0 0.0
      %493 = vmatpush1.msra.mxu0 0.0
      %494 = vmatprep.subr.mxu0 0.0
      %495 = vmatpush1.msra.mxu0 0.0
      %496 = vmatprep.subr.mxu0 0.0
      %497 = vmatpush1.msra.mxu0 0.0
      %498 = vmatprep.subr.mxu0 0.0
      %499 = vmatpush1.msra.mxu0 0.0
      %500 = vmatprep.subr.mxu0 0.0
      %501 = vmatpush1.msra.mxu0 0.0
      %502 = vmatprep.mubr.f32.mxu0 0.0
      %503 = vmatmul.mubr.f32.gmra.mrb[0].mxu0 %v436
      %v504 = vpop.f32.mrb[0].mxu0
      %v505 = vadd.f32 %v432, %v504
      %v506 = vpop.f32.mrb[0].mxu0
      %507 = vdwg.mxu0
      %v508 = vld [vmem:[%s5] sm:$0xff]
      %v509 = vld [vmem:[%s5 + $0x8] sm:$0xff]
      %v510 = vld [vmem:[%s5 + $0x10] sm:$0xff]
      %v511 = vld [vmem:[%s5 + $0x18] sm:$0xff]
      %v512 = vld [vmem:[%s6] sm:$0x1]
      %v514 = vlaneseq
      %v515 = vshrl.u32 %v514, 7
      %v516 = vsub.s32 0, %v515
      %v517 = vrot.slane %v512, %v516
      %v520 = vsel %vm434, %v420, 0
      %v523 = vsel %vm434, %v421, 0
      %525 = vmatprep.subr.mxu0 0.0
      %526 = vmatpush1.msra.mxu0 %v508
      %527 = vmatprep.subr.mxu0 0.0
      %528 = vmatpush1.msra.mxu0 %v509
      %529 = vmatprep.subr.mxu0 0.0
      %530 = vmatpush1.msra.mxu0 %v510
      %531 = vmatprep.subr.mxu0 0.0
      %532 = vmatpush1.msra.mxu0 %v511
      %533 = vmatprep.subr.mxu0 0.0
      %534 = vmatpush1.msra.mxu0 0.0
      %535 = vmatprep.subr.mxu0 0.0
      %536 = vmatpush1.msra.mxu0 0.0
      %537 = vmatprep.subr.mxu0 0.0
      %538 = vmatpush1.msra.mxu0 0.0
      %539 = vmatprep.subr.mxu0 0.0
      %540 = vmatpush1.msra.mxu0 0.0
      %541 = vmatprep.subr.mxu0 0.0
      %542 = vmatpush1.msra.mxu0 0.0
      %543 = vmatprep.subr.mxu0 0.0
      %544 = vmatpush1.msra.mxu0 0.0
      %545 = vmatprep.subr.mxu0 0.0
      %546 = vmatpush1.msra.mxu0 0.0
      %547 = vmatprep.subr.mxu0 0.0
      %548 = vmatpush1.msra.mxu0 0.0
      %549 = vmatprep.subr.mxu0 0.0
      %550 = vmatpush1.msra.mxu0 0.0
      %551 = vmatprep.subr.mxu0 0.0
      %552 = vmatpush1.msra.mxu0 0.0
      %553 = vmatprep.subr.mxu0 0.0
      %554 = vmatpush1.msra.mxu0 0.0
      %555 = vmatprep.subr.mxu0 0.0
      %556 = vmatpush1.msra.mxu0 0.0
      %557 = vmatprep.subr.mxu0 0.0
      %558 = vmatpush1.msra.mxu0 0.0
      %559 = vmatprep.subr.mxu0 0.0
      %560 = vmatpush1.msra.mxu0 0.0
      %561 = vmatprep.subr.mxu0 0.0
      %562 = vmatpush1.msra.mxu0 0.0
      %563 = vmatprep.subr.mxu0 0.0
      %564 = vmatpush1.msra.mxu0 0.0
      %565 = vmatprep.subr.mxu0 0.0
      %566 = vmatpush1.msra.mxu0 0.0
      %567 = vmatprep.subr.mxu0 0.0
      %568 = vmatpush1.msra.mxu0 0.0
      %569 = vmatprep.subr.mxu0 0.0
      %570 = vmatpush1.msra.mxu0 0.0
      %571 = vmatprep.subr.mxu0 0.0
      %572 = vmatpush1.msra.mxu0 0.0
      %573 = vmatprep.subr.mxu0 0.0
      %574 = vmatpush1.msra.mxu0 0.0
      %575 = vmatprep.subr.mxu0 0.0
      %576 = vmatpush1.msra.mxu0 0.0
      %577 = vmatprep.subr.mxu0 0.0
      %578 = vmatpush1.msra.mxu0 0.0
      %579 = vmatprep.subr.mxu0 0.0
      %580 = vmatpush1.msra.mxu0 0.0
      %581 = vmatprep.subr.mxu0 0.0
      %582 = vmatpush1.msra.mxu0 0.0
      %583 = vmatprep.subr.mxu0 0.0
      %584 = vmatpush1.msra.mxu0 0.0
      %585 = vmatprep.subr.mxu0 0.0
      %586 = vmatpush1.msra.mxu0 0.0
      %587 = vmatprep.subr.mxu0 0.0
      %588 = vmatpush1.msra.mxu0 0.0
      %589 = vmatprep.mubr.f32.mxu0 0.0
      %590 = vmatmul.mubr.f32.gmra.mrb[0].mxu0 %v520
      %v591 = vpop.f32.mrb[0].mxu0
      %v592 = vadd.f32 %v517, %v591
      %v593 = vpop.f32.mrb[0].mxu0
      %594 = vmatprep.mubr.f32.mxu0 0.0
      %595 = vmatmul.mubr.f32.gmra.mrb[0].mxu0 %v523
      %v596 = vpop.f32.mrb[0].mxu0
      %v597 = vadd.f32 %v517, %v596
      %v598 = vpop.f32.mrb[0].mxu0
      %599 = vdwg.mxu0
      %v600 = vmul.f32 %v505, 0.35355338
      %vm601 = vcmask 64512
      %v603 = vsel %vm601, %v600, 0
      %v606 = vsel %vm601, %v592, 0
      %v609 = vsel %vm601, %v597, 0
      %611 = vmatprep.subr.mxu0 0.0
      %612 = vmatpush1.xpose.msra.mxu0 %v606
      %613 = vmatprep.subr.mxu0 0.0
      %614 = vmatpush1.xpose.msra.mxu0 %v609
      %615 = vmatprep.subr.mxu0 0.0
      %616 = vmatpush1.xpose.msra.mxu0 0.0
      %617 = vmatprep.subr.mxu0 0.0
      %618 = vmatpush1.xpose.msra.mxu0 0.0
      %619 = vmatprep.subr.mxu0 0.0
      %620 = vmatpush1.xpose.msra.mxu0 0.0
      %621 = vmatprep.subr.mxu0 0.0
      %622 = vmatpush1.xpose.msra.mxu0 0.0
      %623 = vmatprep.subr.mxu0 0.0
      %624 = vmatpush1.xpose.msra.mxu0 0.0
      %625 = vmatprep.subr.mxu0 0.0
      %626 = vmatpush1.xpose.msra.mxu0 0.0
      %627 = vmatprep.subr.mxu0 0.0
      %628 = vmatpush1.xpose.msra.mxu0 0.0
      %629 = vmatprep.subr.mxu0 0.0
      %630 = vmatpush1.xpose.msra.mxu0 0.0
      %631 = vmatprep.subr.mxu0 0.0
      %632 = vmatpush1.xpose.msra.mxu0 0.0
      %633 = vmatprep.subr.mxu0 0.0
      %634 = vmatpush1.xpose.msra.mxu0 0.0
      %635 = vmatprep.subr.mxu0 0.0
      %636 = vmatpush1.xpose.msra.mxu0 0.0
      %637 = vmatprep.subr.mxu0 0.0
      %638 = vmatpush1.xpose.msra.mxu0 0.0
      %639 = vmatprep.subr.mxu0 0.0
      %640 = vmatpush1.xpose.msra.mxu0 0.0
      %641 = vmatprep.subr.mxu0 0.0
      %642 = vmatpush1.xpose.msra.mxu0 0.0
      %643 = vmatprep.subr.mxu0 0.0
      %644 = vmatpush1.xpose.msra.mxu0 0.0
      %645 = vmatprep.subr.mxu0 0.0
      %646 = vmatpush1.xpose.msra.mxu0 0.0
      %647 = vmatprep.subr.mxu0 0.0
      %648 = vmatpush1.xpose.msra.mxu0 0.0
      %649 = vmatprep.subr.mxu0 0.0
      %650 = vmatpush1.xpose.msra.mxu0 0.0
      %651 = vmatprep.subr.mxu0 0.0
      %652 = vmatpush1.xpose.msra.mxu0 0.0
      %653 = vmatprep.subr.mxu0 0.0
      %654 = vmatpush1.xpose.msra.mxu0 0.0
      %655 = vmatprep.subr.mxu0 0.0
      %656 = vmatpush1.xpose.msra.mxu0 0.0
      %657 = vmatprep.subr.mxu0 0.0
      %658 = vmatpush1.xpose.msra.mxu0 0.0
      %659 = vmatprep.subr.mxu0 0.0
      %660 = vmatpush1.xpose.msra.mxu0 0.0
      %661 = vmatprep.subr.mxu0 0.0
      %662 = vmatpush1.xpose.msra.mxu0 0.0
      %663 = vmatprep.subr.mxu0 0.0
      %664 = vmatpush1.xpose.msra.mxu0 0.0
      %665 = vmatprep.subr.mxu0 0.0
      %666 = vmatpush1.xpose.msra.mxu0 0.0
      %667 = vmatprep.subr.mxu0 0.0
      %668 = vmatpush1.xpose.msra.mxu0 0.0
      %669 = vmatprep.subr.mxu0 0.0
      %670 = vmatpush1.xpose.msra.mxu0 0.0
      %671 = vmatprep.subr.mxu0 0.0
      %672 = vmatpush1.xpose.msra.mxu0 0.0
      %673 = vmatprep.subr.mxu0 0.0
      %674 = vmatpush1.xpose.msra.mxu0 0.0
      %675 = vmatprep.mubr.f32.mxu0 0.0
      %676 = vmatmul.mubr.f32.gmra.mrb[0].mxu0 %v603
      %v677 = vpop.f32.mrb[0].mxu0
      %v678 = vadd.f32 0.0, %v677
      %v679 = vpop.f32.mrb[0].mxu0
      %680 = vdwg.mxu0
      %vm681 = vcmp.gt.f32.partialorder %v422, 0.0
      %v682 = vsel %vm681, %v678, -1e+09
      %vm683 = vcmask 80896
      %v684 = vsel %vm683, %v682, -inf
      %685 = vmax.xlane.f32.xlu0 %v684
      %v686 = vpop.xlane.xlu0 %685
      %v687 = vsub.f32 %v682, %v686
      %v688 = vmul.f32 %v687, 1.442695
      %v689 = vpow.pop %v688
      %v690 = vsel %vm683, %v689, 0.0
      %691 = vadd.xlane.f32.xlu0 %v690
      %v692 = vpop.xlane.xlu0 %691
      %v693 = vrcp.pop %v692
      %v694 = vmul.f32 %v689, %v693
      %695 = vrot.lane.b32.xlu0 %v592, 96
      %v696 = vpop.permute.xlu0 %695
      %697 = vrot.lane.b32.xlu0 %v597, 96
      %v698 = vpop.permute.xlu0 %697
      %v701 = vsel %vm683, %v694, 0
      %vm703 = vcmask 1041408
      %v704 = vsel %vm703, %v698, 0
      %706 = vmatprep.subr.mxu0 0.0
      %707 = vmatpush1.msra.mxu0 %v696
      %708 = vmatprep.subr.mxu0 0.0
      %709 = vmatpush1.msra.mxu0 %v704
      %710 = vmatprep.subr.mxu0 0.0
      %711 = vmatpush1.msra.mxu0 0.0
      %712 = vmatprep.subr.mxu0 0.0
      %713 = vmatpush1.msra.mxu0 0.0
      %714 = vmatprep.subr.mxu0 0.0
      %715 = vmatpush1.msra.mxu0 0.0
      %716 = vmatprep.subr.mxu0 0.0
      %717 = vmatpush1.msra.mxu0 0.0
      %718 = vmatprep.subr.mxu0 0.0
      %719 = vmatpush1.msra.mxu0 0.0
      %720 = vmatprep.subr.mxu0 0.0
      %721 = vmatpush1.msra.mxu0 0.0
      %722 = vmatprep.subr.mxu0 0.0
      %723 = vmatpush1.msra.mxu0 0.0
      %724 = vmatprep.subr.mxu0 0.0
      %725 = vmatpush1.msra.mxu0 0.0
      %726 = vmatprep.subr.mxu0 0.0
      %727 = vmatpush1.msra.mxu0 0.0
      %728 = vmatprep.subr.mxu0 0.0
      %729 = vmatpush1.msra.mxu0 0.0
      %730 = vmatprep.subr.mxu0 0.0
      %731 = vmatpush1.msra.mxu0 0.0
      %732 = vmatprep.subr.mxu0 0.0
      %733 = vmatpush1.msra.mxu0 0.0
      %734 = vmatprep.subr.mxu0 0.0
      %735 = vmatpush1.msra.mxu0 0.0
      %736 = vmatprep.subr.mxu0 0.0
      %737 = vmatpush1.msra.mxu0 0.0
      %738 = vmatprep.subr.mxu0 0.0
      %739 = vmatpush1.msra.mxu0 0.0
      %740 = vmatprep.subr.mxu0 0.0
      %741 = vmatpush1.msra.mxu0 0.0
      %742 = vmatprep.subr.mxu0 0.0
      %743 = vmatpush1.msra.mxu0 0.0
      %744 = vmatprep.subr.mxu0 0.0
      %745 = vmatpush1.msra.mxu0 0.0
      %746 = vmatprep.subr.mxu0 0.0
      %747 = vmatpush1.msra.mxu0 0.0
      %748 = vmatprep.subr.mxu0 0.0
      %749 = vmatpush1.msra.mxu0 0.0
      %750 = vmatprep.subr.mxu0 0.0
      %751 = vmatpush1.msra.mxu0 0.0
      %752 = vmatprep.subr.mxu0 0.0
      %753 = vmatpush1.msra.mxu0 0.0
      %754 = vmatprep.subr.mxu0 0.0
      %755 = vmatpush1.msra.mxu0 0.0
      %756 = vmatprep.subr.mxu0 0.0
      %757 = vmatpush1.msra.mxu0 0.0
      %758 = vmatprep.subr.mxu0 0.0
      %759 = vmatpush1.msra.mxu0 0.0
      %760 = vmatprep.subr.mxu0 0.0
      %761 = vmatpush1.msra.mxu0 0.0
      %762 = vmatprep.subr.mxu0 0.0
      %763 = vmatpush1.msra.mxu0 0.0
      %764 = vmatprep.subr.mxu0 0.0
      %765 = vmatpush1.msra.mxu0 0.0
      %766 = vmatprep.subr.mxu0 0.0
      %767 = vmatpush1.msra.mxu0 0.0
      %768 = vmatprep.subr.mxu0 0.0
      %769 = vmatpush1.msra.mxu0 0.0
      %770 = vmatprep.mubr.f32.mxu0 0.0
      %771 = vmatmul.mubr.f32.gmra.mrb[0].mxu0 %v701
      %v772 = vpop.f32.mrb[0].mxu0
      %v773 = vadd.f32 0.0, %v772
      %v774 = vpop.f32.mrb[0].mxu0
      %775 = vdwg.mxu0
      %v776 = vld [vmem:[%s7] sm:$0xff]
      %777 = vrot.lane.b32.xlu0 %v600, 120
      %v778 = vpop.permute.xlu0 %777
      %779 = vrot.lane.b32.xlu0 %v592, 120
      %v780 = vpop.permute.xlu0 %779
      %781 = vrot.lane.b32.xlu0 %v597, 120
      %v782 = vpop.permute.xlu0 %781
      %v783 = vsel %vm601, %v778, 0
      %v785 = vsel %vm601, %v780, 0
      %v787 = vsel %vm601, %v782, 0
      %789 = vmatprep.subr.mxu0 0.0
      %790 = vmatpush1.xpose.msra.mxu0 %v785
      %791 = vmatprep.subr.mxu0 0.0
      %792 = vmatpush1.xpose.msra.mxu0 %v787
      %793 = vmatprep.subr.mxu0 0.0
      %794 = vmatpush1.xpose.msra.mxu0 0.0
      %795 = vmatprep.subr.mxu0 0.0
      %796 = vmatpush1.xpose.msra.mxu0 0.0
      %797 = vmatprep.subr.mxu0 0.0
      %798 = vmatpush1.xpose.msra.mxu0 0.0
      %799 = vmatprep.subr.mxu0 0.0
      %800 = vmatpush1.xpose.msra.mxu0 0.0
      %801 = vmatprep.subr.mxu0 0.0
      %802 = vmatpush1.xpose.msra.mxu0 0.0
      %803 = vmatprep.subr.mxu0 0.0
      %804 = vmatpush1.xpose.msra.mxu0 0.0
      %805 = vmatprep.subr.mxu0 0.0
      %806 = vmatpush1.xpose.msra.mxu0 0.0
      %807 = vmatprep.subr.mxu0 0.0
      %808 = vmatpush1.xpose.msra.mxu0 0.0
      %809 = vmatprep.subr.mxu0 0.0
      %810 = vmatpush1.xpose.msra.mxu0 0.0
      %811 = vmatprep.subr.mxu0 0.0
      %812 = vmatpush1.xpose.msra.mxu0 0.0
      %813 = vmatprep.subr.mxu0 0.0
      %814 = vmatpush1.xpose.msra.mxu0 0.0
      %815 = vmatprep.subr.mxu0 0.0
      %816 = vmatpush1.xpose.msra.mxu0 0.0
      %817 = vmatprep.subr.mxu0 0.0
      %818 = vmatpush1.xpose.msra.mxu0 0.0
      %819 = vmatprep.subr.mxu0 0.0
      %820 = vmatpush1.xpose.msra.mxu0 0.0
      %821 = vmatprep.subr.mxu0 0.0
      %822 = vmatpush1.xpose.msra.mxu0 0.0
      %823 = vmatprep.subr.mxu0 0.0
      %824 = vmatpush1.xpose.msra.mxu0 0.0
      %825 = vmatprep.subr.mxu0 0.0
      %826 = vmatpush1.xpose.msra.mxu0 0.0
      %827 = vmatprep.subr.mxu0 0.0
      %828 = vmatpush1.xpose.msra.mxu0 0.0
      %829 = vmatprep.subr.mxu0 0.0
      %830 = vmatpush1.xpose.msra.mxu0 0.0
      %831 = vmatprep.subr.mxu0 0.0
      %832 = vmatpush1.xpose.msra.mxu0 0.0
      %833 = vmatprep.subr.mxu0 0.0
      %834 = vmatpush1.xpose.msra.mxu0 0.0
      %835 = vmatprep.subr.mxu0 0.0
      %836 = vmatpush1.xpose.msra.mxu0 0.0
      %837 = vmatprep.subr.mxu0 0.0
      %838 = vmatpush1.xpose.msra.mxu0 0.0
      %839 = vmatprep.subr.mxu0 0.0
      %840 = vmatpush1.xpose.msra.mxu0 0.0
      %841 = vmatprep.subr.mxu0 0.0
      %842 = vmatpush1.xpose.msra.mxu0 0.0
      %843 = vmatprep.subr.mxu0 0.0
      %844 = vmatpush1.xpose.msra.mxu0 0.0
      %845 = vmatprep.subr.mxu0 0.0
      %846 = vmatpush1.xpose.msra.mxu0 0.0
      %847 = vmatprep.subr.mxu0 0.0
      %848 = vmatpush1.xpose.msra.mxu0 0.0
      %849 = vmatprep.subr.mxu0 0.0
      %850 = vmatpush1.xpose.msra.mxu0 0.0
      %851 = vmatprep.subr.mxu0 0.0
      %852 = vmatpush1.xpose.msra.mxu0 0.0
      %853 = vmatprep.mubr.f32.mxu0 0.0
      %854 = vmatmul.mubr.f32.gmra.mrb[0].mxu0 %v783
      %v855 = vpop.f32.mrb[0].mxu0
      %v856 = vadd.f32 0.0, %v855
      %v857 = vpop.f32.mrb[0].mxu0
      %858 = vdwg.mxu0
      %v859 = vsel %vm681, %v856, -1e+09
      %v860 = vsel %vm683, %v859, -inf
      %861 = vmax.xlane.f32.xlu0 %v860
      %v862 = vpop.xlane.xlu0 %861
      %v863 = vsub.f32 %v859, %v862
      %v864 = vmul.f32 %v863, 1.442695
      %v865 = vpow.pop %v864
      %v866 = vsel %vm683, %v865, 0.0
      %867 = vadd.xlane.f32.xlu0 %v866
      %v868 = vpop.xlane.xlu0 %867
      %v869 = vrcp.pop %v868
      %v870 = vmul.f32 %v865, %v869
      %871 = vrot.lane.b32.xlu0 %v592, 88
      %v872 = vpop.permute.xlu0 %871
      %873 = vrot.lane.b32.xlu0 %v597, 88
      %v874 = vpop.permute.xlu0 %873
      %v877 = vsel %vm683, %v870, 0
      %v879 = vsel %vm703, %v874, 0
      %881 = vmatprep.subr.mxu0 0.0
      %882 = vmatpush1.msra.mxu0 %v872
      %883 = vmatprep.subr.mxu0 0.0
      %884 = vmatpush1.msra.mxu0 %v879
      %885 = vmatprep.subr.mxu0 0.0
      %886 = vmatpush1.msra.mxu0 0.0
      %887 = vmatprep.subr.mxu0 0.0
      %888 = vmatpush1.msra.mxu0 0.0
      %889 = vmatprep.subr.mxu0 0.0
      %890 = vmatpush1.msra.mxu0 0.0
      %891 = vmatprep.subr.mxu0 0.0
      %892 = vmatpush1.msra.mxu0 0.0
      %893 = vmatprep.subr.mxu0 0.0
      %894 = vmatpush1.msra.mxu0 0.0
      %895 = vmatprep.subr.mxu0 0.0
      %896 = vmatpush1.msra.mxu0 0.0
      %897 = vmatprep.subr.mxu0 0.0
      %898 = vmatpush1.msra.mxu0 0.0
      %899 = vmatprep.subr.mxu0 0.0
      %900 = vmatpush1.msra.mxu0 0.0
      %901 = vmatprep.subr.mxu0 0.0
      %902 = vmatpush1.msra.mxu0 0.0
      %903 = vmatprep.subr.mxu0 0.0
      %904 = vmatpush1.msra.mxu0 0.0
      %905 = vmatprep.subr.mxu0 0.0
      %906 = vmatpush1.msra.mxu0 0.0
      %907 = vmatprep.subr.mxu0 0.0
      %908 = vmatpush1.msra.mxu0 0.0
      %909 = vmatprep.subr.mxu0 0.0
      %910 = vmatpush1.msra.mxu0 0.0
      %911 = vmatprep.subr.mxu0 0.0
      %912 = vmatpush1.msra.mxu0 0.0
      %913 = vmatprep.subr.mxu0 0.0
      %914 = vmatpush1.msra.mxu0 0.0
      %915 = vmatprep.subr.mxu0 0.0
      %916 = vmatpush1.msra.mxu0 0.0
      %917 = vmatprep.subr.mxu0 0.0
      %918 = vmatpush1.msra.mxu0 0.0
      %919 = vmatprep.subr.mxu0 0.0
      %920 = vmatpush1.msra.mxu0 0.0
      %921 = vmatprep.subr.mxu0 0.0
      %922 = vmatpush1.msra.mxu0 0.0
      %923 = vmatprep.subr.mxu0 0.0
      %924 = vmatpush1.msra.mxu0 0.0
      %925 = vmatprep.subr.mxu0 0.0
      %926 = vmatpush1.msra.mxu0 0.0
      %927 = vmatprep.subr.mxu0 0.0
      %928 = vmatpush1.msra.mxu0 0.0
      %929 = vmatprep.subr.mxu0 0.0
      %930 = vmatpush1.msra.mxu0 0.0
      %931 = vmatprep.subr.mxu0 0.0
      %932 = vmatpush1.msra.mxu0 0.0
      %933 = vmatprep.subr.mxu0 0.0
      %934 = vmatpush1.msra.mxu0 0.0
      %935 = vmatprep.subr.mxu0 0.0
      %936 = vmatpush1.msra.mxu0 0.0
      %937 = vmatprep.subr.mxu0 0.0
      %938 = vmatpush1.msra.mxu0 0.0
      %939 = vmatprep.subr.mxu0 0.0
      %940 = vmatpush1.msra.mxu0 0.0
      %941 = vmatprep.subr.mxu0 0.0
      %942 = vmatpush1.msra.mxu0 0.0
      %943 = vmatprep.subr.mxu0 0.0
      %944 = vmatpush1.msra.mxu0 0.0
      %945 = vmatprep.mubr.f32.mxu0 0.0
      %946 = vmatmul.mubr.f32.gmra.mrb[0].mxu0 %v877
      %v947 = vpop.f32.mrb[0].mxu0
      %v948 = vadd.f32 0.0, %v947
      %v949 = vpop.f32.mrb[0].mxu0
      %950 = vdwg.mxu0
      %v951 = vld [vmem:[%s7 + $0x8] sm:$0xff]
      %v953 = vsel %vm601, %v948, 0
      %955 = vmatprep.subr.mxu0 0.0
      %956 = vmatpush1.msra.mxu0 %v951
      %957 = vmatprep.subr.mxu0 0.0
      %958 = vmatpush1.msra.mxu0 0.0
      %959 = vmatprep.subr.mxu0 0.0
      %960 = vmatpush1.msra.mxu0 0.0
      %961 = vmatprep.subr.mxu0 0.0
      %962 = vmatpush1.msra.mxu0 0.0
      %963 = vmatprep.subr.mxu0 0.0
      %964 = vmatpush1.msra.mxu0 0.0
      %965 = vmatprep.subr.mxu0 0.0
      %966 = vmatpush1.msra.mxu0 0.0
      %967 = vmatprep.subr.mxu0 0.0
      %968 = vmatpush1.msra.mxu0 0.0
      %969 = vmatprep.subr.mxu0 0.0
      %970 = vmatpush1.msra.mxu0 0.0
      %971 = vmatprep.subr.mxu0 0.0
      %972 = vmatpush1.msra.mxu0 0.0
      %973 = vmatprep.subr.mxu0 0.0
      %974 = vmatpush1.msra.mxu0 0.0
      %975 = vmatprep.subr.mxu0 0.0
      %976 = vmatpush1.msra.mxu0 0.0
      %977 = vmatprep.subr.mxu0 0.0
      %978 = vmatpush1.msra.mxu0 0.0
      %979 = vmatprep.subr.mxu0 0.0
      %980 = vmatpush1.msra.mxu0 0.0
      %981 = vmatprep.subr.mxu0 0.0
      %982 = vmatpush1.msra.mxu0 0.0
      %983 = vmatprep.subr.mxu0 0.0
      %984 = vmatpush1.msra.mxu0 0.0
      %985 = vmatprep.subr.mxu0 0.0
      %986 = vmatpush1.msra.mxu0 0.0
      %987 = vmatprep.subr.mxu0 0.0
      %988 = vmatpush1.msra.mxu0 0.0
      %989 = vmatprep.subr.mxu0 0.0
      %990 = vmatpush1.msra.mxu0 0.0
      %991 = vmatprep.subr.mxu0 0.0
      %992 = vmatpush1.msra.mxu0 0.0
      %993 = vmatprep.subr.mxu0 0.0
      %994 = vmatpush1.msra.mxu0 0.0
      %995 = vmatprep.subr.mxu0 0.0
      %996 = vmatpush1.msra.mxu0 0.0
      %997 = vmatprep.subr.mxu0 0.0
      %998 = vmatpush1.msra.mxu0 0.0
      %999 = vmatprep.subr.mxu0 0.0
      %1000 = vmatpush1.msra.mxu0 0.0
      %1001 = vmatprep.subr.mxu0 0.0
      %1002 = vmatpush1.msra.mxu0 0.0
      %1003 = vmatprep.subr.mxu0 0.0
      %1004 = vmatpush1.msra.mxu0 0.0
      %1005 = vmatprep.subr.mxu0 0.0
      %1006 = vmatpush1.msra.mxu0 0.0
      %1007 = vmatprep.subr.mxu0 0.0
      %1008 = vmatpush1.msra.mxu0 0.0
      %1009 = vmatprep.subr.mxu0 0.0
      %1010 = vmatpush1.msra.mxu0 0.0
      %1011 = vmatprep.subr.mxu0 0.0
      %1012 = vmatpush1.msra.mxu0 0.0
      %1013 = vmatprep.subr.mxu0 0.0
      %1014 = vmatpush1.msra.mxu0 0.0
      %1015 = vmatprep.subr.mxu0 0.0
      %1016 = vmatpush1.msra.mxu0 0.0
      %1017 = vmatprep.subr.mxu0 0.0
      %1018 = vmatpush1.msra.mxu0 0.0
      %1019 = vmatprep.mubr.f32.mxu0 0.0
      %1020 = vmatmul.mubr.f32.gmra.mrb[0].mxu0 %v953
      %v1021 = vpop.f32.mrb[0].mxu0
      %v1022 = vadd.f32 0.0, %v1021
      %v1023 = vpop.f32.mrb[0].mxu0
      %1024 = vdwg.mxu0
      %v1026 = vsel %vm601, %v773, 0
      %1028 = vmatprep.subr.mxu0 0.0
      %1029 = vmatpush1.msra.mxu0 %v776
      %1030 = vmatprep.subr.mxu0 0.0
      %1031 = vmatpush1.msra.mxu0 0.0
      %1032 = vmatprep.subr.mxu0 0.0
      %1033 = vmatpush1.msra.mxu0 0.0
      %1034 = vmatprep.subr.mxu0 0.0
      %1035 = vmatpush1.msra.mxu0 0.0
      %1036 = vmatprep.subr.mxu0 0.0
      %1037 = vmatpush1.msra.mxu0 0.0
      %1038 = vmatprep.subr.mxu0 0.0
      %1039 = vmatpush1.msra.mxu0 0.0
      %1040 = vmatprep.subr.mxu0 0.0
      %1041 = vmatpush1.msra.mxu0 0.0
      %1042 = vmatprep.subr.mxu0 0.0
      %1043 = vmatpush1.msra.mxu0 0.0
      %1044 = vmatprep.subr.mxu0 0.0
      %1045 = vmatpush1.msra.mxu0 0.0
      %1046 = vmatprep.subr.mxu0 0.0
      %1047 = vmatpush1.msra.mxu0 0.0
      %1048 = vmatprep.subr.mxu0 0.0
      %1049 = vmatpush1.msra.mxu0 0.0
      %1050 = vmatprep.subr.mxu0 0.0
      %1051 = vmatpush1.msra.mxu0 0.0
      %1052 = vmatprep.subr.mxu0 0.0
      %1053 = vmatpush1.msra.mxu0 0.0
      %1054 = vmatprep.subr.mxu0 0.0
      %1055 = vmatpush1.msra.mxu0 0.0
      %1056 = vmatprep.subr.mxu0 0.0
      %1057 = vmatpush1.msra.mxu0 0.0
      %1058 = vmatprep.subr.mxu0 0.0
      %1059 = vmatpush1.msra.mxu0 0.0
      %1060 = vmatprep.subr.mxu0 0.0
      %1061 = vmatpush1.msra.mxu0 0.0
      %1062 = vmatprep.subr.mxu0 0.0
      %1063 = vmatpush1.msra.mxu0 0.0
      %1064 = vmatprep.subr.mxu0 0.0
      %1065 = vmatpush1.msra.mxu0 0.0
      %1066 = vmatprep.subr.mxu0 0.0
      %1067 = vmatpush1.msra.mxu0 0.0
      %1068 = vmatprep.subr.mxu0 0.0
      %1069 = vmatpush1.msra.mxu0 0.0
      %1070 = vmatprep.subr.mxu0 0.0
      %1071 = vmatpush1.msra.mxu0 0.0
      %1072 = vmatprep.subr.mxu0 0.0
      %1073 = vmatpush1.msra.mxu0 0.0
      %1074 = vmatprep.subr.mxu0 0.0
      %1075 = vmatpush1.msra.mxu0 0.0
      %1076 = vmatprep.subr.mxu0 0.0
      %1077 = vmatpush1.msra.mxu0 0.0
      %1078 = vmatprep.subr.mxu0 0.0
      %1079 = vmatpush1.msra.mxu0 0.0
      %1080 = vmatprep.subr.mxu0 0.0
      %1081 = vmatpush1.msra.mxu0 0.0
      %1082 = vmatprep.subr.mxu0 0.0
      %1083 = vmatpush1.msra.mxu0 0.0
      %1084 = vmatprep.subr.mxu0 0.0
      %1085 = vmatpush1.msra.mxu0 0.0
      %1086 = vmatprep.subr.mxu0 0.0
      %1087 = vmatpush1.msra.mxu0 0.0
      %1088 = vmatprep.subr.mxu0 0.0
      %1089 = vmatpush1.msra.mxu0 0.0
      %1090 = vmatprep.subr.mxu0 0.0
      %1091 = vmatpush1.msra.mxu0 0.0
      %1092 = vmatprep.mubr.f32.mxu0 0.0
      %1093 = vmatmul.mubr.f32.gmra.mrb[0].mxu0 %v1026
      %v1094 = vpop.f32.mrb[0].mxu0
      %v1095 = vadd.f32 %v1022, %v1094
      %v1096 = vpop.f32.mrb[0].mxu0
      %1097 = vdwg.mxu0
      %1098 = vrot.lane.b32.xlu0 %v600, 112
      %v1099 = vpop.permute.xlu0 %1098
      %1100 = vrot.lane.b32.xlu0 %v592, 112
      %v1101 = vpop.permute.xlu0 %1100
      %1102 = vrot.lane.b32.xlu0 %v597, 112
      %v1103 = vpop.permute.xlu0 %1102
      %v1104 = vsel %vm601, %v1099, 0
      %v1106 = vsel %vm601, %v1101, 0
      %v1108 = vsel %vm601, %v1103, 0
      %1110 = vmatprep.subr.mxu0 0.0
      %1111 = vmatpush1.xpose.msra.mxu0 %v1106
      %1112 = vmatprep.subr.mxu0 0.0
      %1113 = vmatpush1.xpose.msra.mxu0 %v1108
      %1114 = vmatprep.subr.mxu0 0.0
      %1115 = vmatpush1.xpose.msra.mxu0 0.0
      %1116 = vmatprep.subr.mxu0 0.0
      %1117 = vmatpush1.xpose.msra.mxu0 0.0
      %1118 = vmatprep.subr.mxu0 0.0
      %1119 = vmatpush1.xpose.msra.mxu0 0.0
      %1120 = vmatprep.subr.mxu0 0.0
      %1121 = vmatpush1.xpose.msra.mxu0 0.0
      %1122 = vmatprep.subr.mxu0 0.0
      %1123 = vmatpush1.xpose.msra.mxu0 0.0
      %1124 = vmatprep.subr.mxu0 0.0
      %1125 = vmatpush1.xpose.msra.mxu0 0.0
      %1126 = vmatprep.subr.mxu0 0.0
      %1127 = vmatpush1.xpose.msra.mxu0 0.0
      %1128 = vmatprep.subr.mxu0 0.0
      %1129 = vmatpush1.xpose.msra.mxu0 0.0
      %1130 = vmatprep.subr.mxu0 0.0
      %1131 = vmatpush1.xpose.msra.mxu0 0.0
      %1132 = vmatprep.subr.mxu0 0.0
      %1133 = vmatpush1.xpose.msra.mxu0 0.0
      %1134 = vmatprep.subr.mxu0 0.0
      %1135 = vmatpush1.xpose.msra.mxu0 0.0
      %1136 = vmatprep.subr.mxu0 0.0
      %1137 = vmatpush1.xpose.msra.mxu0 0.0
      %1138 = vmatprep.subr.mxu0 0.0
      %1139 = vmatpush1.xpose.msra.mxu0 0.0
      %1140 = vmatprep.subr.mxu0 0.0
      %1141 = vmatpush1.xpose.msra.mxu0 0.0
      %1142 = vmatprep.subr.mxu0 0.0
      %1143 = vmatpush1.xpose.msra.mxu0 0.0
      %1144 = vmatprep.subr.mxu0 0.0
      %1145 = vmatpush1.xpose.msra.mxu0 0.0
      %1146 = vmatprep.subr.mxu0 0.0
      %1147 = vmatpush1.xpose.msra.mxu0 0.0
      %1148 = vmatprep.subr.mxu0 0.0
      %1149 = vmatpush1.xpose.msra.mxu0 0.0
      %1150 = vmatprep.subr.mxu0 0.0
      %1151 = vmatpush1.xpose.msra.mxu0 0.0
      %1152 = vmatprep.subr.mxu0 0.0
      %1153 = vmatpush1.xpose.msra.mxu0 0.0
      %1154 = vmatprep.subr.mxu0 0.0
      %1155 = vmatpush1.xpose.msra.mxu0 0.0
      %1156 = vmatprep.subr.mxu0 0.0
      %1157 = vmatpush1.xpose.msra.mxu0 0.0
      %1158 = vmatprep.subr.mxu0 0.0
      %1159 = vmatpush1.xpose.msra.mxu0 0.0
      %1160 = vmatprep.subr.mxu0 0.0
      %1161 = vmatpush1.xpose.msra.mxu0 0.0
      %1162 = vmatprep.subr.mxu0 0.0
      %1163 = vmatpush1.xpose.msra.mxu0 0.0
      %1164 = vmatprep.subr.mxu0 0.0
      %1165 = vmatpush1.xpose.msra.mxu0 0.0
      %1166 = vmatprep.subr.mxu0 0.0
      %1167 = vmatpush1.xpose.msra.mxu0 0.0
      %1168 = vmatprep.subr.mxu0 0.0
      %1169 = vmatpush1.xpose.msra.mxu0 0.0
      %1170 = vmatprep.subr.mxu0 0.0
      %1171 = vmatpush1.xpose.msra.mxu0 0.0
      %1172 = vmatprep.subr.mxu0 0.0
      %1173 = vmatpush1.xpose.msra.mxu0 0.0
      %1174 = vmatprep.mubr.f32.mxu0 0.0
      %1175 = vmatmul.mubr.f32.gmra.mrb[0].mxu0 %v1104
      %v1176 = vpop.f32.mrb[0].mxu0
      %v1177 = vadd.f32 0.0, %v1176
      %v1178 = vpop.f32.mrb[0].mxu0
      %1179 = vdwg.mxu0
      %v1180 = vsel %vm681, %v1177, -1e+09
      %v1181 = vsel %vm683, %v1180, -inf
      %1182 = vmax.xlane.f32.xlu0 %v1181
      %v1183 = vpop.xlane.xlu0 %1182
      %v1184 = vsub.f32 %v1180, %v1183
      %v1185 = vmul.f32 %v1184, 1.442695
      %v1186 = vpow.pop %v1185
      %v1187 = vsel %vm683, %v1186, 0.0
      %1188 = vadd.xlane.f32.xlu0 %v1187
      %v1189 = vpop.xlane.xlu0 %1188
      %v1190 = vrcp.pop %v1189
      %v1191 = vmul.f32 %v1186, %v1190
      %1192 = vrot.lane.b32.xlu0 %v592, 80
      %v1193 = vpop.permute.xlu0 %1192
      %1194 = vrot.lane.b32.xlu0 %v597, 80
      %v1195 = vpop.permute.xlu0 %1194
      %v1198 = vsel %vm683, %v1191, 0
      %v1200 = vsel %vm703, %v1195, 0
      %1202 = vmatprep.subr.mxu0 0.0
      %1203 = vmatpush1.msra.mxu0 %v1193
      %1204 = vmatprep.subr.mxu0 0.0
      %1205 = vmatpush1.msra.mxu0 %v1200
      %1206 = vmatprep.subr.mxu0 0.0
      %1207 = vmatpush1.msra.mxu0 0.0
      %1208 = vmatprep.subr.mxu0 0.0
      %1209 = vmatpush1.msra.mxu0 0.0
      %1210 = vmatprep.subr.mxu0 0.0
      %1211 = vmatpush1.msra.mxu0 0.0
      %1212 = vmatprep.subr.mxu0 0.0
      %1213 = vmatpush1.msra.mxu0 0.0
      %1214 = vmatprep.subr.mxu0 0.0
      %1215 = vmatpush1.msra.mxu0 0.0
      %1216 = vmatprep.subr.mxu0 0.0
      %1217 = vmatpush1.msra.mxu0 0.0
      %1218 = vmatprep.subr.mxu0 0.0
      %1219 = vmatpush1.msra.mxu0 0.0
      %1220 = vmatprep.subr.mxu0 0.0
      %1221 = vmatpush1.msra.mxu0 0.0
      %1222 = vmatprep.subr.mxu0 0.0
      %1223 = vmatpush1.msra.mxu0 0.0
      %1224 = vmatprep.subr.mxu0 0.0
      %1225 = vmatpush1.msra.mxu0 0.0
      %1226 = vmatprep.subr.mxu0 0.0
      %1227 = vmatpush1.msra.mxu0 0.0
      %1228 = vmatprep.subr.mxu0 0.0
      %1229 = vmatpush1.msra.mxu0 0.0
      %1230 = vmatprep.subr.mxu0 0.0
      %1231 = vmatpush1.msra.mxu0 0.0
      %1232 = vmatprep.subr.mxu0 0.0
      %1233 = vmatpush1.msra.mxu0 0.0
      %1234 = vmatprep.subr.mxu0 0.0
      %1235 = vmatpush1.msra.mxu0 0.0
      %1236 = vmatprep.subr.mxu0 0.0
      %1237 = vmatpush1.msra.mxu0 0.0
      %1238 = vmatprep.subr.mxu0 0.0
      %1239 = vmatpush1.msra.mxu0 0.0
      %1240 = vmatprep.subr.mxu0 0.0
      %1241 = vmatpush1.msra.mxu0 0.0
      %1242 = vmatprep.subr.mxu0 0.0
      %1243 = vmatpush1.msra.mxu0 0.0
      %1244 = vmatprep.subr.mxu0 0.0
      %1245 = vmatpush1.msra.mxu0 0.0
      %1246 = vmatprep.subr.mxu0 0.0
      %1247 = vmatpush1.msra.mxu0 0.0
      %1248 = vmatprep.subr.mxu0 0.0
      %1249 = vmatpush1.msra.mxu0 0.0
      %1250 = vmatprep.subr.mxu0 0.0
      %1251 = vmatpush1.msra.mxu0 0.0
      %1252 = vmatprep.subr.mxu0 0.0
      %1253 = vmatpush1.msra.mxu0 0.0
      %1254 = vmatprep.subr.mxu0 0.0
      %1255 = vmatpush1.msra.mxu0 0.0
      %1256 = vmatprep.subr.mxu0 0.0
      %1257 = vmatpush1.msra.mxu0 0.0
      %1258 = vmatprep.subr.mxu0 0.0
      %1259 = vmatpush1.msra.mxu0 0.0
      %1260 = vmatprep.subr.mxu0 0.0
      %1261 = vmatpush1.msra.mxu0 0.0
      %1262 = vmatprep.subr.mxu0 0.0
      %1263 = vmatpush1.msra.mxu0 0.0
      %1264 = vmatprep.subr.mxu0 0.0
      %1265 = vmatpush1.msra.mxu0 0.0
      %1266 = vmatprep.mubr.f32.mxu0 0.0
      %1267 = vmatmul.mubr.f32.gmra.mrb[0].mxu0 %v1198
      %v1268 = vpop.f32.mrb[0].mxu0
      %v1269 = vadd.f32 0.0, %v1268
      %v1270 = vpop.f32.mrb[0].mxu0
      %1271 = vdwg.mxu0
      %v1272 = vld [vmem:[%s7 + $0x10] sm:$0xff]
      %v1274 = vsel %vm601, %v1269, 0
      %1276 = vmatprep.subr.mxu0 0.0
      %1277 = vmatpush1.msra.mxu0 %v1272
      %1278 = vmatprep.subr.mxu0 0.0
      %1279 = vmatpush1.msra.mxu0 0.0
      %1280 = vmatprep.subr.mxu0 0.0
      %1281 = vmatpush1.msra.mxu0 0.0
      %1282 = vmatprep.subr.mxu0 0.0
      %1283 = vmatpush1.msra.mxu0 0.0
      %1284 = vmatprep.subr.mxu0 0.0
      %1285 = vmatpush1.msra.mxu0 0.0
      %1286 = vmatprep.subr.mxu0 0.0
      %1287 = vmatpush1.msra.mxu0 0.0
      %1288 = vmatprep.subr.mxu0 0.0
      %1289 = vmatpush1.msra.mxu0 0.0
      %1290 = vmatprep.subr.mxu0 0.0
      %1291 = vmatpush1.msra.mxu0 0.0
      %1292 = vmatprep.subr.mxu0 0.0
      %1293 = vmatpush1.msra.mxu0 0.0
      %1294 = vmatprep.subr.mxu0 0.0
      %1295 = vmatpush1.msra.mxu0 0.0
      %1296 = vmatprep.subr.mxu0 0.0
      %1297 = vmatpush1.msra.mxu0 0.0
      %1298 = vmatprep.subr.mxu0 0.0
      %1299 = vmatpush1.msra.mxu0 0.0
      %1300 = vmatprep.subr.mxu0 0.0
      %1301 = vmatpush1.msra.mxu0 0.0
      %1302 = vmatprep.subr.mxu0 0.0
      %1303 = vmatpush1.msra.mxu0 0.0
      %1304 = vmatprep.subr.mxu0 0.0
      %1305 = vmatpush1.msra.mxu0 0.0
      %1306 = vmatprep.subr.mxu0 0.0
      %1307 = vmatpush1.msra.mxu0 0.0
      %1308 = vmatprep.subr.mxu0 0.0
      %1309 = vmatpush1.msra.mxu0 0.0
      %1310 = vmatprep.subr.mxu0 0.0
      %1311 = vmatpush1.msra.mxu0 0.0
      %1312 = vmatprep.subr.mxu0 0.0
      %1313 = vmatpush1.msra.mxu0 0.0
      %1314 = vmatprep.subr.mxu0 0.0
      %1315 = vmatpush1.msra.mxu0 0.0
      %1316 = vmatprep.subr.mxu0 0.0
      %1317 = vmatpush1.msra.mxu0 0.0
      %1318 = vmatprep.subr.mxu0 0.0
      %1319 = vmatpush1.msra.mxu0 0.0
      %1320 = vmatprep.subr.mxu0 0.0
      %1321 = vmatpush1.msra.mxu0 0.0
      %1322 = vmatprep.subr.mxu0 0.0
      %1323 = vmatpush1.msra.mxu0 0.0
      %1324 = vmatprep.subr.mxu0 0.0
      %1325 = vmatpush1.msra.mxu0 0.0
      %1326 = vmatprep.subr.mxu0 0.0
      %1327 = vmatpush1.msra.mxu0 0.0
      %1328 = vmatprep.subr.mxu0 0.0
      %1329 = vmatpush1.msra.mxu0 0.0
      %1330 = vmatprep.subr.mxu0 0.0
      %1331 = vmatpush1.msra.mxu0 0.0
      %1332 = vmatprep.subr.mxu0 0.0
      %1333 = vmatpush1.msra.mxu0 0.0
      %1334 = vmatprep.subr.mxu0 0.0
      %1335 = vmatpush1.msra.mxu0 0.0
      %1336 = vmatprep.subr.mxu0 0.0
      %1337 = vmatpush1.msra.mxu0 0.0
      %1338 = vmatprep.subr.mxu0 0.0
      %1339 = vmatpush1.msra.mxu0 0.0
      %1340 = vmatprep.mubr.f32.mxu0 0.0
      %1341 = vmatmul.mubr.f32.gmra.mrb[0].mxu0 %v1274
      %v1342 = vpop.f32.mrb[0].mxu0
      %v1343 = vadd.f32 0.0, %v1342
      %v1344 = vpop.f32.mrb[0].mxu0
      %1345 = vdwg.mxu0
      %v1346 = vadd.f32 %v1095, %v1343
      %1347 = vrot.lane.b32.xlu0 %v600, 104
      %v1348 = vpop.permute.xlu0 %1347
      %1349 = vrot.lane.b32.xlu0 %v592, 104
      %v1350 = vpop.permute.xlu0 %1349
      %1351 = vrot.lane.b32.xlu0 %v597, 104
      %v1352 = vpop.permute.xlu0 %1351
      %v1353 = vsel %vm601, %v1348, 0
      %v1355 = vsel %vm601, %v1350, 0
      %v1357 = vsel %vm601, %v1352, 0
      %1359 = vmatprep.subr.mxu0 0.0
      %1360 = vmatpush1.xpose.msra.mxu0 %v1355
      %1361 = vmatprep.subr.mxu0 0.0
      %1362 = vmatpush1.xpose.msra.mxu0 %v1357
      %1363 = vmatprep.subr.mxu0 0.0
      %1364 = vmatpush1.xpose.msra.mxu0 0.0
      %1365 = vmatprep.subr.mxu0 0.0
      %1366 = vmatpush1.xpose.msra.mxu0 0.0
      %1367 = vmatprep.subr.mxu0 0.0
      %1368 = vmatpush1.xpose.msra.mxu0 0.0
      %1369 = vmatprep.subr.mxu0 0.0
      %1370 = vmatpush1.xpose.msra.mxu0 0.0
      %1371 = vmatprep.subr.mxu0 0.0
      %1372 = vmatpush1.xpose.msra.mxu0 0.0
      %1373 = vmatprep.subr.mxu0 0.0
      %1374 = vmatpush1.xpose.msra.mxu0 0.0
      %1375 = vmatprep.subr.mxu0 0.0
      %1376 = vmatpush1.xpose.msra.mxu0 0.0
      %1377 = vmatprep.subr.mxu0 0.0
      %1378 = vmatpush1.xpose.msra.mxu0 0.0
      %1379 = vmatprep.subr.mxu0 0.0
      %1380 = vmatpush1.xpose.msra.mxu0 0.0
      %1381 = vmatprep.subr.mxu0 0.0
      %1382 = vmatpush1.xpose.msra.mxu0 0.0
      %1383 = vmatprep.subr.mxu0 0.0
      %1384 = vmatpush1.xpose.msra.mxu0 0.0
      %1385 = vmatprep.subr.mxu0 0.0
      %1386 = vmatpush1.xpose.msra.mxu0 0.0
      %1387 = vmatprep.subr.mxu0 0.0
      %1388 = vmatpush1.xpose.msra.mxu0 0.0
      %1389 = vmatprep.subr.mxu0 0.0
      %1390 = vmatpush1.xpose.msra.mxu0 0.0
      %1391 = vmatprep.subr.mxu0 0.0
      %1392 = vmatpush1.xpose.msra.mxu0 0.0
      %1393 = vmatprep.subr.mxu0 0.0
      %1394 = vmatpush1.xpose.msra.mxu0 0.0
      %1395 = vmatprep.subr.mxu0 0.0
      %1396 = vmatpush1.xpose.msra.mxu0 0.0
      %1397 = vmatprep.subr.mxu0 0.0
      %1398 = vmatpush1.xpose.msra.mxu0 0.0
      %1399 = vmatprep.subr.mxu0 0.0
      %1400 = vmatpush1.xpose.msra.mxu0 0.0
      %1401 = vmatprep.subr.mxu0 0.0
      %1402 = vmatpush1.xpose.msra.mxu0 0.0
      %1403 = vmatprep.subr.mxu0 0.0
      %1404 = vmatpush1.xpose.msra.mxu0 0.0
      %1405 = vmatprep.subr.mxu0 0.0
      %1406 = vmatpush1.xpose.msra.mxu0 0.0
      %1407 = vmatprep.subr.mxu0 0.0
      %1408 = vmatpush1.xpose.msra.mxu0 0.0
      %1409 = vmatprep.subr.mxu0 0.0
      %1410 = vmatpush1.xpose.msra.mxu0 0.0
      %1411 = vmatprep.subr.mxu0 0.0
      %1412 = vmatpush1.xpose.msra.mxu0 0.0
      %1413 = vmatprep.subr.mxu0 0.0
      %1414 = vmatpush1.xpose.msra.mxu0 0.0
      %1415 = vmatprep.subr.mxu0 0.0
      %1416 = vmatpush1.xpose.msra.mxu0 0.0
      %1417 = vmatprep.subr.mxu0 0.0
      %1418 = vmatpush1.xpose.msra.mxu0 0.0
      %1419 = vmatprep.subr.mxu0 0.0
      %1420 = vmatpush1.xpose.msra.mxu0 0.0
      %1421 = vmatprep.subr.mxu0 0.0
      %1422 = vmatpush1.xpose.msra.mxu0 0.0
      %1423 = vmatprep.mubr.f32.mxu0 0.0
      %1424 = vmatmul.mubr.f32.gmra.mrb[0].mxu0 %v1353
      %v1425 = vpop.f32.mrb[0].mxu0
      %v1426 = vadd.f32 0.0, %v1425
      %v1427 = vpop.f32.mrb[0].mxu0
      %1428 = vdwg.mxu0
      %v1429 = vsel %vm681, %v1426, -1e+09
      %v1430 = vsel %vm683, %v1429, -inf
      %1431 = vmax.xlane.f32.xlu0 %v1430
      %v1432 = vpop.xlane.xlu0 %1431
      %v1433 = vsub.f32 %v1429, %v1432
      %v1434 = vmul.f32 %v1433, 1.442695
      %v1435 = vpow.pop %v1434
      %v1436 = vsel %vm683, %v1435, 0.0
      %1437 = vadd.xlane.f32.xlu0 %v1436
      %v1438 = vpop.xlane.xlu0 %1437
      %v1439 = vrcp.pop %v1438
      %v1440 = vmul.f32 %v1435, %v1439
      %1441 = vrot.lane.b32.xlu0 %v592, 72
      %v1442 = vpop.permute.xlu0 %1441
      %1443 = vrot.lane.b32.xlu0 %v597, 72
      %v1444 = vpop.permute.xlu0 %1443
      %v1447 = vsel %vm683, %v1440, 0
      %v1449 = vsel %vm703, %v1444, 0
      %1451 = vmatprep.subr.mxu0 0.0
      %1452 = vmatpush1.msra.mxu0 %v1442
      %1453 = vmatprep.subr.mxu0 0.0
      %1454 = vmatpush1.msra.mxu0 %v1449
      %1455 = vmatprep.subr.mxu0 0.0
      %1456 = vmatpush1.msra.mxu0 0.0
      %1457 = vmatprep.subr.mxu0 0.0
      %1458 = vmatpush1.msra.mxu0 0.0
      %1459 = vmatprep.subr.mxu0 0.0
      %1460 = vmatpush1.msra.mxu0 0.0
      %1461 = vmatprep.subr.mxu0 0.0
      %1462 = vmatpush1.msra.mxu0 0.0
      %1463 = vmatprep.subr.mxu0 0.0
      %1464 = vmatpush1.msra.mxu0 0.0
      %1465 = vmatprep.subr.mxu0 0.0
      %1466 = vmatpush1.msra.mxu0 0.0
      %1467 = vmatprep.subr.mxu0 0.0
      %1468 = vmatpush1.msra.mxu0 0.0
      %1469 = vmatprep.subr.mxu0 0.0
      %1470 = vmatpush1.msra.mxu0 0.0
      %1471 = vmatprep.subr.mxu0 0.0
      %1472 = vmatpush1.msra.mxu0 0.0
      %1473 = vmatprep.subr.mxu0 0.0
      %1474 = vmatpush1.msra.mxu0 0.0
      %1475 = vmatprep.subr.mxu0 0.0
      %1476 = vmatpush1.msra.mxu0 0.0
      %1477 = vmatprep.subr.mxu0 0.0
      %1478 = vmatpush1.msra.mxu0 0.0
      %1479 = vmatprep.subr.mxu0 0.0
      %1480 = vmatpush1.msra.mxu0 0.0
      %1481 = vmatprep.subr.mxu0 0.0
      %1482 = vmatpush1.msra.mxu0 0.0
      %1483 = vmatprep.subr.mxu0 0.0
      %1484 = vmatpush1.msra.mxu0 0.0
      %1485 = vmatprep.subr.mxu0 0.0
      %1486 = vmatpush1.msra.mxu0 0.0
      %1487 = vmatprep.subr.mxu0 0.0
      %1488 = vmatpush1.msra.mxu0 0.0
      %1489 = vmatprep.subr.mxu0 0.0
      %1490 = vmatpush1.msra.mxu0 0.0
      %1491 = vmatprep.subr.mxu0 0.0
      %1492 = vmatpush1.msra.mxu0 0.0
      %1493 = vmatprep.subr.mxu0 0.0
      %1494 = vmatpush1.msra.mxu0 0.0
      %1495 = vmatprep.subr.mxu0 0.0
      %1496 = vmatpush1.msra.mxu0 0.0
      %1497 = vmatprep.subr.mxu0 0.0
      %1498 = vmatpush1.msra.mxu0 0.0
      %1499 = vmatprep.subr.mxu0 0.0
      %1500 = vmatpush1.msra.mxu0 0.0
      %1501 = vmatprep.subr.mxu0 0.0
      %1502 = vmatpush1.msra.mxu0 0.0
      %1503 = vmatprep.subr.mxu0 0.0
      %1504 = vmatpush1.msra.mxu0 0.0
      %1505 = vmatprep.subr.mxu0 0.0
      %1506 = vmatpush1.msra.mxu0 0.0
      %1507 = vmatprep.subr.mxu0 0.0
      %1508 = vmatpush1.msra.mxu0 0.0
      %1509 = vmatprep.subr.mxu0 0.0
      %1510 = vmatpush1.msra.mxu0 0.0
      %1511 = vmatprep.subr.mxu0 0.0
      %1512 = vmatpush1.msra.mxu0 0.0
      %1513 = vmatprep.subr.mxu0 0.0
      %1514 = vmatpush1.msra.mxu0 0.0
      %1515 = vmatprep.mubr.f32.mxu0 0.0
      %1516 = vmatmul.mubr.f32.gmra.mrb[0].mxu0 %v1447
      %v1517 = vpop.f32.mrb[0].mxu0
      %v1518 = vadd.f32 0.0, %v1517
      %v1519 = vpop.f32.mrb[0].mxu0
      %1520 = vdwg.mxu0
      %v1521 = vld [vmem:[%s7 + $0x18] sm:$0xff]
      %v1523 = vsel %vm601, %v1518, 0
      %1525 = vmatprep.subr.mxu0 0.0
      %1526 = vmatpush1.msra.mxu0 %v1521
      %1527 = vmatprep.subr.mxu0 0.0
      %1528 = vmatpush1.msra.mxu0 0.0
      %1529 = vmatprep.subr.mxu0 0.0
      %1530 = vmatpush1.msra.mxu0 0.0
      %1531 = vmatprep.subr.mxu0 0.0
      %1532 = vmatpush1.msra.mxu0 0.0
      %1533 = vmatprep.subr.mxu0 0.0
      %1534 = vmatpush1.msra.mxu0 0.0
      %1535 = vmatprep.subr.mxu0 0.0
      %1536 = vmatpush1.msra.mxu0 0.0
      %1537 = vmatprep.subr.mxu0 0.0
      %1538 = vmatpush1.msra.mxu0 0.0
      %1539 = vmatprep.subr.mxu0 0.0
      %1540 = vmatpush1.msra.mxu0 0.0
      %1541 = vmatprep.subr.mxu0 0.0
      %1542 = vmatpush1.msra.mxu0 0.0
      %1543 = vmatprep.subr.mxu0 0.0
      %1544 = vmatpush1.msra.mxu0 0.0
      %1545 = vmatprep.subr.mxu0 0.0
      %1546 = vmatpush1.msra.mxu0 0.0
      %1547 = vmatprep.subr.mxu0 0.0
      %1548 = vmatpush1.msra.mxu0 0.0
      %1549 = vmatprep.subr.mxu0 0.0
      %1550 = vmatpush1.msra.mxu0 0.0
      %1551 = vmatprep.subr.mxu0 0.0
      %1552 = vmatpush1.msra.mxu0 0.0
      %1553 = vmatprep.subr.mxu0 0.0
      %1554 = vmatpush1.msra.mxu0 0.0
      %1555 = vmatprep.subr.mxu0 0.0
      %1556 = vmatpush1.msra.mxu0 0.0
      %1557 = vmatprep.subr.mxu0 0.0
      %1558 = vmatpush1.msra.mxu0 0.0
      %1559 = vmatprep.subr.mxu0 0.0
      %1560 = vmatpush1.msra.mxu0 0.0
      %1561 = vmatprep.subr.mxu0 0.0
      %1562 = vmatpush1.msra.mxu0 0.0
      %1563 = vmatprep.subr.mxu0 0.0
      %1564 = vmatpush1.msra.mxu0 0.0
      %1565 = vmatprep.subr.mxu0 0.0
      %1566 = vmatpush1.msra.mxu0 0.0
      %1567 = vmatprep.subr.mxu0 0.0
      %1568 = vmatpush1.msra.mxu0 0.0
      %1569 = vmatprep.subr.mxu0 0.0
      %1570 = vmatpush1.msra.mxu0 0.0
      %1571 = vmatprep.subr.mxu0 0.0
      %1572 = vmatpush1.msra.mxu0 0.0
      %1573 = vmatprep.subr.mxu0 0.0
      %1574 = vmatpush1.msra.mxu0 0.0
      %1575 = vmatprep.subr.mxu0 0.0
      %1576 = vmatpush1.msra.mxu0 0.0
      %1577 = vmatprep.subr.mxu0 0.0
      %1578 = vmatpush1.msra.mxu0 0.0
      %1579 = vmatprep.subr.mxu0 0.0
      %1580 = vmatpush1.msra.mxu0 0.0
      %1581 = vmatprep.subr.mxu0 0.0
      %1582 = vmatpush1.msra.mxu0 0.0
      %1583 = vmatprep.subr.mxu0 0.0
      %1584 = vmatpush1.msra.mxu0 0.0
      %1585 = vmatprep.subr.mxu0 0.0
      %1586 = vmatpush1.msra.mxu0 0.0
      %1587 = vmatprep.subr.mxu0 0.0
      %1588 = vmatpush1.msra.mxu0 0.0
      %1589 = vmatprep.mubr.f32.mxu0 0.0
      %1590 = vmatmul.mubr.f32.gmra.mrb[0].mxu0 %v1523
      %v1591 = vpop.f32.mrb[0].mxu0
      %v1592 = vadd.f32 0.0, %v1591
      %v1593 = vpop.f32.mrb[0].mxu0
      %1594 = vdwg.mxu0
      %v1595 = vadd.f32 %v1346, %v1592
      %v1596 = vld [vmem:[%s8] sm:$0x1]
      %v1598 = vlaneseq
      %v1599 = vshrl.u32 %v1598, 7
      %v1600 = vsub.s32 0, %v1599
      %v1601 = vrot.slane %v1596, %v1600
      %v1603 = vadd.f32 %v1595, %v1601
      %v1604 = vadd.f32 %v419, %v1603
      %v1605 = vsel %vm434, %v1604, 0.0
      %1606 = vadd.xlane.f32.xlu0 %v1605
      %v1607 = vpop.xlane.xlu0 %1606
      %v1608 = vrcp.pop 32.0
      %v1609 = vmul.f32 %v1607, %v1608
      %v1610 = vsub.f32 %v1604, %v1609
      %v1611 = vmul.f32 %v1610, %v1610
      %v1612 = vsel %vm434, %v1611, 0.0
      %1613 = vadd.xlane.f32.xlu0 %v1612
      %v1614 = vpop.xlane.xlu0 %1613
      %v1615 = vmul.f32 %v1614, %v1608
      %v1616 = vadd.f32 %v1615, 1e-05
      %v1617 = vrsqrt.pop %v1616
      %v1618 = vmul.f32 %v1610, %v1617
      %v1619 = vld [vmem:[%s9] sm:$0x1]
      %v1621 = vlaneseq
      %v1622 = vshrl.u32 %v1621, 7
      %v1623 = vsub.s32 0, %v1622
      %v1624 = vrot.slane %v1619, %v1623
      %v1626 = vmul.f32 %v1618, %v1624
      %v1627 = vld [vmem:[%s10] sm:$0x1]
      %v1629 = vlaneseq
      %v1630 = vshrl.u32 %v1629, 7
      %v1631 = vsub.s32 0, %v1630
      %v1632 = vrot.slane %v1627, %v1631
      %v1634 = vadd.f32 %v1626, %v1632
      %1635 = vst.msk [vmem:[%s418] sm:$0xff] %vm434, %v1634
      %p1636 = scmp.lt.s32.totalorder %s22, 1
      %s1637 = scalar_select %p1636, %s22, 1
      %s1638 = smul.addr %s1637, 8
      %s1639 = scalar_lea.vmem %s11, %s1638
      // Predicated region
      $region65: #{decoder_forward.7} parent=63 // pred_check
        %p1640 = pneg %p286
      $region66: #{decoder_forward.7} parent=63 // pred_check_branch
        %1642 = sbr.rel (%p1640) target = $region68
      $region67: #{decoder_forward.7} parent=63 // pred_region
        _
      $region68: #{decoder_forward.7} parent=63 // pred_fallthru
        _
    $region64: #{decoder_forward.7} parent=5 // pred_fallthru
      _
    %p1643 = scmp.le.s32.totalorder 2, %s17
    // Predicated region
    $region69: #{decoder_forward.7} parent=5 // pred_check
      %p1644 = pneg %p1643
    $region70: #{decoder_forward.7} parent=5 // pred_check_branch
      %1646 = sbr.rel (%p1644) target = $region72
    $region71: #{decoder_forward.7} parent=5 // pred_region
      %s1647 = ssub.s32 %s17, 2
      // Predicated region
      $region73: #{decoder_forward.7} parent=71 // pred_check
        %p1648 = pneg %p292
      $region74: #{decoder_forward.7} parent=71 // pred_check_branch
        %1650 = sbr.rel (%p1648) target = $region76
      $region75: #{decoder_forward.7} parent=71 // pred_region
        %p1651 = scmp.lt.s32.totalorder %s23, 1
        %s1652 = scalar_select %p1651, %s23, 1
        %s1653 = smul.addr %s1652, 8
        %s1654 = scalar_lea.vmem %s11, %s1653
      $region76: #{decoder_forward.7} parent=71 // pred_fallthru
        _
    $region72: #{decoder_forward.7} parent=5 // pred_fallthru
      _
  $region6: #{decoder_forward.7} parent=0 // loop_footer
    %s21 = sadd.s32 1, %s17
  $region7: #{decoder_forward.7} parent=0 // loop_footer_branch
    %16 = sbr.rel target = $region3
  $region8: #{decoder_forward.7} parent=0 // loop_exit
    _

// kernel: decoder_forward.6
$region0: #{decoder_forward.6}
  #allocation0 [shape = 'u32[]', space=smem, size = 0x4, offset = 0x4, fixed_abs, tag = 'smem constant byte address 0x4 - core index']
  #allocation1 [shape = 'u32[144,128]{1,0:T(1,128)}', space=vmem, size = 0x12000, scoped, tag = 'internal scratch']
  %s0 = inlined_call_operand.vmem [shape: f32[2,8,32], index: 0, kind: input, shape index: {}, may-alias: {0,1}]
  %s1 = inlined_call_operand.vmem [shape: f32[2,8,32], index: 1, kind: input, shape index: {}, may-alias: {0,1}]
  %s2 = inlined_call_operand.vmem [shape: f32[2,8,8], index: 2, kind: input, shape index: {}]
  %s3 = inlined_call_operand.vmem [shape: f32[32,32], index: 3, kind: input, shape index: {}]
  %s4 = inlined_call_operand.vmem [shape: f32[1,32], index: 4, kind: input, shape index: {}]
  %s5 = inlined_call_operand.vmem [shape: f32[32,64], index: 5, kind: input, shape index: {}]
  %s6 = inlined_call_operand.vmem [shape: f32[1,64], index: 6, kind: input, shape index: {}]
  %s7 = inlined_call_operand.vmem [shape: f32[32,32], index: 7, kind: input, shape index: {}]
  %s8 = inlined_call_operand.vmem [shape: f32[1,32], index: 8, kind: input, shape index: {}]
  %s9 = inlined_call_operand.vmem [shape: f32[1,32], index: 9, kind: input, shape index: {}]
  %s10 = inlined_call_operand.vmem [shape: f32[1,32], index: 10, kind: input, shape index: {}]
  %s11 = inlined_call_operand.vmem [shape: f32[2,8,32], index: 11, kind: output, shape index: {}]
  %s12 = sld [smem:[#allocation0]]
  $region77: #{decoder_forward.6} parent=0
    _
  %s14 = ssub.s32 1, %s12
  %s15 = scalar_select 0, %s14, %s12
  loop: start=0, step=1, limit=4
  $region2: #{decoder_forward.6} parent=0 // loop_pre_header
    _
  $region3: #{decoder_forward.6} parent=0 // loop_header
    %s17 = sphi 0, %s21
    %p18 = scmp.ge.s32.totalorder %s17, 4
    %s27 = sphi 0, %s29
    %s30 = sphi 0, %s27
    %s31 = sphi 0, %s30
    %s47 = sphi 0, %s31
    %s53 = sphi 0, %s55
    %s56 = sphi 0, %s53
    %s57 = sphi 0, %s56
    %s73 = sphi 0, %s57
    %s79 = sphi 0, %s81
    %s82 = sphi 0, %s79
    %s83 = sphi 0, %s82
    %s99 = sphi 0, %s83
    %s103 = sphi 0, %s103
    %s105 = sphi 0, %s103
    %s106 = sphi 0, %s105
    %s120 = sphi 0, %s106
    %s124 = sphi 0, %s124
    %s126 = sphi 0, %s124
    %s127 = sphi 0, %s126
    %s141 = sphi 0, %s127
    %s145 = sphi 0, %s145
    %s147 = sphi 0, %s145
    %s148 = sphi 0, %s147
    %s162 = sphi 0, %s148
    %s166 = sphi 0, %s166
    %s168 = sphi 0, %s166
    %s169 = sphi 0, %s168
    %s183 = sphi 0, %s169
    %s187 = sphi 0, %s187
    %s189 = sphi 0, %s187
    %s190 = sphi 0, %s189
    %s204 = sphi 0, %s190
    %s208 = sphi 0, %s208
    %s210 = sphi 0, %s208
    %s211 = sphi 0, %s210
    %s225 = sphi 0, %s211
    %s229 = sphi 0, %s229
    %s231 = sphi 0, %s229
    %s232 = sphi 0, %s231
    %s246 = sphi 0, %s232
    %s250 = sphi 0, %s250
    %s252 = sphi 0, %s250
    %s253 = sphi 0, %s252
    %s267 = sphi 0, %s253
    %s273 = sphi 0, %s275
    %s276 = sphi 0, %s273
    %s277 = sphi 0, %s276
    %s293 = sphi 0, %s277
  $region4: #{decoder_forward.6} parent=0 // loop_header_branch
    %20 = sbr.rel (%p18) target = $region8
  $region5: #{decoder_forward.6} parent=0 // loop_body
    %s22 = ssub.s32 %s17, 1
    %s23 = ssub.s32 %s17, 2
    %s24 = sadd.s32 %s17, 1
    %s25 = ssub.s32 %s17, %s24
    %p26 = scmp.eq.s32.totalorder %s25, 0
    %s28 = sadd.s32 %s27, 1
    %s29 = scalar_select %p26, %s27, %s28
    %p32 = pneg %p26
    %p33 = scmp.eq.s32.totalorder %s17, 1
    %p34 = por %p32, %p33
    %p35 = scmp.ne.s32.totalorder %s27, %s30
    %p36 = scmp.eq.s32.totalorder %s17, 0
    %p37 = por %p35, %p36
    %p38 = scmp.ne.s32.totalorder %s27, %s30
    %p39 = scmp.eq.s32.totalorder %s22, 1
    %p40 = por %p38, %p39
    %p41 = scmp.ne.s32.totalorder %s30, %s31
    %p42 = scmp.eq.s32.totalorder %s22, 0
    %p43 = por %p41, %p42
    %p44 = scmp.ne.s32.totalorder %s30, %s31
    %p45 = scmp.eq.s32.totalorder %s23, 1
    %p46 = por %p44, %p45
    %p48 = scmp.ne.s32.totalorder %s31, %s47
    %p49 = scmp.eq.s32.totalorder %s23, 0
    %p50 = por %p48, %p49
    %s51 = ssub.s32 %s17, %s24
    %p52 = scmp.eq.s32.totalorder %s51, 0
    %s54 = sadd.s32 %s53, 1
    %s55 = scalar_select %p52, %s53, %s54
    %p58 = pneg %p52
    %p59 = scmp.eq.s32.totalorder %s17, 1
    %p60 = por %p58, %p59
    %p61 = scmp.ne.s32.totalorder %s53, %s56
    %p62 = scmp.eq.s32.totalorder %s17, 0
    %p63 = por %p61, %p62
    %p64 = scmp.ne.s32.totalorder %s53, %s56
    %p65 = scmp.eq.s32.totalorder %s22, 1
    %p66 = por %p64, %p65
    %p67 = scmp.ne.s32.totalorder %s56, %s57
    %p68 = scmp.eq.s32.totalorder %s22, 0
    %p69 = por %p67, %p68
    %p70 = scmp.ne.s32.totalorder %s56, %s57
    %p71 = scmp.eq.s32.totalorder %s23, 1
    %p72 = por %p70, %p71
    %p74 = scmp.ne.s32.totalorder %s57, %s73
    %p75 = scmp.eq.s32.totalorder %s23, 0
    %p76 = por %p74, %p75
    %s77 = ssub.s32 %s17, %s24
    %p78 = scmp.eq.s32.totalorder %s77, 0
    %s80 = sadd.s32 %s79, 1
    %s81 = scalar_select %p78, %s79, %s80
    %p84 = pneg %p78
    %p85 = scmp.eq.s32.totalorder %s17, 1
    %p86 = por %p84, %p85
    %p87 = scmp.ne.s32.totalorder %s79, %s82
    %p88 = scmp.eq.s32.totalorder %s17, 0
    %p89 = por %p87, %p88
    %p90 = scmp.ne.s32.totalorder %s79, %s82
    %p91 = scmp.eq.s32.totalorder %s22, 1
    %p92 = por %p90, %p91
    %p93 = scmp.ne.s32.totalorder %s82, %s83
    %p94 = scmp.eq.s32.totalorder %s22, 0
    %p95 = por %p93, %p94
    %p96 = scmp.ne.s32.totalorder %s82, %s83
    %p97 = scmp.eq.s32.totalorder %s23, 1
    %p98 = por %p96, %p97
    %p100 = scmp.ne.s32.totalorder %s83, %s99
    %p101 = scmp.eq.s32.totalorder %s23, 0
    %p102 = por %p100, %p101
    %s104 = sadd.s32 %s103, 1
    %p107 = scmp.eq.s32.totalorder %s17, 1
    %p108 = scmp.ne.s32.totalorder %s103, %s105
    %p109 = scmp.eq.s32.totalorder %s17, 0
    %p110 = por %p108, %p109
    %p111 = scmp.ne.s32.totalorder %s103, %s105
    %p112 = scmp.eq.s32.totalorder %s22, 1
    %p113 = por %p111, %p112
    %p114 = scmp.ne.s32.totalorder %s105, %s106
    %p115 = scmp.eq.s32.totalorder %s22, 0
    %p116 = por %p114, %p115
    %p117 = scmp.ne.s32.totalorder %s105, %s106
    %p118 = scmp.eq.s32.totalorder %s23, 1
    %p119 = por %p117, %p118
    %p121 = scmp.ne.s32.totalorder %s106, %s120
    %p122 = scmp.eq.s32.totalorder %s23, 0
    %p123 = por %p121, %p122
    %s125 = sadd.s32 %s124, 1
    %p128 = scmp.eq.s32.totalorder %s17, 1
    %p129 = scmp.ne.s32.totalorder %s124, %s126
    %p130 = scmp.eq.s32.totalorder %s17, 0
    %p131 = por %p129, %p130
    %p132 = scmp.ne.s32.totalorder %s124, %s126
    %p133 = scmp.eq.s32.totalorder %s22, 1
    %p134 = por %p132, %p133
    %p135 = scmp.ne.s32.totalorder %s126, %s127
    %p136 = scmp.eq.s32.totalorder %s22, 0
    %p137 = por %p135, %p136
    %p138 = scmp.ne.s32.totalorder %s126, %s127
    %p139 = scmp.eq.s32.totalorder %s23, 1
    %p140 = por %p138, %p139
    %p142 = scmp.ne.s32.totalorder %s127, %s141
    %p143 = scmp.eq.s32.totalorder %s23, 0
    %p144 = por %p142, %p143
    %s146 = sadd.s32 %s145, 1
    %p149 = scmp.eq.s32.totalorder %s17, 1
    %p150 = scmp.ne.s32.totalorder %s145, %s147
    %p151 = scmp.eq.s32.totalorder %s17, 0
    %p152 = por %p150, %p151
    %p153 = scmp.ne.s32.totalorder %s145, %s147
    %p154 = scmp.eq.s32.totalorder %s22, 1
    %p155 = por %p153, %p154
    %p156 = scmp.ne.s32.totalorder %s147, %s148
    %p157 = scmp.eq.s32.totalorder %s22, 0
    %p158 = por %p156, %p157
    %p159 = scmp.ne.s32.totalorder %s147, %s148
    %p160 = scmp.eq.s32.totalorder %s23, 1
    %p161 = por %p159, %p160
    %p163 = scmp.ne.s32.totalorder %s148, %s162
    %p164 = scmp.eq.s32.totalorder %s23, 0
    %p165 = por %p163, %p164
    %s167 = sadd.s32 %s166, 1
    %p170 = scmp.eq.s32.totalorder %s17, 1
    %p171 = scmp.ne.s32.totalorder %s166, %s168
    %p172 = scmp.eq.s32.totalorder %s17, 0
    %p173 = por %p171, %p172
    %p174 = scmp.ne.s32.totalorder %s166, %s168
    %p175 = scmp.eq.s32.totalorder %s22, 1
    %p176 = por %p174, %p175
    %p177 = scmp.ne.s32.totalorder %s168, %s169
    %p178 = scmp.eq.s32.totalorder %s22, 0
    %p179 = por %p177, %p178
    %p180 = scmp.ne.s32.totalorder %s168, %s169
    %p181 = scmp.eq.s32.totalorder %s23, 1
    %p182 = por %p180, %p181
    %p184 = scmp.ne.s32.totalorder %s169, %s183
    %p185 = scmp.eq.s32.totalorder %s23, 0
    %p186 = por %p184, %p185
    %s188 = sadd.s32 %s187, 1
    %p191 = scmp.eq.s32.totalorder %s17, 1
    %p192 = scmp.ne.s32.totalorder %s187, %s189
    %p193 = scmp.eq.s32.totalorder %s17, 0
    %p194 = por %p192, %p193
    %p195 = scmp.ne.s32.totalorder %s187, %s189
    %p196 = scmp.eq.s32.totalorder %s22, 1
    %p197 = por %p195, %p196
    %p198 = scmp.ne.s32.totalorder %s189, %s190
    %p199 = scmp.eq.s32.totalorder %s22, 0
    %p200 = por %p198, %p199
    %p201 = scmp.ne.s32.totalorder %s189, %s190
    %p202 = scmp.eq.s32.totalorder %s23, 1
    %p203 = por %p201, %p202
    %p205 = scmp.ne.s32.totalorder %s190, %s204
    %p206 = scmp.eq.s32.totalorder %s23, 0
    %p207 = por %p205, %p206
    %s209 = sadd.s32 %s208, 1
    %p212 = scmp.eq.s32.totalorder %s17, 1
    %p213 = scmp.ne.s32.totalorder %s208, %s210
    %p214 = scmp.eq.s32.totalorder %s17, 0
    %p215 = por %p213, %p214
    %p216 = scmp.ne.s32.totalorder %s208, %s210
    %p217 = scmp.eq.s32.totalorder %s22, 1
    %p218 = por %p216, %p217
    %p219 = scmp.ne.s32.totalorder %s210, %s211
    %p220 = scmp.eq.s32.totalorder %s22, 0
    %p221 = por %p219, %p220
    %p222 = scmp.ne.s32.totalorder %s210, %s211
    %p223 = scmp.eq.s32.totalorder %s23, 1
    %p224 = por %p222, %p223
    %p226 = scmp.ne.s32.totalorder %s211, %s225
    %p227 = scmp.eq.s32.totalorder %s23, 0
    %p228 = por %p226, %p227
    %s230 = sadd.s32 %s229, 1
    %p233 = scmp.eq.s32.totalorder %s17, 1
    %p234 = scmp.ne.s32.totalorder %s229, %s231
    %p235 = scmp.eq.s32.totalorder %s17, 0
    %p236 = por %p234, %p235
    %p237 = scmp.ne.s32.totalorder %s229, %s231
    %p238 = scmp.eq.s32.totalorder %s22, 1
    %p239 = por %p237, %p238
    %p240 = scmp.ne.s32.totalorder %s231, %s232
    %p241 = scmp.eq.s32.totalorder %s22, 0
    %p242 = por %p240, %p241
    %p243 = scmp.ne.s32.totalorder %s231, %s232
    %p244 = scmp.eq.s32.totalorder %s23, 1
    %p245 = por %p243, %p244
    %p247 = scmp.ne.s32.totalorder %s232, %s246
    %p248 = scmp.eq.s32.totalorder %s23, 0
    %p249 = por %p247, %p248
    %s251 = sadd.s32 %s250, 1
    %p254 = scmp.eq.s32.totalorder %s17, 1
    %p255 = scmp.ne.s32.totalorder %s250, %s252
    %p256 = scmp.eq.s32.totalorder %s17, 0
    %p257 = por %p255, %p256
    %p258 = scmp.ne.s32.totalorder %s250, %s252
    %p259 = scmp.eq.s32.totalorder %s22, 1
    %p260 = por %p258, %p259
    %p261 = scmp.ne.s32.totalorder %s252, %s253
    %p262 = scmp.eq.s32.totalorder %s22, 0
    %p263 = por %p261, %p262
    %p264 = scmp.ne.s32.totalorder %s252, %s253
    %p265 = scmp.eq.s32.totalorder %s23, 1
    %p266 = por %p264, %p265
    %p268 = scmp.ne.s32.totalorder %s253, %s267
    %p269 = scmp.eq.s32.totalorder %s23, 0
    %p270 = por %p268, %p269
    %s271 = ssub.s32 %s17, %s24
    %p272 = scmp.eq.s32.totalorder %s271, 0
    %s274 = sadd.s32 %s273, 1
    %s275 = scalar_select %p272, %s273, %s274
    %p278 = pneg %p272
    %p279 = scmp.eq.s32.totalorder %s17, 1
    %p280 = por %p278, %p279
    %p281 = scmp.ne.s32.totalorder %s273, %s276
    %p282 = scmp.eq.s32.totalorder %s17, 0
    %p283 = por %p281, %p282
    %p284 = scmp.ne.s32.totalorder %s273, %s276
    %p285 = scmp.eq.s32.totalorder %s22, 1
    %p286 = por %p284, %p285
    %p287 = scmp.ne.s32.totalorder %s276, %s277
    %p288 = scmp.eq.s32.totalorder %s22, 0
    %p289 = por %p287, %p288
    %p290 = scmp.ne.s32.totalorder %s276, %s277
    %p291 = scmp.eq.s32.totalorder %s23, 1
    %p292 = por %p290, %p291
    %p294 = scmp.ne.s32.totalorder %s277, %s293
    %p295 = scmp.eq.s32.totalorder %s23, 0
    %p296 = por %p294, %p295
    %p297 = scmp.le.s32.totalorder 1, %s17
    %p298 = scmp.lt.s32.totalorder %s17, 3
    %p299 = pnand %p297, %p298
    %p300 = pneg %p299
    // Predicated region
    $region9: #{decoder_forward.6} parent=5 // pred_check
      _
    $region10: #{decoder_forward.6} parent=5 // pred_check_branch
      %302 = sbr.rel (%p299) target = $region12
    $region11: #{decoder_forward.6} parent=5 // pred_region
      %s303 = ssub.s32 %s17, 1
      // Predicated region
      $region13: #{decoder_forward.6} parent=11 // pred_check
        %p304 = pneg %p116
      $region14: #{decoder_forward.6} parent=11 // pred_check_branch
        %306 = sbr.rel (%p304) target = $region16
      $region15: #{decoder_forward.6} parent=11 // pred_region
        _
      $region16: #{decoder_forward.6} parent=11 // pred_fallthru
        _
      // Predicated region
      $region17: #{decoder_forward.6} parent=11 // pred_check
        %p307 = pneg %p137
      $region18: #{decoder_forward.6} parent=11 // pred_check_branch
        %309 = sbr.rel (%p307) target = $region20
      $region19: #{decoder_forward.6} parent=11 // pred_region
        _
      $region20: #{decoder_forward.6} parent=11 // pred_fallthru
        _
      // Predicated region
      $region21: #{decoder_forward.6} parent=11 // pred_check
        %p310 = pneg %p158
      $region22: #{decoder_forward.6} parent=11 // pred_check_branch
        %312 = sbr.rel (%p310) target = $region24
      $region23: #{decoder_forward.6} parent=11 // pred_region
        _
      $region24: #{decoder_forward.6} parent=11 // pred_fallthru
        _
      // Predicated region
      $region25: #{decoder_forward.6} parent=11 // pred_check
        %p313 = pneg %p179
      $region26: #{decoder_forward.6} parent=11 // pred_check_branch
        %315 = sbr.rel (%p313) target = $region28
      $region27: #{decoder_forward.6} parent=11 // pred_region
        _
      $region28: #{decoder_forward.6} parent=11 // pred_fallthru
        _
      // Predicated region
      $region29: #{decoder_forward.6} parent=11 // pred_check
        %p316 = pneg %p200
      $region30: #{decoder_forward.6} parent=11 // pred_check_branch
        %318 = sbr.rel (%p316) target = $region32
      $region31: #{decoder_forward.6} parent=11 // pred_region
        _
      $region32: #{decoder_forward.6} parent=11 // pred_fallthru
        _
      // Predicated region
      $region33: #{decoder_forward.6} parent=11 // pred_check
        %p319 = pneg %p221
      $region34: #{decoder_forward.6} parent=11 // pred_check_branch
        %321 = sbr.rel (%p319) target = $region36
      $region35: #{decoder_forward.6} parent=11 // pred_region
        _
      $region36: #{decoder_forward.6} parent=11 // pred_fallthru
        _
      // Predicated region
      $region37: #{decoder_forward.6} parent=11 // pred_check
        %p322 = pneg %p242
      $region38: #{decoder_forward.6} parent=11 // pred_check_branch
        %324 = sbr.rel (%p322) target = $region40
      $region39: #{decoder_forward.6} parent=11 // pred_region
        _
      $region40: #{decoder_forward.6} parent=11 // pred_fallthru
        _
      // Predicated region
      $region41: #{decoder_forward.6} parent=11 // pred_check
        %p325 = pneg %p263
      $region42: #{decoder_forward.6} parent=11 // pred_check_branch
        %327 = sbr.rel (%p325) target = $region44
      $region43: #{decoder_forward.6} parent=11 // pred_region
        _
      $region44: #{decoder_forward.6} parent=11 // pred_fallthru
        _
    $region12: #{decoder_forward.6} parent=5 // pred_fallthru
      _
    %p328 = scmp.lt.s32.totalorder %s17, 2
    // Predicated region
    $region45: #{decoder_forward.6} parent=5 // pred_check
      %p329 = pneg %p328
    $region46: #{decoder_forward.6} parent=5 // pred_check_branch
      %331 = sbr.rel (%p329) target = $region48
    $region47: #{decoder_forward.6} parent=5 // pred_region
      // Predicated region
      $region49: #{decoder_forward.6} parent=47 // pred_check
        %p332 = pneg %p37
      $region50: #{decoder_forward.6} parent=47 // pred_check_branch
        %334 = sbr.rel (%p332) target = $region52
      $region51: #{decoder_forward.6} parent=47 // pred_region
        %p335 = scmp.lt.s32.totalorder %s17, 1
        %s336 = scalar_select %p335, %s17, 1
        %s337 = smul.addr %s336, 8
        %s338 = scalar_lea.vmem %s0, %s337
      $region52: #{decoder_forward.6} parent=47 // pred_fallthru
        _
      // Predicated region
      $region53: #{decoder_forward.6} parent=47 // pred_check
        %p339 = pneg %p63
      $region54: #{decoder_forward.6} parent=47 // pred_check_branch
        %341 = sbr.rel (%p339) target = $region56
      $region55: #{decoder_forward.6} parent=47 // pred_region
        %p342 = scmp.lt.s32.totalorder %s17, 1
        %s343 = scalar_select %p342, %s17, 1
        %s344 = smul.addr %s343, 8
        %s345 = scalar_lea.vmem %s1, %s344
      $region56: #{decoder_forward.6} parent=47 // pred_fallthru
        _
      // Predicated region
      $region57: #{decoder_forward.6} parent=47 // pred_check
        %p346 = pneg %p89
      $region58: #{decoder_forward.6} parent=47 // pred_check_branch
        %348 = sbr.rel (%p346) target = $region60
      $region59: #{decoder_forward.6} parent=47 // pred_region
        %p349 = scmp.lt.s32.totalorder %s17, 1
        %s350 = scalar_select %p349, %s17, 1
        %s351 = smul.addr %s350, 8
        %s352 = scalar_lea.vmem %s2, %s351
      $region60: #{decoder_forward.6} parent=47 // pred_fallthru
        _
    $region48: #{decoder_forward.6} parent=5 // pred_fallthru
      _
    %p353 = scmp.le.s32.totalorder 1, %s17
    %p354 = scmp.lt.s32.totalorder %s17, 3
    %p355 = pnand %p353, %p354
    %p356 = pneg %p355
    // Predicated region
    $region61: #{decoder_forward.6} parent=5 // pred_check
      _
    $region62: #{decoder_forward.6} parent=5 // pred_check_branch
      %358 = sbr.rel (%p355) target = $region64
    $region63: #{decoder_forward.6} parent=5 // pred_region
      %s359 = ssub.s32 %s17, 1
      %p360 = scmp.lt.s32.totalorder %s22, 1
      %s361 = scalar_select %p360, %s22, 1
      %s362 = smul.addr %s361, 8
      %s363 = scalar_lea.vmem %s0, %s362
      %p364 = pneg %p43
      %p365 = pneg %p40
      %p366 = scmp.lt.s32.totalorder %s22, 1
      %s367 = scalar_select %p366, %s22, 1
      %s368 = smul.addr %s367, 8
      %s369 = scalar_lea.vmem %s1, %s368
      %p370 = pneg %p69
      %p371 = pneg %p66
      %p372 = scmp.lt.s32.totalorder %s22, 1
      %s373 = scalar_select %p372, %s22, 1
      %s374 = smul.addr %s373, 8
      %s375 = scalar_lea.vmem %s2, %s374
      %p376 = pneg %p95
      %p377 = pneg %p92
      %p378 = pneg %p116
      %p379 = pneg %p113
      %p380 = pneg %p137
      %p381 = pneg %p134
      %p382 = pneg %p158
      %p383 = pneg %p155
      %p384 = pneg %p179
      %p385 = pneg %p176
      %p386 = pneg %p200
      %p387 = pneg %p197
      %p388 = pneg %p221
      %p389 = pneg %p218
      %p390 = pneg %p242
      %p391 = pneg %p239
      %p392 = pneg %p263
      %p393 = pneg %p260
      %p394 = pneg %p289
      %p395 = pneg %p286
      %p396 = scmp.lt.s32.totalorder %s22, 1
      %s397 = scalar_select %p396, %s22, 1
      %s398 = smul.addr %s397, 8
      %s399 = scalar_lea.vmem %s11, %s398
      %p400 = scmp.lt.s32.totalorder %s22, 1
      %s401 = scalar_select %p400, %s22, 1
      %s402 = smul.addr %s401, 8
      %s403 = scalar_lea.vmem %s0, %s402
      %p404 = scmp.lt.s32.totalorder %s22, 1
      %s405 = scalar_select %p404, %s22, 1
      %s406 = smul.addr %s405, 8
      %s407 = scalar_lea.vmem %s1, %s406
      %p408 = scmp.lt.s32.totalorder %s22, 1
      %s409 = scalar_select %p408, %s22, 1
      %s410 = smul.addr %s409, 8
      %s411 = scalar_lea.vmem %s2, %s410
      %p412 = scmp.lt.s32.totalorder %s22, 1
      %s413 = scalar_select %p412, %s22, 1
      %s414 = smul.addr %s413, 8
      %s415 = scalar_lea.vmem %s11, %s414
      %v416 = vld [vmem:[%s403] sm:$0xff]
      %v417 = vld [vmem:[%s407] sm:$0xff]
      %v418 = vld [vmem:[%s411] sm:$0xff]
      %v419 = vld [vmem:[%s3] sm:$0xff]
      %v420 = vld [vmem:[%s3 + $0x8] sm:$0xff]
      %v421 = vld [vmem:[%s3 + $0x10] sm:$0xff]
      %v422 = vld [vmem:[%s3 + $0x18] sm:$0xff]
      %v423 = vld [vmem:[%s4] sm:$0x1]
      %v425 = vlaneseq
      %v426 = vshrl.u32 %v425, 7
      %v427 = vsub.s32 0, %v426
      %v428 = vrot.slane %v423, %v427
      %vm430 = vcmask 261120
      %v432 = vsel %vm430, %v416, 0
      %434 = vmatprep.subr.mxu0 0.0
      %435 = vmatpush1.msra.mxu0 %v419
      %436 = vmatprep.subr.mxu0 0.0
      %437 = vmatpush1.msra.mxu0 %v420
      %438 = vmatprep.subr.mxu0 0.0
      %439 = vmatpush1.msra.mxu0 %v421
      %440 = vmatprep.subr.mxu0 0.0
      %441 = vmatpush1.msra.mxu0 %v422
      %442 = vmatprep.subr.mxu0 0.0
      %443 = vmatpush1.msra.mxu0 0.0
      %444 = vmatprep.subr.mxu0 0.0
      %445 = vmatpush1.msra.mxu0 0.0
      %446 = vmatprep.subr.mxu0 0.0
      %447 = vmatpush1.msra.mxu0 0.0
      %448 = vmatprep.subr.mxu0 0.0
      %449 = vmatpush1.msra.mxu0 0.0
      %450 = vmatprep.subr.mxu0 0.0
      %451 = vmatpush1.msra.mxu0 0.0
      %452 = vmatprep.subr.mxu0 0.0
      %453 = vmatpush1.msra.mxu0 0.0
      %454 = vmatprep.subr.mxu0 0.0
      %455 = vmatpush1.msra.mxu0 0.0
      %456 = vmatprep.subr.mxu0 0.0
      %457 = vmatpush1.msra.mxu0 0.0
      %458 = vmatprep.subr.mxu0 0.0
      %459 = vmatpush1.msra.mxu0 0.0
      %460 = vmatprep.subr.mxu0 0.0
      %461 = vmatpush1.msra.mxu0 0.0
      %462 = vmatprep.subr.mxu0 0.0
      %463 = vmatpush1.msra.mxu0 0.0
      %464 = vmatprep.subr.mxu0 0.0
      %465 = vmatpush1.msra.mxu0 0.0
      %466 = vmatprep.subr.mxu0 0.0
      %467 = vmatpush1.msra.mxu0 0.0
      %468 = vmatprep.subr.mxu0 0.0
      %469 = vmatpush1.msra.mxu0 0.0
      %470 = vmatprep.subr.mxu0 0.0
      %471 = vmatpush1.msra.mxu0 0.0
      %472 = vmatprep.subr.mxu0 0.0
      %473 = vmatpush1.msra.mxu0 0.0
      %474 = vmatprep.subr.mxu0 0.0
      %475 = vmatpush1.msra.mxu0 0.0
      %476 = vmatprep.subr.mxu0 0.0
      %477 = vmatpush1.msra.mxu0 0.0
      %478 = vmatprep.subr.mxu0 0.0
      %479 = vmatpush1.msra.mxu0 0.0
      %480 = vmatprep.subr.mxu0 0.0
      %481 = vmatpush1.msra.mxu0 0.0
      %482 = vmatprep.subr.mxu0 0.0
      %483 = vmatpush1.msra.mxu0 0.0
      %484 = vmatprep.subr.mxu0 0.0
      %485 = vmatpush1.msra.mxu0 0.0
      %486 = vmatprep.subr.mxu0 0.0
      %487 = vmatpush1.msra.mxu0 0.0
      %488 = vmatprep.subr.mxu0 0.0
      %489 = vmatpush1.msra.mxu0 0.0
      %490 = vmatprep.subr.mxu0 0.0
      %491 = vmatpush1.msra.mxu0 0.0
      %492 = vmatprep.subr.mxu0 0.0
      %493 = vmatpush1.msra.mxu0 0.0
      %494 = vmatprep.subr.mxu0 0.0
      %495 = vmatpush1.msra.mxu0 0.0
      %496 = vmatprep.subr.mxu0 0.0
      %497 = vmatpush1.msra.mxu0 0.0
      %498 = vmatprep.mubr.f32.mxu0 0.0
      %499 = vmatmul.mubr.f32.gmra.mrb[0].mxu0 %v432
      %v500 = vpop.f32.mrb[0].mxu0
      %v501 = vadd.f32 %v428, %v500
      %v502 = vpop.f32.mrb[0].mxu0
      %503 = vdwg.mxu0
      %v504 = vld [vmem:[%s5] sm:$0xff]
      %v505 = vld [vmem:[%s5 + $0x8] sm:$0xff]
      %v506 = vld [vmem:[%s5 + $0x10] sm:$0xff]
      %v507 = vld [vmem:[%s5 + $0x18] sm:$0xff]
      %v508 = vld [vmem:[%s6] sm:$0x1]
      %v510 = vlaneseq
      %v511 = vshrl.u32 %v510, 7
      %v512 = vsub.s32 0, %v511
      %v513 = vrot.slane %v508, %v512
      %v516 = vsel %vm430, %v417, 0
      %518 = vmatprep.subr.mxu0 0.0
      %519 = vmatpush1.msra.mxu0 %v504
      %520 = vmatprep.subr.mxu0 0.0
      %521 = vmatpush1.msra.mxu0 %v505
      %522 = vmatprep.subr.mxu0 0.0
      %523 = vmatpush1.msra.mxu0 %v506
      %524 = vmatprep.subr.mxu0 0.0
      %525 = vmatpush1.msra.mxu0 %v507
      %526 = vmatprep.subr.mxu0 0.0
      %527 = vmatpush1.msra.mxu0 0.0
      %528 = vmatprep.subr.mxu0 0.0
      %529 = vmatpush1.msra.mxu0 0.0
      %530 = vmatprep.subr.mxu0 0.0
      %531 = vmatpush1.msra.mxu0 0.0
      %532 = vmatprep.subr.mxu0 0.0
      %533 = vmatpush1.msra.mxu0 0.0
      %534 = vmatprep.subr.mxu0 0.0
      %535 = vmatpush1.msra.mxu0 0.0
      %536 = vmatprep.subr.mxu0 0.0
      %537 = vmatpush1.msra.mxu0 0.0
      %538 = vmatprep.subr.mxu0 0.0
      %539 = vmatpush1.msra.mxu0 0.0
      %540 = vmatprep.subr.mxu0 0.0
      %541 = vmatpush1.msra.mxu0 0.0
      %542 = vmatprep.subr.mxu0 0.0
      %543 = vmatpush1.msra.mxu0 0.0
      %544 = vmatprep.subr.mxu0 0.0
      %545 = vmatpush1.msra.mxu0 0.0
      %546 = vmatprep.subr.mxu0 0.0
      %547 = vmatpush1.msra.mxu0 0.0
      %548 = vmatprep.subr.mxu0 0.0
      %549 = vmatpush1.msra.mxu0 0.0
      %550 = vmatprep.subr.mxu0 0.0
      %551 = vmatpush1.msra.mxu0 0.0
      %552 = vmatprep.subr.mxu0 0.0
      %553 = vmatpush1.msra.mxu0 0.0
      %554 = vmatprep.subr.mxu0 0.0
      %555 = vmatpush1.msra.mxu0 0.0
      %556 = vmatprep.subr.mxu0 0.0
      %557 = vmatpush1.msra.mxu0 0.0
      %558 = vmatprep.subr.mxu0 0.0
      %559 = vmatpush1.msra.mxu0 0.0
      %560 = vmatprep.subr.mxu0 0.0
      %561 = vmatpush1.msra.mxu0 0.0
      %562 = vmatprep.subr.mxu0 0.0
      %563 = vmatpush1.msra.mxu0 0.0
      %564 = vmatprep.subr.mxu0 0.0
      %565 = vmatpush1.msra.mxu0 0.0
      %566 = vmatprep.subr.mxu0 0.0
      %567 = vmatpush1.msra.mxu0 0.0
      %568 = vmatprep.subr.mxu0 0.0
      %569 = vmatpush1.msra.mxu0 0.0
      %570 = vmatprep.subr.mxu0 0.0
      %571 = vmatpush1.msra.mxu0 0.0
      %572 = vmatprep.subr.mxu0 0.0
      %573 = vmatpush1.msra.mxu0 0.0
      %574 = vmatprep.subr.mxu0 0.0
      %575 = vmatpush1.msra.mxu0 0.0
      %576 = vmatprep.subr.mxu0 0.0
      %577 = vmatpush1.msra.mxu0 0.0
      %578 = vmatprep.subr.mxu0 0.0
      %579 = vmatpush1.msra.mxu0 0.0
      %580 = vmatprep.subr.mxu0 0.0
      %581 = vmatpush1.msra.mxu0 0.0
      %582 = vmatprep.mubr.f32.mxu0 0.0
      %583 = vmatmul.mubr.f32.gmra.mrb[0].mxu0 %v516
      %v584 = vpop.f32.mrb[0].mxu0
      %v585 = vadd.f32 %v513, %v584
      %v586 = vpop.f32.mrb[0].mxu0
      %587 = vdwg.mxu0
      %v588 = vmul.f32 %v501, 0.35355338
      %vm589 = vcmask 64512
      %v591 = vsel %vm589, %v588, 0
      %v594 = vsel %vm589, %v585, 0
      %596 = vmatprep.subr.mxu0 0.0
      %597 = vmatpush1.xpose.msra.mxu0 %v594
      %598 = vmatprep.subr.mxu0 0.0
      %599 = vmatpush1.xpose.msra.mxu0 0.0
      %600 = vmatprep.subr.mxu0 0.0
      %601 = vmatpush1.xpose.msra.mxu0 0.0
      %602 = vmatprep.subr.mxu0 0.0
      %603 = vmatpush1.xpose.msra.mxu0 0.0
      %604 = vmatprep.subr.mxu0 0.0
      %605 = vmatpush1.xpose.msra.mxu0 0.0
      %606 = vmatprep.subr.mxu0 0.0
      %607 = vmatpush1.xpose.msra.mxu0 0.0
      %608 = vmatprep.subr.mxu0 0.0
      %609 = vmatpush1.xpose.msra.mxu0 0.0
      %610 = vmatprep.subr.mxu0 0.0
      %611 = vmatpush1.xpose.msra.mxu0 0.0
      %612 = vmatprep.subr.mxu0 0.0
      %613 = vmatpush1.xpose.msra.mxu0 0.0
      %614 = vmatprep.subr.mxu0 0.0
      %615 = vmatpush1.xpose.msra.mxu0 0.0
      %616 = vmatprep.subr.mxu0 0.0
      %617 = vmatpush1.xpose.msra.mxu0 0.0
      %618 = vmatprep.subr.mxu0 0.0
      %619 = vmatpush1.xpose.msra.mxu0 0.0
      %620 = vmatprep.subr.mxu0 0.0
      %621 = vmatpush1.xpose.msra.mxu0 0.0
      %622 = vmatprep.subr.mxu0 0.0
      %623 = vmatpush1.xpose.msra.mxu0 0.0
      %624 = vmatprep.subr.mxu0 0.0
      %625 = vmatpush1.xpose.msra.mxu0 0.0
      %626 = vmatprep.subr.mxu0 0.0
      %627 = vmatpush1.xpose.msra.mxu0 0.0
      %628 = vmatprep.subr.mxu0 0.0
      %629 = vmatpush1.xpose.msra.mxu0 0.0
      %630 = vmatprep.subr.mxu0 0.0
      %631 = vmatpush1.xpose.msra.mxu0 0.0
      %632 = vmatprep.subr.mxu0 0.0
      %633 = vmatpush1.xpose.msra.mxu0 0.0
      %634 = vmatprep.subr.mxu0 0.0
      %635 = vmatpush1.xpose.msra.mxu0 0.0
      %636 = vmatprep.subr.mxu0 0.0
      %637 = vmatpush1.xpose.msra.mxu0 0.0
      %638 = vmatprep.subr.mxu0 0.0
      %639 = vmatpush1.xpose.msra.mxu0 0.0
      %640 = vmatprep.subr.mxu0 0.0
      %641 = vmatpush1.xpose.msra.mxu0 0.0
      %642 = vmatprep.subr.mxu0 0.0
      %643 = vmatpush1.xpose.msra.mxu0 0.0
      %644 = vmatprep.subr.mxu0 0.0
      %645 = vmatpush1.xpose.msra.mxu0 0.0
      %646 = vmatprep.subr.mxu0 0.0
      %647 = vmatpush1.xpose.msra.mxu0 0.0
      %648 = vmatprep.subr.mxu0 0.0
      %649 = vmatpush1.xpose.msra.mxu0 0.0
      %650 = vmatprep.subr.mxu0 0.0
      %651 = vmatpush1.xpose.msra.mxu0 0.0
      %652 = vmatprep.subr.mxu0 0.0
      %653 = vmatpush1.xpose.msra.mxu0 0.0
      %654 = vmatprep.subr.mxu0 0.0
      %655 = vmatpush1.xpose.msra.mxu0 0.0
      %656 = vmatprep.subr.mxu0 0.0
      %657 = vmatpush1.xpose.msra.mxu0 0.0
      %658 = vmatprep.subr.mxu0 0.0
      %659 = vmatpush1.xpose.msra.mxu0 0.0
      %660 = vmatprep.mubr.f32.mxu0 0.0
      %661 = vmatmul.mubr.f32.gmra.mrb[0].mxu0 %v591
      %v662 = vpop.f32.mrb[0].mxu0
      %v663 = vadd.f32 0.0, %v662
      %v664 = vpop.f32.mrb[0].mxu0
      %665 = vdwg.mxu0
      %vm666 = vcmp.gt.f32.partialorder %v418, 0.0
      %v667 = vsel %vm666, %v663, -1e+09
      %v668 = vsel %vm589, %v667, -inf
      %669 = vmax.xlane.f32.xlu0 %v668
      %v670 = vpop.xlane.xlu0 %669
      %v671 = vsub.f32 %v667, %v670
      %v672 = vmul.f32 %v671, 1.442695
      %v673 = vpow.pop %v672
      %v674 = vsel %vm589, %v673, 0.0
      %675 = vadd.xlane.f32.xlu0 %v674
      %v676 = vpop.xlane.xlu0 %675
      %v677 = vrcp.pop %v676
      %v678 = vmul.f32 %v673, %v677
      %679 = vrot.lane.b32.xlu0 %v585, 96
      %v680 = vpop.permute.xlu0 %679
      %v683 = vsel %vm589, %v678, 0
      %685 = vmatprep.subr.mxu0 0.0
      %686 = vmatpush1.msra.mxu0 %v680
      %687 = vmatprep.subr.mxu0 0.0
      %688 = vmatpush1.msra.mxu0 0.0
      %689 = vmatprep.subr.mxu0 0.0
      %690 = vmatpush1.msra.mxu0 0.0
      %691 = vmatprep.subr.mxu0 0.0
      %692 = vmatpush1.msra.mxu0 0.0
      %693 = vmatprep.subr.mxu0 0.0
      %694 = vmatpush1.msra.mxu0 0.0
      %695 = vmatprep.subr.mxu0 0.0
      %696 = vmatpush1.msra.mxu0 0.0
      %697 = vmatprep.subr.mxu0 0.0
      %698 = vmatpush1.msra.mxu0 0.0
      %699 = vmatprep.subr.mxu0 0.0
      %700 = vmatpush1.msra.mxu0 0.0
      %701 = vmatprep.subr.mxu0 0.0
      %702 = vmatpush1.msra.mxu0 0.0
      %703 = vmatprep.subr.mxu0 0.0
      %704 = vmatpush1.msra.mxu0 0.0
      %705 = vmatprep.subr.mxu0 0.0
      %706 = vmatpush1.msra.mxu0 0.0
      %707 = vmatprep.subr.mxu0 0.0
      %708 = vmatpush1.msra.mxu0 0.0
      %709 = vmatprep.subr.mxu0 0.0
      %710 = vmatpush1.msra.mxu0 0.0
      %711 = vmatprep.subr.mxu0 0.0
      %712 = vmatpush1.msra.mxu0 0.0
      %713 = vmatprep.subr.mxu0 0.0
      %714 = vmatpush1.msra.mxu0 0.0
      %715 = vmatprep.subr.mxu0 0.0
      %716 = vmatpush1.msra.mxu0 0.0
      %717 = vmatprep.subr.mxu0 0.0
      %718 = vmatpush1.msra.mxu0 0.0
      %719 = vmatprep.subr.mxu0 0.0
      %720 = vmatpush1.msra.mxu0 0.0
      %721 = vmatprep.subr.mxu0 0.0
      %722 = vmatpush1.msra.mxu0 0.0
      %723 = vmatprep.subr.mxu0 0.0
      %724 = vmatpush1.msra.mxu0 0.0
      %725 = vmatprep.subr.mxu0 0.0
      %726 = vmatpush1.msra.mxu0 0.0
      %727 = vmatprep.subr.mxu0 0.0
      %728 = vmatpush1.msra.mxu0 0.0
      %729 = vmatprep.subr.mxu0 0.0
      %730 = vmatpush1.msra.mxu0 0.0
      %731 = vmatprep.subr.mxu0 0.0
      %732 = vmatpush1.msra.mxu0 0.0
      %733 = vmatprep.subr.mxu0 0.0
      %734 = vmatpush1.msra.mxu0 0.0
      %735 = vmatprep.subr.mxu0 0.0
      %736 = vmatpush1.msra.mxu0 0.0
      %737 = vmatprep.subr.mxu0 0.0
      %738 = vmatpush1.msra.mxu0 0.0
      %739 = vmatprep.subr.mxu0 0.0
      %740 = vmatpush1.msra.mxu0 0.0
      %741 = vmatprep.subr.mxu0 0.0
      %742 = vmatpush1.msra.mxu0 0.0
      %743 = vmatprep.subr.mxu0 0.0
      %744 = vmatpush1.msra.mxu0 0.0
      %745 = vmatprep.subr.mxu0 0.0
      %746 = vmatpush1.msra.mxu0 0.0
      %747 = vmatprep.subr.mxu0 0.0
      %748 = vmatpush1.msra.mxu0 0.0
      %749 = vmatprep.mubr.f32.mxu0 0.0
      %750 = vmatmul.mubr.f32.gmra.mrb[0].mxu0 %v683
      %v751 = vpop.f32.mrb[0].mxu0
      %v752 = vadd.f32 0.0, %v751
      %v753 = vpop.f32.mrb[0].mxu0
      %754 = vdwg.mxu0
      %v755 = vld [vmem:[%s7] sm:$0xff]
      %756 = vrot.lane.b32.xlu0 %v588, 120
      %v757 = vpop.permute.xlu0 %756
      %758 = vrot.lane.b32.xlu0 %v585, 120
      %v759 = vpop.permute.xlu0 %758
      %v760 = vsel %vm589, %v757, 0
      %v762 = vsel %vm589, %v759, 0
      %764 = vmatprep.subr.mxu0 0.0
      %765 = vmatpush1.xpose.msra.mxu0 %v762
      %766 = vmatprep.subr.mxu0 0.0
      %767 = vmatpush1.xpose.msra.mxu0 0.0
      %768 = vmatprep.subr.mxu0 0.0
      %769 = vmatpush1.xpose.msra.mxu0 0.0
      %770 = vmatprep.subr.mxu0 0.0
      %771 = vmatpush1.xpose.msra.mxu0 0.0
      %772 = vmatprep.subr.mxu0 0.0
      %773 = vmatpush1.xpose.msra.mxu0 0.0
      %774 = vmatprep.subr.mxu0 0.0
      %775 = vmatpush1.xpose.msra.mxu0 0.0
      %776 = vmatprep.subr.mxu0 0.0
      %777 = vmatpush1.xpose.msra.mxu0 0.0
      %778 = vmatprep.subr.mxu0 0.0
      %779 = vmatpush1.xpose.msra.mxu0 0.0
      %780 = vmatprep.subr.mxu0 0.0
      %781 = vmatpush1.xpose.msra.mxu0 0.0
      %782 = vmatprep.subr.mxu0 0.0
      %783 = vmatpush1.xpose.msra.mxu0 0.0
      %784 = vmatprep.subr.mxu0 0.0
      %785 = vmatpush1.xpose.msra.mxu0 0.0
      %786 = vmatprep.subr.mxu0 0.0
      %787 = vmatpush1.xpose.msra.mxu0 0.0
      %788 = vmatprep.subr.mxu0 0.0
      %789 = vmatpush1.xpose.msra.mxu0 0.0
      %790 = vmatprep.subr.mxu0 0.0
      %791 = vmatpush1.xpose.msra.mxu0 0.0
      %792 = vmatprep.subr.mxu0 0.0
      %793 = vmatpush1.xpose.msra.mxu0 0.0
      %794 = vmatprep.subr.mxu0 0.0
      %795 = vmatpush1.xpose.msra.mxu0 0.0
      %796 = vmatprep.subr.mxu0 0.0
      %797 = vmatpush1.xpose.msra.mxu0 0.0
      %798 = vmatprep.subr.mxu0 0.0
      %799 = vmatpush1.xpose.msra.mxu0 0.0
      %800 = vmatprep.subr.mxu0 0.0
      %801 = vmatpush1.xpose.msra.mxu0 0.0
      %802 = vmatprep.subr.mxu0 0.0
      %803 = vmatpush1.xpose.msra.mxu0 0.0
      %804 = vmatprep.subr.mxu0 0.0
      %805 = vmatpush1.xpose.msra.mxu0 0.0
      %806 = vmatprep.subr.mxu0 0.0
      %807 = vmatpush1.xpose.msra.mxu0 0.0
      %808 = vmatprep.subr.mxu0 0.0
      %809 = vmatpush1.xpose.msra.mxu0 0.0
      %810 = vmatprep.subr.mxu0 0.0
      %811 = vmatpush1.xpose.msra.mxu0 0.0
      %812 = vmatprep.subr.mxu0 0.0
      %813 = vmatpush1.xpose.msra.mxu0 0.0
      %814 = vmatprep.subr.mxu0 0.0
      %815 = vmatpush1.xpose.msra.mxu0 0.0
      %816 = vmatprep.subr.mxu0 0.0
      %817 = vmatpush1.xpose.msra.mxu0 0.0
      %818 = vmatprep.subr.mxu0 0.0
      %819 = vmatpush1.xpose.msra.mxu0 0.0
      %820 = vmatprep.subr.mxu0 0.0
      %821 = vmatpush1.xpose.msra.mxu0 0.0
      %822 = vmatprep.subr.mxu0 0.0
      %823 = vmatpush1.xpose.msra.mxu0 0.0
      %824 = vmatprep.subr.mxu0 0.0
      %825 = vmatpush1.xpose.msra.mxu0 0.0
      %826 = vmatprep.subr.mxu0 0.0
      %827 = vmatpush1.xpose.msra.mxu0 0.0
      %828 = vmatprep.mubr.f32.mxu0 0.0
      %829 = vmatmul.mubr.f32.gmra.mrb[0].mxu0 %v760
      %v830 = vpop.f32.mrb[0].mxu0
      %v831 = vadd.f32 0.0, %v830
      %v832 = vpop.f32.mrb[0].mxu0
      %833 = vdwg.mxu0
      %v834 = vsel %vm666, %v831, -1e+09
      %v835 = vsel %vm589, %v834, -inf
      %836 = vmax.xlane.f32.xlu0 %v835
      %v837 = vpop.xlane.xlu0 %836
      %v838 = vsub.f32 %v834, %v837
      %v839 = vmul.f32 %v838, 1.442695
      %v840 = vpow.pop %v839
      %v841 = vsel %vm589, %v840, 0.0
      %842 = vadd.xlane.f32.xlu0 %v841
      %v843 = vpop.xlane.xlu0 %842
      %v844 = vrcp.pop %v843
      %v845 = vmul.f32 %v840, %v844
      %846 = vrot.lane.b32.xlu0 %v585, 88
      %v847 = vpop.permute.xlu0 %846
      %v850 = vsel %vm589, %v845, 0
      %852 = vmatprep.subr.mxu0 0.0
      %853 = vmatpush1.msra.mxu0 %v847
      %854 = vmatprep.subr.mxu0 0.0
      %855 = vmatpush1.msra.mxu0 0.0
      %856 = vmatprep.subr.mxu0 0.0
      %857 = vmatpush1.msra.mxu0 0.0
      %858 = vmatprep.subr.mxu0 0.0
      %859 = vmatpush1.msra.mxu0 0.0
      %860 = vmatprep.subr.mxu0 0.0
      %861 = vmatpush1.msra.mxu0 0.0
      %862 = vmatprep.subr.mxu0 0.0
      %863 = vmatpush1.msra.mxu0 0.0
      %864 = vmatprep.subr.mxu0 0.0
      %865 = vmatpush1.msra.mxu0 0.0
      %866 = vmatprep.subr.mxu0 0.0
      %867 = vmatpush1.msra.mxu0 0.0
      %868 = vmatprep.subr.mxu0 0.0
      %869 = vmatpush1.msra.mxu0 0.0
      %870 = vmatprep.subr.mxu0 0.0
      %871 = vmatpush1.msra.mxu0 0.0
      %872 = vmatprep.subr.mxu0 0.0
      %873 = vmatpush1.msra.mxu0 0.0
      %874 = vmatprep.subr.mxu0 0.0
      %875 = vmatpush1.msra.mxu0 0.0
      %876 = vmatprep.subr.mxu0 0.0
      %877 = vmatpush1.msra.mxu0 0.0
      %878 = vmatprep.subr.mxu0 0.0
      %879 = vmatpush1.msra.mxu0 0.0
      %880 = vmatprep.subr.mxu0 0.0
      %881 = vmatpush1.msra.mxu0 0.0
      %882 = vmatprep.subr.mxu0 0.0
      %883 = vmatpush1.msra.mxu0 0.0
      %884 = vmatprep.subr.mxu0 0.0
      %885 = vmatpush1.msra.mxu0 0.0
      %886 = vmatprep.subr.mxu0 0.0
      %887 = vmatpush1.msra.mxu0 0.0
      %888 = vmatprep.subr.mxu0 0.0
      %889 = vmatpush1.msra.mxu0 0.0
      %890 = vmatprep.subr.mxu0 0.0
      %891 = vmatpush1.msra.mxu0 0.0
      %892 = vmatprep.subr.mxu0 0.0
      %893 = vmatpush1.msra.mxu0 0.0
      %894 = vmatprep.subr.mxu0 0.0
      %895 = vmatpush1.msra.mxu0 0.0
      %896 = vmatprep.subr.mxu0 0.0
      %897 = vmatpush1.msra.mxu0 0.0
      %898 = vmatprep.subr.mxu0 0.0
      %899 = vmatpush1.msra.mxu0 0.0
      %900 = vmatprep.subr.mxu0 0.0
      %901 = vmatpush1.msra.mxu0 0.0
      %902 = vmatprep.subr.mxu0 0.0
      %903 = vmatpush1.msra.mxu0 0.0
      %904 = vmatprep.subr.mxu0 0.0
      %905 = vmatpush1.msra.mxu0 0.0
      %906 = vmatprep.subr.mxu0 0.0
      %907 = vmatpush1.msra.mxu0 0.0
      %908 = vmatprep.subr.mxu0 0.0
      %909 = vmatpush1.msra.mxu0 0.0
      %910 = vmatprep.subr.mxu0 0.0
      %911 = vmatpush1.msra.mxu0 0.0
      %912 = vmatprep.subr.mxu0 0.0
      %913 = vmatpush1.msra.mxu0 0.0
      %914 = vmatprep.subr.mxu0 0.0
      %915 = vmatpush1.msra.mxu0 0.0
      %916 = vmatprep.mubr.f32.mxu0 0.0
      %917 = vmatmul.mubr.f32.gmra.mrb[0].mxu0 %v850
      %v918 = vpop.f32.mrb[0].mxu0
      %v919 = vadd.f32 0.0, %v918
      %v920 = vpop.f32.mrb[0].mxu0
      %921 = vdwg.mxu0
      %v922 = vld [vmem:[%s7 + $0x8] sm:$0xff]
      %v924 = vsel %vm589, %v919, 0
      %926 = vmatprep.subr.mxu0 0.0
      %927 = vmatpush1.msra.mxu0 %v922
      %928 = vmatprep.subr.mxu0 0.0
      %929 = vmatpush1.msra.mxu0 0.0
      %930 = vmatprep.subr.mxu0 0.0
      %931 = vmatpush1.msra.mxu0 0.0
      %932 = vmatprep.subr.mxu0 0.0
      %933 = vmatpush1.msra.mxu0 0.0
      %934 = vmatprep.subr.mxu0 0.0
      %935 = vmatpush1.msra.mxu0 0.0
      %936 = vmatprep.subr.mxu0 0.0
      %937 = vmatpush1.msra.mxu0 0.0
      %938 = vmatprep.subr.mxu0 0.0
      %939 = vmatpush1.msra.mxu0 0.0
      %940 = vmatprep.subr.mxu0 0.0
      %941 = vmatpush1.msra.mxu0 0.0
      %942 = vmatprep.subr.mxu0 0.0
      %943 = vmatpush1.msra.mxu0 0.0
      %944 = vmatprep.subr.mxu0 0.0
      %945 = vmatpush1.msra.mxu0 0.0
      %946 = vmatprep.subr.mxu0 0.0
      %947 = vmatpush1.msra.mxu0 0.0
      %948 = vmatprep.subr.mxu0 0.0
      %949 = vmatpush1.msra.mxu0 0.0
      %950 = vmatprep.subr.mxu0 0.0
      %951 = vmatpush1.msra.mxu0 0.0
      %952 = vmatprep.subr.mxu0 0.0
      %953 = vmatpush1.msra.mxu0 0.0
      %954 = vmatprep.subr.mxu0 0.0
      %955 = vmatpush1.msra.mxu0 0.0
      %956 = vmatprep.subr.mxu0 0.0
      %957 = vmatpush1.msra.mxu0 0.0
      %958 = vmatprep.subr.mxu0 0.0
      %959 = vmatpush1.msra.mxu0 0.0
      %960 = vmatprep.subr.mxu0 0.0
      %961 = vmatpush1.msra.mxu0 0.0
      %962 = vmatprep.subr.mxu0 0.0
      %963 = vmatpush1.msra.mxu0 0.0
      %964 = vmatprep.subr.mxu0 0.0
      %965 = vmatpush1.msra.mxu0 0.0
      %966 = vmatprep.subr.mxu0 0.0
      %967 = vmatpush1.msra.mxu0 0.0
      %968 = vmatprep.subr.mxu0 0.0
      %969 = vmatpush1.msra.mxu0 0.0
      %970 = vmatprep.subr.mxu0 0.0
      %971 = vmatpush1.msra.mxu0 0.0
      %972 = vmatprep.subr.mxu0 0.0
      %973 = vmatpush1.msra.mxu0 0.0
      %974 = vmatprep.subr.mxu0 0.0
      %975 = vmatpush1.msra.mxu0 0.0
      %976 = vmatprep.subr.mxu0 0.0
      %977 = vmatpush1.msra.mxu0 0.0
      %978 = vmatprep.subr.mxu0 0.0
      %979 = vmatpush1.msra.mxu0 0.0
      %980 = vmatprep.subr.mxu0 0.0
      %981 = vmatpush1.msra.mxu0 0.0
      %982 = vmatprep.subr.mxu0 0.0
      %983 = vmatpush1.msra.mxu0 0.0
      %984 = vmatprep.subr.mxu0 0.0
      %985 = vmatpush1.msra.mxu0 0.0
      %986 = vmatprep.subr.mxu0 0.0
      %987 = vmatpush1.msra.mxu0 0.0
      %988 = vmatprep.subr.mxu0 0.0
      %989 = vmatpush1.msra.mxu0 0.0
      %990 = vmatprep.mubr.f32.mxu0 0.0
      %991 = vmatmul.mubr.f32.gmra.mrb[0].mxu0 %v924
      %v992 = vpop.f32.mrb[0].mxu0
      %v993 = vadd.f32 0.0, %v992
      %v994 = vpop.f32.mrb[0].mxu0
      %995 = vdwg.mxu0
      %v997 = vsel %vm589, %v752, 0
      %999 = vmatprep.subr.mxu0 0.0
      %1000 = vmatpush1.msra.mxu0 %v755
      %1001 = vmatprep.subr.mxu0 0.0
      %1002 = vmatpush1.msra.mxu0 0.0
      %1003 = vmatprep.subr.mxu0 0.0
      %1004 = vmatpush1.msra.mxu0 0.0
      %1005 = vmatprep.subr.mxu0 0.0
      %1006 = vmatpush1.msra.mxu0 0.0
      %1007 = vmatprep.subr.mxu0 0.0
      %1008 = vmatpush1.msra.mxu0 0.0
      %1009 = vmatprep.subr.mxu0 0.0
      %1010 = vmatpush1.msra.mxu0 0.0
      %1011 = vmatprep.subr.mxu0 0.0
      %1012 = vmatpush1.msra.mxu0 0.0
      %1013 = vmatprep.subr.mxu0 0.0
      %1014 = vmatpush1.msra.mxu0 0.0
      %1015 = vmatprep.subr.mxu0 0.0
      %1016 = vmatpush1.msra.mxu0 0.0
      %1017 = vmatprep.subr.mxu0 0.0
      %1018 = vmatpush1.msra.mxu0 0.0
      %1019 = vmatprep.subr.mxu0 0.0
      %1020 = vmatpush1.msra.mxu0 0.0
      %1021 = vmatprep.subr.mxu0 0.0
      %1022 = vmatpush1.msra.mxu0 0.0
      %1023 = vmatprep.subr.mxu0 0.0
      %1024 = vmatpush1.msra.mxu0 0.0
      %1025 = vmatprep.subr.mxu0 0.0
      %1026 = vmatpush1.msra.mxu0 0.0
      %1027 = vmatprep.subr.mxu0 0.0
      %1028 = vmatpush1.msra.mxu0 0.0
      %1029 = vmatprep.subr.mxu0 0.0
      %1030 = vmatpush1.msra.mxu0 0.0
      %1031 = vmatprep.subr.mxu0 0.0
      %1032 = vmatpush1.msra.mxu0 0.0
      %1033 = vmatprep.subr.mxu0 0.0
      %1034 = vmatpush1.msra.mxu0 0.0
      %1035 = vmatprep.subr.mxu0 0.0
      %1036 = vmatpush1.msra.mxu0 0.0
      %1037 = vmatprep.subr.mxu0 0.0
      %1038 = vmatpush1.msra.mxu0 0.0
      %1039 = vmatprep.subr.mxu0 0.0
      %1040 = vmatpush1.msra.mxu0 0.0
      %1041 = vmatprep.subr.mxu0 0.0
      %1042 = vmatpush1.msra.mxu0 0.0
      %1043 = vmatprep.subr.mxu0 0.0
      %1044 = vmatpush1.msra.mxu0 0.0
      %1045 = vmatprep.subr.mxu0 0.0
      %1046 = vmatpush1.msra.mxu0 0.0
      %1047 = vmatprep.subr.mxu0 0.0
      %1048 = vmatpush1.msra.mxu0 0.0
      %1049 = vmatprep.subr.mxu0 0.0
      %1050 = vmatpush1.msra.mxu0 0.0
      %1051 = vmatprep.subr.mxu0 0.0
      %1052 = vmatpush1.msra.mxu0 0.0
      %1053 = vmatprep.subr.mxu0 0.0
      %1054 = vmatpush1.msra.mxu0 0.0
      %1055 = vmatprep.subr.mxu0 0.0
      %1056 = vmatpush1.msra.mxu0 0.0
      %1057 = vmatprep.subr.mxu0 0.0
      %1058 = vmatpush1.msra.mxu0 0.0
      %1059 = vmatprep.subr.mxu0 0.0
      %1060 = vmatpush1.msra.mxu0 0.0
      %1061 = vmatprep.subr.mxu0 0.0
      %1062 = vmatpush1.msra.mxu0 0.0
      %1063 = vmatprep.mubr.f32.mxu0 0.0
      %1064 = vmatmul.mubr.f32.gmra.mrb[0].mxu0 %v997
      %v1065 = vpop.f32.mrb[0].mxu0
      %v1066 = vadd.f32 %v993, %v1065
      %v1067 = vpop.f32.mrb[0].mxu0
      %1068 = vdwg.mxu0
      %1069 = vrot.lane.b32.xlu0 %v588, 112
      %v1070 = vpop.permute.xlu0 %1069
      %1071 = vrot.lane.b32.xlu0 %v585, 112
      %v1072 = vpop.permute.xlu0 %1071
      %v1073 = vsel %vm589, %v1070, 0
      %v1075 = vsel %vm589, %v1072, 0
      %1077 = vmatprep.subr.mxu0 0.0
      %1078 = vmatpush1.xpose.msra.mxu0 %v1075
      %1079 = vmatprep.subr.mxu0 0.0
      %1080 = vmatpush1.xpose.msra.mxu0 0.0
      %1081 = vmatprep.subr.mxu0 0.0
      %1082 = vmatpush1.xpose.msra.mxu0 0.0
      %1083 = vmatprep.subr.mxu0 0.0
      %1084 = vmatpush1.xpose.msra.mxu0 0.0
      %1085 = vmatprep.subr.mxu0 0.0
      %1086 = vmatpush1.xpose.msra.mxu0 0.0
      %1087 = vmatprep.subr.mxu0 0.0
      %1088 = vmatpush1.xpose.msra.mxu0 0.0
      %1089 = vmatprep.subr.mxu0 0.0
      %1090 = vmatpush1.xpose.msra.mxu0 0.0
      %1091 = vmatprep.subr.mxu0 0.0
      %1092 = vmatpush1.xpose.msra.mxu0 0.0
      %1093 = vmatprep.subr.mxu0 0.0
      %1094 = vmatpush1.xpose.msra.mxu0 0.0
      %1095 = vmatprep.subr.mxu0 0.0
      %1096 = vmatpush1.xpose.msra.mxu0 0.0
      %1097 = vmatprep.subr.mxu0 0.0
      %1098 = vmatpush1.xpose.msra.mxu0 0.0
      %1099 = vmatprep.subr.mxu0 0.0
      %1100 = vmatpush1.xpose.msra.mxu0 0.0
      %1101 = vmatprep.subr.mxu0 0.0
      %1102 = vmatpush1.xpose.msra.mxu0 0.0
      %1103 = vmatprep.subr.mxu0 0.0
      %1104 = vmatpush1.xpose.msra.mxu0 0.0
      %1105 = vmatprep.subr.mxu0 0.0
      %1106 = vmatpush1.xpose.msra.mxu0 0.0
      %1107 = vmatprep.subr.mxu0 0.0
      %1108 = vmatpush1.xpose.msra.mxu0 0.0
      %1109 = vmatprep.subr.mxu0 0.0
      %1110 = vmatpush1.xpose.msra.mxu0 0.0
      %1111 = vmatprep.subr.mxu0 0.0
      %1112 = vmatpush1.xpose.msra.mxu0 0.0
      %1113 = vmatprep.subr.mxu0 0.0
      %1114 = vmatpush1.xpose.msra.mxu0 0.0
      %1115 = vmatprep.subr.mxu0 0.0
      %1116 = vmatpush1.xpose.msra.mxu0 0.0
      %1117 = vmatprep.subr.mxu0 0.0
      %1118 = vmatpush1.xpose.msra.mxu0 0.0
      %1119 = vmatprep.subr.mxu0 0.0
      %1120 = vmatpush1.xpose.msra.mxu0 0.0
      %1121 = vmatprep.subr.mxu0 0.0
      %1122 = vmatpush1.xpose.msra.mxu0 0.0
      %1123 = vmatprep.subr.mxu0 0.0
      %1124 = vmatpush1.xpose.msra.mxu0 0.0
      %1125 = vmatprep.subr.mxu0 0.0
      %1126 = vmatpush1.xpose.msra.mxu0 0.0
      %1127 = vmatprep.subr.mxu0 0.0
      %1128 = vmatpush1.xpose.msra.mxu0 0.0
      %1129 = vmatprep.subr.mxu0 0.0
      %1130 = vmatpush1.xpose.msra.mxu0 0.0
      %1131 = vmatprep.subr.mxu0 0.0
      %1132 = vmatpush1.xpose.msra.mxu0 0.0
      %1133 = vmatprep.subr.mxu0 0.0
      %1134 = vmatpush1.xpose.msra.mxu0 0.0
      %1135 = vmatprep.subr.mxu0 0.0
      %1136 = vmatpush1.xpose.msra.mxu0 0.0
      %1137 = vmatprep.subr.mxu0 0.0
      %1138 = vmatpush1.xpose.msra.mxu0 0.0
      %1139 = vmatprep.subr.mxu0 0.0
      %1140 = vmatpush1.xpose.msra.mxu0 0.0
      %1141 = vmatprep.mubr.f32.mxu0 0.0
      %1142 = vmatmul.mubr.f32.gmra.mrb[0].mxu0 %v1073
      %v1143 = vpop.f32.mrb[0].mxu0
      %v1144 = vadd.f32 0.0, %v1143
      %v1145 = vpop.f32.mrb[0].mxu0
      %1146 = vdwg.mxu0
      %v1147 = vsel %vm666, %v1144, -1e+09
      %v1148 = vsel %vm589, %v1147, -inf
      %1149 = vmax.xlane.f32.xlu0 %v1148
      %v1150 = vpop.xlane.xlu0 %1149
      %v1151 = vsub.f32 %v1147, %v1150
      %v1152 = vmul.f32 %v1151, 1.442695
      %v1153 = vpow.pop %v1152
      %v1154 = vsel %vm589, %v1153, 0.0
      %1155 = vadd.xlane.f32.xlu0 %v1154
      %v1156 = vpop.xlane.xlu0 %1155
      %v1157 = vrcp.pop %v1156
      %v1158 = vmul.f32 %v1153, %v1157
      %1159 = vrot.lane.b32.xlu0 %v585, 80
      %v1160 = vpop.permute.xlu0 %1159
      %v1163 = vsel %vm589, %v1158, 0
      %1165 = vmatprep.subr.mxu0 0.0
      %1166 = vmatpush1.msra.mxu0 %v1160
      %1167 = vmatprep.subr.mxu0 0.0
      %1168 = vmatpush1.msra.mxu0 0.0
      %1169 = vmatprep.subr.mxu0 0.0
      %1170 = vmatpush1.msra.mxu0 0.0
      %1171 = vmatprep.subr.mxu0 0.0
      %1172 = vmatpush1.msra.mxu0 0.0
      %1173 = vmatprep.subr.mxu0 0.0
      %1174 = vmatpush1.msra.mxu0 0.0
      %1175 = vmatprep.subr.mxu0 0.0
      %1176 = vmatpush1.msra.mxu0 0.0
      %1177 = vmatprep.subr.mxu0 0.0
      %1178 = vmatpush1.msra.mxu0 0.0
      %1179 = vmatprep.subr.mxu0 0.0
      %1180 = vmatpush1.msra.mxu0 0.0
      %1181 = vmatprep.subr.mxu0 0.0
      %1182 = vmatpush1.msra.mxu0 0.0
      %1183 = vmatprep.subr.mxu0 0.0
      %1184 = vmatpush1.msra.mxu0 0.0
      %1185 = vmatprep.subr.mxu0 0.0
      %1186 = vmatpush1.msra.mxu0 0.0
      %1187 = vmatprep.subr.mxu0 0.0
      %1188 = vmatpush1.msra.mxu0 0.0
      %1189 = vmatprep.subr.mxu0 0.0
      %1190 = vmatpush1.msra.mxu0 0.0
      %1191 = vmatprep.subr.mxu0 0.0
      %1192 = vmatpush1.msra.mxu0 0.0
      %1193 = vmatprep.subr.mxu0 0.0
      %1194 = vmatpush1.msra.mxu0 0.0
      %1195 = vmatprep.subr.mxu0 0.0
      %1196 = vmatpush1.msra.mxu0 0.0
      %1197 = vmatprep.subr.mxu0 0.0
      %1198 = vmatpush1.msra.mxu0 0.0
      %1199 = vmatprep.subr.mxu0 0.0
      %1200 = vmatpush1.msra.mxu0 0.0
      %1201 = vmatprep.subr.mxu0 0.0
      %1202 = vmatpush1.msra.mxu0 0.0
      %1203 = vmatprep.subr.mxu0 0.0
      %1204 = vmatpush1.msra.mxu0 0.0
      %1205 = vmatprep.subr.mxu0 0.0
      %1206 = vmatpush1.msra.mxu0 0.0
      %1207 = vmatprep.subr.mxu0 0.0
      %1208 = vmatpush1.msra.mxu0 0.0
      %1209 = vmatprep.subr.mxu0 0.0
      %1210 = vmatpush1.msra.mxu0 0.0
      %1211 = vmatprep.subr.mxu0 0.0
      %1212 = vmatpush1.msra.mxu0 0.0
      %1213 = vmatprep.subr.mxu0 0.0
      %1214 = vmatpush1.msra.mxu0 0.0
      %1215 = vmatprep.subr.mxu0 0.0
      %1216 = vmatpush1.msra.mxu0 0.0
      %1217 = vmatprep.subr.mxu0 0.0
      %1218 = vmatpush1.msra.mxu0 0.0
      %1219 = vmatprep.subr.mxu0 0.0
      %1220 = vmatpush1.msra.mxu0 0.0
      %1221 = vmatprep.subr.mxu0 0.0
      %1222 = vmatpush1.msra.mxu0 0.0
      %1223 = vmatprep.subr.mxu0 0.0
      %1224 = vmatpush1.msra.mxu0 0.0
      %1225 = vmatprep.subr.mxu0 0.0
      %1226 = vmatpush1.msra.mxu0 0.0
      %1227 = vmatprep.subr.mxu0 0.0
      %1228 = vmatpush1.msra.mxu0 0.0
      %1229 = vmatprep.mubr.f32.mxu0 0.0
      %1230 = vmatmul.mubr.f32.gmra.mrb[0].mxu0 %v1163
      %v1231 = vpop.f32.mrb[0].mxu0
      %v1232 = vadd.f32 0.0, %v1231
      %v1233 = vpop.f32.mrb[0].mxu0
      %1234 = vdwg.mxu0
      %v1235 = vld [vmem:[%s7 + $0x10] sm:$0xff]
      %v1237 = vsel %vm589, %v1232, 0
      %1239 = vmatprep.subr.mxu0 0.0
      %1240 = vmatpush1.msra.mxu0 %v1235
      %1241 = vmatprep.subr.mxu0 0.0
      %1242 = vmatpush1.msra.mxu0 0.0
      %1243 = vmatprep.subr.mxu0 0.0
      %1244 = vmatpush1.msra.mxu0 0.0
      %1245 = vmatprep.subr.mxu0 0.0
      %1246 = vmatpush1.msra.mxu0 0.0
      %1247 = vmatprep.subr.mxu0 0.0
      %1248 = vmatpush1.msra.mxu0 0.0
      %1249 = vmatprep.subr.mxu0 0.0
      %1250 = vmatpush1.msra.mxu0 0.0
      %1251 = vmatprep.subr.mxu0 0.0
      %1252 = vmatpush1.msra.mxu0 0.0
      %1253 = vmatprep.subr.mxu0 0.0
      %1254 = vmatpush1.msra.mxu0 0.0
      %1255 = vmatprep.subr.mxu0 0.0
      %1256 = vmatpush1.msra.mxu0 0.0
      %1257 = vmatprep.subr.mxu0 0.0
      %1258 = vmatpush1.msra.mxu0 0.0
      %1259 = vmatprep.subr.mxu0 0.0
      %1260 = vmatpush1.msra.mxu0 0.0
      %1261 = vmatprep.subr.mxu0 0.0
      %1262 = vmatpush1.msra.mxu0 0.0
      %1263 = vmatprep.subr.mxu0 0.0
      %1264 = vmatpush1.msra.mxu0 0.0
      %1265 = vmatprep.subr.mxu0 0.0
      %1266 = vmatpush1.msra.mxu0 0.0
      %1267 = vmatprep.subr.mxu0 0.0
      %1268 = vmatpush1.msra.mxu0 0.0
      %1269 = vmatprep.subr.mxu0 0.0
      %1270 = vmatpush1.msra.mxu0 0.0
      %1271 = vmatprep.subr.mxu0 0.0
      %1272 = vmatpush1.msra.mxu0 0.0
      %1273 = vmatprep.subr.mxu0 0.0
      %1274 = vmatpush1.msra.mxu0 0.0
      %1275 = vmatprep.subr.mxu0 0.0
      %1276 = vmatpush1.msra.mxu0 0.0
      %1277 = vmatprep.subr.mxu0 0.0
      %1278 = vmatpush1.msra.mxu0 0.0
      %1279 = vmatprep.subr.mxu0 0.0
      %1280 = vmatpush1.msra.mxu0 0.0
      %1281 = vmatprep.subr.mxu0 0.0
      %1282 = vmatpush1.msra.mxu0 0.0
      %1283 = vmatprep.subr.mxu0 0.0
      %1284 = vmatpush1.msra.mxu0 0.0
      %1285 = vmatprep.subr.mxu0 0.0
      %1286 = vmatpush1.msra.mxu0 0.0
      %1287 = vmatprep.subr.mxu0 0.0
      %1288 = vmatpush1.msra.mxu0 0.0
      %1289 = vmatprep.subr.mxu0 0.0
      %1290 = vmatpush1.msra.mxu0 0.0
      %1291 = vmatprep.subr.mxu0 0.0
      %1292 = vmatpush1.msra.mxu0 0.0
      %1293 = vmatprep.subr.mxu0 0.0
      %1294 = vmatpush1.msra.mxu0 0.0
      %1295 = vmatprep.subr.mxu0 0.0
      %1296 = vmatpush1.msra.mxu0 0.0
      %1297 = vmatprep.subr.mxu0 0.0
      %1298 = vmatpush1.msra.mxu0 0.0
      %1299 = vmatprep.subr.mxu0 0.0
      %1300 = vmatpush1.msra.mxu0 0.0
      %1301 = vmatprep.subr.mxu0 0.0
      %1302 = vmatpush1.msra.mxu0 0.0
      %1303 = vmatprep.mubr.f32.mxu0 0.0
      %1304 = vmatmul.mubr.f32.gmra.mrb[0].mxu0 %v1237
      %v1305 = vpop.f32.mrb[0].mxu0
      %v1306 = vadd.f32 0.0, %v1305
      %v1307 = vpop.f32.mrb[0].mxu0
      %1308 = vdwg.mxu0
      %v1309 = vadd.f32 %v1066, %v1306
      %1310 = vrot.lane.b32.xlu0 %v588, 104
      %v1311 = vpop.permute.xlu0 %1310
      %1312 = vrot.lane.b32.xlu0 %v585, 104
      %v1313 = vpop.permute.xlu0 %1312
      %v1314 = vsel %vm589, %v1311, 0
      %v1316 = vsel %vm589, %v1313, 0
      %1318 = vmatprep.subr.mxu0 0.0
      %1319 = vmatpush1.xpose.msra.mxu0 %v1316
      %1320 = vmatprep.subr.mxu0 0.0
      %1321 = vmatpush1.xpose.msra.mxu0 0.0
      %1322 = vmatprep.subr.mxu0 0.0
      %1323 = vmatpush1.xpose.msra.mxu0 0.0
      %1324 = vmatprep.subr.mxu0 0.0
      %1325 = vmatpush1.xpose.msra.mxu0 0.0
      %1326 = vmatprep.subr.mxu0 0.0
      %1327 = vmatpush1.xpose.msra.mxu0 0.0
      %1328 = vmatprep.subr.mxu0 0.0
      %1329 = vmatpush1.xpose.msra.mxu0 0.0
      %1330 = vmatprep.subr.mxu0 0.0
      %1331 = vmatpush1.xpose.msra.mxu0 0.0
      %1332 = vmatprep.subr.mxu0 0.0
      %1333 = vmatpush1.xpose.msra.mxu0 0.0
      %1334 = vmatprep.subr.mxu0 0.0
      %1335 = vmatpush1.xpose.msra.mxu0 0.0
      %1336 = vmatprep.subr.mxu0 0.0
      %1337 = vmatpush1.xpose.msra.mxu0 0.0
      %1338 = vmatprep.subr.mxu0 0.0
      %1339 = vmatpush1.xpose.msra.mxu0 0.0
      %1340 = vmatprep.subr.mxu0 0.0
      %1341 = vmatpush1.xpose.msra.mxu0 0.0
      %1342 = vmatprep.subr.mxu0 0.0
      %1343 = vmatpush1.xpose.msra.mxu0 0.0
      %1344 = vmatprep.subr.mxu0 0.0
      %1345 = vmatpush1.xpose.msra.mxu0 0.0
      %1346 = vmatprep.subr.mxu0 0.0
      %1347 = vmatpush1.xpose.msra.mxu0 0.0
      %1348 = vmatprep.subr.mxu0 0.0
      %1349 = vmatpush1.xpose.msra.mxu0 0.0
      %1350 = vmatprep.subr.mxu0 0.0
      %1351 = vmatpush1.xpose.msra.mxu0 0.0
      %1352 = vmatprep.subr.mxu0 0.0
      %1353 = vmatpush1.xpose.msra.mxu0 0.0
      %1354 = vmatprep.subr.mxu0 0.0
      %1355 = vmatpush1.xpose.msra.mxu0 0.0
      %1356 = vmatprep.subr.mxu0 0.0
      %1357 = vmatpush1.xpose.msra.mxu0 0.0
      %1358 = vmatprep.subr.mxu0 0.0
      %1359 = vmatpush1.xpose.msra.mxu0 0.0
      %1360 = vmatprep.subr.mxu0 0.0
      %1361 = vmatpush1.xpose.msra.mxu0 0.0
      %1362 = vmatprep.subr.mxu0 0.0
      %1363 = vmatpush1.xpose.msra.mxu0 0.0
      %1364 = vmatprep.subr.mxu0 0.0
      %1365 = vmatpush1.xpose.msra.mxu0 0.0
      %1366 = vmatprep.subr.mxu0 0.0
      %1367 = vmatpush1.xpose.msra.mxu0 0.0
      %1368 = vmatprep.subr.mxu0 0.0
      %1369 = vmatpush1.xpose.msra.mxu0 0.0
      %1370 = vmatprep.subr.mxu0 0.0
      %1371 = vmatpush1.xpose.msra.mxu0 0.0
      %1372 = vmatprep.subr.mxu0 0.0
      %1373 = vmatpush1.xpose.msra.mxu0 0.0
      %1374 = vmatprep.subr.mxu0 0.0
      %1375 = vmatpush1.xpose.msra.mxu0 0.0
      %1376 = vmatprep.subr.mxu0 0.0
      %1377 = vmatpush1.xpose.msra.mxu0 0.0
      %1378 = vmatprep.subr.mxu0 0.0
      %1379 = vmatpush1.xpose.msra.mxu0 0.0
      %1380 = vmatprep.subr.mxu0 0.0
      %1381 = vmatpush1.xpose.msra.mxu0 0.0
      %1382 = vmatprep.mubr.f32.mxu0 0.0
      %1383 = vmatmul.mubr.f32.gmra.mrb[0].mxu0 %v1314
      %v1384 = vpop.f32.mrb[0].mxu0
      %v1385 = vadd.f32 0.0, %v1384
      %v1386 = vpop.f32.mrb[0].mxu0
      %1387 = vdwg.mxu0
      %v1388 = vsel %vm666, %v1385, -1e+09
      %v1389 = vsel %vm589, %v1388, -inf
      %1390 = vmax.xlane.f32.xlu0 %v1389
      %v1391 = vpop.xlane.xlu0 %1390
      %v1392 = vsub.f32 %v1388, %v1391
      %v1393 = vmul.f32 %v1392, 1.442695
      %v1394 = vpow.pop %v1393
      %v1395 = vsel %vm589, %v1394, 0.0
      %1396 = vadd.xlane.f32.xlu0 %v1395
      %v1397 = vpop.xlane.xlu0 %1396
      %v1398 = vrcp.pop %v1397
      %v1399 = vmul.f32 %v1394, %v1398
      %1400 = vrot.lane.b32.xlu0 %v585, 72
      %v1401 = vpop.permute.xlu0 %1400
      %v1404 = vsel %vm589, %v1399, 0
      %1406 = vmatprep.subr.mxu0 0.0
      %1407 = vmatpush1.msra.mxu0 %v1401
      %1408 = vmatprep.subr.mxu0 0.0
      %1409 = vmatpush1.msra.mxu0 0.0
      %1410 = vmatprep.subr.mxu0 0.0
      %1411 = vmatpush1.msra.mxu0 0.0
      %1412 = vmatprep.subr.mxu0 0.0
      %1413 = vmatpush1.msra.mxu0 0.0
      %1414 = vmatprep.subr.mxu0 0.0
      %1415 = vmatpush1.msra.mxu0 0.0
      %1416 = vmatprep.subr.mxu0 0.0
      %1417 = vmatpush1.msra.mxu0 0.0
      %1418 = vmatprep.subr.mxu0 0.0
      %1419 = vmatpush1.msra.mxu0 0.0
      %1420 = vmatprep.subr.mxu0 0.0
      %1421 = vmatpush1.msra.mxu0 0.0
      %1422 = vmatprep.subr.mxu0 0.0
      %1423 = vmatpush1.msra.mxu0 0.0
      %1424 = vmatprep.subr.mxu0 0.0
      %1425 = vmatpush1.msra.mxu0 0.0
      %1426 = vmatprep.subr.mxu0 0.0
      %1427 = vmatpush1.msra.mxu0 0.0
      %1428 = vmatprep.subr.mxu0 0.0
      %1429 = vmatpush1.msra.mxu0 0.0
      %1430 = vmatprep.subr.mxu0 0.0
      %1431 = vmatpush1.msra.mxu0 0.0
      %1432 = vmatprep.subr.mxu0 0.0
      %1433 = vmatpush1.msra.mxu0 0.0
      %1434 = vmatprep.subr.mxu0 0.0
      %1435 = vmatpush1.msra.mxu0 0.0
      %1436 = vmatprep.subr.mxu0 0.0
      %1437 = vmatpush1.msra.mxu0 0.0
      %1438 = vmatprep.subr.mxu0 0.0
      %1439 = vmatpush1.msra.mxu0 0.0
      %1440 = vmatprep.subr.mxu0 0.0
      %1441 = vmatpush1.msra.mxu0 0.0
      %1442 = vmatprep.subr.mxu0 0.0
      %1443 = vmatpush1.msra.mxu0 0.0
      %1444 = vmatprep.subr.mxu0 0.0
      %1445 = vmatpush1.msra.mxu0 0.0
      %1446 = vmatprep.subr.mxu0 0.0
      %1447 = vmatpush1.msra.mxu0 0.0
      %1448 = vmatprep.subr.mxu0 0.0
      %1449 = vmatpush1.msra.mxu0 0.0
      %1450 = vmatprep.subr.mxu0 0.0
      %1451 = vmatpush1.msra.mxu0 0.0
      %1452 = vmatprep.subr.mxu0 0.0
      %1453 = vmatpush1.msra.mxu0 0.0
      %1454 = vmatprep.subr.mxu0 0.0
      %1455 = vmatpush1.msra.mxu0 0.0
      %1456 = vmatprep.subr.mxu0 0.0
      %1457 = vmatpush1.msra.mxu0 0.0
      %1458 = vmatprep.subr.mxu0 0.0
      %1459 = vmatpush1.msra.mxu0 0.0
      %1460 = vmatprep.subr.mxu0 0.0
      %1461 = vmatpush1.msra.mxu0 0.0
      %1462 = vmatprep.subr.mxu0 0.0
      %1463 = vmatpush1.msra.mxu0 0.0
      %1464 = vmatprep.subr.mxu0 0.0
      %1465 = vmatpush1.msra.mxu0 0.0
      %1466 = vmatprep.subr.mxu0 0.0
      %1467 = vmatpush1.msra.mxu0 0.0
      %1468 = vmatprep.subr.mxu0 0.0
      %1469 = vmatpush1.msra.mxu0 0.0
      %1470 = vmatprep.mubr.f32.mxu0 0.0
      %1471 = vmatmul.mubr.f32.gmra.mrb[0].mxu0 %v1404
      %v1472 = vpop.f32.mrb[0].mxu0
      %v1473 = vadd.f32 0.0, %v1472
      %v1474 = vpop.f32.mrb[0].mxu0
      %1475 = vdwg.mxu0
      %v1476 = vld [vmem:[%s7 + $0x18] sm:$0xff]
      %v1478 = vsel %vm589, %v1473, 0
      %1480 = vmatprep.subr.mxu0 0.0
      %1481 = vmatpush1.msra.mxu0 %v1476
      %1482 = vmatprep.subr.mxu0 0.0
      %1483 = vmatpush1.msra.mxu0 0.0
      %1484 = vmatprep.subr.mxu0 0.0
      %1485 = vmatpush1.msra.mxu0 0.0
      %1486 = vmatprep.subr.mxu0 0.0
      %1487 = vmatpush1.msra.mxu0 0.0
      %1488 = vmatprep.subr.mxu0 0.0
      %1489 = vmatpush1.msra.mxu0 0.0
      %1490 = vmatprep.subr.mxu0 0.0
      %1491 = vmatpush1.msra.mxu0 0.0
      %1492 = vmatprep.subr.mxu0 0.0
      %1493 = vmatpush1.msra.mxu0 0.0
      %1494 = vmatprep.subr.mxu0 0.0
      %1495 = vmatpush1.msra.mxu0 0.0
      %1496 = vmatprep.subr.mxu0 0.0
      %1497 = vmatpush1.msra.mxu0 0.0
      %1498 = vmatprep.subr.mxu0 0.0
      %1499 = vmatpush1.msra.mxu0 0.0
      %1500 = vmatprep.subr.mxu0 0.0
      %1501 = vmatpush1.msra.mxu0 0.0
      %1502 = vmatprep.subr.mxu0 0.0
      %1503 = vmatpush1.msra.mxu0 0.0
      %1504 = vmatprep.subr.mxu0 0.0
      %1505 = vmatpush1.msra.mxu0 0.0
      %1506 = vmatprep.subr.mxu0 0.0
      %1507 = vmatpush1.msra.mxu0 0.0
      %1508 = vmatprep.subr.mxu0 0.0
      %1509 = vmatpush1.msra.mxu0 0.0
      %1510 = vmatprep.subr.mxu0 0.0
      %1511 = vmatpush1.msra.mxu0 0.0
      %1512 = vmatprep.subr.mxu0 0.0
      %1513 = vmatpush1.msra.mxu0 0.0
      %1514 = vmatprep.subr.mxu0 0.0
      %1515 = vmatpush1.msra.mxu0 0.0
      %1516 = vmatprep.subr.mxu0 0.0
      %1517 = vmatpush1.msra.mxu0 0.0
      %1518 = vmatprep.subr.mxu0 0.0
      %1519 = vmatpush1.msra.mxu0 0.0
      %1520 = vmatprep.subr.mxu0 0.0
      %1521 = vmatpush1.msra.mxu0 0.0
      %1522 = vmatprep.subr.mxu0 0.0
      %1523 = vmatpush1.msra.mxu0 0.0
      %1524 = vmatprep.subr.mxu0 0.0
      %1525 = vmatpush1.msra.mxu0 0.0
      %1526 = vmatprep.subr.mxu0 0.0
      %1527 = vmatpush1.msra.mxu0 0.0
      %1528 = vmatprep.subr.mxu0 0.0
      %1529 = vmatpush1.msra.mxu0 0.0
      %1530 = vmatprep.subr.mxu0 0.0
      %1531 = vmatpush1.msra.mxu0 0.0
      %1532 = vmatprep.subr.mxu0 0.0
      %1533 = vmatpush1.msra.mxu0 0.0
      %1534 = vmatprep.subr.mxu0 0.0
      %1535 = vmatpush1.msra.mxu0 0.0
      %1536 = vmatprep.subr.mxu0 0.0
      %1537 = vmatpush1.msra.mxu0 0.0
      %1538 = vmatprep.subr.mxu0 0.0
      %1539 = vmatpush1.msra.mxu0 0.0
      %1540 = vmatprep.subr.mxu0 0.0
      %1541 = vmatpush1.msra.mxu0 0.0
      %1542 = vmatprep.subr.mxu0 0.0
      %1543 = vmatpush1.msra.mxu0 0.0
      %1544 = vmatprep.mubr.f32.mxu0 0.0
      %1545 = vmatmul.mubr.f32.gmra.mrb[0].mxu0 %v1478
      %v1546 = vpop.f32.mrb[0].mxu0
      %v1547 = vadd.f32 0.0, %v1546
      %v1548 = vpop.f32.mrb[0].mxu0
      %1549 = vdwg.mxu0
      %v1550 = vadd.f32 %v1309, %v1547
      %v1551 = vld [vmem:[%s8] sm:$0x1]
      %v1553 = vlaneseq
      %v1554 = vshrl.u32 %v1553, 7
      %v1555 = vsub.s32 0, %v1554
      %v1556 = vrot.slane %v1551, %v1555
      %v1558 = vadd.f32 %v1550, %v1556
      %v1559 = vadd.f32 %v416, %v1558
      %v1560 = vsel %vm430, %v1559, 0.0
      %1561 = vadd.xlane.f32.xlu0 %v1560
      %v1562 = vpop.xlane.xlu0 %1561
      %v1563 = vrcp.pop 32.0
      %v1564 = vmul.f32 %v1562, %v1563
      %v1565 = vsub.f32 %v1559, %v1564
      %v1566 = vmul.f32 %v1565, %v1565
      %v1567 = vsel %vm430, %v1566, 0.0
      %1568 = vadd.xlane.f32.xlu0 %v1567
      %v1569 = vpop.xlane.xlu0 %1568
      %v1570 = vmul.f32 %v1569, %v1563
      %v1571 = vadd.f32 %v1570, 1e-05
      %v1572 = vrsqrt.pop %v1571
      %v1573 = vmul.f32 %v1565, %v1572
      %v1574 = vld [vmem:[%s9] sm:$0x1]
      %v1576 = vlaneseq
      %v1577 = vshrl.u32 %v1576, 7
      %v1578 = vsub.s32 0, %v1577
      %v1579 = vrot.slane %v1574, %v1578
      %v1581 = vmul.f32 %v1573, %v1579
      %v1582 = vld [vmem:[%s10] sm:$0x1]
      %v1584 = vlaneseq
      %v1585 = vshrl.u32 %v1584, 7
      %v1586 = vsub.s32 0, %v1585
      %v1587 = vrot.slane %v1582, %v1586
      %v1589 = vadd.f32 %v1581, %v1587
      %1590 = vst.msk [vmem:[%s415] sm:$0xff] %vm430, %v1589
      %p1591 = scmp.lt.s32.totalorder %s22, 1
      %s1592 = scalar_select %p1591, %s22, 1
      %s1593 = smul.addr %s1592, 8
      %s1594 = scalar_lea.vmem %s11, %s1593
      // Predicated region
      $region65: #{decoder_forward.6} parent=63 // pred_check
        %p1595 = pneg %p286
      $region66: #{decoder_forward.6} parent=63 // pred_check_branch
        %1597 = sbr.rel (%p1595) target = $region68
      $region67: #{decoder_forward.6} parent=63 // pred_region
        _
      $region68: #{decoder_forward.6} parent=63 // pred_fallthru
        _
    $region64: #{decoder_forward.6} parent=5 // pred_fallthru
      _
    %p1598 = scmp.le.s32.totalorder 2, %s17
    // Predicated region
    $region69: #{decoder_forward.6} parent=5 // pred_check
      %p1599 = pneg %p1598
    $region70: #{decoder_forward.6} parent=5 // pred_check_branch
      %1601 = sbr.rel (%p1599) target = $region72
    $region71: #{decoder_forward.6} parent=5 // pred_region
      %s1602 = ssub.s32 %s17, 2
      // Predicated region
      $region73: #{decoder_forward.6} parent=71 // pred_check
        %p1603 = pneg %p292
      $region74: #{decoder_forward.6} parent=71 // pred_check_branch
        %1605 = sbr.rel (%p1603) target = $region76
      $region75: #{decoder_forward.6} parent=71 // pred_region
        %p1606 = scmp.lt.s32.totalorder %s23, 1
        %s1607 = scalar_select %p1606, %s23, 1
        %s1608 = smul.addr %s1607, 8
        %s1609 = scalar_lea.vmem %s11, %s1608
      $region76: #{decoder_forward.6} parent=71 // pred_fallthru
        _
    $region72: #{decoder_forward.6} parent=5 // pred_fallthru
      _
  $region6: #{decoder_forward.6} parent=0 // loop_footer
    %s21 = sadd.s32 1, %s17
  $region7: #{decoder_forward.6} parent=0 // loop_footer_branch
    %16 = sbr.rel target = $region3
  $region8: #{decoder_forward.6} parent=0 // loop_exit
    _

// kernel: decoder_forward.9
$region0: #{decoder_forward.9}
  #allocation0 [shape = 'u32[]', space=smem, size = 0x4, offset = 0x4, fixed_abs, tag = 'smem constant byte address 0x4 - core index']
  #allocation1 [shape = 'u32[144,128]{1,0:T(1,128)}', space=vmem, size = 0x12000, scoped, tag = 'internal scratch']
  %s0 = inlined_call_operand.vmem [shape: f32[2,8,32], index: 0, kind: input, shape index: {}, may-alias: {0,1}]
  %s1 = inlined_call_operand.vmem [shape: f32[2,8,32], index: 1, kind: input, shape index: {}, may-alias: {0,1}]
  %s2 = inlined_call_operand.vmem [shape: f32[2,8,8], index: 2, kind: input, shape index: {}]
  %s3 = inlined_call_operand.vmem [shape: f32[32,32], index: 3, kind: input, shape index: {}]
  %s4 = inlined_call_operand.vmem [shape: f32[1,32], index: 4, kind: input, shape index: {}]
  %s5 = inlined_call_operand.vmem [shape: f32[32,64], index: 5, kind: input, shape index: {}]
  %s6 = inlined_call_operand.vmem [shape: f32[1,64], index: 6, kind: input, shape index: {}]
  %s7 = inlined_call_operand.vmem [shape: f32[32,32], index: 7, kind: input, shape index: {}]
  %s8 = inlined_call_operand.vmem [shape: f32[1,32], index: 8, kind: input, shape index: {}]
  %s9 = inlined_call_operand.vmem [shape: f32[1,32], index: 9, kind: input, shape index: {}]
  %s10 = inlined_call_operand.vmem [shape: f32[1,32], index: 10, kind: input, shape index: {}]
  %s11 = inlined_call_operand.vmem [shape: f32[2,8,32], index: 11, kind: output, shape index: {0}]
  %s12 = inlined_call_operand.hbm [shape: f32[2,4,8,8], index: 12, kind: output, shape index: {1}]
  %13 = xla_tuple %s11, %s12
  %s14 = sld [smem:[#allocation0]]
  $region85: #{decoder_forward.9} parent=0
    _
  %s16 = ssub.s32 1, %s14
  %s17 = scalar_select 0, %s16, %s14
  $region1: #{decoder_forward.9} parent=0
    #allocation2 [shape = 'u8[32768]{0}', space=vmem, size = 0x8000, scoped, tag = 'output window, operand 1']
    #allocation3 [shape = 's32[2]{0}', space=sflag, size = 0x8, scoped, tag = 'scoped memory for decoder_forward.9']
    %18 = vsyncpa [#allocation3], 0
    %s19 = scalar_lea.sflag [#allocation3], 1
    %20 = vsyncpa %s19, 0
    loop: start=0, step=1, limit=4
    $region2: #{decoder_forward.9} parent=1 // loop_pre_header
      _
    $region3: #{decoder_forward.9} parent=1 // loop_header
      %s22 = sphi 0, %s26
      %p23 = scmp.ge.s32.totalorder %s22, 4
      %s32 = sphi 0, %s34
      %s35 = sphi 0, %s32
      %s36 = sphi 0, %s35
      %s52 = sphi 0, %s36
      %s58 = sphi 0, %s60
      %s61 = sphi 0, %s58
      %s62 = sphi 0, %s61
      %s78 = sphi 0, %s62
      %s84 = sphi 0, %s86
      %s87 = sphi 0, %s84
      %s88 = sphi 0, %s87
      %s104 = sphi 0, %s88
      %s108 = sphi 0, %s108
      %s110 = sphi 0, %s108
      %s111 = sphi 0, %s110
      %s125 = sphi 0, %s111
      %s129 = sphi 0, %s129
      %s131 = sphi 0, %s129
      %s132 = sphi 0, %s131
      %s146 = sphi 0, %s132
      %s150 = sphi 0, %s150
      %s152 = sphi 0, %s150
      %s153 = sphi 0, %s152
      %s167 = sphi 0, %s153
      %s171 = sphi 0, %s171
      %s173 = sphi 0, %s171
      %s174 = sphi 0, %s173
      %s188 = sphi 0, %s174
      %s192 = sphi 0, %s192
      %s194 = sphi 0, %s192
      %s195 = sphi 0, %s194
      %s209 = sphi 0, %s195
      %s213 = sphi 0, %s213
      %s215 = sphi 0, %s213
      %s216 = sphi 0, %s215
      %s230 = sphi 0, %s216
      %s234 = sphi 0, %s234
      %s236 = sphi 0, %s234
      %s237 = sphi 0, %s236
      %s251 = sphi 0, %s237
      %s255 = sphi 0, %s255
      %s257 = sphi 0, %s255
      %s258 = sphi 0, %s257
      %s272 = sphi 0, %s258
      %s278 = sphi 0, %s280
      %s281 = sphi 0, %s278
      %s282 = sphi 0, %s281
      %s298 = sphi 0, %s282
      %s304 = sphi 0, %s306
      %s307 = sphi 0, %s304
      %s308 = sphi 0, %s307
      %s324 = sphi 0, %s308
    $region4: #{decoder_forward.9} parent=1 // loop_header_branch
      %25 = sbr.rel (%p23) target = $region8
    $region5: #{decoder_forward.9} parent=1 // loop_body
      %s27 = ssub.s32 %s22, 1
      %s28 = ssub.s32 %s22, 2
      %s29 = sadd.s32 %s22, 1
      %s30 = ssub.s32 %s22, %s29
      %p31 = scmp.eq.s32.totalorder %s30, 0
      %s33 = sadd.s32 %s32, 1
      %s34 = scalar_select %p31, %s32, %s33
      %p37 = pneg %p31
      %p38 = scmp.eq.s32.totalorder %s22, 1
      %p39 = por %p37, %p38
      %p40 = scmp.ne.s32.totalorder %s32, %s35
      %p41 = scmp.eq.s32.totalorder %s22, 0
      %p42 = por %p40, %p41
      %p43 = scmp.ne.s32.totalorder %s32, %s35
      %p44 = scmp.eq.s32.totalorder %s27, 1
      %p45 = por %p43, %p44
      %p46 = scmp.ne.s32.totalorder %s35, %s36
      %p47 = scmp.eq.s32.totalorder %s27, 0
      %p48 = por %p46, %p47
      %p49 = scmp.ne.s32.totalorder %s35, %s36
      %p50 = scmp.eq.s32.totalorder %s28, 1
      %p51 = por %p49, %p50
      %p53 = scmp.ne.s32.totalorder %s36, %s52
      %p54 = scmp.eq.s32.totalorder %s28, 0
      %p55 = por %p53, %p54
      %s56 = ssub.s32 %s22, %s29
      %p57 = scmp.eq.s32.totalorder %s56, 0
      %s59 = sadd.s32 %s58, 1
      %s60 = scalar_select %p57, %s58, %s59
      %p63 = pneg %p57
      %p64 = scmp.eq.s32.totalorder %s22, 1
      %p65 = por %p63, %p64
      %p66 = scmp.ne.s32.totalorder %s58, %s61
      %p67 = scmp.eq.s32.totalorder %s22, 0
      %p68 = por %p66, %p67
      %p69 = scmp.ne.s32.totalorder %s58, %s61
      %p70 = scmp.eq.s32.totalorder %s27, 1
      %p71 = por %p69, %p70
      %p72 = scmp.ne.s32.totalorder %s61, %s62
      %p73 = scmp.eq.s32.totalorder %s27, 0
      %p74 = por %p72, %p73
      %p75 = scmp.ne.s32.totalorder %s61, %s62
      %p76 = scmp.eq.s32.totalorder %s28, 1
      %p77 = por %p75, %p76
      %p79 = scmp.ne.s32.totalorder %s62, %s78
      %p80 = scmp.eq.s32.totalorder %s28, 0
      %p81 = por %p79, %p80
      %s82 = ssub.s32 %s22, %s29
      %p83 = scmp.eq.s32.totalorder %s82, 0
      %s85 = sadd.s32 %s84, 1
      %s86 = scalar_select %p83, %s84, %s85
      %p89 = pneg %p83
      %p90 = scmp.eq.s32.totalorder %s22, 1
      %p91 = por %p89, %p90
      %p92 = scmp.ne.s32.totalorder %s84, %s87
      %p93 = scmp.eq.s32.totalorder %s22, 0
      %p94 = por %p92, %p93
      %p95 = scmp.ne.s32.totalorder %s84, %s87
      %p96 = scmp.eq.s32.totalorder %s27, 1
      %p97 = por %p95, %p96
      %p98 = scmp.ne.s32.totalorder %s87, %s88
      %p99 = scmp.eq.s32.totalorder %s27, 0
      %p100 = por %p98, %p99
      %p101 = scmp.ne.s32.totalorder %s87, %s88
      %p102 = scmp.eq.s32.totalorder %s28, 1
      %p103 = por %p101, %p102
      %p105 = scmp.ne.s32.totalorder %s88, %s104
      %p106 = scmp.eq.s32.totalorder %s28, 0
      %p107 = por %p105, %p106
      %s109 = sadd.s32 %s108, 1
      %p112 = scmp.eq.s32.totalorder %s22, 1
      %p113 = scmp.ne.s32.totalorder %s108, %s110
      %p114 = scmp.eq.s32.totalorder %s22, 0
      %p115 = por %p113, %p114
      %p116 = scmp.ne.s32.totalorder %s108, %s110
      %p117 = scmp.eq.s32.totalorder %s27, 1
      %p118 = por %p116, %p117
      %p119 = scmp.ne.s32.totalorder %s110, %s111
      %p120 = scmp.eq.s32.totalorder %s27, 0
      %p121 = por %p119, %p120
      %p122 = scmp.ne.s32.totalorder %s110, %s111
      %p123 = scmp.eq.s32.totalorder %s28, 1
      %p124 = por %p122, %p123
      %p126 = scmp.ne.s32.totalorder %s111, %s125
      %p127 = scmp.eq.s32.totalorder %s28, 0
      %p128 = por %p126, %p127
      %s130 = sadd.s32 %s129, 1
      %p133 = scmp.eq.s32.totalorder %s22, 1
      %p134 = scmp.ne.s32.totalorder %s129, %s131
      %p135 = scmp.eq.s32.totalorder %s22, 0
      %p136 = por %p134, %p135
      %p137 = scmp.ne.s32.totalorder %s129, %s131
      %p138 = scmp.eq.s32.totalorder %s27, 1
      %p139 = por %p137, %p138
      %p140 = scmp.ne.s32.totalorder %s131, %s132
      %p141 = scmp.eq.s32.totalorder %s27, 0
      %p142 = por %p140, %p141
      %p143 = scmp.ne.s32.totalorder %s131, %s132
      %p144 = scmp.eq.s32.totalorder %s28, 1
      %p145 = por %p143, %p144
      %p147 = scmp.ne.s32.totalorder %s132, %s146
      %p148 = scmp.eq.s32.totalorder %s28, 0
      %p149 = por %p147, %p148
      %s151 = sadd.s32 %s150, 1
      %p154 = scmp.eq.s32.totalorder %s22, 1
      %p155 = scmp.ne.s32.totalorder %s150, %s152
      %p156 = scmp.eq.s32.totalorder %s22, 0
      %p157 = por %p155, %p156
      %p158 = scmp.ne.s32.totalorder %s150, %s152
      %p159 = scmp.eq.s32.totalorder %s27, 1
      %p160 = por %p158, %p159
      %p161 = scmp.ne.s32.totalorder %s152, %s153
      %p162 = scmp.eq.s32.totalorder %s27, 0
      %p163 = por %p161, %p162
      %p164 = scmp.ne.s32.totalorder %s152, %s153
      %p165 = scmp.eq.s32.totalorder %s28, 1
      %p166 = por %p164, %p165
      %p168 = scmp.ne.s32.totalorder %s153, %s167
      %p169 = scmp.eq.s32.totalorder %s28, 0
      %p170 = por %p168, %p169
      %s172 = sadd.s32 %s171, 1
      %p175 = scmp.eq.s32.totalorder %s22, 1
      %p176 = scmp.ne.s32.totalorder %s171, %s173
      %p177 = scmp.eq.s32.totalorder %s22, 0
      %p178 = por %p176, %p177
      %p179 = scmp.ne.s32.totalorder %s171, %s173
      %p180 = scmp.eq.s32.totalorder %s27, 1
      %p181 = por %p179, %p180
      %p182 = scmp.ne.s32.totalorder %s173, %s174
      %p183 = scmp.eq.s32.totalorder %s27, 0
      %p184 = por %p182, %p183
      %p185 = scmp.ne.s32.totalorder %s173, %s174
      %p186 = scmp.eq.s32.totalorder %s28, 1
      %p187 = por %p185, %p186
      %p189 = scmp.ne.s32.totalorder %s174, %s188
      %p190 = scmp.eq.s32.totalorder %s28, 0
      %p191 = por %p189, %p190
      %s193 = sadd.s32 %s192, 1
      %p196 = scmp.eq.s32.totalorder %s22, 1
      %p197 = scmp.ne.s32.totalorder %s192, %s194
      %p198 = scmp.eq.s32.totalorder %s22, 0
      %p199 = por %p197, %p198
      %p200 = scmp.ne.s32.totalorder %s192, %s194
      %p201 = scmp.eq.s32.totalorder %s27, 1
      %p202 = por %p200, %p201
      %p203 = scmp.ne.s32.totalorder %s194, %s195
      %p204 = scmp.eq.s32.totalorder %s27, 0
      %p205 = por %p203, %p204
      %p206 = scmp.ne.s32.totalorder %s194, %s195
      %p207 = scmp.eq.s32.totalorder %s28, 1
      %p208 = por %p206, %p207
      %p210 = scmp.ne.s32.totalorder %s195, %s209
      %p211 = scmp.eq.s32.totalorder %s28, 0
      %p212 = por %p210, %p211
      %s214 = sadd.s32 %s213, 1
      %p217 = scmp.eq.s32.totalorder %s22, 1
      %p218 = scmp.ne.s32.totalorder %s213, %s215
      %p219 = scmp.eq.s32.totalorder %s22, 0
      %p220 = por %p218, %p219
      %p221 = scmp.ne.s32.totalorder %s213, %s215
      %p222 = scmp.eq.s32.totalorder %s27, 1
      %p223 = por %p221, %p222
      %p224 = scmp.ne.s32.totalorder %s215, %s216
      %p225 = scmp.eq.s32.totalorder %s27, 0
      %p226 = por %p224, %p225
      %p227 = scmp.ne.s32.totalorder %s215, %s216
      %p228 = scmp.eq.s32.totalorder %s28, 1
      %p229 = por %p227, %p228
      %p231 = scmp.ne.s32.totalorder %s216, %s230
      %p232 = scmp.eq.s32.totalorder %s28, 0
      %p233 = por %p231, %p232
      %s235 = sadd.s32 %s234, 1
      %p238 = scmp.eq.s32.totalorder %s22, 1
      %p239 = scmp.ne.s32.totalorder %s234, %s236
      %p240 = scmp.eq.s32.totalorder %s22, 0
      %p241 = por %p239, %p240
      %p242 = scmp.ne.s32.totalorder %s234, %s236
      %p243 = scmp.eq.s32.totalorder %s27, 1
      %p244 = por %p242, %p243
      %p245 = scmp.ne.s32.totalorder %s236, %s237
      %p246 = scmp.eq.s32.totalorder %s27, 0
      %p247 = por %p245, %p246
      %p248 = scmp.ne.s32.totalorder %s236, %s237
      %p249 = scmp.eq.s32.totalorder %s28, 1
      %p250 = por %p248, %p249
      %p252 = scmp.ne.s32.totalorder %s237, %s251
      %p253 = scmp.eq.s32.totalorder %s28, 0
      %p254 = por %p252, %p253
      %s256 = sadd.s32 %s255, 1
      %p259 = scmp.eq.s32.totalorder %s22, 1
      %p260 = scmp.ne.s32.totalorder %s255, %s257
      %p261 = scmp.eq.s32.totalorder %s22, 0
      %p262 = por %p260, %p261
      %p263 = scmp.ne.s32.totalorder %s255, %s257
      %p264 = scmp.eq.s32.totalorder %s27, 1
      %p265 = por %p263, %p264
      %p266 = scmp.ne.s32.totalorder %s257, %s258
      %p267 = scmp.eq.s32.totalorder %s27, 0
      %p268 = por %p266, %p267
      %p269 = scmp.ne.s32.totalorder %s257, %s258
      %p270 = scmp.eq.s32.totalorder %s28, 1
      %p271 = por %p269, %p270
      %p273 = scmp.ne.s32.totalorder %s258, %s272
      %p274 = scmp.eq.s32.totalorder %s28, 0
      %p275 = por %p273, %p274
      %s276 = ssub.s32 %s22, %s29
      %p277 = scmp.eq.s32.totalorder %s276, 0
      %s279 = sadd.s32 %s278, 1
      %s280 = scalar_select %p277, %s278, %s279
      %p283 = pneg %p277
      %p284 = scmp.eq.s32.totalorder %s22, 1
      %p285 = por %p283, %p284
      %p286 = scmp.ne.s32.totalorder %s278, %s281
      %p287 = scmp.eq.s32.totalorder %s22, 0
      %p288 = por %p286, %p287
      %p289 = scmp.ne.s32.totalorder %s278, %s281
      %p290 = scmp.eq.s32.totalorder %s27, 1
      %p291 = por %p289, %p290
      %p292 = scmp.ne.s32.totalorder %s281, %s282
      %p293 = scmp.eq.s32.totalorder %s27, 0
      %p294 = por %p292, %p293
      %p295 = scmp.ne.s32.totalorder %s281, %s282
      %p296 = scmp.eq.s32.totalorder %s28, 1
      %p297 = por %p295, %p296
      %p299 = scmp.ne.s32.totalorder %s282, %s298
      %p300 = scmp.eq.s32.totalorder %s28, 0
      %p301 = por %p299, %p300
      %s302 = ssub.s32 %s22, %s29
      %p303 = scmp.eq.s32.totalorder %s302, 0
      %s305 = sadd.s32 %s304, 1
      %s306 = scalar_select %p303, %s304, %s305
      %p309 = pneg %p303
      %p310 = scmp.eq.s32.totalorder %s22, 1
      %p311 = por %p309, %p310
      %p312 = scmp.ne.s32.totalorder %s304, %s307
      %p313 = scmp.eq.s32.totalorder %s22, 0
      %p314 = por %p312, %p313
      %p315 = scmp.ne.s32.totalorder %s304, %s307
      %p316 = scmp.eq.s32.totalorder %s27, 1
      %p317 = por %p315, %p316
      %p318 = scmp.ne.s32.totalorder %s307, %s308
      %p319 = scmp.eq.s32.totalorder %s27, 0
      %p320 = por %p318, %p319
      %p321 = scmp.ne.s32.totalorder %s307, %s308
      %p322 = scmp.eq.s32.totalorder %s28, 1
      %p323 = por %p321, %p322
      %p325 = scmp.ne.s32.totalorder %s308, %s324
      %p326 = scmp.eq.s32.totalorder %s28, 0
      %p327 = por %p325, %p326
      %p328 = scmp.le.s32.totalorder 1, %s22
      %p329 = scmp.lt.s32.totalorder %s22, 3
      %p330 = pnand %p328, %p329
      %p331 = pneg %p330
      // Predicated region
      $region9: #{decoder_forward.9} parent=5 // pred_check
        _
      $region10: #{decoder_forward.9} parent=5 // pred_check_branch
        %333 = sbr.rel (%p330) target = $region12
      $region11: #{decoder_forward.9} parent=5 // pred_region
        %s334 = ssub.s32 %s22, 1
        // Predicated region
        $region13: #{decoder_forward.9} parent=11 // pred_check
          %p335 = pneg %p121
        $region14: #{decoder_forward.9} parent=11 // pred_check_branch
          %337 = sbr.rel (%p335) target = $region16
        $region15: #{decoder_forward.9} parent=11 // pred_region
          _
        $region16: #{decoder_forward.9} parent=11 // pred_fallthru
          _
        // Predicated region
        $region17: #{decoder_forward.9} parent=11 // pred_check
          %p338 = pneg %p142
        $region18: #{decoder_forward.9} parent=11 // pred_check_branch
          %340 = sbr.rel (%p338) target = $region20
        $region19: #{decoder_forward.9} parent=11 // pred_region
          _
        $region20: #{decoder_forward.9} parent=11 // pred_fallthru
          _
        // Predicated region
        $region21: #{decoder_forward.9} parent=11 // pred_check
          %p341 = pneg %p163
        $region22: #{decoder_forward.9} parent=11 // pred_check_branch
          %343 = sbr.rel (%p341) target = $region24
        $region23: #{decoder_forward.9} parent=11 // pred_region
          _
        $region24: #{decoder_forward.9} parent=11 // pred_fallthru
          _
        // Predicated region
        $region25: #{decoder_forward.9} parent=11 // pred_check
          %p344 = pneg %p184
        $region26: #{decoder_forward.9} parent=11 // pred_check_branch
          %346 = sbr.rel (%p344) target = $region28
        $region27: #{decoder_forward.9} parent=11 // pred_region
          _
        $region28: #{decoder_forward.9} parent=11 // pred_fallthru
          _
        // Predicated region
        $region29: #{decoder_forward.9} parent=11 // pred_check
          %p347 = pneg %p205
        $region30: #{decoder_forward.9} parent=11 // pred_check_branch
          %349 = sbr.rel (%p347) target = $region32
        $region31: #{decoder_forward.9} parent=11 // pred_region
          _
        $region32: #{decoder_forward.9} parent=11 // pred_fallthru
          _
        // Predicated region
        $region33: #{decoder_forward.9} parent=11 // pred_check
          %p350 = pneg %p226
        $region34: #{decoder_forward.9} parent=11 // pred_check_branch
          %352 = sbr.rel (%p350) target = $region36
        $region35: #{decoder_forward.9} parent=11 // pred_region
          _
        $region36: #{decoder_forward.9} parent=11 // pred_fallthru
          _
        // Predicated region
        $region37: #{decoder_forward.9} parent=11 // pred_check
          %p353 = pneg %p247
        $region38: #{decoder_forward.9} parent=11 // pred_check_branch
          %355 = sbr.rel (%p353) target = $region40
        $region39: #{decoder_forward.9} parent=11 // pred_region
          _
        $region40: #{decoder_forward.9} parent=11 // pred_fallthru
          _
        // Predicated region
        $region41: #{decoder_forward.9} parent=11 // pred_check
          %p356 = pneg %p268
        $region42: #{decoder_forward.9} parent=11 // pred_check_branch
          %358 = sbr.rel (%p356) target = $region44
        $region43: #{decoder_forward.9} parent=11 // pred_region
          _
        $region44: #{decoder_forward.9} parent=11 // pred_fallthru
          _
      $region12: #{decoder_forward.9} parent=5 // pred_fallthru
        _
      %p359 = scmp.lt.s32.totalorder %s22, 2
      // Predicated region
      $region45: #{decoder_forward.9} parent=5 // pred_check
        %p360 = pneg %p359
      $region46: #{decoder_forward.9} parent=5 // pred_check_branch
        %362 = sbr.rel (%p360) target = $region48
      $region47: #{decoder_forward.9} parent=5 // pred_region
        // Predicated region
        $region49: #{decoder_forward.9} parent=47 // pred_check
          %p363 = pneg %p42
        $region50: #{decoder_forward.9} parent=47 // pred_check_branch
          %365 = sbr.rel (%p363) target = $region52
        $region51: #{decoder_forward.9} parent=47 // pred_region
          %p366 = scmp.lt.s32.totalorder %s22, 1
          %s367 = scalar_select %p366, %s22, 1
          %s368 = smul.addr %s367, 8
          %s369 = scalar_lea.vmem %s0, %s368
        $region52: #{decoder_forward.9} parent=47 // pred_fallthru
          _
        // Predicated region
        $region53: #{decoder_forward.9} parent=47 // pred_check
          %p370 = pneg %p68
        $region54: #{decoder_forward.9} parent=47 // pred_check_branch
          %372 = sbr.rel (%p370) target = $region56
        $region55: #{decoder_forward.9} parent=47 // pred_region
          %p373 = scmp.lt.s32.totalorder %s22, 1
          %s374 = scalar_select %p373, %s22, 1
          %s375 = smul.addr %s374, 8
          %s376 = scalar_lea.vmem %s1, %s375
        $region56: #{decoder_forward.9} parent=47 // pred_fallthru
          _
        // Predicated region
        $region57: #{decoder_forward.9} parent=47 // pred_check
          %p377 = pneg %p94
        $region58: #{decoder_forward.9} parent=47 // pred_check_branch
          %379 = sbr.rel (%p377) target = $region60
        $region59: #{decoder_forward.9} parent=47 // pred_region
          %p380 = scmp.lt.s32.totalorder %s22, 1
          %s381 = scalar_select %p380, %s22, 1
          %s382 = smul.addr %s381, 8
          %s383 = scalar_lea.vmem %s2, %s382
        $region60: #{decoder_forward.9} parent=47 // pred_fallthru
          _
      $region48: #{decoder_forward.9} parent=5 // pred_fallthru
        _
      %p384 = scmp.le.s32.totalorder 1, %s22
      %p385 = scmp.lt.s32.totalorder %s22, 3
      %p386 = pnand %p384, %p385
      %p387 = pneg %p386
      // Predicated region
      $region61: #{decoder_forward.9} parent=5 // pred_check
        _
      $region62: #{decoder_forward.9} parent=5 // pred_check_branch
        %389 = sbr.rel (%p386) target = $region64
      $region63: #{decoder_forward.9} parent=5 // pred_region
        %s390 = ssub.s32 %s22, 1
        %p391 = scmp.lt.s32.totalorder %s27, 1
        %s392 = scalar_select %p391, %s27, 1
        %s393 = smul.addr %s392, 8
        %s394 = scalar_lea.vmem %s0, %s393
        %p395 = pneg %p48
        %p396 = pneg %p45
        %p397 = scmp.lt.s32.totalorder %s27, 1
        %s398 = scalar_select %p397, %s27, 1
        %s399 = smul.addr %s398, 8
        %s400 = scalar_lea.vmem %s1, %s399
        %p401 = pneg %p74
        %p402 = pneg %p71
        %p403 = scmp.lt.s32.totalorder %s27, 1
        %s404 = scalar_select %p403, %s27, 1
        %s405 = smul.addr %s404, 8
        %s406 = scalar_lea.vmem %s2, %s405
        %p407 = pneg %p100
        %p408 = pneg %p97
        %p409 = pneg %p121
        %p410 = pneg %p118
        %p411 = pneg %p142
        %p412 = pneg %p139
        %p413 = pneg %p163
        %p414 = pneg %p160
        %p415 = pneg %p184
        %p416 = pneg %p181
        %p417 = pneg %p205
        %p418 = pneg %p202
        %p419 = pneg %p226
        %p420 = pneg %p223
        %p421 = pneg %p247
        %p422 = pneg %p244
        %p423 = pneg %p268
        %p424 = pneg %p265
        %p425 = pneg %p294
        %p426 = pneg %p291
        %p427 = scmp.lt.s32.totalorder %s27, 1
        %s428 = scalar_select %p427, %s27, 1
        %s429 = smul.addr %s428, 8
        %s430 = scalar_lea.vmem %s11, %s429
        %p431 = pneg %p320
        %p432 = pneg %p317
        %s433 = sand.u32 %s307, 1
        %s434 = scalar_lea.sflag [#allocation3], %s433
        %s435 = sand.u32 %s307, 1
        %s436 = smul.addr %s435, 32
        %s437 = scalar_lea.vmem [#allocation2], %s436
        %p438 = scmp.lt.s32.totalorder %s27, 1
        %s439 = scalar_select %p438, %s27, 1
        %s440 = smul.addr %s439, 8
        %s441 = scalar_lea.vmem %s0, %s440
        %p442 = scmp.lt.s32.totalorder %s27, 1
        %s443 = scalar_select %p442, %s27, 1
        %s444 = smul.addr %s443, 8
        %s445 = scalar_lea.vmem %s1, %s444
        %p446 = scmp.lt.s32.totalorder %s27, 1
        %s447 = scalar_select %p446, %s27, 1
        %s448 = smul.addr %s447, 8
        %s449 = scalar_lea.vmem %s2, %s448
        %p450 = scmp.lt.s32.totalorder %s27, 1
        %s451 = scalar_select %p450, %s27, 1
        %s452 = smul.addr %s451, 8
        %s453 = scalar_lea.vmem %s11, %s452
        %v454 = vld [vmem:[%s441] sm:$0xff]
        %v455 = vld [vmem:[%s445] sm:$0xff]
        %v456 = vld [vmem:[%s449] sm:$0xff]
        %v457 = vld [vmem:[%s3] sm:$0xff]
        %v458 = vld [vmem:[%s3 + $0x8] sm:$0xff]
        %v459 = vld [vmem:[%s3 + $0x10] sm:$0xff]
        %v460 = vld [vmem:[%s3 + $0x18] sm:$0xff]
        %v461 = vld [vmem:[%s4] sm:$0x1]
        %v463 = vlaneseq
        %v464 = vshrl.u32 %v463, 7
        %v465 = vsub.s32 0, %v464
        %v466 = vrot.slane %v461, %v465
        %vm468 = vcmask 261120
        %v470 = vsel %vm468, %v454, 0
        %472 = vmatprep.subr.mxu0 0.0
        %473 = vmatpush1.msra.mxu0 %v457
        %474 = vmatprep.subr.mxu0 0.0
        %475 = vmatpush1.msra.mxu0 %v458
        %476 = vmatprep.subr.mxu0 0.0
        %477 = vmatpush1.msra.mxu0 %v459
        %478 = vmatprep.subr.mxu0 0.0
        %479 = vmatpush1.msra.mxu0 %v460
        %480 = vmatprep.subr.mxu0 0.0
        %481 = vmatpush1.msra.mxu0 0.0
        %482 = vmatprep.subr.mxu0 0.0
        %483 = vmatpush1.msra.mxu0 0.0
        %484 = vmatprep.subr.mxu0 0.0
        %485 = vmatpush1.msra.mxu0 0.0
        %486 = vmatprep.subr.mxu0 0.0
        %487 = vmatpush1.msra.mxu0 0.0
        %488 = vmatprep.subr.mxu0 0.0
        %489 = vmatpush1.msra.mxu0 0.0
        %490 = vmatprep.subr.mxu0 0.0
        %491 = vmatpush1.msra.mxu0 0.0
        %492 = vmatprep.subr.mxu0 0.0
        %493 = vmatpush1.msra.mxu0 0.0
        %494 = vmatprep.subr.mxu0 0.0
        %495 = vmatpush1.msra.mxu0 0.0
        %496 = vmatprep.subr.mxu0 0.0
        %497 = vmatpush1.msra.mxu0 0.0
        %498 = vmatprep.subr.mxu0 0.0
        %499 = vmatpush1.msra.mxu0 0.0
        %500 = vmatprep.subr.mxu0 0.0
        %501 = vmatpush1.msra.mxu0 0.0
        %502 = vmatprep.subr.mxu0 0.0
        %503 = vmatpush1.msra.mxu0 0.0
        %504 = vmatprep.subr.mxu0 0.0
        %505 = vmatpush1.msra.mxu0 0.0
        %506 = vmatprep.subr.mxu0 0.0
        %507 = vmatpush1.msra.mxu0 0.0
        %508 = vmatprep.subr.mxu0 0.0
        %509 = vmatpush1.msra.mxu0 0.0
        %510 = vmatprep.subr.mxu0 0.0
        %511 = vmatpush1.msra.mxu0 0.0
        %512 = vmatprep.subr.mxu0 0.0
        %513 = vmatpush1.msra.mxu0 0.0
        %514 = vmatprep.subr.mxu0 0.0
        %515 = vmatpush1.msra.mxu0 0.0
        %516 = vmatprep.subr.mxu0 0.0
        %517 = vmatpush1.msra.mxu0 0.0
        %518 = vmatprep.subr.mxu0 0.0
        %519 = vmatpush1.msra.mxu0 0.0
        %520 = vmatprep.subr.mxu0 0.0
        %521 = vmatpush1.msra.mxu0 0.0
        %522 = vmatprep.subr.mxu0 0.0
        %523 = vmatpush1.msra.mxu0 0.0
        %524 = vmatprep.subr.mxu0 0.0
        %525 = vmatpush1.msra.mxu0 0.0
        %526 = vmatprep.subr.mxu0 0.0
        %527 = vmatpush1.msra.mxu0 0.0
        %528 = vmatprep.subr.mxu0 0.0
        %529 = vmatpush1.msra.mxu0 0.0
        %530 = vmatprep.subr.mxu0 0.0
        %531 = vmatpush1.msra.mxu0 0.0
        %532 = vmatprep.subr.mxu0 0.0
        %533 = vmatpush1.msra.mxu0 0.0
        %534 = vmatprep.subr.mxu0 0.0
        %535 = vmatpush1.msra.mxu0 0.0
        %536 = vmatprep.mubr.f32.mxu0 0.0
        %537 = vmatmul.mubr.f32.gmra.mrb[0].mxu0 %v470
        %v538 = vpop.f32.mrb[0].mxu0
        %v539 = vadd.f32 %v466, %v538
        %v540 = vpop.f32.mrb[0].mxu0
        %541 = vdwg.mxu0
        %v542 = vld [vmem:[%s5] sm:$0xff]
        %v543 = vld [vmem:[%s5 + $0x8] sm:$0xff]
        %v544 = vld [vmem:[%s5 + $0x10] sm:$0xff]
        %v545 = vld [vmem:[%s5 + $0x18] sm:$0xff]
        %v546 = vld [vmem:[%s6] sm:$0x1]
        %v548 = vlaneseq
        %v549 = vshrl.u32 %v548, 7
        %v550 = vsub.s32 0, %v549
        %v551 = vrot.slane %v546, %v550
        %v554 = vsel %vm468, %v455, 0
        %556 = vmatprep.subr.mxu0 0.0
        %557 = vmatpush1.msra.mxu0 %v542
        %558 = vmatprep.subr.mxu0 0.0
        %559 = vmatpush1.msra.mxu0 %v543
        %560 = vmatprep.subr.mxu0 0.0
        %561 = vmatpush1.msra.mxu0 %v544
        %562 = vmatprep.subr.mxu0 0.0
        %563 = vmatpush1.msra.mxu0 %v545
        %564 = vmatprep.subr.mxu0 0.0
        %565 = vmatpush1.msra.mxu0 0.0
        %566 = vmatprep.subr.mxu0 0.0
        %567 = vmatpush1.msra.mxu0 0.0
        %568 = vmatprep.subr.mxu0 0.0
        %569 = vmatpush1.msra.mxu0 0.0
        %570 = vmatprep.subr.mxu0 0.0
        %571 = vmatpush1.msra.mxu0 0.0
        %572 = vmatprep.subr.mxu0 0.0
        %573 = vmatpush1.msra.mxu0 0.0
        %574 = vmatprep.subr.mxu0 0.0
        %575 = vmatpush1.msra.mxu0 0.0
        %576 = vmatprep.subr.mxu0 0.0
        %577 = vmatpush1.msra.mxu0 0.0
        %578 = vmatprep.subr.mxu0 0.0
        %579 = vmatpush1.msra.mxu0 0.0
        %580 = vmatprep.subr.mxu0 0.0
        %581 = vmatpush1.msra.mxu0 0.0
        %582 = vmatprep.subr.mxu0 0.0
        %583 = vmatpush1.msra.mxu0 0.0
        %584 = vmatprep.subr.mxu0 0.0
        %585 = vmatpush1.msra.mxu0 0.0
        %586 = vmatprep.subr.mxu0 0.0
        %587 = vmatpush1.msra.mxu0 0.0
        %588 = vmatprep.subr.mxu0 0.0
        %589 = vmatpush1.msra.mxu0 0.0
        %590 = vmatprep.subr.mxu0 0.0
        %591 = vmatpush1.msra.mxu0 0.0
        %592 = vmatprep.subr.mxu0 0.0
        %593 = vmatpush1.msra.mxu0 0.0
        %594 = vmatprep.subr.mxu0 0.0
        %595 = vmatpush1.msra.mxu0 0.0
        %596 = vmatprep.subr.mxu0 0.0
        %597 = vmatpush1.msra.mxu0 0.0
        %598 = vmatprep.subr.mxu0 0.0
        %599 = vmatpush1.msra.mxu0 0.0
        %600 = vmatprep.subr.mxu0 0.0
        %601 = vmatpush1.msra.mxu0 0.0
        %602 = vmatprep.subr.mxu0 0.0
        %603 = vmatpush1.msra.mxu0 0.0
        %604 = vmatprep.subr.mxu0 0.0
        %605 = vmatpush1.msra.mxu0 0.0
        %606 = vmatprep.subr.mxu0 0.0
        %607 = vmatpush1.msra.mxu0 0.0
        %608 = vmatprep.subr.mxu0 0.0
        %609 = vmatpush1.msra.mxu0 0.0
        %610 = vmatprep.subr.mxu0 0.0
        %611 = vmatpush1.msra.mxu0 0.0
        %612 = vmatprep.subr.mxu0 0.0
        %613 = vmatpush1.msra.mxu0 0.0
        %614 = vmatprep.subr.mxu0 0.0
        %615 = vmatpush1.msra.mxu0 0.0
        %616 = vmatprep.subr.mxu0 0.0
        %617 = vmatpush1.msra.mxu0 0.0
        %618 = vmatprep.subr.mxu0 0.0
        %619 = vmatpush1.msra.mxu0 0.0
        %620 = vmatprep.mubr.f32.mxu0 0.0
        %621 = vmatmul.mubr.f32.gmra.mrb[0].mxu0 %v554
        %v622 = vpop.f32.mrb[0].mxu0
        %v623 = vadd.f32 %v551, %v622
        %v624 = vpop.f32.mrb[0].mxu0
        %625 = vdwg.mxu0
        %v626 = vmul.f32 %v539, 0.35355338
        %vm627 = vcmask 64512
        %v629 = vsel %vm627, %v626, 0
        %v632 = vsel %vm627, %v623, 0
        %634 = vmatprep.subr.mxu0 0.0
        %635 = vmatpush1.xpose.msra.mxu0 %v632
        %636 = vmatprep.subr.mxu0 0.0
        %637 = vmatpush1.xpose.msra.mxu0 0.0
        %638 = vmatprep.subr.mxu0 0.0
        %639 = vmatpush1.xpose.msra.mxu0 0.0
        %640 = vmatprep.subr.mxu0 0.0
        %641 = vmatpush1.xpose.msra.mxu0 0.0
        %642 = vmatprep.subr.mxu0 0.0
        %643 = vmatpush1.xpose.msra.mxu0 0.0
        %644 = vmatprep.subr.mxu0 0.0
        %645 = vmatpush1.xpose.msra.mxu0 0.0
        %646 = vmatprep.subr.mxu0 0.0
        %647 = vmatpush1.xpose.msra.mxu0 0.0
        %648 = vmatprep.subr.mxu0 0.0
        %649 = vmatpush1.xpose.msra.mxu0 0.0
        %650 = vmatprep.subr.mxu0 0.0
        %651 = vmatpush1.xpose.msra.mxu0 0.0
        %652 = vmatprep.subr.mxu0 0.0
        %653 = vmatpush1.xpose.msra.mxu0 0.0
        %654 = vmatprep.subr.mxu0 0.0
        %655 = vmatpush1.xpose.msra.mxu0 0.0
        %656 = vmatprep.subr.mxu0 0.0
        %657 = vmatpush1.xpose.msra.mxu0 0.0
        %658 = vmatprep.subr.mxu0 0.0
        %659 = vmatpush1.xpose.msra.mxu0 0.0
        %660 = vmatprep.subr.mxu0 0.0
        %661 = vmatpush1.xpose.msra.mxu0 0.0
        %662 = vmatprep.subr.mxu0 0.0
        %663 = vmatpush1.xpose.msra.mxu0 0.0
        %664 = vmatprep.subr.mxu0 0.0
        %665 = vmatpush1.xpose.msra.mxu0 0.0
        %666 = vmatprep.subr.mxu0 0.0
        %667 = vmatpush1.xpose.msra.mxu0 0.0
        %668 = vmatprep.subr.mxu0 0.0
        %669 = vmatpush1.xpose.msra.mxu0 0.0
        %670 = vmatprep.subr.mxu0 0.0
        %671 = vmatpush1.xpose.msra.mxu0 0.0
        %672 = vmatprep.subr.mxu0 0.0
        %673 = vmatpush1.xpose.msra.mxu0 0.0
        %674 = vmatprep.subr.mxu0 0.0
        %675 = vmatpush1.xpose.msra.mxu0 0.0
        %676 = vmatprep.subr.mxu0 0.0
        %677 = vmatpush1.xpose.msra.mxu0 0.0
        %678 = vmatprep.subr.mxu0 0.0
        %679 = vmatpush1.xpose.msra.mxu0 0.0
        %680 = vmatprep.subr.mxu0 0.0
        %681 = vmatpush1.xpose.msra.mxu0 0.0
        %682 = vmatprep.subr.mxu0 0.0
        %683 = vmatpush1.xpose.msra.mxu0 0.0
        %684 = vmatprep.subr.mxu0 0.0
        %685 = vmatpush1.xpose.msra.mxu0 0.0
        %686 = vmatprep.subr.mxu0 0.0
        %687 = vmatpush1.xpose.msra.mxu0 0.0
        %688 = vmatprep.subr.mxu0 0.0
        %689 = vmatpush1.xpose.msra.mxu0 0.0
        %690 = vmatprep.subr.mxu0 0.0
        %691 = vmatpush1.xpose.msra.mxu0 0.0
        %692 = vmatprep.subr.mxu0 0.0
        %693 = vmatpush1.xpose.msra.mxu0 0.0
        %694 = vmatprep.subr.mxu0 0.0
        %695 = vmatpush1.xpose.msra.mxu0 0.0
        %696 = vmatprep.subr.mxu0 0.0
        %697 = vmatpush1.xpose.msra.mxu0 0.0
        %698 = vmatprep.mubr.f32.mxu0 0.0
        %699 = vmatmul.mubr.f32.gmra.mrb[0].mxu0 %v629
        %v700 = vpop.f32.mrb[0].mxu0
        %v701 = vadd.f32 0.0, %v700
        %v702 = vpop.f32.mrb[0].mxu0
        %703 = vdwg.mxu0
        %vm704 = vcmp.gt.f32.partialorder %v456, 0.0
        %v705 = vsel %vm704, %v701, -1e+09
        %v706 = vsel %vm627, %v705, -inf
        %707 = vmax.xlane.f32.xlu0 %v706
        %v708 = vpop.xlane.xlu0 %707
        %v709 = vsub.f32 %v705, %v708
        %v710 = vmul.f32 %v709, 1.442695
        %v711 = vpow.pop %v710
        %v712 = vsel %vm627, %v711, 0.0
        %713 = vadd.xlane.f32.xlu0 %v712
        %v714 = vpop.xlane.xlu0 %713
        %v715 = vrcp.pop %v714
        %v716 = vmul.f32 %v711, %v715
        %717 = vst.msk [vmem:[%s437] sm:$0xff] %vm627, %v716
        %718 = vrot.lane.b32.xlu0 %v623, 96
        %v719 = vpop.permute.xlu0 %718
        %v722 = vsel %vm627, %v716, 0
        %724 = vmatprep.subr.mxu0 0.0
        %725 = vmatpush1.msra.mxu0 %v719
        %726 = vmatprep.subr.mxu0 0.0
        %727 = vmatpush1.msra.mxu0 0.0
        %728 = vmatprep.subr.mxu0 0.0
        %729 = vmatpush1.msra.mxu0 0.0
        %730 = vmatprep.subr.mxu0 0.0
        %731 = vmatpush1.msra.mxu0 0.0
        %732 = vmatprep.subr.mxu0 0.0
        %733 = vmatpush1.msra.mxu0 0.0
        %734 = vmatprep.subr.mxu0 0.0
        %735 = vmatpush1.msra.mxu0 0.0
        %736 = vmatprep.subr.mxu0 0.0
        %737 = vmatpush1.msra.mxu0 0.0
        %738 = vmatprep.subr.mxu0 0.0
        %739 = vmatpush1.msra.mxu0 0.0
        %740 = vmatprep.subr.mxu0 0.0
        %741 = vmatpush1.msra.mxu0 0.0
        %742 = vmatprep.subr.mxu0 0.0
        %743 = vmatpush1.msra.mxu0 0.0
        %744 = vmatprep.subr.mxu0 0.0
        %745 = vmatpush1.msra.mxu0 0.0
        %746 = vmatprep.subr.mxu0 0.0
        %747 = vmatpush1.msra.mxu0 0.0
        %748 = vmatprep.subr.mxu0 0.0
        %749 = vmatpush1.msra.mxu0 0.0
        %750 = vmatprep.subr.mxu0 0.0
        %751 = vmatpush1.msra.mxu0 0.0
        %752 = vmatprep.subr.mxu0 0.0
        %753 = vmatpush1.msra.mxu0 0.0
        %754 = vmatprep.subr.mxu0 0.0
        %755 = vmatpush1.msra.mxu0 0.0
        %756 = vmatprep.subr.mxu0 0.0
        %757 = vmatpush1.msra.mxu0 0.0
        %758 = vmatprep.subr.mxu0 0.0
        %759 = vmatpush1.msra.mxu0 0.0
        %760 = vmatprep.subr.mxu0 0.0
        %761 = vmatpush1.msra.mxu0 0.0
        %762 = vmatprep.subr.mxu0 0.0
        %763 = vmatpush1.msra.mxu0 0.0
        %764 = vmatprep.subr.mxu0 0.0
        %765 = vmatpush1.msra.mxu0 0.0
        %766 = vmatprep.subr.mxu0 0.0
        %767 = vmatpush1.msra.mxu0 0.0
        %768 = vmatprep.subr.mxu0 0.0
        %769 = vmatpush1.msra.mxu0 0.0
        %770 = vmatprep.subr.mxu0 0.0
        %771 = vmatpush1.msra.mxu0 0.0
        %772 = vmatprep.subr.mxu0 0.0
        %773 = vmatpush1.msra.mxu0 0.0
        %774 = vmatprep.subr.mxu0 0.0
        %775 = vmatpush1.msra.mxu0 0.0
        %776 = vmatprep.subr.mxu0 0.0
        %777 = vmatpush1.msra.mxu0 0.0
        %778 = vmatprep.subr.mxu0 0.0
        %779 = vmatpush1.msra.mxu0 0.0
        %780 = vmatprep.subr.mxu0 0.0
        %781 = vmatpush1.msra.mxu0 0.0
        %782 = vmatprep.subr.mxu0 0.0
        %783 = vmatpush1.msra.mxu0 0.0
        %784 = vmatprep.subr.mxu0 0.0
        %785 = vmatpush1.msra.mxu0 0.0
        %786 = vmatprep.subr.mxu0 0.0
        %787 = vmatpush1.msra.mxu0 0.0
        %788 = vmatprep.mubr.f32.mxu0 0.0
        %789 = vmatmul.mubr.f32.gmra.mrb[0].mxu0 %v722
        %v790 = vpop.f32.mrb[0].mxu0
        %v791 = vadd.f32 0.0, %v790
        %v792 = vpop.f32.mrb[0].mxu0
        %793 = vdwg.mxu0
        %v794 = vld [vmem:[%s7] sm:$0xff]
        %795 = vrot.lane.b32.xlu0 %v626, 120
        %v796 = vpop.permute.xlu0 %795
        %797 = vrot.lane.b32.xlu0 %v623, 120
        %v798 = vpop.permute.xlu0 %797
        %v799 = vsel %vm627, %v796, 0
        %v801 = vsel %vm627, %v798, 0
        %803 = vmatprep.subr.mxu0 0.0
        %804 = vmatpush1.xpose.msra.mxu0 %v801
        %805 = vmatprep.subr.mxu0 0.0
        %806 = vmatpush1.xpose.msra.mxu0 0.0
        %807 = vmatprep.subr.mxu0 0.0
        %808 = vmatpush1.xpose.msra.mxu0 0.0
        %809 = vmatprep.subr.mxu0 0.0
        %810 = vmatpush1.xpose.msra.mxu0 0.0
        %811 = vmatprep.subr.mxu0 0.0
        %812 = vmatpush1.xpose.msra.mxu0 0.0
        %813 = vmatprep.subr.mxu0 0.0
        %814 = vmatpush1.xpose.msra.mxu0 0.0
        %815 = vmatprep.subr.mxu0 0.0
        %816 = vmatpush1.xpose.msra.mxu0 0.0
        %817 = vmatprep.subr.mxu0 0.0
        %818 = vmatpush1.xpose.msra.mxu0 0.0
        %819 = vmatprep.subr.mxu0 0.0
        %820 = vmatpush1.xpose.msra.mxu0 0.0
        %821 = vmatprep.subr.mxu0 0.0
        %822 = vmatpush1.xpose.msra.mxu0 0.0
        %823 = vmatprep.subr.mxu0 0.0
        %824 = vmatpush1.xpose.msra.mxu0 0.0
        %825 = vmatprep.subr.mxu0 0.0
        %826 = vmatpush1.xpose.msra.mxu0 0.0
        %827 = vmatprep.subr.mxu0 0.0
        %828 = vmatpush1.xpose.msra.mxu0 0.0
        %829 = vmatprep.subr.mxu0 0.0
        %830 = vmatpush1.xpose.msra.mxu0 0.0
        %831 = vmatprep.subr.mxu0 0.0
        %832 = vmatpush1.xpose.msra.mxu0 0.0
        %833 = vmatprep.subr.mxu0 0.0
        %834 = vmatpush1.xpose.msra.mxu0 0.0
        %835 = vmatprep.subr.mxu0 0.0
        %836 = vmatpush1.xpose.msra.mxu0 0.0
        %837 = vmatprep.subr.mxu0 0.0
        %838 = vmatpush1.xpose.msra.mxu0 0.0
        %839 = vmatprep.subr.mxu0 0.0
        %840 = vmatpush1.xpose.msra.mxu0 0.0
        %841 = vmatprep.subr.mxu0 0.0
        %842 = vmatpush1.xpose.msra.mxu0 0.0
        %843 = vmatprep.subr.mxu0 0.0
        %844 = vmatpush1.xpose.msra.mxu0 0.0
        %845 = vmatprep.subr.mxu0 0.0
        %846 = vmatpush1.xpose.msra.mxu0 0.0
        %847 = vmatprep.subr.mxu0 0.0
        %848 = vmatpush1.xpose.msra.mxu0 0.0
        %849 = vmatprep.subr.mxu0 0.0
        %850 = vmatpush1.xpose.msra.mxu0 0.0
        %851 = vmatprep.subr.mxu0 0.0
        %852 = vmatpush1.xpose.msra.mxu0 0.0
        %853 = vmatprep.subr.mxu0 0.0
        %854 = vmatpush1.xpose.msra.mxu0 0.0
        %855 = vmatprep.subr.mxu0 0.0
        %856 = vmatpush1.xpose.msra.mxu0 0.0
        %857 = vmatprep.subr.mxu0 0.0
        %858 = vmatpush1.xpose.msra.mxu0 0.0
        %859 = vmatprep.subr.mxu0 0.0
        %860 = vmatpush1.xpose.msra.mxu0 0.0
        %861 = vmatprep.subr.mxu0 0.0
        %862 = vmatpush1.xpose.msra.mxu0 0.0
        %863 = vmatprep.subr.mxu0 0.0
        %864 = vmatpush1.xpose.msra.mxu0 0.0
        %865 = vmatprep.subr.mxu0 0.0
        %866 = vmatpush1.xpose.msra.mxu0 0.0
        %867 = vmatprep.mubr.f32.mxu0 0.0
        %868 = vmatmul.mubr.f32.gmra.mrb[0].mxu0 %v799
        %v869 = vpop.f32.mrb[0].mxu0
        %v870 = vadd.f32 0.0, %v869
        %v871 = vpop.f32.mrb[0].mxu0
        %872 = vdwg.mxu0
        %v873 = vsel %vm704, %v870, -1e+09
        %v874 = vsel %vm627, %v873, -inf
        %875 = vmax.xlane.f32.xlu0 %v874
        %v876 = vpop.xlane.xlu0 %875
        %v877 = vsub.f32 %v873, %v876
        %v878 = vmul.f32 %v877, 1.442695
        %v879 = vpow.pop %v878
        %v880 = vsel %vm627, %v879, 0.0
        %881 = vadd.xlane.f32.xlu0 %v880
        %v882 = vpop.xlane.xlu0 %881
        %v883 = vrcp.pop %v882
        %v884 = vmul.f32 %v879, %v883
        %s885 = scalar_lea.vmem %s437, 8 [#allocation2]
        %886 = vst.msk [vmem:[%s885] sm:$0xff] %vm627, %v884
        %887 = vrot.lane.b32.xlu0 %v623, 88
        %v888 = vpop.permute.xlu0 %887
        %v891 = vsel %vm627, %v884, 0
        %893 = vmatprep.subr.mxu0 0.0
        %894 = vmatpush1.msra.mxu0 %v888
        %895 = vmatprep.subr.mxu0 0.0
        %896 = vmatpush1.msra.mxu0 0.0
        %897 = vmatprep.subr.mxu0 0.0
        %898 = vmatpush1.msra.mxu0 0.0
        %899 = vmatprep.subr.mxu0 0.0
        %900 = vmatpush1.msra.mxu0 0.0
        %901 = vmatprep.subr.mxu0 0.0
        %902 = vmatpush1.msra.mxu0 0.0
        %903 = vmatprep.subr.mxu0 0.0
        %904 = vmatpush1.msra.mxu0 0.0
        %905 = vmatprep.subr.mxu0 0.0
        %906 = vmatpush1.msra.mxu0 0.0
        %907 = vmatprep.subr.mxu0 0.0
        %908 = vmatpush1.msra.mxu0 0.0
        %909 = vmatprep.subr.mxu0 0.0
        %910 = vmatpush1.msra.mxu0 0.0
        %911 = vmatprep.subr.mxu0 0.0
        %912 = vmatpush1.msra.mxu0 0.0
        %913 = vmatprep.subr.mxu0 0.0
        %914 = vmatpush1.msra.mxu0 0.0
        %915 = vmatprep.subr.mxu0 0.0
        %916 = vmatpush1.msra.mxu0 0.0
        %917 = vmatprep.subr.mxu0 0.0
        %918 = vmatpush1.msra.mxu0 0.0
        %919 = vmatprep.subr.mxu0 0.0
        %920 = vmatpush1.msra.mxu0 0.0
        %921 = vmatprep.subr.mxu0 0.0
        %922 = vmatpush1.msra.mxu0 0.0
        %923 = vmatprep.subr.mxu0 0.0
        %924 = vmatpush1.msra.mxu0 0.0
        %925 = vmatprep.subr.mxu0 0.0
        %926 = vmatpush1.msra.mxu0 0.0
        %927 = vmatprep.subr.mxu0 0.0
        %928 = vmatpush1.msra.mxu0 0.0
        %929 = vmatprep.subr.mxu0 0.0
        %930 = vmatpush1.msra.mxu0 0.0
        %931 = vmatprep.subr.mxu0 0.0
        %932 = vmatpush1.msra.mxu0 0.0
        %933 = vmatprep.subr.mxu0 0.0
        %934 = vmatpush1.msra.mxu0 0.0
        %935 = vmatprep.subr.mxu0 0.0
        %936 = vmatpush1.msra.mxu0 0.0
        %937 = vmatprep.subr.mxu0 0.0
        %938 = vmatpush1.msra.mxu0 0.0
        %939 = vmatprep.subr.mxu0 0.0
        %940 = vmatpush1.msra.mxu0 0.0
        %941 = vmatprep.subr.mxu0 0.0
        %942 = vmatpush1.msra.mxu0 0.0
        %943 = vmatprep.subr.mxu0 0.0
        %944 = vmatpush1.msra.mxu0 0.0
        %945 = vmatprep.subr.mxu0 0.0
        %946 = vmatpush1.msra.mxu0 0.0
        %947 = vmatprep.subr.mxu0 0.0
        %948 = vmatpush1.msra.mxu0 0.0
        %949 = vmatprep.subr.mxu0 0.0
        %950 = vmatpush1.msra.mxu0 0.0
        %951 = vmatprep.subr.mxu0 0.0
        %952 = vmatpush1.msra.mxu0 0.0
        %953 = vmatprep.subr.mxu0 0.0
        %954 = vmatpush1.msra.mxu0 0.0
        %955 = vmatprep.subr.mxu0 0.0
        %956 = vmatpush1.msra.mxu0 0.0
        %957 = vmatprep.mubr.f32.mxu0 0.0
        %958 = vmatmul.mubr.f32.gmra.mrb[0].mxu0 %v891
        %v959 = vpop.f32.mrb[0].mxu0
        %v960 = vadd.f32 0.0, %v959
        %v961 = vpop.f32.mrb[0].mxu0
        %962 = vdwg.mxu0
        %v963 = vld [vmem:[%s7 + $0x8] sm:$0xff]
        %v965 = vsel %vm627, %v960, 0
        %967 = vmatprep.subr.mxu0 0.0
        %968 = vmatpush1.msra.mxu0 %v963
        %969 = vmatprep.subr.mxu0 0.0
        %970 = vmatpush1.msra.mxu0 0.0
        %971 = vmatprep.subr.mxu0 0.0
        %972 = vmatpush1.msra.mxu0 0.0
        %973 = vmatprep.subr.mxu0 0.0
        %974 = vmatpush1.msra.mxu0 0.0
        %975 = vmatprep.subr.mxu0 0.0
        %976 = vmatpush1.msra.mxu0 0.0
        %977 = vmatprep.subr.mxu0 0.0
        %978 = vmatpush1.msra.mxu0 0.0
        %979 = vmatprep.subr.mxu0 0.0
        %980 = vmatpush1.msra.mxu0 0.0
        %981 = vmatprep.subr.mxu0 0.0
        %982 = vmatpush1.msra.mxu0 0.0
        %983 = vmatprep.subr.mxu0 0.0
        %984 = vmatpush1.msra.mxu0 0.0
        %985 = vmatprep.subr.mxu0 0.0
        %986 = vmatpush1.msra.mxu0 0.0
        %987 = vmatprep.subr.mxu0 0.0
        %988 = vmatpush1.msra.mxu0 0.0
        %989 = vmatprep.subr.mxu0 0.0
        %990 = vmatpush1.msra.mxu0 0.0
        %991 = vmatprep.subr.mxu0 0.0
        %992 = vmatpush1.msra.mxu0 0.0
        %993 = vmatprep.subr.mxu0 0.0
        %994 = vmatpush1.msra.mxu0 0.0
        %995 = vmatprep.subr.mxu0 0.0
        %996 = vmatpush1.msra.mxu0 0.0
        %997 = vmatprep.subr.mxu0 0.0
        %998 = vmatpush1.msra.mxu0 0.0
        %999 = vmatprep.subr.mxu0 0.0
        %1000 = vmatpush1.msra.mxu0 0.0
        %1001 = vmatprep.subr.mxu0 0.0
        %1002 = vmatpush1.msra.mxu0 0.0
        %1003 = vmatprep.subr.mxu0 0.0
        %1004 = vmatpush1.msra.mxu0 0.0
        %1005 = vmatprep.subr.mxu0 0.0
        %1006 = vmatpush1.msra.mxu0 0.0
        %1007 = vmatprep.subr.mxu0 0.0
        %1008 = vmatpush1.msra.mxu0 0.0
        %1009 = vmatprep.subr.mxu0 0.0
        %1010 = vmatpush1.msra.mxu0 0.0
        %1011 = vmatprep.subr.mxu0 0.0
        %1012 = vmatpush1.msra.mxu0 0.0
        %1013 = vmatprep.subr.mxu0 0.0
        %1014 = vmatpush1.msra.mxu0 0.0
        %1015 = vmatprep.subr.mxu0 0.0
        %1016 = vmatpush1.msra.mxu0 0.0
        %1017 = vmatprep.subr.mxu0 0.0
        %1018 = vmatpush1.msra.mxu0 0.0
        %1019 = vmatprep.subr.mxu0 0.0
        %1020 = vmatpush1.msra.mxu0 0.0
        %1021 = vmatprep.subr.mxu0 0.0
        %1022 = vmatpush1.msra.mxu0 0.0
        %1023 = vmatprep.subr.mxu0 0.0
        %1024 = vmatpush1.msra.mxu0 0.0
        %1025 = vmatprep.subr.mxu0 0.0
        %1026 = vmatpush1.msra.mxu0 0.0
        %1027 = vmatprep.subr.mxu0 0.0
        %1028 = vmatpush1.msra.mxu0 0.0
        %1029 = vmatprep.subr.mxu0 0.0
        %1030 = vmatpush1.msra.mxu0 0.0
        %1031 = vmatprep.mubr.f32.mxu0 0.0
        %1032 = vmatmul.mubr.f32.gmra.mrb[0].mxu0 %v965
        %v1033 = vpop.f32.mrb[0].mxu0
        %v1034 = vadd.f32 0.0, %v1033
        %v1035 = vpop.f32.mrb[0].mxu0
        %1036 = vdwg.mxu0
        %v1038 = vsel %vm627, %v791, 0
        %1040 = vmatprep.subr.mxu0 0.0
        %1041 = vmatpush1.msra.mxu0 %v794
        %1042 = vmatprep.subr.mxu0 0.0
        %1043 = vmatpush1.msra.mxu0 0.0
        %1044 = vmatprep.subr.mxu0 0.0
        %1045 = vmatpush1.msra.mxu0 0.0
        %1046 = vmatprep.subr.mxu0 0.0
        %1047 = vmatpush1.msra.mxu0 0.0
        %1048 = vmatprep.subr.mxu0 0.0
        %1049 = vmatpush1.msra.mxu0 0.0
        %1050 = vmatprep.subr.mxu0 0.0
        %1051 = vmatpush1.msra.mxu0 0.0
        %1052 = vmatprep.subr.mxu0 0.0
        %1053 = vmatpush1.msra.mxu0 0.0
        %1054 = vmatprep.subr.mxu0 0.0
        %1055 = vmatpush1.msra.mxu0 0.0
        %1056 = vmatprep.subr.mxu0 0.0
        %1057 = vmatpush1.msra.mxu0 0.0
        %1058 = vmatprep.subr.mxu0 0.0
        %1059 = vmatpush1.msra.mxu0 0.0
        %1060 = vmatprep.subr.mxu0 0.0
        %1061 = vmatpush1.msra.mxu0 0.0
        %1062 = vmatprep.subr.mxu0 0.0
        %1063 = vmatpush1.msra.mxu0 0.0
        %1064 = vmatprep.subr.mxu0 0.0
        %1065 = vmatpush1.msra.mxu0 0.0
        %1066 = vmatprep.subr.mxu0 0.0
        %1067 = vmatpush1.msra.mxu0 0.0
        %1068 = vmatprep.subr.mxu0 0.0
        %1069 = vmatpush1.msra.mxu0 0.0
        %1070 = vmatprep.subr.mxu0 0.0
        %1071 = vmatpush1.msra.mxu0 0.0
        %1072 = vmatprep.subr.mxu0 0.0
        %1073 = vmatpush1.msra.mxu0 0.0
        %1074 = vmatprep.subr.mxu0 0.0
        %1075 = vmatpush1.msra.mxu0 0.0
        %1076 = vmatprep.subr.mxu0 0.0
        %1077 = vmatpush1.msra.mxu0 0.0
        %1078 = vmatprep.subr.mxu0 0.0
        %1079 = vmatpush1.msra.mxu0 0.0
        %1080 = vmatprep.subr.mxu0 0.0
        %1081 = vmatpush1.msra.mxu0 0.0
        %1082 = vmatprep.subr.mxu0 0.0
        %1083 = vmatpush1.msra.mxu0 0.0
        %1084 = vmatprep.subr.mxu0 0.0
        %1085 = vmatpush1.msra.mxu0 0.0
        %1086 = vmatprep.subr.mxu0 0.0
        %1087 = vmatpush1.msra.mxu0 0.0
        %1088 = vmatprep.subr.mxu0 0.0
        %1089 = vmatpush1.msra.mxu0 0.0
        %1090 = vmatprep.subr.mxu0 0.0
        %1091 = vmatpush1.msra.mxu0 0.0
        %1092 = vmatprep.subr.mxu0 0.0
        %1093 = vmatpush1.msra.mxu0 0.0
        %1094 = vmatprep.subr.mxu0 0.0
        %1095 = vmatpush1.msra.mxu0 0.0
        %1096 = vmatprep.subr.mxu0 0.0
        %1097 = vmatpush1.msra.mxu0 0.0
        %1098 = vmatprep.subr.mxu0 0.0
        %1099 = vmatpush1.msra.mxu0 0.0
        %1100 = vmatprep.subr.mxu0 0.0
        %1101 = vmatpush1.msra.mxu0 0.0
        %1102 = vmatprep.subr.mxu0 0.0
        %1103 = vmatpush1.msra.mxu0 0.0
        %1104 = vmatprep.mubr.f32.mxu0 0.0
        %1105 = vmatmul.mubr.f32.gmra.mrb[0].mxu0 %v1038
        %v1106 = vpop.f32.mrb[0].mxu0
        %v1107 = vadd.f32 %v1034, %v1106
        %v1108 = vpop.f32.mrb[0].mxu0
        %1109 = vdwg.mxu0
        %1110 = vrot.lane.b32.xlu0 %v626, 112
        %v1111 = vpop.permute.xlu0 %1110
        %1112 = vrot.lane.b32.xlu0 %v623, 112
        %v1113 = vpop.permute.xlu0 %1112
        %v1114 = vsel %vm627, %v1111, 0
        %v1116 = vsel %vm627, %v1113, 0
        %1118 = vmatprep.subr.mxu0 0.0
        %1119 = vmatpush1.xpose.msra.mxu0 %v1116
        %1120 = vmatprep.subr.mxu0 0.0
        %1121 = vmatpush1.xpose.msra.mxu0 0.0
        %1122 = vmatprep.subr.mxu0 0.0
        %1123 = vmatpush1.xpose.msra.mxu0 0.0
        %1124 = vmatprep.subr.mxu0 0.0
        %1125 = vmatpush1.xpose.msra.mxu0 0.0
        %1126 = vmatprep.subr.mxu0 0.0
        %1127 = vmatpush1.xpose.msra.mxu0 0.0
        %1128 = vmatprep.subr.mxu0 0.0
        %1129 = vmatpush1.xpose.msra.mxu0 0.0
        %1130 = vmatprep.subr.mxu0 0.0
        %1131 = vmatpush1.xpose.msra.mxu0 0.0
        %1132 = vmatprep.subr.mxu0 0.0
        %1133 = vmatpush1.xpose.msra.mxu0 0.0
        %1134 = vmatprep.subr.mxu0 0.0
        %1135 = vmatpush1.xpose.msra.mxu0 0.0
        %1136 = vmatprep.subr.mxu0 0.0
        %1137 = vmatpush1.xpose.msra.mxu0 0.0
        %1138 = vmatprep.subr.mxu0 0.0
        %1139 = vmatpush1.xpose.msra.mxu0 0.0
        %1140 = vmatprep.subr.mxu0 0.0
        %1141 = vmatpush1.xpose.msra.mxu0 0.0
        %1142 = vmatprep.subr.mxu0 0.0
        %1143 = vmatpush1.xpose.msra.mxu0 0.0
        %1144 = vmatprep.subr.mxu0 0.0
        %1145 = vmatpush1.xpose.msra.mxu0 0.0
        %1146 = vmatprep.subr.mxu0 0.0
        %1147 = vmatpush1.xpose.msra.mxu0 0.0
        %1148 = vmatprep.subr.mxu0 0.0
        %1149 = vmatpush1.xpose.msra.mxu0 0.0
        %1150 = vmatprep.subr.mxu0 0.0
        %1151 = vmatpush1.xpose.msra.mxu0 0.0
        %1152 = vmatprep.subr.mxu0 0.0
        %1153 = vmatpush1.xpose.msra.mxu0 0.0
        %1154 = vmatprep.subr.mxu0 0.0
        %1155 = vmatpush1.xpose.msra.mxu0 0.0
        %1156 = vmatprep.subr.mxu0 0.0
        %1157 = vmatpush1.xpose.msra.mxu0 0.0
        %1158 = vmatprep.subr.mxu0 0.0
        %1159 = vmatpush1.xpose.msra.mxu0 0.0
        %1160 = vmatprep.subr.mxu0 0.0
        %1161 = vmatpush1.xpose.msra.mxu0 0.0
        %1162 = vmatprep.subr.mxu0 0.0
        %1163 = vmatpush1.xpose.msra.mxu0 0.0
        %1164 = vmatprep.subr.mxu0 0.0
        %1165 = vmatpush1.xpose.msra.mxu0 0.0
        %1166 = vmatprep.subr.mxu0 0.0
        %1167 = vmatpush1.xpose.msra.mxu0 0.0
        %1168 = vmatprep.subr.mxu0 0.0
        %1169 = vmatpush1.xpose.msra.mxu0 0.0
        %1170 = vmatprep.subr.mxu0 0.0
        %1171 = vmatpush1.xpose.msra.mxu0 0.0
        %1172 = vmatprep.subr.mxu0 0.0
        %1173 = vmatpush1.xpose.msra.mxu0 0.0
        %1174 = vmatprep.subr.mxu0 0.0
        %1175 = vmatpush1.xpose.msra.mxu0 0.0
        %1176 = vmatprep.subr.mxu0 0.0
        %1177 = vmatpush1.xpose.msra.mxu0 0.0
        %1178 = vmatprep.subr.mxu0 0.0
        %1179 = vmatpush1.xpose.msra.mxu0 0.0
        %1180 = vmatprep.subr.mxu0 0.0
        %1181 = vmatpush1.xpose.msra.mxu0 0.0
        %1182 = vmatprep.mubr.f32.mxu0 0.0
        %1183 = vmatmul.mubr.f32.gmra.mrb[0].mxu0 %v1114
        %v1184 = vpop.f32.mrb[0].mxu0
        %v1185 = vadd.f32 0.0, %v1184
        %v1186 = vpop.f32.mrb[0].mxu0
        %1187 = vdwg.mxu0
        %v1188 = vsel %vm704, %v1185, -1e+09
        %v1189 = vsel %vm627, %v1188, -inf
        %1190 = vmax.xlane.f32.xlu0 %v1189
        %v1191 = vpop.xlane.xlu0 %1190
        %v1192 = vsub.f32 %v1188, %v1191
        %v1193 = vmul.f32 %v1192, 1.442695
        %v1194 = vpow.pop %v1193
        %v1195 = vsel %vm627, %v1194, 0.0
        %1196 = vadd.xlane.f32.xlu0 %v1195
        %v1197 = vpop.xlane.xlu0 %1196
        %v1198 = vrcp.pop %v1197
        %v1199 = vmul.f32 %v1194, %v1198
        %s1200 = scalar_lea.vmem %s437, 16 [#allocation2]
        %1201 = vst.msk [vmem:[%s1200] sm:$0xff] %vm627, %v1199
        %1202 = vrot.lane.b32.xlu0 %v623, 80
        %v1203 = vpop.permute.xlu0 %1202
        %v1206 = vsel %vm627, %v1199, 0
        %1208 = vmatprep.subr.mxu0 0.0
        %1209 = vmatpush1.msra.mxu0 %v1203
        %1210 = vmatprep.subr.mxu0 0.0
        %1211 = vmatpush1.msra.mxu0 0.0
        %1212 = vmatprep.subr.mxu0 0.0
        %1213 = vmatpush1.msra.mxu0 0.0
        %1214 = vmatprep.subr.mxu0 0.0
        %1215 = vmatpush1.msra.mxu0 0.0
        %1216 = vmatprep.subr.mxu0 0.0
        %1217 = vmatpush1.msra.mxu0 0.0
        %1218 = vmatprep.subr.mxu0 0.0
        %1219 = vmatpush1.msra.mxu0 0.0
        %1220 = vmatprep.subr.mxu0 0.0
        %1221 = vmatpush1.msra.mxu0 0.0
        %1222 = vmatprep.subr.mxu0 0.0
        %1223 = vmatpush1.msra.mxu0 0.0
        %1224 = vmatprep.subr.mxu0 0.0
        %1225 = vmatpush1.msra.mxu0 0.0
        %1226 = vmatprep.subr.mxu0 0.0
        %1227 = vmatpush1.msra.mxu0 0.0
        %1228 = vmatprep.subr.mxu0 0.0
        %1229 = vmatpush1.msra.mxu0 0.0
        %1230 = vmatprep.subr.mxu0 0.0
        %1231 = vmatpush1.msra.mxu0 0.0
        %1232 = vmatprep.subr.mxu0 0.0
        %1233 = vmatpush1.msra.mxu0 0.0
        %1234 = vmatprep.subr.mxu0 0.0
        %1235 = vmatpush1.msra.mxu0 0.0
        %1236 = vmatprep.subr.mxu0 0.0
        %1237 = vmatpush1.msra.mxu0 0.0
        %1238 = vmatprep.subr.mxu0 0.0
        %1239 = vmatpush1.msra.mxu0 0.0
        %1240 = vmatprep.subr.mxu0 0.0
        %1241 = vmatpush1.msra.mxu0 0.0
        %1242 = vmatprep.subr.mxu0 0.0
        %1243 = vmatpush1.msra.mxu0 0.0
        %1244 = vmatprep.subr.mxu0 0.0
        %1245 = vmatpush1.msra.mxu0 0.0
        %1246 = vmatprep.subr.mxu0 0.0
        %1247 = vmatpush1.msra.mxu0 0.0
        %1248 = vmatprep.subr.mxu0 0.0
        %1249 = vmatpush1.msra.mxu0 0.0
        %1250 = vmatprep.subr.mxu0 0.0
        %1251 = vmatpush1.msra.mxu0 0.0
        %1252 = vmatprep.subr.mxu0 0.0
        %1253 = vmatpush1.msra.mxu0 0.0
        %1254 = vmatprep.subr.mxu0 0.0
        %1255 = vmatpush1.msra.mxu0 0.0
        %1256 = vmatprep.subr.mxu0 0.0
        %1257 = vmatpush1.msra.mxu0 0.0
        %1258 = vmatprep.subr.mxu0 0.0
        %1259 = vmatpush1.msra.mxu0 0.0
        %1260 = vmatprep.subr.mxu0 0.0
        %1261 = vmatpush1.msra.mxu0 0.0
        %1262 = vmatprep.subr.mxu0 0.0
        %1263 = vmatpush1.msra.mxu0 0.0
        %1264 = vmatprep.subr.mxu0 0.0
        %1265 = vmatpush1.msra.mxu0 0.0
        %1266 = vmatprep.subr.mxu0 0.0
        %1267 = vmatpush1.msra.mxu0 0.0
        %1268 = vmatprep.subr.mxu0 0.0
        %1269 = vmatpush1.msra.mxu0 0.0
        %1270 = vmatprep.subr.mxu0 0.0
        %1271 = vmatpush1.msra.mxu0 0.0
        %1272 = vmatprep.mubr.f32.mxu0 0.0
        %1273 = vmatmul.mubr.f32.gmra.mrb[0].mxu0 %v1206
        %v1274 = vpop.f32.mrb[0].mxu0
        %v1275 = vadd.f32 0.0, %v1274
        %v1276 = vpop.f32.mrb[0].mxu0
        %1277 = vdwg.mxu0
        %v1278 = vld [vmem:[%s7 + $0x10] sm:$0xff]
        %v1280 = vsel %vm627, %v1275, 0
        %1282 = vmatprep.subr.mxu0 0.0
        %1283 = vmatpush1.msra.mxu0 %v1278
        %1284 = vmatprep.subr.mxu0 0.0
        %1285 = vmatpush1.msra.mxu0 0.0
        %1286 = vmatprep.subr.mxu0 0.0
        %1287 = vmatpush1.msra.mxu0 0.0
        %1288 = vmatprep.subr.mxu0 0.0
        %1289 = vmatpush1.msra.mxu0 0.0
        %1290 = vmatprep.subr.mxu0 0.0
        %1291 = vmatpush1.msra.mxu0 0.0
        %1292 = vmatprep.subr.mxu0 0.0
        %1293 = vmatpush1.msra.mxu0 0.0
        %1294 = vmatprep.subr.mxu0 0.0
        %1295 = vmatpush1.msra.mxu0 0.0
        %1296 = vmatprep.subr.mxu0 0.0
        %1297 = vmatpush1.msra.mxu0 0.0
        %1298 = vmatprep.subr.mxu0 0.0
        %1299 = vmatpush1.msra.mxu0 0.0
        %1300 = vmatprep.subr.mxu0 0.0
        %1301 = vmatpush1.msra.mxu0 0.0
        %1302 = vmatprep.subr.mxu0 0.0
        %1303 = vmatpush1.msra.mxu0 0.0
        %1304 = vmatprep.subr.mxu0 0.0
        %1305 = vmatpush1.msra.mxu0 0.0
        %1306 = vmatprep.subr.mxu0 0.0
        %1307 = vmatpush1.msra.mxu0 0.0
        %1308 = vmatprep.subr.mxu0 0.0
        %1309 = vmatpush1.msra.mxu0 0.0
        %1310 = vmatprep.subr.mxu0 0.0
        %1311 = vmatpush1.msra.mxu0 0.0
        %1312 = vmatprep.subr.mxu0 0.0
        %1313 = vmatpush1.msra.mxu0 0.0
        %1314 = vmatprep.subr.mxu0 0.0
        %1315 = vmatpush1.msra.mxu0 0.0
        %1316 = vmatprep.subr.mxu0 0.0
        %1317 = vmatpush1.msra.mxu0 0.0
        %1318 = vmatprep.subr.mxu0 0.0
        %1319 = vmatpush1.msra.mxu0 0.0
        %1320 = vmatprep.subr.mxu0 0.0
        %1321 = vmatpush1.msra.mxu0 0.0
        %1322 = vmatprep.subr.mxu0 0.0
        %1323 = vmatpush1.msra.mxu0 0.0
        %1324 = vmatprep.subr.mxu0 0.0
        %1325 = vmatpush1.msra.mxu0 0.0
        %1326 = vmatprep.subr.mxu0 0.0
        %1327 = vmatpush1.msra.mxu0 0.0
        %1328 = vmatprep.subr.mxu0 0.0
        %1329 = vmatpush1.msra.mxu0 0.0
        %1330 = vmatprep.subr.mxu0 0.0
        %1331 = vmatpush1.msra.mxu0 0.0
        %1332 = vmatprep.subr.mxu0 0.0
        %1333 = vmatpush1.msra.mxu0 0.0
        %1334 = vmatprep.subr.mxu0 0.0
        %1335 = vmatpush1.msra.mxu0 0.0
        %1336 = vmatprep.subr.mxu0 0.0
        %1337 = vmatpush1.msra.mxu0 0.0
        %1338 = vmatprep.subr.mxu0 0.0
        %1339 = vmatpush1.msra.mxu0 0.0
        %1340 = vmatprep.subr.mxu0 0.0
        %1341 = vmatpush1.msra.mxu0 0.0
        %1342 = vmatprep.subr.mxu0 0.0
        %1343 = vmatpush1.msra.mxu0 0.0
        %1344 = vmatprep.subr.mxu0 0.0
        %1345 = vmatpush1.msra.mxu0 0.0
        %1346 = vmatprep.mubr.f32.mxu0 0.0
        %1347 = vmatmul.mubr.f32.gmra.mrb[0].mxu0 %v1280
        %v1348 = vpop.f32.mrb[0].mxu0
        %v1349 = vadd.f32 0.0, %v1348
        %v1350 = vpop.f32.mrb[0].mxu0
        %1351 = vdwg.mxu0
        %v1352 = vadd.f32 %v1107, %v1349
        %1353 = vrot.lane.b32.xlu0 %v626, 104
        %v1354 = vpop.permute.xlu0 %1353
        %1355 = vrot.lane.b32.xlu0 %v623, 104
        %v1356 = vpop.permute.xlu0 %1355
        %v1357 = vsel %vm627, %v1354, 0
        %v1359 = vsel %vm627, %v1356, 0
        %1361 = vmatprep.subr.mxu0 0.0
        %1362 = vmatpush1.xpose.msra.mxu0 %v1359
        %1363 = vmatprep.subr.mxu0 0.0
        %1364 = vmatpush1.xpose.msra.mxu0 0.0
        %1365 = vmatprep.subr.mxu0 0.0
        %1366 = vmatpush1.xpose.msra.mxu0 0.0
        %1367 = vmatprep.subr.mxu0 0.0
        %1368 = vmatpush1.xpose.msra.mxu0 0.0
        %1369 = vmatprep.subr.mxu0 0.0
        %1370 = vmatpush1.xpose.msra.mxu0 0.0
        %1371 = vmatprep.subr.mxu0 0.0
        %1372 = vmatpush1.xpose.msra.mxu0 0.0
        %1373 = vmatprep.subr.mxu0 0.0
        %1374 = vmatpush1.xpose.msra.mxu0 0.0
        %1375 = vmatprep.subr.mxu0 0.0
        %1376 = vmatpush1.xpose.msra.mxu0 0.0
        %1377 = vmatprep.subr.mxu0 0.0
        %1378 = vmatpush1.xpose.msra.mxu0 0.0
        %1379 = vmatprep.subr.mxu0 0.0
        %1380 = vmatpush1.xpose.msra.mxu0 0.0
        %1381 = vmatprep.subr.mxu0 0.0
        %1382 = vmatpush1.xpose.msra.mxu0 0.0
        %1383 = vmatprep.subr.mxu0 0.0
        %1384 = vmatpush1.xpose.msra.mxu0 0.0
        %1385 = vmatprep.subr.mxu0 0.0
        %1386 = vmatpush1.xpose.msra.mxu0 0.0
        %1387 = vmatprep.subr.mxu0 0.0
        %1388 = vmatpush1.xpose.msra.mxu0 0.0
        %1389 = vmatprep.subr.mxu0 0.0
        %1390 = vmatpush1.xpose.msra.mxu0 0.0
        %1391 = vmatprep.subr.mxu0 0.0
        %1392 = vmatpush1.xpose.msra.mxu0 0.0
        %1393 = vmatprep.subr.mxu0 0.0
        %1394 = vmatpush1.xpose.msra.mxu0 0.0
        %1395 = vmatprep.subr.mxu0 0.0
        %1396 = vmatpush1.xpose.msra.mxu0 0.0
        %1397 = vmatprep.subr.mxu0 0.0
        %1398 = vmatpush1.xpose.msra.mxu0 0.0
        %1399 = vmatprep.subr.mxu0 0.0
        %1400 = vmatpush1.xpose.msra.mxu0 0.0
        %1401 = vmatprep.subr.mxu0 0.0
        %1402 = vmatpush1.xpose.msra.mxu0 0.0
        %1403 = vmatprep.subr.mxu0 0.0
        %1404 = vmatpush1.xpose.msra.mxu0 0.0
        %1405 = vmatprep.subr.mxu0 0.0
        %1406 = vmatpush1.xpose.msra.mxu0 0.0
        %1407 = vmatprep.subr.mxu0 0.0
        %1408 = vmatpush1.xpose.msra.mxu0 0.0
        %1409 = vmatprep.subr.mxu0 0.0
        %1410 = vmatpush1.xpose.msra.mxu0 0.0
        %1411 = vmatprep.subr.mxu0 0.0
        %1412 = vmatpush1.xpose.msra.mxu0 0.0
        %1413 = vmatprep.subr.mxu0 0.0
        %1414 = vmatpush1.xpose.msra.mxu0 0.0
        %1415 = vmatprep.subr.mxu0 0.0
        %1416 = vmatpush1.xpose.msra.mxu0 0.0
        %1417 = vmatprep.subr.mxu0 0.0
        %1418 = vmatpush1.xpose.msra.mxu0 0.0
        %1419 = vmatprep.subr.mxu0 0.0
        %1420 = vmatpush1.xpose.msra.mxu0 0.0
        %1421 = vmatprep.subr.mxu0 0.0
        %1422 = vmatpush1.xpose.msra.mxu0 0.0
        %1423 = vmatprep.subr.mxu0 0.0
        %1424 = vmatpush1.xpose.msra.mxu0 0.0
        %1425 = vmatprep.mubr.f32.mxu0 0.0
        %1426 = vmatmul.mubr.f32.gmra.mrb[0].mxu0 %v1357
        %v1427 = vpop.f32.mrb[0].mxu0
        %v1428 = vadd.f32 0.0, %v1427
        %v1429 = vpop.f32.mrb[0].mxu0
        %1430 = vdwg.mxu0
        %v1431 = vsel %vm704, %v1428, -1e+09
        %v1432 = vsel %vm627, %v1431, -inf
        %1433 = vmax.xlane.f32.xlu0 %v1432
        %v1434 = vpop.xlane.xlu0 %1433
        %v1435 = vsub.f32 %v1431, %v1434
        %v1436 = vmul.f32 %v1435, 1.442695
        %v1437 = vpow.pop %v1436
        %v1438 = vsel %vm627, %v1437, 0.0
        %1439 = vadd.xlane.f32.xlu0 %v1438
        %v1440 = vpop.xlane.xlu0 %1439
        %v1441 = vrcp.pop %v1440
        %v1442 = vmul.f32 %v1437, %v1441
        %s1443 = scalar_lea.vmem %s437, 24 [#allocation2]
        %1444 = vst.msk [vmem:[%s1443] sm:$0xff] %vm627, %v1442
        %1445 = vrot.lane.b32.xlu0 %v623, 72
        %v1446 = vpop.permute.xlu0 %1445
        %v1449 = vsel %vm627, %v1442, 0
        %1451 = vmatprep.subr.mxu0 0.0
        %1452 = vmatpush1.msra.mxu0 %v1446
        %1453 = vmatprep.subr.mxu0 0.0
        %1454 = vmatpush1.msra.mxu0 0.0
        %1455 = vmatprep.subr.mxu0 0.0
        %1456 = vmatpush1.msra.mxu0 0.0
        %1457 = vmatprep.subr.mxu0 0.0
        %1458 = vmatpush1.msra.mxu0 0.0
        %1459 = vmatprep.subr.mxu0 0.0
        %1460 = vmatpush1.msra.mxu0 0.0
        %1461 = vmatprep.subr.mxu0 0.0
        %1462 = vmatpush1.msra.mxu0 0.0
        %1463 = vmatprep.subr.mxu0 0.0
        %1464 = vmatpush1.msra.mxu0 0.0
        %1465 = vmatprep.subr.mxu0 0.0
        %1466 = vmatpush1.msra.mxu0 0.0
        %1467 = vmatprep.subr.mxu0 0.0
        %1468 = vmatpush1.msra.mxu0 0.0
        %1469 = vmatprep.subr.mxu0 0.0
        %1470 = vmatpush1.msra.mxu0 0.0
        %1471 = vmatprep.subr.mxu0 0.0
        %1472 = vmatpush1.msra.mxu0 0.0
        %1473 = vmatprep.subr.mxu0 0.0
        %1474 = vmatpush1.msra.mxu0 0.0
        %1475 = vmatprep.subr.mxu0 0.0
        %1476 = vmatpush1.msra.mxu0 0.0
        %1477 = vmatprep.subr.mxu0 0.0
        %1478 = vmatpush1.msra.mxu0 0.0
        %1479 = vmatprep.subr.mxu0 0.0
        %1480 = vmatpush1.msra.mxu0 0.0
        %1481 = vmatprep.subr.mxu0 0.0
        %1482 = vmatpush1.msra.mxu0 0.0
        %1483 = vmatprep.subr.mxu0 0.0
        %1484 = vmatpush1.msra.mxu0 0.0
        %1485 = vmatprep.subr.mxu0 0.0
        %1486 = vmatpush1.msra.mxu0 0.0
        %1487 = vmatprep.subr.mxu0 0.0
        %1488 = vmatpush1.msra.mxu0 0.0
        %1489 = vmatprep.subr.mxu0 0.0
        %1490 = vmatpush1.msra.mxu0 0.0
        %1491 = vmatprep.subr.mxu0 0.0
        %1492 = vmatpush1.msra.mxu0 0.0
        %1493 = vmatprep.subr.mxu0 0.0
        %1494 = vmatpush1.msra.mxu0 0.0
        %1495 = vmatprep.subr.mxu0 0.0
        %1496 = vmatpush1.msra.mxu0 0.0
        %1497 = vmatprep.subr.mxu0 0.0
        %1498 = vmatpush1.msra.mxu0 0.0
        %1499 = vmatprep.subr.mxu0 0.0
        %1500 = vmatpush1.msra.mxu0 0.0
        %1501 = vmatprep.subr.mxu0 0.0
        %1502 = vmatpush1.msra.mxu0 0.0
        %1503 = vmatprep.subr.mxu0 0.0
        %1504 = vmatpush1.msra.mxu0 0.0
        %1505 = vmatprep.subr.mxu0 0.0
        %1506 = vmatpush1.msra.mxu0 0.0
        %1507 = vmatprep.subr.mxu0 0.0
        %1508 = vmatpush1.msra.mxu0 0.0
        %1509 = vmatprep.subr.mxu0 0.0
        %1510 = vmatpush1.msra.mxu0 0.0
        %1511 = vmatprep.subr.mxu0 0.0
        %1512 = vmatpush1.msra.mxu0 0.0
        %1513 = vmatprep.subr.mxu0 0.0
        %1514 = vmatpush1.msra.mxu0 0.0
        %1515 = vmatprep.mubr.f32.mxu0 0.0
        %1516 = vmatmul.mubr.f32.gmra.mrb[0].mxu0 %v1449
        %v1517 = vpop.f32.mrb[0].mxu0
        %v1518 = vadd.f32 0.0, %v1517
        %v1519 = vpop.f32.mrb[0].mxu0
        %1520 = vdwg.mxu0
        %v1521 = vld [vmem:[%s7 + $0x18] sm:$0xff]
        %v1523 = vsel %vm627, %v1518, 0
        %1525 = vmatprep.subr.mxu0 0.0
        %1526 = vmatpush1.msra.mxu0 %v1521
        %1527 = vmatprep.subr.mxu0 0.0
        %1528 = vmatpush1.msra.mxu0 0.0
        %1529 = vmatprep.subr.mxu0 0.0
        %1530 = vmatpush1.msra.mxu0 0.0
        %1531 = vmatprep.subr.mxu0 0.0
        %1532 = vmatpush1.msra.mxu0 0.0
        %1533 = vmatprep.subr.mxu0 0.0
        %1534 = vmatpush1.msra.mxu0 0.0
        %1535 = vmatprep.subr.mxu0 0.0
        %1536 = vmatpush1.msra.mxu0 0.0
        %1537 = vmatprep.subr.mxu0 0.0
        %1538 = vmatpush1.msra.mxu0 0.0
        %1539 = vmatprep.subr.mxu0 0.0
        %1540 = vmatpush1.msra.mxu0 0.0
        %1541 = vmatprep.subr.mxu0 0.0
        %1542 = vmatpush1.msra.mxu0 0.0
        %1543 = vmatprep.subr.mxu0 0.0
        %1544 = vmatpush1.msra.mxu0 0.0
        %1545 = vmatprep.subr.mxu0 0.0
        %1546 = vmatpush1.msra.mxu0 0.0
        %1547 = vmatprep.subr.mxu0 0.0
        %1548 = vmatpush1.msra.mxu0 0.0
        %1549 = vmatprep.subr.mxu0 0.0
        %1550 = vmatpush1.msra.mxu0 0.0
        %1551 = vmatprep.subr.mxu0 0.0
        %1552 = vmatpush1.msra.mxu0 0.0
        %1553 = vmatprep.subr.mxu0 0.0
        %1554 = vmatpush1.msra.mxu0 0.0
        %1555 = vmatprep.subr.mxu0 0.0
        %1556 = vmatpush1.msra.mxu0 0.0
        %1557 = vmatprep.subr.mxu0 0.0
        %1558 = vmatpush1.msra.mxu0 0.0
        %1559 = vmatprep.subr.mxu0 0.0
        %1560 = vmatpush1.msra.mxu0 0.0
        %1561 = vmatprep.subr.mxu0 0.0
        %1562 = vmatpush1.msra.mxu0 0.0
        %1563 = vmatprep.subr.mxu0 0.0
        %1564 = vmatpush1.msra.mxu0 0.0
        %1565 = vmatprep.subr.mxu0 0.0
        %1566 = vmatpush1.msra.mxu0 0.0
        %1567 = vmatprep.subr.mxu0 0.0
        %1568 = vmatpush1.msra.mxu0 0.0
        %1569 = vmatprep.subr.mxu0 0.0
        %1570 = vmatpush1.msra.mxu0 0.0
        %1571 = vmatprep.subr.mxu0 0.0
        %1572 = vmatpush1.msra.mxu0 0.0
        %1573 = vmatprep.subr.mxu0 0.0
        %1574 = vmatpush1.msra.mxu0 0.0
        %1575 = vmatprep.subr.mxu0 0.0
        %1576 = vmatpush1.msra.mxu0 0.0
        %1577 = vmatprep.subr.mxu0 0.0
        %1578 = vmatpush1.msra.mxu0 0.0
        %1579 = vmatprep.subr.mxu0 0.0
        %1580 = vmatpush1.msra.mxu0 0.0
        %1581 = vmatprep.subr.mxu0 0.0
        %1582 = vmatpush1.msra.mxu0 0.0
        %1583 = vmatprep.subr.mxu0 0.0
        %1584 = vmatpush1.msra.mxu0 0.0
        %1585 = vmatprep.subr.mxu0 0.0
        %1586 = vmatpush1.msra.mxu0 0.0
        %1587 = vmatprep.subr.mxu0 0.0
        %1588 = vmatpush1.msra.mxu0 0.0
        %1589 = vmatprep.mubr.f32.mxu0 0.0
        %1590 = vmatmul.mubr.f32.gmra.mrb[0].mxu0 %v1523
        %v1591 = vpop.f32.mrb[0].mxu0
        %v1592 = vadd.f32 0.0, %v1591
        %v1593 = vpop.f32.mrb[0].mxu0
        %1594 = vdwg.mxu0
        %v1595 = vadd.f32 %v1352, %v1592
        %v1596 = vld [vmem:[%s8] sm:$0x1]
        %v1598 = vlaneseq
        %v1599 = vshrl.u32 %v1598, 7
        %v1600 = vsub.s32 0, %v1599
        %v1601 = vrot.slane %v1596, %v1600
        %v1603 = vadd.f32 %v1595, %v1601
        %v1604 = vadd.f32 %v454, %v1603
        %v1605 = vsel %vm468, %v1604, 0.0
        %1606 = vadd.xlane.f32.xlu0 %v1605
        %v1607 = vpop.xlane.xlu0 %1606
        %v1608 = vrcp.pop 32.0
        %v1609 = vmul.f32 %v1607, %v1608
        %v1610 = vsub.f32 %v1604, %v1609
        %v1611 = vmul.f32 %v1610, %v1610
        %v1612 = vsel %vm468, %v1611, 0.0
        %1613 = vadd.xlane.f32.xlu0 %v1612
        %v1614 = vpop.xlane.xlu0 %1613
        %v1615 = vmul.f32 %v1614, %v1608
        %v1616 = vadd.f32 %v1615, 1e-05
        %v1617 = vrsqrt.pop %v1616
        %v1618 = vmul.f32 %v1610, %v1617
        %v1619 = vld [vmem:[%s9] sm:$0x1]
        %v1621 = vlaneseq
        %v1622 = vshrl.u32 %v1621, 7
        %v1623 = vsub.s32 0, %v1622
        %v1624 = vrot.slane %v1619, %v1623
        %v1626 = vmul.f32 %v1618, %v1624
        %v1627 = vld [vmem:[%s10] sm:$0x1]
        %v1629 = vlaneseq
        %v1630 = vshrl.u32 %v1629, 7
        %v1631 = vsub.s32 0, %v1630
        %v1632 = vrot.slane %v1627, %v1631
        %v1634 = vadd.f32 %v1626, %v1632
        %1635 = vst.msk [vmem:[%s453] sm:$0xff] %vm468, %v1634
        %p1636 = scmp.lt.s32.totalorder %s27, 1
        %s1637 = scalar_select %p1636, %s27, 1
        %s1638 = smul.addr %s1637, 8
        %s1639 = scalar_lea.vmem %s11, %s1638
        %s1640 = sand.u32 %s307, 1
        %s1641 = scalar_lea.sflag [#allocation3], %s1640
        %s1642 = sand.u32 %s307, 1
        %s1643 = smul.addr %s1642, 32
        %s1644 = scalar_lea.vmem [#allocation2], %s1643
        // Predicated region
        $region65: #{decoder_forward.9} parent=63 // pred_check
          %p1645 = pneg %p291
        $region66: #{decoder_forward.9} parent=63 // pred_check_branch
          %1647 = sbr.rel (%p1645) target = $region68
        $region67: #{decoder_forward.9} parent=63 // pred_region
          _
        $region68: #{decoder_forward.9} parent=63 // pred_fallthru
          _
        // Predicated region
        $region69: #{decoder_forward.9} parent=63 // pred_check
          %p1648 = pneg %p317
        $region70: #{decoder_forward.9} parent=63 // pred_check_branch
          %1650 = sbr.rel (%p1648) target = $region72
        $region71: #{decoder_forward.9} parent=63 // pred_region
          %s1652 = ssub.s32 512, 512
          %1653 = vsyncadd %s1641, %s1652
          %s1654 = smul.addr %s27, 4
          %s1655 = smul.addr %s1654, 128
          %s1656 = scalar_lea.hbm %s12, %s1655
          %s1657 = sshll.u32 %s1644, 4
          %s1658 = int_to_ptr.vmem [resolvable:$true] %s1657
          %1663 = dma.vmem_to_hbm [thread:$0]  %s1658, 512, %s1656, %s1641, 128, 128, 8
        $region72: #{decoder_forward.9} parent=63 // pred_fallthru
          _
      $region64: #{decoder_forward.9} parent=5 // pred_fallthru
        _
      %p1664 = scmp.le.s32.totalorder 2, %s22
      // Predicated region
      $region73: #{decoder_forward.9} parent=5 // pred_check
        %p1665 = pneg %p1664
      $region74: #{decoder_forward.9} parent=5 // pred_check_branch
        %1667 = sbr.rel (%p1665) target = $region76
      $region75: #{decoder_forward.9} parent=5 // pred_region
        %s1668 = ssub.s32 %s22, 2
        // Predicated region
        $region77: #{decoder_forward.9} parent=75 // pred_check
          %p1669 = pneg %p297
        $region78: #{decoder_forward.9} parent=75 // pred_check_branch
          %1671 = sbr.rel (%p1669) target = $region80
        $region79: #{decoder_forward.9} parent=75 // pred_region
          %p1672 = scmp.lt.s32.totalorder %s28, 1
          %s1673 = scalar_select %p1672, %s28, 1
          %s1674 = smul.addr %s1673, 8
          %s1675 = scalar_lea.vmem %s11, %s1674
        $region80: #{decoder_forward.9} parent=75 // pred_fallthru
          _
        // Predicated region
        $region81: #{decoder_forward.9} parent=75 // pred_check
          %p1676 = pneg %p323
        $region82: #{decoder_forward.9} parent=75 // pred_check_branch
          %1678 = sbr.rel (%p1676) target = $region84
        $region83: #{decoder_forward.9} parent=75 // pred_region
          %s1679 = sand.u32 %s308, 1
          %s1680 = scalar_lea.sflag [#allocation3], %s1679
          %s1681 = sand.u32 %s308, 1
          %s1682 = smul.addr %s1681, 32
          %s1683 = scalar_lea.vmem [#allocation2], %s1682
          %1684 = dma.done %s1680, 512
        $region84: #{decoder_forward.9} parent=75 // pred_fallthru
          _
      $region76: #{decoder_forward.9} parent=5 // pred_fallthru
        _
    $region6: #{decoder_forward.9} parent=1 // loop_footer
      %s26 = sadd.s32 1, %s22
    $region7: #{decoder_forward.9} parent=1 // loop_footer_branch
      %21 = sbr.rel target = $region3
    $region8: #{decoder_forward.9} parent=1 // loop_exit
      _
    %1685 = vsyncpa [#allocation3], 1
    %s1686 = scalar_lea.sflag [#allocation3], 1
    %1687 = vsyncpa %s1686, 1

// kernel: decoder_forward.11
$region0: #{decoder_forward.11}
  #allocation0 [shape = 'u32[]', space=smem, size = 0x4, offset = 0x4, fixed_abs, tag = 'smem constant byte address 0x4 - core index']
  #allocation1 [shape = 'u32[144,128]{1,0:T(1,128)}', space=vmem, size = 0x12000, scoped, tag = 'internal scratch']
  %s0 = inlined_call_operand.vmem [shape: f32[16,32], index: 0, kind: input, shape index: {}]
  %s1 = inlined_call_operand.vmem [shape: f32[32,64], index: 1, kind: input, shape index: {}]
  %s2 = inlined_call_operand.vmem [shape: f32[1,64], index: 2, kind: input, shape index: {}]
  %s3 = inlined_call_operand.vmem [shape: f32[64,32], index: 3, kind: input, shape index: {}]
  %s4 = inlined_call_operand.vmem [shape: f32[1,32], index: 4, kind: input, shape index: {}]
  %s5 = inlined_call_operand.vmem [shape: f32[1,32], index: 5, kind: input, shape index: {}]
  %s6 = inlined_call_operand.vmem [shape: f32[1,32], index: 6, kind: input, shape index: {}]
  %s7 = inlined_call_operand.hbm [shape: f32[16,32], index: 7, kind: output, shape index: {}]
  %s8 = sld [smem:[#allocation0]]
  $region38: #{decoder_forward.11} parent=0
    _
  %s10 = ssub.s32 1, %s8
  %s11 = scalar_select 0, %s10, %s8
  $region1: #{decoder_forward.11} parent=0
    #allocation2 [shape = 'u8[8192]{0}', space=vmem, size = 0x2000, scoped, tag = 'output window, operand 0, single buffered']
    #allocation3 [shape = 's32[1]{0}', space=sflag, size = 0x4, scoped, tag = 'scoped memory for decoder_forward.11']
    %12 = vsyncpa [#allocation3], 0
    // Predicated region
    $region2: #{decoder_forward.11} parent=1 // pred_check
      _
    $region3: #{decoder_forward.11} parent=1 // pred_check_branch
      %14 = sbr.rel (0) target = $region5
    $region4: #{decoder_forward.11} parent=1 // pred_region
      _
    $region5: #{decoder_forward.11} parent=1 // pred_fallthru
      _
    // Predicated region
    $region6: #{decoder_forward.11} parent=1 // pred_check
      _
    $region7: #{decoder_forward.11} parent=1 // pred_check_branch
      %16 = sbr.rel (0) target = $region9
    $region8: #{decoder_forward.11} parent=1 // pred_region
      _
    $region9: #{decoder_forward.11} parent=1 // pred_fallthru
      _
    // Predicated region
    $region10: #{decoder_forward.11} parent=1 // pred_check
      _
    $region11: #{decoder_forward.11} parent=1 // pred_check_branch
      %18 = sbr.rel (0) target = $region13
    $region12: #{decoder_forward.11} parent=1 // pred_region
      _
    $region13: #{decoder_forward.11} parent=1 // pred_fallthru
      _
    // Predicated region
    $region14: #{decoder_forward.11} parent=1 // pred_check
      _
    $region15: #{decoder_forward.11} parent=1 // pred_check_branch
      %20 = sbr.rel (0) target = $region17
    $region16: #{decoder_forward.11} parent=1 // pred_region
      _
    $region17: #{decoder_forward.11} parent=1 // pred_fallthru
      _
    // Predicated region
    $region18: #{decoder_forward.11} parent=1 // pred_check
      _
    $region19: #{decoder_forward.11} parent=1 // pred_check_branch
      %22 = sbr.rel (0) target = $region21
    $region20: #{decoder_forward.11} parent=1 // pred_region
      _
    $region21: #{decoder_forward.11} parent=1 // pred_fallthru
      _
    // Predicated region
    $region22: #{decoder_forward.11} parent=1 // pred_check
      _
    $region23: #{decoder_forward.11} parent=1 // pred_check_branch
      %24 = sbr.rel (0) target = $region25
    $region24: #{decoder_forward.11} parent=1 // pred_region
      _
    $region25: #{decoder_forward.11} parent=1 // pred_fallthru
      _
    // Predicated region
    $region26: #{decoder_forward.11} parent=1 // pred_check
      _
    $region27: #{decoder_forward.11} parent=1 // pred_check_branch
      %26 = sbr.rel (0) target = $region29
    $region28: #{decoder_forward.11} parent=1 // pred_region
      _
    $region29: #{decoder_forward.11} parent=1 // pred_fallthru
      _
    %v27 = vld [vmem:[%s0] sm:$0xff]
    %v28 = vld [vmem:[%s0 + $0x8] sm:$0xff]
    %v29 = vld [vmem:[%s1] sm:$0xff]
    %v30 = vld [vmem:[%s1 + $0x8] sm:$0xff]
    %v31 = vld [vmem:[%s1 + $0x10] sm:$0xff]
    %v32 = vld [vmem:[%s1 + $0x18] sm:$0xff]
    %v33 = vld [vmem:[%s2] sm:$0x1]
    %v35 = vlaneseq
    %v36 = vshrl.u32 %v35, 7
    %v37 = vsub.s32 0, %v36
    %v38 = vrot.slane %v33, %v37
    %vm40 = vcmask 261120
    %v42 = vsel %vm40, %v27, 0
    %v45 = vsel %vm40, %v28, 0
    %47 = vmatprep.subr.mxu0 0.0
    %48 = vmatpush1.msra.mxu0 %v29
    %49 = vmatprep.subr.mxu0 0.0
    %50 = vmatpush1.msra.mxu0 %v30
    %51 = vmatprep.subr.mxu0 0.0
    %52 = vmatpush1.msra.mxu0 %v31
    %53 = vmatprep.subr.mxu0 0.0
    %54 = vmatpush1.msra.mxu0 %v32
    %55 = vmatprep.subr.mxu0 0.0
    %56 = vmatpush1.msra.mxu0 0.0
    %57 = vmatprep.subr.mxu0 0.0
    %58 = vmatpush1.msra.mxu0 0.0
    %59 = vmatprep.subr.mxu0 0.0
    %60 = vmatpush1.msra.mxu0 0.0
    %61 = vmatprep.subr.mxu0 0.0
    %62 = vmatpush1.msra.mxu0 0.0
    %63 = vmatprep.subr.mxu0 0.0
    %64 = vmatpush1.msra.mxu0 0.0
    %65 = vmatprep.subr.mxu0 0.0
    %66 = vmatpush1.msra.mxu0 0.0
    %67 = vmatprep.subr.mxu0 0.0
    %68 = vmatpush1.msra.mxu0 0.0
    %69 = vmatprep.subr.mxu0 0.0
    %70 = vmatpush1.msra.mxu0 0.0
    %71 = vmatprep.subr.mxu0 0.0
    %72 = vmatpush1.msra.mxu0 0.0
    %73 = vmatprep.subr.mxu0 0.0
    %74 = vmatpush1.msra.mxu0 0.0
    %75 = vmatprep.subr.mxu0 0.0
    %76 = vmatpush1.msra.mxu0 0.0
    %77 = vmatprep.subr.mxu0 0.0
    %78 = vmatpush1.msra.mxu0 0.0
    %79 = vmatprep.subr.mxu0 0.0
    %80 = vmatpush1.msra.mxu0 0.0
    %81 = vmatprep.subr.mxu0 0.0
    %82 = vmatpush1.msra.mxu0 0.0
    %83 = vmatprep.subr.mxu0 0.0
    %84 = vmatpush1.msra.mxu0 0.0
    %85 = vmatprep.subr.mxu0 0.0
    %86 = vmatpush1.msra.mxu0 0.0
    %87 = vmatprep.subr.mxu0 0.0
    %88 = vmatpush1.msra.mxu0 0.0
    %89 = vmatprep.subr.mxu0 0.0
    %90 = vmatpush1.msra.mxu0 0.0
    %91 = vmatprep.subr.mxu0 0.0
    %92 = vmatpush1.msra.mxu0 0.0
    %93 = vmatprep.subr.mxu0 0.0
    %94 = vmatpush1.msra.mxu0 0.0
    %95 = vmatprep.subr.mxu0 0.0
    %96 = vmatpush1.msra.mxu0 0.0
    %97 = vmatprep.subr.mxu0 0.0
    %98 = vmatpush1.msra.mxu0 0.0
    %99 = vmatprep.subr.mxu0 0.0
    %100 = vmatpush1.msra.mxu0 0.0
    %101 = vmatprep.subr.mxu0 0.0
    %102 = vmatpush1.msra.mxu0 0.0
    %103 = vmatprep.subr.mxu0 0.0
    %104 = vmatpush1.msra.mxu0 0.0
    %105 = vmatprep.subr.mxu0 0.0
    %106 = vmatpush1.msra.mxu0 0.0
    %107 = vmatprep.subr.mxu0 0.0
    %108 = vmatpush1.msra.mxu0 0.0
    %109 = vmatprep.subr.mxu0 0.0
    %110 = vmatpush1.msra.mxu0 0.0
    %111 = vmatprep.mubr.f32.mxu0 0.0
    %112 = vmatmul.mubr.f32.gmra.mrb[0].mxu0 %v42
    %v113 = vpop.f32.mrb[0].mxu0
    %v114 = vadd.f32 %v38, %v113
    %v115 = vpop.f32.mrb[0].mxu0
    %116 = vmatprep.mubr.f32.mxu0 0.0
    %117 = vmatmul.mubr.f32.gmra.mrb[0].mxu0 %v45
    %v118 = vpop.f32.mrb[0].mxu0
    %v119 = vadd.f32 %v38, %v118
    %v120 = vpop.f32.mrb[0].mxu0
    %121 = vdwg.mxu0
    %v122 = vmax.f32 %v114, 0.0
    %v123 = vmax.f32 %v119, 0.0
    %v124 = vld [vmem:[%s3] sm:$0xff]
    %v125 = vld [vmem:[%s3 + $0x8] sm:$0xff]
    %v126 = vld [vmem:[%s3 + $0x10] sm:$0xff]
    %v127 = vld [vmem:[%s3 + $0x18] sm:$0xff]
    %v128 = vld [vmem:[%s3 + $0x20] sm:$0xff]
    %v129 = vld [vmem:[%s3 + $0x28] sm:$0xff]
    %v130 = vld [vmem:[%s3 + $0x30] sm:$0xff]
    %v131 = vld [vmem:[%s3 + $0x38] sm:$0xff]
    %vm132 = vcmask 523264
    %v134 = vsel %vm132, %v122, 0
    %v137 = vsel %vm132, %v123, 0
    %139 = vmatprep.subr.mxu0 0.0
    %140 = vmatpush1.msra.mxu0 %v124
    %141 = vmatprep.subr.mxu0 0.0
    %142 = vmatpush1.msra.mxu0 %v125
    %143 = vmatprep.subr.mxu0 0.0
    %144 = vmatpush1.msra.mxu0 %v126
    %145 = vmatprep.subr.mxu0 0.0
    %146 = vmatpush1.msra.mxu0 %v127
    %147 = vmatprep.subr.mxu0 0.0
    %148 = vmatpush1.msra.mxu0 %v128
    %149 = vmatprep.subr.mxu0 0.0
    %150 = vmatpush1.msra.mxu0 %v129
    %151 = vmatprep.subr.mxu0 0.0
    %152 = vmatpush1.msra.mxu0 %v130
    %153 = vmatprep.subr.mxu0 0.0
    %154 = vmatpush1.msra.mxu0 %v131
    %155 = vmatprep.subr.mxu0 0.0
    %156 = vmatpush1.msra.mxu0 0.0
    %157 = vmatprep.subr.mxu0 0.0
    %158 = vmatpush1.msra.mxu0 0.0
    %159 = vmatprep.subr.mxu0 0.0
    %160 = vmatpush1.msra.mxu0 0.0
    %161 = vmatprep.subr.mxu0 0.0
    %162 = vmatpush1.msra.mxu0 0.0
    %163 = vmatprep.subr.mxu0 0.0
    %164 = vmatpush1.msra.mxu0 0.0
    %165 = vmatprep.subr.mxu0 0.0
    %166 = vmatpush1.msra.mxu0 0.0
    %167 = vmatprep.subr.mxu0 0.0
    %168 = vmatpush1.msra.mxu0 0.0
    %169 = vmatprep.subr.mxu0 0.0
    %170 = vmatpush1.msra.mxu0 0.0
    %171 = vmatprep.subr.mxu0 0.0
    %172 = vmatpush1.msra.mxu0 0.0
    %173 = vmatprep.subr.mxu0 0.0
    %174 = vmatpush1.msra.mxu0 0.0
    %175 = vmatprep.subr.mxu0 0.0
    %176 = vmatpush1.msra.mxu0 0.0
    %177 = vmatprep.subr.mxu0 0.0
    %178 = vmatpush1.msra.mxu0 0.0
    %179 = vmatprep.subr.mxu0 0.0
    %180 = vmatpush1.msra.mxu0 0.0
    %181 = vmatprep.subr.mxu0 0.0
    %182 = vmatpush1.msra.mxu0 0.0
    %183 = vmatprep.subr.mxu0 0.0
    %184 = vmatpush1.msra.mxu0 0.0
    %185 = vmatprep.subr.mxu0 0.0
    %186 = vmatpush1.msra.mxu0 0.0
    %187 = vmatprep.subr.mxu0 0.0
    %188 = vmatpush1.msra.mxu0 0.0
    %189 = vmatprep.subr.mxu0 0.0
    %190 = vmatpush1.msra.mxu0 0.0
    %191 = vmatprep.subr.mxu0 0.0
    %192 = vmatpush1.msra.mxu0 0.0
    %193 = vmatprep.subr.mxu0 0.0
    %194 = vmatpush1.msra.mxu0 0.0
    %195 = vmatprep.subr.mxu0 0.0
    %196 = vmatpush1.msra.mxu0 0.0
    %197 = vmatprep.subr.mxu0 0.0
    %198 = vmatpush1.msra.mxu0 0.0
    %199 = vmatprep.subr.mxu0 0.0
    %200 = vmatpush1.msra.mxu0 0.0
    %201 = vmatprep.subr.mxu0 0.0
    %202 = vmatpush1.msra.mxu0 0.0
    %203 = vmatprep.mubr.f32.mxu0 0.0
    %204 = vmatmul.mubr.f32.gmra.mrb[0].mxu0 %v134
    %v205 = vpop.f32.mrb[0].mxu0
    %v206 = vadd.f32 0.0, %v205
    %v207 = vpop.f32.mrb[0].mxu0
    %208 = vmatprep.mubr.f32.mxu0 0.0
    %209 = vmatmul.mubr.f32.gmra.mrb[0].mxu0 %v137
    %v210 = vpop.f32.mrb[0].mxu0
    %v211 = vadd.f32 0.0, %v210
    %v212 = vpop.f32.mrb[0].mxu0
    %213 = vdwg.mxu0
    %v214 = vadd.f32 %v27, %v206
    %v215 = vadd.f32 %v28, %v211
    %v216 = vld [vmem:[%s4] sm:$0x1]
    %v218 = vlaneseq
    %v219 = vshrl.u32 %v218, 7
    %v220 = vsub.s32 0, %v219
    %v221 = vrot.slane %v216, %v220
    %v223 = vadd.f32 %v214, %v221
    %v224 = vadd.f32 %v215, %v221
    %v225 = vsel %vm40, %v223, 0.0
    %226 = vadd.xlane.f32.xlu0 %v225
    %v227 = vpop.xlane.xlu0 %226
    %v228 = vsel %vm40, %v224, 0.0
    %229 = vadd.xlane.f32.xlu0 %v228
    %v230 = vpop.xlane.xlu0 %229
    %v231 = vrcp.pop 32.0
    %v232 = vmul.f32 %v227, %v231
    %v233 = vmul.f32 %v230, %v231
    %v234 = vsub.f32 %v223, %v232
    %v235 = vsub.f32 %v224, %v233
    %v236 = vmul.f32 %v234, %v234
    %v237 = vmul.f32 %v235, %v235
    %v238 = vsel %vm40, %v236, 0.0
    %239 = vadd.xlane.f32.xlu0 %v238
    %v240 = vpop.xlane.xlu0 %239
    %v241 = vsel %vm40, %v237, 0.0
    %242 = vadd.xlane.f32.xlu0 %v241
    %v243 = vpop.xlane.xlu0 %242
    %v244 = vmul.f32 %v240, %v231
    %v245 = vmul.f32 %v243, %v231
    %v246 = vadd.f32 %v244, 1e-05
    %v247 = vadd.f32 %v245, 1e-05
    %v248 = vrsqrt.pop %v246
    %v249 = vrsqrt.pop %v247
    %v250 = vmul.f32 %v234, %v248
    %v251 = vmul.f32 %v235, %v249
    %v252 = vld [vmem:[%s5] sm:$0x1]
    %v254 = vlaneseq
    %v255 = vshrl.u32 %v254, 7
    %v256 = vsub.s32 0, %v255
    %v257 = vrot.slane %v252, %v256
    %v259 = vmul.f32 %v250, %v257
    %v260 = vmul.f32 %v251, %v257
    %v261 = vld [vmem:[%s6] sm:$0x1]
    %v263 = vlaneseq
    %v264 = vshrl.u32 %v263, 7
    %v265 = vsub.s32 0, %v264
    %v266 = vrot.slane %v261, %v265
    %v268 = vadd.f32 %v259, %v266
    %v269 = vadd.f32 %v260, %v266
    %270 = vst.msk [vmem:[#allocation2] sm:$0xff] %vm40, %v268
    %271 = vst.msk [vmem:[#allocation2 + $0x8] sm:$0xff] %vm40, %v269
    // Predicated region
    $region30: #{decoder_forward.11} parent=1 // pred_check
      _
    $region31: #{decoder_forward.11} parent=1 // pred_check_branch
      %273 = sbr.rel (0) target = $region33
    $region32: #{decoder_forward.11} parent=1 // pred_region
      %s275 = ssub.s32 256, 256
      %276 = vsyncadd [#allocation3], %s275
      %s277 = sshll.u32 [#allocation2], 4
      %s278 = int_to_ptr.vmem [resolvable:$true] %s277
      %283 = dma.vmem_to_hbm [thread:$0]  %s278, 256, %s7, [#allocation3], 128, 128, 8
    $region33: #{decoder_forward.11} parent=1 // pred_fallthru
      _
    // Predicated region
    $region34: #{decoder_forward.11} parent=1 // pred_check
      _
    $region35: #{decoder_forward.11} parent=1 // pred_check_branch
      %285 = sbr.rel (0) target = $region37
    $region36: #{decoder_forward.11} parent=1 // pred_region
      %286 = dma.done [#allocation3], 256
    $region37: #{decoder_forward.11} parent=1 // pred_fallthru
      _
    %287 = vsyncpa [#allocation3], 1

// kernel: decoder_forward.10
$region0: #{decoder_forward.10}
  #allocation0 [shape = 'u32[]', space=smem, size = 0x4, offset = 0x4, fixed_abs, tag = 'smem constant byte address 0x4 - core index']
  #allocation1 [shape = 'u32[144,128]{1,0:T(1,128)}', space=vmem, size = 0x12000, scoped, tag = 'internal scratch']
  %s0 = inlined_call_operand.vmem [shape: f32[2,8,32], index: 0, kind: input, shape index: {}]
  %s1 = inlined_call_operand.vmem [shape: f32[2,10,32], index: 1, kind: input, shape index: {}]
  %s2 = inlined_call_operand.vmem [shape: f32[2,8,10], index: 2, kind: input, shape index: {}]
  %s3 = inlined_call_operand.vmem [shape: f32[32,32], index: 3, kind: input, shape index: {}]
  %s4 = inlined_call_operand.vmem [shape: f32[1,32], index: 4, kind: input, shape index: {}]
  %s5 = inlined_call_operand.vmem [shape: f32[32,64], index: 5, kind: input, shape index: {}]
  %s6 = inlined_call_operand.vmem [shape: f32[1,64], index: 6, kind: input, shape index: {}]
  %s7 = inlined_call_operand.vmem [shape: f32[32,32], index: 7, kind: input, shape index: {}]
  %s8 = inlined_call_operand.vmem [shape: f32[1,32], index: 8, kind: input, shape index: {}]
  %s9 = inlined_call_operand.vmem [shape: f32[1,32], index: 9, kind: input, shape index: {}]
  %s10 = inlined_call_operand.vmem [shape: f32[1,32], index: 10, kind: input, shape index: {}]
  %s11 = inlined_call_operand.vmem [shape: f32[2,8,32], index: 11, kind: output, shape index: {0}]
  %s12 = inlined_call_operand.hbm [shape: f32[2,4,8,10], index: 12, kind: output, shape index: {1}]
  %13 = xla_tuple %s11, %s12
  %s14 = sld [smem:[#allocation0]]
  $region85: #{decoder_forward.10} parent=0
    _
  %s16 = ssub.s32 1, %s14
  %s17 = scalar_select 0, %s16, %s14
  $region1: #{decoder_forward.10} parent=0
    #allocation2 [shape = 'u8[32768]{0}', space=vmem, size = 0x8000, scoped, tag = 'output window, operand 1']
    #allocation3 [shape = 's32[2]{0}', space=sflag, size = 0x8, scoped, tag = 'scoped memory for decoder_forward.10']
    %18 = vsyncpa [#allocation3], 0
    %s19 = scalar_lea.sflag [#allocation3], 1
    %20 = vsyncpa %s19, 0
    loop: start=0, step=1, limit=4
    $region2: #{decoder_forward.10} parent=1 // loop_pre_header
      _
    $region3: #{decoder_forward.10} parent=1 // loop_header
      %s22 = sphi 0, %s26
      %p23 = scmp.ge.s32.totalorder %s22, 4
      %s32 = sphi 0, %s34
      %s35 = sphi 0, %s32
      %s36 = sphi 0, %s35
      %s52 = sphi 0, %s36
      %s58 = sphi 0, %s60
      %s61 = sphi 0, %s58
      %s62 = sphi 0, %s61
      %s78 = sphi 0, %s62
      %s84 = sphi 0, %s86
      %s87 = sphi 0, %s84
      %s88 = sphi 0, %s87
      %s104 = sphi 0, %s88
      %s108 = sphi 0, %s108
      %s110 = sphi 0, %s108
      %s111 = sphi 0, %s110
      %s125 = sphi 0, %s111
      %s129 = sphi 0, %s129
      %s131 = sphi 0, %s129
      %s132 = sphi 0, %s131
      %s146 = sphi 0, %s132
      %s150 = sphi 0, %s150
      %s152 = sphi 0, %s150
      %s153 = sphi 0, %s152
      %s167 = sphi 0, %s153
      %s171 = sphi 0, %s171
      %s173 = sphi 0, %s171
      %s174 = sphi 0, %s173
      %s188 = sphi 0, %s174
      %s192 = sphi 0, %s192
      %s194 = sphi 0, %s192
      %s195 = sphi 0, %s194
      %s209 = sphi 0, %s195
      %s213 = sphi 0, %s213
      %s215 = sphi 0, %s213
      %s216 = sphi 0, %s215
      %s230 = sphi 0, %s216
      %s234 = sphi 0, %s234
      %s236 = sphi 0, %s234
      %s237 = sphi 0, %s236
      %s251 = sphi 0, %s237
      %s255 = sphi 0, %s255
      %s257 = sphi 0, %s255
      %s258 = sphi 0, %s257
      %s272 = sphi 0, %s258
      %s278 = sphi 0, %s280
      %s281 = sphi 0, %s278
      %s282 = sphi 0, %s281
      %s298 = sphi 0, %s282
      %s304 = sphi 0, %s306
      %s307 = sphi 0, %s304
      %s308 = sphi 0, %s307
      %s324 = sphi 0, %s308
    $region4: #{decoder_forward.10} parent=1 // loop_header_branch
      %25 = sbr.rel (%p23) target = $region8
    $region5: #{decoder_forward.10} parent=1 // loop_body
      %s27 = ssub.s32 %s22, 1
      %s28 = ssub.s32 %s22, 2
      %s29 = sadd.s32 %s22, 1
      %s30 = ssub.s32 %s22, %s29
      %p31 = scmp.eq.s32.totalorder %s30, 0
      %s33 = sadd.s32 %s32, 1
      %s34 = scalar_select %p31, %s32, %s33
      %p37 = pneg %p31
      %p38 = scmp.eq.s32.totalorder %s22, 1
      %p39 = por %p37, %p38
      %p40 = scmp.ne.s32.totalorder %s32, %s35
      %p41 = scmp.eq.s32.totalorder %s22, 0
      %p42 = por %p40, %p41
      %p43 = scmp.ne.s32.totalorder %s32, %s35
      %p44 = scmp.eq.s32.totalorder %s27, 1
      %p45 = por %p43, %p44
      %p46 = scmp.ne.s32.totalorder %s35, %s36
      %p47 = scmp.eq.s32.totalorder %s27, 0
      %p48 = por %p46, %p47
      %p49 = scmp.ne.s32.totalorder %s35, %s36
      %p50 = scmp.eq.s32.totalorder %s28, 1
      %p51 = por %p49, %p50
      %p53 = scmp.ne.s32.totalorder %s36, %s52
      %p54 = scmp.eq.s32.totalorder %s28, 0
      %p55 = por %p53, %p54
      %s56 = ssub.s32 %s22, %s29
      %p57 = scmp.eq.s32.totalorder %s56, 0
      %s59 = sadd.s32 %s58, 1
      %s60 = scalar_select %p57, %s58, %s59
      %p63 = pneg %p57
      %p64 = scmp.eq.s32.totalorder %s22, 1
      %p65 = por %p63, %p64
      %p66 = scmp.ne.s32.totalorder %s58, %s61
      %p67 = scmp.eq.s32.totalorder %s22, 0
      %p68 = por %p66, %p67
      %p69 = scmp.ne.s32.totalorder %s58, %s61
      %p70 = scmp.eq.s32.totalorder %s27, 1
      %p71 = por %p69, %p70
      %p72 = scmp.ne.s32.totalorder %s61, %s62
      %p73 = scmp.eq.s32.totalorder %s27, 0
      %p74 = por %p72, %p73
      %p75 = scmp.ne.s32.totalorder %s61, %s62
      %p76 = scmp.eq.s32.totalorder %s28, 1
      %p77 = por %p75, %p76
      %p79 = scmp.ne.s32.totalorder %s62, %s78
      %p80 = scmp.eq.s32.totalorder %s28, 0
      %p81 = por %p79, %p80
      %s82 = ssub.s32 %s22, %s29
      %p83 = scmp.eq.s32.totalorder %s82, 0
      %s85 = sadd.s32 %s84, 1
      %s86 = scalar_select %p83, %s84, %s85
      %p89 = pneg %p83
      %p90 = scmp.eq.s32.totalorder %s22, 1
      %p91 = por %p89, %p90
      %p92 = scmp.ne.s32.totalorder %s84, %s87
      %p93 = scmp.eq.s32.totalorder %s22, 0
      %p94 = por %p92, %p93
      %p95 = scmp.ne.s32.totalorder %s84, %s87
      %p96 = scmp.eq.s32.totalorder %s27, 1
      %p97 = por %p95, %p96
      %p98 = scmp.ne.s32.totalorder %s87, %s88
      %p99 = scmp.eq.s32.totalorder %s27, 0
      %p100 = por %p98, %p99
      %p101 = scmp.ne.s32.totalorder %s87, %s88
      %p102 = scmp.eq.s32.totalorder %s28, 1
      %p103 = por %p101, %p102
      %p105 = scmp.ne.s32.totalorder %s88, %s104
      %p106 = scmp.eq.s32.totalorder %s28, 0
      %p107 = por %p105, %p106
      %s109 = sadd.s32 %s108, 1
      %p112 = scmp.eq.s32.totalorder %s22, 1
      %p113 = scmp.ne.s32.totalorder %s108, %s110
      %p114 = scmp.eq.s32.totalorder %s22, 0
      %p115 = por %p113, %p114
      %p116 = scmp.ne.s32.totalorder %s108, %s110
      %p117 = scmp.eq.s32.totalorder %s27, 1
      %p118 = por %p116, %p117
      %p119 = scmp.ne.s32.totalorder %s110, %s111
      %p120 = scmp.eq.s32.totalorder %s27, 0
      %p121 = por %p119, %p120
      %p122 = scmp.ne.s32.totalorder %s110, %s111
      %p123 = scmp.eq.s32.totalorder %s28, 1
      %p124 = por %p122, %p123
      %p126 = scmp.ne.s32.totalorder %s111, %s125
      %p127 = scmp.eq.s32.totalorder %s28, 0
      %p128 = por %p126, %p127
      %s130 = sadd.s32 %s129, 1
      %p133 = scmp.eq.s32.totalorder %s22, 1
      %p134 = scmp.ne.s32.totalorder %s129, %s131
      %p135 = scmp.eq.s32.totalorder %s22, 0
      %p136 = por %p134, %p135
      %p137 = scmp.ne.s32.totalorder %s129, %s131
      %p138 = scmp.eq.s32.totalorder %s27, 1
      %p139 = por %p137, %p138
      %p140 = scmp.ne.s32.totalorder %s131, %s132
      %p141 = scmp.eq.s32.totalorder %s27, 0
      %p142 = por %p140, %p141
      %p143 = scmp.ne.s32.totalorder %s131, %s132
      %p144 = scmp.eq.s32.totalorder %s28, 1
      %p145 = por %p143, %p144
      %p147 = scmp.ne.s32.totalorder %s132, %s146
      %p148 = scmp.eq.s32.totalorder %s28, 0
      %p149 = por %p147, %p148
      %s151 = sadd.s32 %s150, 1
      %p154 = scmp.eq.s32.totalorder %s22, 1
      %p155 = scmp.ne.s32.totalorder %s150, %s152
      %p156 = scmp.eq.s32.totalorder %s22, 0
      %p157 = por %p155, %p156
      %p158 = scmp.ne.s32.totalorder %s150, %s152
      %p159 = scmp.eq.s32.totalorder %s27, 1
      %p160 = por %p158, %p159
      %p161 = scmp.ne.s32.totalorder %s152, %s153
      %p162 = scmp.eq.s32.totalorder %s27, 0
      %p163 = por %p161, %p162
      %p164 = scmp.ne.s32.totalorder %s152, %s153
      %p165 = scmp.eq.s32.totalorder %s28, 1
      %p166 = por %p164, %p165
      %p168 = scmp.ne.s32.totalorder %s153, %s167
      %p169 = scmp.eq.s32.totalorder %s28, 0
      %p170 = por %p168, %p169
      %s172 = sadd.s32 %s171, 1
      %p175 = scmp.eq.s32.totalorder %s22, 1
      %p176 = scmp.ne.s32.totalorder %s171, %s173
      %p177 = scmp.eq.s32.totalorder %s22, 0
      %p178 = por %p176, %p177
      %p179 = scmp.ne.s32.totalorder %s171, %s173
      %p180 = scmp.eq.s32.totalorder %s27, 1
      %p181 = por %p179, %p180
      %p182 = scmp.ne.s32.totalorder %s173, %s174
      %p183 = scmp.eq.s32.totalorder %s27, 0
      %p184 = por %p182, %p183
      %p185 = scmp.ne.s32.totalorder %s173, %s174
      %p186 = scmp.eq.s32.totalorder %s28, 1
      %p187 = por %p185, %p186
      %p189 = scmp.ne.s32.totalorder %s174, %s188
      %p190 = scmp.eq.s32.totalorder %s28, 0
      %p191 = por %p189, %p190
      %s193 = sadd.s32 %s192, 1
      %p196 = scmp.eq.s32.totalorder %s22, 1
      %p197 = scmp.ne.s32.totalorder %s192, %s194
      %p198 = scmp.eq.s32.totalorder %s22, 0
      %p199 = por %p197, %p198
      %p200 = scmp.ne.s32.totalorder %s192, %s194
      %p201 = scmp.eq.s32.totalorder %s27, 1
      %p202 = por %p200, %p201
      %p203 = scmp.ne.s32.totalorder %s194, %s195
      %p204 = scmp.eq.s32.totalorder %s27, 0
      %p205 = por %p203, %p204
      %p206 = scmp.ne.s32.totalorder %s194, %s195
      %p207 = scmp.eq.s32.totalorder %s28, 1
      %p208 = por %p206, %p207
      %p210 = scmp.ne.s32.totalorder %s195, %s209
      %p211 = scmp.eq.s32.totalorder %s28, 0
      %p212 = por %p210, %p211
      %s214 = sadd.s32 %s213, 1
      %p217 = scmp.eq.s32.totalorder %s22, 1
      %p218 = scmp.ne.s32.totalorder %s213, %s215
      %p219 = scmp.eq.s32.totalorder %s22, 0
      %p220 = por %p218, %p219
      %p221 = scmp.ne.s32.totalorder %s213, %s215
      %p222 = scmp.eq.s32.totalorder %s27, 1
      %p223 = por %p221, %p222
      %p224 = scmp.ne.s32.totalorder %s215, %s216
      %p225 = scmp.eq.s32.totalorder %s27, 0
      %p226 = por %p224, %p225
      %p227 = scmp.ne.s32.totalorder %s215, %s216
      %p228 = scmp.eq.s32.totalorder %s28, 1
      %p229 = por %p227, %p228
      %p231 = scmp.ne.s32.totalorder %s216, %s230
      %p232 = scmp.eq.s32.totalorder %s28, 0
      %p233 = por %p231, %p232
      %s235 = sadd.s32 %s234, 1
      %p238 = scmp.eq.s32.totalorder %s22, 1
      %p239 = scmp.ne.s32.totalorder %s234, %s236
      %p240 = scmp.eq.s32.totalorder %s22, 0
      %p241 = por %p239, %p240
      %p242 = scmp.ne.s32.totalorder %s234, %s236
      %p243 = scmp.eq.s32.totalorder %s27, 1
      %p244 = por %p242, %p243
      %p245 = scmp.ne.s32.totalorder %s236, %s237
      %p246 = scmp.eq.s32.totalorder %s27, 0
      %p247 = por %p245, %p246
      %p248 = scmp.ne.s32.totalorder %s236, %s237
      %p249 = scmp.eq.s32.totalorder %s28, 1
      %p250 = por %p248, %p249
      %p252 = scmp.ne.s32.totalorder %s237, %s251
      %p253 = scmp.eq.s32.totalorder %s28, 0
      %p254 = por %p252, %p253
      %s256 = sadd.s32 %s255, 1
      %p259 = scmp.eq.s32.totalorder %s22, 1
      %p260 = scmp.ne.s32.totalorder %s255, %s257
      %p261 = scmp.eq.s32.totalorder %s22, 0
      %p262 = por %p260, %p261
      %p263 = scmp.ne.s32.totalorder %s255, %s257
      %p264 = scmp.eq.s32.totalorder %s27, 1
      %p265 = por %p263, %p264
      %p266 = scmp.ne.s32.totalorder %s257, %s258
      %p267 = scmp.eq.s32.totalorder %s27, 0
      %p268 = por %p266, %p267
      %p269 = scmp.ne.s32.totalorder %s257, %s258
      %p270 = scmp.eq.s32.totalorder %s28, 1
      %p271 = por %p269, %p270
      %p273 = scmp.ne.s32.totalorder %s258, %s272
      %p274 = scmp.eq.s32.totalorder %s28, 0
      %p275 = por %p273, %p274
      %s276 = ssub.s32 %s22, %s29
      %p277 = scmp.eq.s32.totalorder %s276, 0
      %s279 = sadd.s32 %s278, 1
      %s280 = scalar_select %p277, %s278, %s279
      %p283 = pneg %p277
      %p284 = scmp.eq.s32.totalorder %s22, 1
      %p285 = por %p283, %p284
      %p286 = scmp.ne.s32.totalorder %s278, %s281
      %p287 = scmp.eq.s32.totalorder %s22, 0
      %p288 = por %p286, %p287
      %p289 = scmp.ne.s32.totalorder %s278, %s281
      %p290 = scmp.eq.s32.totalorder %s27, 1
      %p291 = por %p289, %p290
      %p292 = scmp.ne.s32.totalorder %s281, %s282
      %p293 = scmp.eq.s32.totalorder %s27, 0
      %p294 = por %p292, %p293
      %p295 = scmp.ne.s32.totalorder %s281, %s282
      %p296 = scmp.eq.s32.totalorder %s28, 1
      %p297 = por %p295, %p296
      %p299 = scmp.ne.s32.totalorder %s282, %s298
      %p300 = scmp.eq.s32.totalorder %s28, 0
      %p301 = por %p299, %p300
      %s302 = ssub.s32 %s22, %s29
      %p303 = scmp.eq.s32.totalorder %s302, 0
      %s305 = sadd.s32 %s304, 1
      %s306 = scalar_select %p303, %s304, %s305
      %p309 = pneg %p303
      %p310 = scmp.eq.s32.totalorder %s22, 1
      %p311 = por %p309, %p310
      %p312 = scmp.ne.s32.totalorder %s304, %s307
      %p313 = scmp.eq.s32.totalorder %s22, 0
      %p314 = por %p312, %p313
      %p315 = scmp.ne.s32.totalorder %s304, %s307
      %p316 = scmp.eq.s32.totalorder %s27, 1
      %p317 = por %p315, %p316
      %p318 = scmp.ne.s32.totalorder %s307, %s308
      %p319 = scmp.eq.s32.totalorder %s27, 0
      %p320 = por %p318, %p319
      %p321 = scmp.ne.s32.totalorder %s307, %s308
      %p322 = scmp.eq.s32.totalorder %s28, 1
      %p323 = por %p321, %p322
      %p325 = scmp.ne.s32.totalorder %s308, %s324
      %p326 = scmp.eq.s32.totalorder %s28, 0
      %p327 = por %p325, %p326
      %p328 = scmp.le.s32.totalorder 1, %s22
      %p329 = scmp.lt.s32.totalorder %s22, 3
      %p330 = pnand %p328, %p329
      %p331 = pneg %p330
      // Predicated region
      $region9: #{decoder_forward.10} parent=5 // pred_check
        _
      $region10: #{decoder_forward.10} parent=5 // pred_check_branch
        %333 = sbr.rel (%p330) target = $region12
      $region11: #{decoder_forward.10} parent=5 // pred_region
        %s334 = ssub.s32 %s22, 1
        // Predicated region
        $region13: #{decoder_forward.10} parent=11 // pred_check
          %p335 = pneg %p121
        $region14: #{decoder_forward.10} parent=11 // pred_check_branch
          %337 = sbr.rel (%p335) target = $region16
        $region15: #{decoder_forward.10} parent=11 // pred_region
          _
        $region16: #{decoder_forward.10} parent=11 // pred_fallthru
          _
        // Predicated region
        $region17: #{decoder_forward.10} parent=11 // pred_check
          %p338 = pneg %p142
        $region18: #{decoder_forward.10} parent=11 // pred_check_branch
          %340 = sbr.rel (%p338) target = $region20
        $region19: #{decoder_forward.10} parent=11 // pred_region
          _
        $region20: #{decoder_forward.10} parent=11 // pred_fallthru
          _
        // Predicated region
        $region21: #{decoder_forward.10} parent=11 // pred_check
          %p341 = pneg %p163
        $region22: #{decoder_forward.10} parent=11 // pred_check_branch
          %343 = sbr.rel (%p341) target = $region24
        $region23: #{decoder_forward.10} parent=11 // pred_region
          _
        $region24: #{decoder_forward.10} parent=11 // pred_fallthru
          _
        // Predicated region
        $region25: #{decoder_forward.10} parent=11 // pred_check
          %p344 = pneg %p184
        $region26: #{decoder_forward.10} parent=11 // pred_check_branch
          %346 = sbr.rel (%p344) target = $region28
        $region27: #{decoder_forward.10} parent=11 // pred_region
          _
        $region28: #{decoder_forward.10} parent=11 // pred_fallthru
          _
        // Predicated region
        $region29: #{decoder_forward.10} parent=11 // pred_check
          %p347 = pneg %p205
        $region30: #{decoder_forward.10} parent=11 // pred_check_branch
          %349 = sbr.rel (%p347) target = $region32
        $region31: #{decoder_forward.10} parent=11 // pred_region
          _
        $region32: #{decoder_forward.10} parent=11 // pred_fallthru
          _
        // Predicated region
        $region33: #{decoder_forward.10} parent=11 // pred_check
          %p350 = pneg %p226
        $region34: #{decoder_forward.10} parent=11 // pred_check_branch
          %352 = sbr.rel (%p350) target = $region36
        $region35: #{decoder_forward.10} parent=11 // pred_region
          _
        $region36: #{decoder_forward.10} parent=11 // pred_fallthru
          _
        // Predicated region
        $region37: #{decoder_forward.10} parent=11 // pred_check
          %p353 = pneg %p247
        $region38: #{decoder_forward.10} parent=11 // pred_check_branch
          %355 = sbr.rel (%p353) target = $region40
        $region39: #{decoder_forward.10} parent=11 // pred_region
          _
        $region40: #{decoder_forward.10} parent=11 // pred_fallthru
          _
        // Predicated region
        $region41: #{decoder_forward.10} parent=11 // pred_check
          %p356 = pneg %p268
        $region42: #{decoder_forward.10} parent=11 // pred_check_branch
          %358 = sbr.rel (%p356) target = $region44
        $region43: #{decoder_forward.10} parent=11 // pred_region
          _
        $region44: #{decoder_forward.10} parent=11 // pred_fallthru
          _
      $region12: #{decoder_forward.10} parent=5 // pred_fallthru
        _
      %p359 = scmp.lt.s32.totalorder %s22, 2
      // Predicated region
      $region45: #{decoder_forward.10} parent=5 // pred_check
        %p360 = pneg %p359
      $region46: #{decoder_forward.10} parent=5 // pred_check_branch
        %362 = sbr.rel (%p360) target = $region48
      $region47: #{decoder_forward.10} parent=5 // pred_region
        // Predicated region
        $region49: #{decoder_forward.10} parent=47 // pred_check
          %p363 = pneg %p42
        $region50: #{decoder_forward.10} parent=47 // pred_check_branch
          %365 = sbr.rel (%p363) target = $region52
        $region51: #{decoder_forward.10} parent=47 // pred_region
          %p366 = scmp.lt.s32.totalorder %s22, 1
          %s367 = scalar_select %p366, %s22, 1
          %s368 = smul.addr %s367, 8
          %s369 = scalar_lea.vmem %s0, %s368
        $region52: #{decoder_forward.10} parent=47 // pred_fallthru
          _
        // Predicated region
        $region53: #{decoder_forward.10} parent=47 // pred_check
          %p370 = pneg %p68
        $region54: #{decoder_forward.10} parent=47 // pred_check_branch
          %372 = sbr.rel (%p370) target = $region56
        $region55: #{decoder_forward.10} parent=47 // pred_region
          %p373 = scmp.lt.s32.totalorder %s22, 1
          %s374 = scalar_select %p373, %s22, 1
          %s375 = smul.addr %s374, 2
          %s376 = smul.addr %s375, 8
          %s377 = scalar_lea.vmem %s1, %s376
        $region56: #{decoder_forward.10} parent=47 // pred_fallthru
          _
        // Predicated region
        $region57: #{decoder_forward.10} parent=47 // pred_check
          %p378 = pneg %p94
        $region58: #{decoder_forward.10} parent=47 // pred_check_branch
          %380 = sbr.rel (%p378) target = $region60
        $region59: #{decoder_forward.10} parent=47 // pred_region
          %p381 = scmp.lt.s32.totalorder %s22, 1
          %s382 = scalar_select %p381, %s22, 1
          %s383 = smul.addr %s382, 8
          %s384 = scalar_lea.vmem %s2, %s383
        $region60: #{decoder_forward.10} parent=47 // pred_fallthru
          _
      $region48: #{decoder_forward.10} parent=5 // pred_fallthru
        _
      %p385 = scmp.le.s32.totalorder 1, %s22
      %p386 = scmp.lt.s32.totalorder %s22, 3
      %p387 = pnand %p385, %p386
      %p388 = pneg %p387
      // Predicated region
      $region61: #{decoder_forward.10} parent=5 // pred_check
        _
      $region62: #{decoder_forward.10} parent=5 // pred_check_branch
        %390 = sbr.rel (%p387) target = $region64
      $region63: #{decoder_forward.10} parent=5 // pred_region
        %s391 = ssub.s32 %s22, 1
        %p392 = scmp.lt.s32.totalorder %s27, 1
        %s393 = scalar_select %p392, %s27, 1
        %s394 = smul.addr %s393, 8
        %s395 = scalar_lea.vmem %s0, %s394
        %p396 = pneg %p48
        %p397 = pneg %p45
        %p398 = scmp.lt.s32.totalorder %s27, 1
        %s399 = scalar_select %p398, %s27, 1
        %s400 = smul.addr %s399, 2
        %s401 = smul.addr %s400, 8
        %s402 = scalar_lea.vmem %s1, %s401
        %p403 = pneg %p74
        %p404 = pneg %p71
        %p405 = scmp.lt.s32.totalorder %s27, 1
        %s406 = scalar_select %p405, %s27, 1
        %s407 = smul.addr %s406, 8
        %s408 = scalar_lea.vmem %s2, %s407
        %p409 = pneg %p100
        %p410 = pneg %p97
        %p411 = pneg %p121
        %p412 = pneg %p118
        %p413 = pneg %p142
        %p414 = pneg %p139
        %p415 = pneg %p163
        %p416 = pneg %p160
        %p417 = pneg %p184
        %p418 = pneg %p181
        %p419 = pneg %p205
        %p420 = pneg %p202
        %p421 = pneg %p226
        %p422 = pneg %p223
        %p423 = pneg %p247
        %p424 = pneg %p244
        %p425 = pneg %p268
        %p426 = pneg %p265
        %p427 = pneg %p294
        %p428 = pneg %p291
        %p429 = scmp.lt.s32.totalorder %s27, 1
        %s430 = scalar_select %p429, %s27, 1
        %s431 = smul.addr %s430, 8
        %s432 = scalar_lea.vmem %s11, %s431
        %p433 = pneg %p320
        %p434 = pneg %p317
        %s435 = sand.u32 %s307, 1
        %s436 = scalar_lea.sflag [#allocation3], %s435
        %s437 = sand.u32 %s307, 1
        %s438 = smul.addr %s437, 32
        %s439 = scalar_lea.vmem [#allocation2], %s438
        %p440 = scmp.lt.s32.totalorder %s27, 1
        %s441 = scalar_select %p440, %s27, 1
        %s442 = smul.addr %s441, 8
        %s443 = scalar_lea.vmem %s0, %s442
        %p444 = scmp.lt.s32.totalorder %s27, 1
        %s445 = scalar_select %p444, %s27, 1
        %s446 = smul.addr %s445, 2
        %s447 = smul.addr %s446, 8
        %s448 = scalar_lea.vmem %s1, %s447
        %p449 = scmp.lt.s32.totalorder %s27, 1
        %s450 = scalar_select %p449, %s27, 1
        %s451 = smul.addr %s450, 8
        %s452 = scalar_lea.vmem %s2, %s451
        %p453 = scmp.lt.s32.totalorder %s27, 1
        %s454 = scalar_select %p453, %s27, 1
        %s455 = smul.addr %s454, 8
        %s456 = scalar_lea.vmem %s11, %s455
        %v457 = vld [vmem:[%s443] sm:$0xff]
        %v458 = vld [vmem:[%s448] sm:$0xff]
        %v459 = vld [vmem:[%s448 + $0x8] sm:$0x3]
        %v460 = vld [vmem:[%s452] sm:$0xff]
        %v461 = vld [vmem:[%s3] sm:$0xff]
        %v462 = vld [vmem:[%s3 + $0x8] sm:$0xff]
        %v463 = vld [vmem:[%s3 + $0x10] sm:$0xff]
        %v464 = vld [vmem:[%s3 + $0x18] sm:$0xff]
        %v465 = vld [vmem:[%s4] sm:$0x1]
        %v467 = vlaneseq
        %v468 = vshrl.u32 %v467, 7
        %v469 = vsub.s32 0, %v468
        %v470 = vrot.slane %v465, %v469
        %vm472 = vcmask 261120
        %v474 = vsel %vm472, %v457, 0
        %476 = vmatprep.subr.mxu0 0.0
        %477 = vmatpush1.msra.mxu0 %v461
        %478 = vmatprep.subr.mxu0 0.0
        %479 = vmatpush1.msra.mxu0 %v462
        %480 = vmatprep.subr.mxu0 0.0
        %481 = vmatpush1.msra.mxu0 %v463
        %482 = vmatprep.subr.mxu0 0.0
        %483 = vmatpush1.msra.mxu0 %v464
        %484 = vmatprep.subr.mxu0 0.0
        %485 = vmatpush1.msra.mxu0 0.0
        %486 = vmatprep.subr.mxu0 0.0
        %487 = vmatpush1.msra.mxu0 0.0
        %488 = vmatprep.subr.mxu0 0.0
        %489 = vmatpush1.msra.mxu0 0.0
        %490 = vmatprep.subr.mxu0 0.0
        %491 = vmatpush1.msra.mxu0 0.0
        %492 = vmatprep.subr.mxu0 0.0
        %493 = vmatpush1.msra.mxu0 0.0
        %494 = vmatprep.subr.mxu0 0.0
        %495 = vmatpush1.msra.mxu0 0.0
        %496 = vmatprep.subr.mxu0 0.0
        %497 = vmatpush1.msra.mxu0 0.0
        %498 = vmatprep.subr.mxu0 0.0
        %499 = vmatpush1.msra.mxu0 0.0
        %500 = vmatprep.subr.mxu0 0.0
        %501 = vmatpush1.msra.mxu0 0.0
        %502 = vmatprep.subr.mxu0 0.0
        %503 = vmatpush1.msra.mxu0 0.0
        %504 = vmatprep.subr.mxu0 0.0
        %505 = vmatpush1.msra.mxu0 0.0
        %506 = vmatprep.subr.mxu0 0.0
        %507 = vmatpush1.msra.mxu0 0.0
        %508 = vmatprep.subr.mxu0 0.0
        %509 = vmatpush1.msra.mxu0 0.0
        %510 = vmatprep.subr.mxu0 0.0
        %511 = vmatpush1.msra.mxu0 0.0
        %512 = vmatprep.subr.mxu0 0.0
        %513 = vmatpush1.msra.mxu0 0.0
        %514 = vmatprep.subr.mxu0 0.0
        %515 = vmatpush1.msra.mxu0 0.0
        %516 = vmatprep.subr.mxu0 0.0
        %517 = vmatpush1.msra.mxu0 0.0
        %518 = vmatprep.subr.mxu0 0.0
        %519 = vmatpush1.msra.mxu0 0.0
        %520 = vmatprep.subr.mxu0 0.0
        %521 = vmatpush1.msra.mxu0 0.0
        %522 = vmatprep.subr.mxu0 0.0
        %523 = vmatpush1.msra.mxu0 0.0
        %524 = vmatprep.subr.mxu0 0.0
        %525 = vmatpush1.msra.mxu0 0.0
        %526 = vmatprep.subr.mxu0 0.0
        %527 = vmatpush1.msra.mxu0 0.0
        %528 = vmatprep.subr.mxu0 0.0
        %529 = vmatpush1.msra.mxu0 0.0
        %530 = vmatprep.subr.mxu0 0.0
        %531 = vmatpush1.msra.mxu0 0.0
        %532 = vmatprep.subr.mxu0 0.0
        %533 = vmatpush1.msra.mxu0 0.0
        %534 = vmatprep.subr.mxu0 0.0
        %535 = vmatpush1.msra.mxu0 0.0
        %536 = vmatprep.subr.mxu0 0.0
        %537 = vmatpush1.msra.mxu0 0.0
        %538 = vmatprep.subr.mxu0 0.0
        %539 = vmatpush1.msra.mxu0 0.0
        %540 = vmatprep.mubr.f32.mxu0 0.0
        %541 = vmatmul.mubr.f32.gmra.mrb[0].mxu0 %v474
        %v542 = vpop.f32.mrb[0].mxu0
        %v543 = vadd.f32 %v470, %v542
        %v544 = vpop.f32.mrb[0].mxu0
        %545 = vdwg.mxu0
        %v546 = vld [vmem:[%s5] sm:$0xff]
        %v547 = vld [vmem:[%s5 + $0x8] sm:$0xff]
        %v548 = vld [vmem:[%s5 + $0x10] sm:$0xff]
        %v549 = vld [vmem:[%s5 + $0x18] sm:$0xff]
        %v550 = vld [vmem:[%s6] sm:$0x1]
        %v552 = vlaneseq
        %v553 = vshrl.u32 %v552, 7
        %v554 = vsub.s32 0, %v553
        %v555 = vrot.slane %v550, %v554
        %v558 = vsel %vm472, %v458, 0
        %v561 = vsel %vm472, %v459, 0
        %563 = vmatprep.subr.mxu0 0.0
        %564 = vmatpush1.msra.mxu0 %v546
        %565 = vmatprep.subr.mxu0 0.0
        %566 = vmatpush1.msra.mxu0 %v547
        %567 = vmatprep.subr.mxu0 0.0
        %568 = vmatpush1.msra.mxu0 %v548
        %569 = vmatprep.subr.mxu0 0.0
        %570 = vmatpush1.msra.mxu0 %v549
        %571 = vmatprep.subr.mxu0 0.0
        %572 = vmatpush1.msra.mxu0 0.0
        %573 = vmatprep.subr.mxu0 0.0
        %574 = vmatpush1.msra.mxu0 0.0
        %575 = vmatprep.subr.mxu0 0.0
        %576 = vmatpush1.msra.mxu0 0.0
        %577 = vmatprep.subr.mxu0 0.0
        %578 = vmatpush1.msra.mxu0 0.0
        %579 = vmatprep.subr.mxu0 0.0
        %580 = vmatpush1.msra.mxu0 0.0
        %581 = vmatprep.subr.mxu0 0.0
        %582 = vmatpush1.msra.mxu0 0.0
        %583 = vmatprep.subr.mxu0 0.0
        %584 = vmatpush1.msra.mxu0 0.0
        %585 = vmatprep.subr.mxu0 0.0
        %586 = vmatpush1.msra.mxu0 0.0
        %587 = vmatprep.subr.mxu0 0.0
        %588 = vmatpush1.msra.mxu0 0.0
        %589 = vmatprep.subr.mxu0 0.0
        %590 = vmatpush1.msra.mxu0 0.0
        %591 = vmatprep.subr.mxu0 0.0
        %592 = vmatpush1.msra.mxu0 0.0
        %593 = vmatprep.subr.mxu0 0.0
        %594 = vmatpush1.msra.mxu0 0.0
        %595 = vmatprep.subr.mxu0 0.0
        %596 = vmatpush1.msra.mxu0 0.0
        %597 = vmatprep.subr.mxu0 0.0
        %598 = vmatpush1.msra.mxu0 0.0
        %599 = vmatprep.subr.mxu0 0.0
        %600 = vmatpush1.msra.mxu0 0.0
        %601 = vmatprep.subr.mxu0 0.0
        %602 = vmatpush1.msra.mxu0 0.0
        %603 = vmatprep.subr.mxu0 0.0
        %604 = vmatpush1.msra.mxu0 0.0
        %605 = vmatprep.subr.mxu0 0.0
        %606 = vmatpush1.msra.mxu0 0.0
        %607 = vmatprep.subr.mxu0 0.0
        %608 = vmatpush1.msra.mxu0 0.0
        %609 = vmatprep.subr.mxu0 0.0
        %610 = vmatpush1.msra.mxu0 0.0
        %611 = vmatprep.subr.mxu0 0.0
        %612 = vmatpush1.msra.mxu0 0.0
        %613 = vmatprep.subr.mxu0 0.0
        %614 = vmatpush1.msra.mxu0 0.0
        %615 = vmatprep.subr.mxu0 0.0
        %616 = vmatpush1.msra.mxu0 0.0
        %617 = vmatprep.subr.mxu0 0.0
        %618 = vmatpush1.msra.mxu0 0.0
        %619 = vmatprep.subr.mxu0 0.0
        %620 = vmatpush1.msra.mxu0 0.0
        %621 = vmatprep.subr.mxu0 0.0
        %622 = vmatpush1.msra.mxu0 0.0
        %623 = vmatprep.subr.mxu0 0.0
        %624 = vmatpush1.msra.mxu0 0.0
        %625 = vmatprep.subr.mxu0 0.0
        %626 = vmatpush1.msra.mxu0 0.0
        %627 = vmatprep.mubr.f32.mxu0 0.0
        %628 = vmatmul.mubr.f32.gmra.mrb[0].mxu0 %v558
        %v629 = vpop.f32.mrb[0].mxu0
        %v630 = vadd.f32 %v555, %v629
        %v631 = vpop.f32.mrb[0].mxu0
        %632 = vmatprep.mubr.f32.mxu0 0.0
        %633 = vmatmul.mubr.f32.gmra.mrb[0].mxu0 %v561
        %v634 = vpop.f32.mrb[0].mxu0
        %v635 = vadd.f32 %v555, %v634
        %v636 = vpop.f32.mrb[0].mxu0
        %637 = vdwg.mxu0
        %v638 = vmul.f32 %v543, 0.35355338
        %vm639 = vcmask 64512
        %v641 = vsel %vm639, %v638, 0
        %v644 = vsel %vm639, %v630, 0
        %v647 = vsel %vm639, %v635, 0
        %649 = vmatprep.subr.mxu0 0.0
        %650 = vmatpush1.xpose.msra.mxu0 %v644
        %651 = vmatprep.subr.mxu0 0.0
        %652 = vmatpush1.xpose.msra.mxu0 %v647
        %653 = vmatprep.subr.mxu0 0.0
        %654 = vmatpush1.xpose.msra.mxu0 0.0
        %655 = vmatprep.subr.mxu0 0.0
        %656 = vmatpush1.xpose.msra.mxu0 0.0
        %657 = vmatprep.subr.mxu0 0.0
        %658 = vmatpush1.xpose.msra.mxu0 0.0
        %659 = vmatprep.subr.mxu0 0.0
        %660 = vmatpush1.xpose.msra.mxu0 0.0
        %661 = vmatprep.subr.mxu0 0.0
        %662 = vmatpush1.xpose.msra.mxu0 0.0
        %663 = vmatprep.subr.mxu0 0.0
        %664 = vmatpush1.xpose.msra.mxu0 0.0
        %665 = vmatprep.subr.mxu0 0.0
        %666 = vmatpush1.xpose.msra.mxu0 0.0
        %667 = vmatprep.subr.mxu0 0.0
        %668 = vmatpush1.xpose.msra.mxu0 0.0
        %669 = vmatprep.subr.mxu0 0.0
        %670 = vmatpush1.xpose.msra.mxu0 0.0
        %671 = vmatprep.subr.mxu0 0.0
        %672 = vmatpush1.xpose.msra.mxu0 0.0
        %673 = vmatprep.subr.mxu0 0.0
        %674 = vmatpush1.xpose.msra.mxu0 0.0
        %675 = vmatprep.subr.mxu0 0.0
        %676 = vmatpush1.xpose.msra.mxu0 0.0
        %677 = vmatprep.subr.mxu0 0.0
        %678 = vmatpush1.xpose.msra.mxu0 0.0
        %679 = vmatprep.subr.mxu0 0.0
        %680 = vmatpush1.xpose.msra.mxu0 0.0
        %681 = vmatprep.subr.mxu0 0.0
        %682 = vmatpush1.xpose.msra.mxu0 0.0
        %683 = vmatprep.subr.mxu0 0.0
        %684 = vmatpush1.xpose.msra.mxu0 0.0
        %685 = vmatprep.subr.mxu0 0.0
        %686 = vmatpush1.xpose.msra.mxu0 0.0
        %687 = vmatprep.subr.mxu0 0.0
        %688 = vmatpush1.xpose.msra.mxu0 0.0
        %689 = vmatprep.subr.mxu0 0.0
        %690 = vmatpush1.xpose.msra.mxu0 0.0
        %691 = vmatprep.subr.mxu0 0.0
        %692 = vmatpush1.xpose.msra.mxu0 0.0
        %693 = vmatprep.subr.mxu0 0.0
        %694 = vmatpush1.xpose.msra.mxu0 0.0
        %695 = vmatprep.subr.mxu0 0.0
        %696 = vmatpush1.xpose.msra.mxu0 0.0
        %697 = vmatprep.subr.mxu0 0.0
        %698 = vmatpush1.xpose.msra.mxu0 0.0
        %699 = vmatprep.subr.mxu0 0.0
        %700 = vmatpush1.xpose.msra.mxu0 0.0
        %701 = vmatprep.subr.mxu0 0.0
        %702 = vmatpush1.xpose.msra.mxu0 0.0
        %703 = vmatprep.subr.mxu0 0.0
        %704 = vmatpush1.xpose.msra.mxu0 0.0
        %705 = vmatprep.subr.mxu0 0.0
        %706 = vmatpush1.xpose.msra.mxu0 0.0
        %707 = vmatprep.subr.mxu0 0.0
        %708 = vmatpush1.xpose.msra.mxu0 0.0
        %709 = vmatprep.subr.mxu0 0.0
        %710 = vmatpush1.xpose.msra.mxu0 0.0
        %711 = vmatprep.subr.mxu0 0.0
        %712 = vmatpush1.xpose.msra.mxu0 0.0
        %713 = vmatprep.mubr.f32.mxu0 0.0
        %714 = vmatmul.mubr.f32.gmra.mrb[0].mxu0 %v641
        %v715 = vpop.f32.mrb[0].mxu0
        %v716 = vadd.f32 0.0, %v715
        %v717 = vpop.f32.mrb[0].mxu0
        %718 = vdwg.mxu0
        %vm719 = vcmp.gt.f32.partialorder %v460, 0.0
        %v720 = vsel %vm719, %v716, -1e+09
        %vm721 = vcmask 80896
        %v722 = vsel %vm721, %v720, -inf
        %723 = vmax.xlane.f32.xlu0 %v722
        %v724 = vpop.xlane.xlu0 %723
        %v725 = vsub.f32 %v720, %v724
        %v726 = vmul.f32 %v725, 1.442695
        %v727 = vpow.pop %v726
        %v728 = vsel %vm721, %v727, 0.0
        %729 = vadd.xlane.f32.xlu0 %v728
        %v730 = vpop.xlane.xlu0 %729
        %v731 = vrcp.pop %v730
        %v732 = vmul.f32 %v727, %v731
        %733 = vst.msk [vmem:[%s439] sm:$0xff] %vm721, %v732
        %734 = vrot.lane.b32.xlu0 %v630, 96
        %v735 = vpop.permute.xlu0 %734
        %736 = vrot.lane.b32.xlu0 %v635, 96
        %v737 = vpop.permute.xlu0 %736
        %v740 = vsel %vm721, %v732, 0
        %vm742 = vcmask 1041408
        %v743 = vsel %vm742, %v737, 0
        %745 = vmatprep.subr.mxu0 0.0
        %746 = vmatpush1.msra.mxu0 %v735
        %747 = vmatprep.subr.mxu0 0.0
        %748 = vmatpush1.msra.mxu0 %v743
        %749 = vmatprep.subr.mxu0 0.0
        %750 = vmatpush1.msra.mxu0 0.0
        %751 = vmatprep.subr.mxu0 0.0
        %752 = vmatpush1.msra.mxu0 0.0
        %753 = vmatprep.subr.mxu0 0.0
        %754 = vmatpush1.msra.mxu0 0.0
        %755 = vmatprep.subr.mxu0 0.0
        %756 = vmatpush1.msra.mxu0 0.0
        %757 = vmatprep.subr.mxu0 0.0
        %758 = vmatpush1.msra.mxu0 0.0
        %759 = vmatprep.subr.mxu0 0.0
        %760 = vmatpush1.msra.mxu0 0.0
        %761 = vmatprep.subr.mxu0 0.0
        %762 = vmatpush1.msra.mxu0 0.0
        %763 = vmatprep.subr.mxu0 0.0
        %764 = vmatpush1.msra.mxu0 0.0
        %765 = vmatprep.subr.mxu0 0.0
        %766 = vmatpush1.msra.mxu0 0.0
        %767 = vmatprep.subr.mxu0 0.0
        %768 = vmatpush1.msra.mxu0 0.0
        %769 = vmatprep.subr.mxu0 0.0
        %770 = vmatpush1.msra.mxu0 0.0
        %771 = vmatprep.subr.mxu0 0.0
        %772 = vmatpush1.msra.mxu0 0.0
        %773 = vmatprep.subr.mxu0 0.0
        %774 = vmatpush1.msra.mxu0 0.0
        %775 = vmatprep.subr.mxu0 0.0
        %776 = vmatpush1.msra.mxu0 0.0
        %777 = vmatprep.subr.mxu0 0.0
        %778 = vmatpush1.msra.mxu0 0.0
        %779 = vmatprep.subr.mxu0 0.0
        %780 = vmatpush1.msra.mxu0 0.0
        %781 = vmatprep.subr.mxu0 0.0
        %782 = vmatpush1.msra.mxu0 0.0
        %783 = vmatprep.subr.mxu0 0.0
        %784 = vmatpush1.msra.mxu0 0.0
        %785 = vmatprep.subr.mxu0 0.0
        %786 = vmatpush1.msra.mxu0 0.0
        %787 = vmatprep.subr.mxu0 0.0
        %788 = vmatpush1.msra.mxu0 0.0
        %789 = vmatprep.subr.mxu0 0.0
        %790 = vmatpush1.msra.mxu0 0.0
        %791 = vmatprep.subr.mxu0 0.0
        %792 = vmatpush1.msra.mxu0 0.0
        %793 = vmatprep.subr.mxu0 0.0
        %794 = vmatpush1.msra.mxu0 0.0
        %795 = vmatprep.subr.mxu0 0.0
        %796 = vmatpush1.msra.mxu0 0.0
        %797 = vmatprep.subr.mxu0 0.0
        %798 = vmatpush1.msra.mxu0 0.0
        %799 = vmatprep.subr.mxu0 0.0
        %800 = vmatpush1.msra.mxu0 0.0
        %801 = vmatprep.subr.mxu0 0.0
        %802 = vmatpush1.msra.mxu0 0.0
        %803 = vmatprep.subr.mxu0 0.0
        %804 = vmatpush1.msra.mxu0 0.0
        %805 = vmatprep.subr.mxu0 0.0
        %806 = vmatpush1.msra.mxu0 0.0
        %807 = vmatprep.subr.mxu0 0.0
        %808 = vmatpush1.msra.mxu0 0.0
        %809 = vmatprep.mubr.f32.mxu0 0.0
        %810 = vmatmul.mubr.f32.gmra.mrb[0].mxu0 %v740
        %v811 = vpop.f32.mrb[0].mxu0
        %v812 = vadd.f32 0.0, %v811
        %v813 = vpop.f32.mrb[0].mxu0
        %814 = vdwg.mxu0
        %v815 = vld [vmem:[%s7] sm:$0xff]
        %816 = vrot.lane.b32.xlu0 %v638, 120
        %v817 = vpop.permute.xlu0 %816
        %818 = vrot.lane.b32.xlu0 %v630, 120
        %v819 = vpop.permute.xlu0 %818
        %820 = vrot.lane.b32.xlu0 %v635, 120
        %v821 = vpop.permute.xlu0 %820
        %v822 = vsel %vm639, %v817, 0
        %v824 = vsel %vm639, %v819, 0
        %v826 = vsel %vm639, %v821, 0
        %828 = vmatprep.subr.mxu0 0.0
        %829 = vmatpush1.xpose.msra.mxu0 %v824
        %830 = vmatprep.subr.mxu0 0.0
        %831 = vmatpush1.xpose.msra.mxu0 %v826
        %832 = vmatprep.subr.mxu0 0.0
        %833 = vmatpush1.xpose.msra.mxu0 0.0
        %834 = vmatprep.subr.mxu0 0.0
        %835 = vmatpush1.xpose.msra.mxu0 0.0
        %836 = vmatprep.subr.mxu0 0.0
        %837 = vmatpush1.xpose.msra.mxu0 0.0
        %838 = vmatprep.subr.mxu0 0.0
        %839 = vmatpush1.xpose.msra.mxu0 0.0
        %840 = vmatprep.subr.mxu0 0.0
        %841 = vmatpush1.xpose.msra.mxu0 0.0
        %842 = vmatprep.subr.mxu0 0.0
        %843 = vmatpush1.xpose.msra.mxu0 0.0
        %844 = vmatprep.subr.mxu0 0.0
        %845 = vmatpush1.xpose.msra.mxu0 0.0
        %846 = vmatprep.subr.mxu0 0.0
        %847 = vmatpush1.xpose.msra.mxu0 0.0
        %848 = vmatprep.subr.mxu0 0.0
        %849 = vmatpush1.xpose.msra.mxu0 0.0
        %850 = vmatprep.subr.mxu0 0.0
        %851 = vmatpush1.xpose.msra.mxu0 0.0
        %852 = vmatprep.subr.mxu0 0.0
        %853 = vmatpush1.xpose.msra.mxu0 0.0
        %854 = vmatprep.subr.mxu0 0.0
        %855 = vmatpush1.xpose.msra.mxu0 0.0
        %856 = vmatprep.subr.mxu0 0.0
        %857 = vmatpush1.xpose.msra.mxu0 0.0
        %858 = vmatprep.subr.mxu0 0.0
        %859 = vmatpush1.xpose.msra.mxu0 0.0
        %860 = vmatprep.subr.mxu0 0.0
        %861 = vmatpush1.xpose.msra.mxu0 0.0
        %862 = vmatprep.subr.mxu0 0.0
        %863 = vmatpush1.xpose.msra.mxu0 0.0
        %864 = vmatprep.subr.mxu0 0.0
        %865 = vmatpush1.xpose.msra.mxu0 0.0
        %866 = vmatprep.subr.mxu0 0.0
        %867 = vmatpush1.xpose.msra.mxu0 0.0
        %868 = vmatprep.subr.mxu0 0.0
        %869 = vmatpush1.xpose.msra.mxu0 0.0
        %870 = vmatprep.subr.mxu0 0.0
        %871 = vmatpush1.xpose.msra.mxu0 0.0
        %872 = vmatprep.subr.mxu0 0.0
        %873 = vmatpush1.xpose.msra.mxu0 0.0
        %874 = vmatprep.subr.mxu0 0.0
        %875 = vmatpush1.xpose.msra.mxu0 0.0
        %876 = vmatprep.subr.mxu0 0.0
        %877 = vmatpush1.xpose.msra.mxu0 0.0
        %878 = vmatprep.subr.mxu0 0.0
        %879 = vmatpush1.xpose.msra.mxu0 0.0
        %880 = vmatprep.subr.mxu0 0.0
        %881 = vmatpush1.xpose.msra.mxu0 0.0
        %882 = vmatprep.subr.mxu0 0.0
        %883 = vmatpush1.xpose.msra.mxu0 0.0
        %884 = vmatprep.subr.mxu0 0.0
        %885 = vmatpush1.xpose.msra.mxu0 0.0
        %886 = vmatprep.subr.mxu0 0.0
        %887 = vmatpush1.xpose.msra.mxu0 0.0
        %888 = vmatprep.subr.mxu0 0.0
        %889 = vmatpush1.xpose.msra.mxu0 0.0
        %890 = vmatprep.subr.mxu0 0.0
        %891 = vmatpush1.xpose.msra.mxu0 0.0
        %892 = vmatprep.mubr.f32.mxu0 0.0
        %893 = vmatmul.mubr.f32.gmra.mrb[0].mxu0 %v822
        %v894 = vpop.f32.mrb[0].mxu0
        %v895 = vadd.f32 0.0, %v894
        %v896 = vpop.f32.mrb[0].mxu0
        %897 = vdwg.mxu0
        %v898 = vsel %vm719, %v895, -1e+09
        %v899 = vsel %vm721, %v898, -inf
        %900 = vmax.xlane.f32.xlu0 %v899
        %v901 = vpop.xlane.xlu0 %900
        %v902 = vsub.f32 %v898, %v901
        %v903 = vmul.f32 %v902, 1.442695
        %v904 = vpow.pop %v903
        %v905 = vsel %vm721, %v904, 0.0
        %906 = vadd.xlane.f32.xlu0 %v905
        %v907 = vpop.xlane.xlu0 %906
        %v908 = vrcp.pop %v907
        %v909 = vmul.f32 %v904, %v908
        %s910 = scalar_lea.vmem %s439, 8 [#allocation2]
        %911 = vst.msk [vmem:[%s910] sm:$0xff] %vm721, %v909
        %912 = vrot.lane.b32.xlu0 %v630, 88
        %v913 = vpop.permute.xlu0 %912
        %914 = vrot.lane.b32.xlu0 %v635, 88
        %v915 = vpop.permute.xlu0 %914
        %v918 = vsel %vm721, %v909, 0
        %v920 = vsel %vm742, %v915, 0
        %922 = vmatprep.subr.mxu0 0.0
        %923 = vmatpush1.msra.mxu0 %v913
        %924 = vmatprep.subr.mxu0 0.0
        %925 = vmatpush1.msra.mxu0 %v920
        %926 = vmatprep.subr.mxu0 0.0
        %927 = vmatpush1.msra.mxu0 0.0
        %928 = vmatprep.subr.mxu0 0.0
        %929 = vmatpush1.msra.mxu0 0.0
        %930 = vmatprep.subr.mxu0 0.0
        %931 = vmatpush1.msra.mxu0 0.0
        %932 = vmatprep.subr.mxu0 0.0
        %933 = vmatpush1.msra.mxu0 0.0
        %934 = vmatprep.subr.mxu0 0.0
        %935 = vmatpush1.msra.mxu0 0.0
        %936 = vmatprep.subr.mxu0 0.0
        %937 = vmatpush1.msra.mxu0 0.0
        %938 = vmatprep.subr.mxu0 0.0
        %939 = vmatpush1.msra.mxu0 0.0
        %940 = vmatprep.subr.mxu0 0.0
        %941 = vmatpush1.msra.mxu0 0.0
        %942 = vmatprep.subr.mxu0 0.0
        %943 = vmatpush1.msra.mxu0 0.0
        %944 = vmatprep.subr.mxu0 0.0
        %945 = vmatpush1.msra.mxu0 0.0
        %946 = vmatprep.subr.mxu0 0.0
        %947 = vmatpush1.msra.mxu0 0.0
        %948 = vmatprep.subr.mxu0 0.0
        %949 = vmatpush1.msra.mxu0 0.0
        %950 = vmatprep.subr.mxu0 0.0
        %951 = vmatpush1.msra.mxu0 0.0
        %952 = vmatprep.subr.mxu0 0.0
        %953 = vmatpush1.msra.mxu0 0.0
        %954 = vmatprep.subr.mxu0 0.0
        %955 = vmatpush1.msra.mxu0 0.0
        %956 = vmatprep.subr.mxu0 0.0
        %957 = vmatpush1.msra.mxu0 0.0
        %958 = vmatprep.subr.mxu0 0.0
        %959 = vmatpush1.msra.mxu0 0.0
        %960 = vmatprep.subr.mxu0 0.0
        %961 = vmatpush1.msra.mxu0 0.0
        %962 = vmatprep.subr.mxu0 0.0
        %963 = vmatpush1.msra.mxu0 0.0
        %964 = vmatprep.subr.mxu0 0.0
        %965 = vmatpush1.msra.mxu0 0.0
        %966 = vmatprep.subr.mxu0 0.0
        %967 = vmatpush1.msra.mxu0 0.0
        %968 = vmatprep.subr.mxu0 0.0
        %969 = vmatpush1.msra.mxu0 0.0
        %970 = vmatprep.subr.mxu0 0.0
        %971 = vmatpush1.msra.mxu0 0.0
        %972 = vmatprep.subr.mxu0 0.0
        %973 = vmatpush1.msra.mxu0 0.0
        %974 = vmatprep.subr.mxu0 0.0
        %975 = vmatpush1.msra.mxu0 0.0
        %976 = vmatprep.subr.mxu0 0.0
        %977 = vmatpush1.msra.mxu0 0.0
        %978 = vmatprep.subr.mxu0 0.0
        %979 = vmatpush1.msra.mxu0 0.0
        %980 = vmatprep.subr.mxu0 0.0
        %981 = vmatpush1.msra.mxu0 0.0
        %982 = vmatprep.subr.mxu0 0.0
        %983 = vmatpush1.msra.mxu0 0.0
        %984 = vmatprep.subr.mxu0 0.0
        %985 = vmatpush1.msra.mxu0 0.0
        %986 = vmatprep.mubr.f32.mxu0 0.0
        %987 = vmatmul.mubr.f32.gmra.mrb[0].mxu0 %v918
        %v988 = vpop.f32.mrb[0].mxu0
        %v989 = vadd.f32 0.0, %v988
        %v990 = vpop.f32.mrb[0].mxu0
        %991 = vdwg.mxu0
        %v992 = vld [vmem:[%s7 + $0x8] sm:$0xff]
        %v994 = vsel %vm639, %v989, 0
        %996 = vmatprep.subr.mxu0 0.0
        %997 = vmatpush1.msra.mxu0 %v992
        %998 = vmatprep.subr.mxu0 0.0
        %999 = vmatpush1.msra.mxu0 0.0
        %1000 = vmatprep.subr.mxu0 0.0
        %1001 = vmatpush1.msra.mxu0 0.0
        %1002 = vmatprep.subr.mxu0 0.0
        %1003 = vmatpush1.msra.mxu0 0.0
        %1004 = vmatprep.subr.mxu0 0.0
        %1005 = vmatpush1.msra.mxu0 0.0
        %1006 = vmatprep.subr.mxu0 0.0
        %1007 = vmatpush1.msra.mxu0 0.0
        %1008 = vmatprep.subr.mxu0 0.0
        %1009 = vmatpush1.msra.mxu0 0.0
        %1010 = vmatprep.subr.mxu0 0.0
        %1011 = vmatpush1.msra.mxu0 0.0
        %1012 = vmatprep.subr.mxu0 0.0
        %1013 = vmatpush1.msra.mxu0 0.0
        %1014 = vmatprep.subr.mxu0 0.0
        %1015 = vmatpush1.msra.mxu0 0.0
        %1016 = vmatprep.subr.mxu0 0.0
        %1017 = vmatpush1.msra.mxu0 0.0
        %1018 = vmatprep.subr.mxu0 0.0
        %1019 = vmatpush1.msra.mxu0 0.0
        %1020 = vmatprep.subr.mxu0 0.0
        %1021 = vmatpush1.msra.mxu0 0.0
        %1022 = vmatprep.subr.mxu0 0.0
        %1023 = vmatpush1.msra.mxu0 0.0
        %1024 = vmatprep.subr.mxu0 0.0
        %1025 = vmatpush1.msra.mxu0 0.0
        %1026 = vmatprep.subr.mxu0 0.0
        %1027 = vmatpush1.msra.mxu0 0.0
        %1028 = vmatprep.subr.mxu0 0.0
        %1029 = vmatpush1.msra.mxu0 0.0
        %1030 = vmatprep.subr.mxu0 0.0
        %1031 = vmatpush1.msra.mxu0 0.0
        %1032 = vmatprep.subr.mxu0 0.0
        %1033 = vmatpush1.msra.mxu0 0.0
        %1034 = vmatprep.subr.mxu0 0.0
        %1035 = vmatpush1.msra.mxu0 0.0
        %1036 = vmatprep.subr.mxu0 0.0
        %1037 = vmatpush1.msra.mxu0 0.0
        %1038 = vmatprep.subr.mxu0 0.0
        %1039 = vmatpush1.msra.mxu0 0.0
        %1040 = vmatprep.subr.mxu0 0.0
        %1041 = vmatpush1.msra.mxu0 0.0
        %1042 = vmatprep.subr.mxu0 0.0
        %1043 = vmatpush1.msra.mxu0 0.0
        %1044 = vmatprep.subr.mxu0 0.0
        %1045 = vmatpush1.msra.mxu0 0.0
        %1046 = vmatprep.subr.mxu0 0.0
        %1047 = vmatpush1.msra.mxu0 0.0
        %1048 = vmatprep.subr.mxu0 0.0
        %1049 = vmatpush1.msra.mxu0 0.0
        %1050 = vmatprep.subr.mxu0 0.0
        %1051 = vmatpush1.msra.mxu0 0.0
        %1052 = vmatprep.subr.mxu0 0.0
        %1053 = vmatpush1.msra.mxu0 0.0
        %1054 = vmatprep.subr.mxu0 0.0
        %1055 = vmatpush1.msra.mxu0 0.0
        %1056 = vmatprep.subr.mxu0 0.0
        %1057 = vmatpush1.msra.mxu0 0.0
        %1058 = vmatprep.subr.mxu0 0.0
        %1059 = vmatpush1.msra.mxu0 0.0
        %1060 = vmatprep.mubr.f32.mxu0 0.0
        %1061 = vmatmul.mubr.f32.gmra.mrb[0].mxu0 %v994
        %v1062 = vpop.f32.mrb[0].mxu0
        %v1063 = vadd.f32 0.0, %v1062
        %v1064 = vpop.f32.mrb[0].mxu0
        %1065 = vdwg.mxu0
        %v1067 = vsel %vm639, %v812, 0
        %1069 = vmatprep.subr.mxu0 0.0
        %1070 = vmatpush1.msra.mxu0 %v815
        %1071 = vmatprep.subr.mxu0 0.0
        %1072 = vmatpush1.msra.mxu0 0.0
        %1073 = vmatprep.subr.mxu0 0.0
        %1074 = vmatpush1.msra.mxu0 0.0
        %1075 = vmatprep.subr.mxu0 0.0
        %1076 = vmatpush1.msra.mxu0 0.0
        %1077 = vmatprep.subr.mxu0 0.0
        %1078 = vmatpush1.msra.mxu0 0.0
        %1079 = vmatprep.subr.mxu0 0.0
        %1080 = vmatpush1.msra.mxu0 0.0
        %1081 = vmatprep.subr.mxu0 0.0
        %1082 = vmatpush1.msra.mxu0 0.0
        %1083 = vmatprep.subr.mxu0 0.0
        %1084 = vmatpush1.msra.mxu0 0.0
        %1085 = vmatprep.subr.mxu0 0.0
        %1086 = vmatpush1.msra.mxu0 0.0
        %1087 = vmatprep.subr.mxu0 0.0
        %1088 = vmatpush1.msra.mxu0 0.0
        %1089 = vmatprep.subr.mxu0 0.0
        %1090 = vmatpush1.msra.mxu0 0.0
        %1091 = vmatprep.subr.mxu0 0.0
        %1092 = vmatpush1.msra.mxu0 0.0
        %1093 = vmatprep.subr.mxu0 0.0
        %1094 = vmatpush1.msra.mxu0 0.0
        %1095 = vmatprep.subr.mxu0 0.0
        %1096 = vmatpush1.msra.mxu0 0.0
        %1097 = vmatprep.subr.mxu0 0.0
        %1098 = vmatpush1.msra.mxu0 0.0
        %1099 = vmatprep.subr.mxu0 0.0
        %1100 = vmatpush1.msra.mxu0 0.0
        %1101 = vmatprep.subr.mxu0 0.0
        %1102 = vmatpush1.msra.mxu0 0.0
        %1103 = vmatprep.subr.mxu0 0.0
        %1104 = vmatpush1.msra.mxu0 0.0
        %1105 = vmatprep.subr.mxu0 0.0
        %1106 = vmatpush1.msra.mxu0 0.0
        %1107 = vmatprep.subr.mxu0 0.0
        %1108 = vmatpush1.msra.mxu0 0.0
        %1109 = vmatprep.subr.mxu0 0.0
        %1110 = vmatpush1.msra.mxu0 0.0
        %1111 = vmatprep.subr.mxu0 0.0
        %1112 = vmatpush1.msra.mxu0 0.0
        %1113 = vmatprep.subr.mxu0 0.0
        %1114 = vmatpush1.msra.mxu0 0.0
        %1115 = vmatprep.subr.mxu0 0.0
        %1116 = vmatpush1.msra.mxu0 0.0
        %1117 = vmatprep.subr.mxu0 0.0
        %1118 = vmatpush1.msra.mxu0 0.0
        %1119 = vmatprep.subr.mxu0 0.0
        %1120 = vmatpush1.msra.mxu0 0.0
        %1121 = vmatprep.subr.mxu0 0.0
        %1122 = vmatpush1.msra.mxu0 0.0
        %1123 = vmatprep.subr.mxu0 0.0
        %1124 = vmatpush1.msra.mxu0 0.0
        %1125 = vmatprep.subr.mxu0 0.0
        %1126 = vmatpush1.msra.mxu0 0.0
        %1127 = vmatprep.subr.mxu0 0.0
        %1128 = vmatpush1.msra.mxu0 0.0
        %1129 = vmatprep.subr.mxu0 0.0
        %1130 = vmatpush1.msra.mxu0 0.0
        %1131 = vmatprep.subr.mxu0 0.0
        %1132 = vmatpush1.msra.mxu0 0.0
        %1133 = vmatprep.mubr.f32.mxu0 0.0
        %1134 = vmatmul.mubr.f32.gmra.mrb[0].mxu0 %v1067
        %v1135 = vpop.f32.mrb[0].mxu0
        %v1136 = vadd.f32 %v1063, %v1135
        %v1137 = vpop.f32.mrb[0].mxu0
        %1138 = vdwg.mxu0
        %1139 = vrot.lane.b32.xlu0 %v638, 112
        %v1140 = vpop.permute.xlu0 %1139
        %1141 = vrot.lane.b32.xlu0 %v630, 112
        %v1142 = vpop.permute.xlu0 %1141
        %1143 = vrot.lane.b32.xlu0 %v635, 112
        %v1144 = vpop.permute.xlu0 %1143
        %v1145 = vsel %vm639, %v1140, 0
        %v1147 = vsel %vm639, %v1142, 0
        %v1149 = vsel %vm639, %v1144, 0
        %1151 = vmatprep.subr.mxu0 0.0
        %1152 = vmatpush1.xpose.msra.mxu0 %v1147
        %1153 = vmatprep.subr.mxu0 0.0
        %1154 = vmatpush1.xpose.msra.mxu0 %v1149
        %1155 = vmatprep.subr.mxu0 0.0
        %1156 = vmatpush1.xpose.msra.mxu0 0.0
        %1157 = vmatprep.subr.mxu0 0.0
        %1158 = vmatpush1.xpose.msra.mxu0 0.0
        %1159 = vmatprep.subr.mxu0 0.0
        %1160 = vmatpush1.xpose.msra.mxu0 0.0
        %1161 = vmatprep.subr.mxu0 0.0
        %1162 = vmatpush1.xpose.msra.mxu0 0.0
        %1163 = vmatprep.subr.mxu0 0.0
        %1164 = vmatpush1.xpose.msra.mxu0 0.0
        %1165 = vmatprep.subr.mxu0 0.0
        %1166 = vmatpush1.xpose.msra.mxu0 0.0
        %1167 = vmatprep.subr.mxu0 0.0
        %1168 = vmatpush1.xpose.msra.mxu0 0.0
        %1169 = vmatprep.subr.mxu0 0.0
        %1170 = vmatpush1.xpose.msra.mxu0 0.0
        %1171 = vmatprep.subr.mxu0 0.0
        %1172 = vmatpush1.xpose.msra.mxu0 0.0
        %1173 = vmatprep.subr.mxu0 0.0
        %1174 = vmatpush1.xpose.msra.mxu0 0.0
        %1175 = vmatprep.subr.mxu0 0.0
        %1176 = vmatpush1.xpose.msra.mxu0 0.0
        %1177 = vmatprep.subr.mxu0 0.0
        %1178 = vmatpush1.xpose.msra.mxu0 0.0
        %1179 = vmatprep.subr.mxu0 0.0
        %1180 = vmatpush1.xpose.msra.mxu0 0.0
        %1181 = vmatprep.subr.mxu0 0.0
        %1182 = vmatpush1.xpose.msra.mxu0 0.0
        %1183 = vmatprep.subr.mxu0 0.0
        %1184 = vmatpush1.xpose.msra.mxu0 0.0
        %1185 = vmatprep.subr.mxu0 0.0
        %1186 = vmatpush1.xpose.msra.mxu0 0.0
        %1187 = vmatprep.subr.mxu0 0.0
        %1188 = vmatpush1.xpose.msra.mxu0 0.0
        %1189 = vmatprep.subr.mxu0 0.0
        %1190 = vmatpush1.xpose.msra.mxu0 0.0
        %1191 = vmatprep.subr.mxu0 0.0
        %1192 = vmatpush1.xpose.msra.mxu0 0.0
        %1193 = vmatprep.subr.mxu0 0.0
        %1194 = vmatpush1.xpose.msra.mxu0 0.0
        %1195 = vmatprep.subr.mxu0 0.0
        %1196 = vmatpush1.xpose.msra.mxu0 0.0
        %1197 = vmatprep.subr.mxu0 0.0
        %1198 = vmatpush1.xpose.msra.mxu0 0.0
        %1199 = vmatprep.subr.mxu0 0.0
        %1200 = vmatpush1.xpose.msra.mxu0 0.0
        %1201 = vmatprep.subr.mxu0 0.0
        %1202 = vmatpush1.xpose.msra.mxu0 0.0
        %1203 = vmatprep.subr.mxu0 0.0
        %1204 = vmatpush1.xpose.msra.mxu0 0.0
        %1205 = vmatprep.subr.mxu0 0.0
        %1206 = vmatpush1.xpose.msra.mxu0 0.0
        %1207 = vmatprep.subr.mxu0 0.0
        %1208 = vmatpush1.xpose.msra.mxu0 0.0
        %1209 = vmatprep.subr.mxu0 0.0
        %1210 = vmatpush1.xpose.msra.mxu0 0.0
        %1211 = vmatprep.subr.mxu0 0.0
        %1212 = vmatpush1.xpose.msra.mxu0 0.0
        %1213 = vmatprep.subr.mxu0 0.0
        %1214 = vmatpush1.xpose.msra.mxu0 0.0
        %1215 = vmatprep.mubr.f32.mxu0 0.0
        %1216 = vmatmul.mubr.f32.gmra.mrb[0].mxu0 %v1145
        %v1217 = vpop.f32.mrb[0].mxu0
        %v1218 = vadd.f32 0.0, %v1217
        %v1219 = vpop.f32.mrb[0].mxu0
        %1220 = vdwg.mxu0
        %v1221 = vsel %vm719, %v1218, -1e+09
        %v1222 = vsel %vm721, %v1221, -inf
        %1223 = vmax.xlane.f32.xlu0 %v1222
        %v1224 = vpop.xlane.xlu0 %1223
        %v1225 = vsub.f32 %v1221, %v1224
        %v1226 = vmul.f32 %v1225, 1.442695
        %v1227 = vpow.pop %v1226
        %v1228 = vsel %vm721, %v1227, 0.0
        %1229 = vadd.xlane.f32.xlu0 %v1228
        %v1230 = vpop.xlane.xlu0 %1229
        %v1231 = vrcp.pop %v1230
        %v1232 = vmul.f32 %v1227, %v1231
        %s1233 = scalar_lea.vmem %s439, 16 [#allocation2]
        %1234 = vst.msk [vmem:[%s1233] sm:$0xff] %vm721, %v1232
        %1235 = vrot.lane.b32.xlu0 %v630, 80
        %v1236 = vpop.permute.xlu0 %1235
        %1237 = vrot.lane.b32.xlu0 %v635, 80
        %v1238 = vpop.permute.xlu0 %1237
        %v1241 = vsel %vm721, %v1232, 0
        %v1243 = vsel %vm742, %v1238, 0
        %1245 = vmatprep.subr.mxu0 0.0
        %1246 = vmatpush1.msra.mxu0 %v1236
        %1247 = vmatprep.subr.mxu0 0.0
        %1248 = vmatpush1.msra.mxu0 %v1243
        %1249 = vmatprep.subr.mxu0 0.0
        %1250 = vmatpush1.msra.mxu0 0.0
        %1251 = vmatprep.subr.mxu0 0.0
        %1252 = vmatpush1.msra.mxu0 0.0
        %1253 = vmatprep.subr.mxu0 0.0
        %1254 = vmatpush1.msra.mxu0 0.0
        %1255 = vmatprep.subr.mxu0 0.0
        %1256 = vmatpush1.msra.mxu0 0.0
        %1257 = vmatprep.subr.mxu0 0.0
        %1258 = vmatpush1.msra.mxu0 0.0
        %1259 = vmatprep.subr.mxu0 0.0
        %1260 = vmatpush1.msra.mxu0 0.0
        %1261 = vmatprep.subr.mxu0 0.0
        %1262 = vmatpush1.msra.mxu0 0.0
        %1263 = vmatprep.subr.mxu0 0.0
        %1264 = vmatpush1.msra.mxu0 0.0
        %1265 = vmatprep.subr.mxu0 0.0
        %1266 = vmatpush1.msra.mxu0 0.0
        %1267 = vmatprep.subr.mxu0 0.0
        %1268 = vmatpush1.msra.mxu0 0.0
        %1269 = vmatprep.subr.mxu0 0.0
        %1270 = vmatpush1.msra.mxu0 0.0
        %1271 = vmatprep.subr.mxu0 0.0
        %1272 = vmatpush1.msra.mxu0 0.0
        %1273 = vmatprep.subr.mxu0 0.0
        %1274 = vmatpush1.msra.mxu0 0.0
        %1275 = vmatprep.subr.mxu0 0.0
        %1276 = vmatpush1.msra.mxu0 0.0
        %1277 = vmatprep.subr.mxu0 0.0
        %1278 = vmatpush1.msra.mxu0 0.0
        %1279 = vmatprep.subr.mxu0 0.0
        %1280 = vmatpush1.msra.mxu0 0.0
        %1281 = vmatprep.subr.mxu0 0.0
        %1282 = vmatpush1.msra.mxu0 0.0
        %1283 = vmatprep.subr.mxu0 0.0
        %1284 = vmatpush1.msra.mxu0 0.0
        %1285 = vmatprep.subr.mxu0 0.0
        %1286 = vmatpush1.msra.mxu0 0.0
        %1287 = vmatprep.subr.mxu0 0.0
        %1288 = vmatpush1.msra.mxu0 0.0
        %1289 = vmatprep.subr.mxu0 0.0
        %1290 = vmatpush1.msra.mxu0 0.0
        %1291 = vmatprep.subr.mxu0 0.0
        %1292 = vmatpush1.msra.mxu0 0.0
        %1293 = vmatprep.subr.mxu0 0.0
        %1294 = vmatpush1.msra.mxu0 0.0
        %1295 = vmatprep.subr.mxu0 0.0
        %1296 = vmatpush1.msra.mxu0 0.0
        %1297 = vmatprep.subr.mxu0 0.0
        %1298 = vmatpush1.msra.mxu0 0.0
        %1299 = vmatprep.subr.mxu0 0.0
        %1300 = vmatpush1.msra.mxu0 0.0
        %1301 = vmatprep.subr.mxu0 0.0
        %1302 = vmatpush1.msra.mxu0 0.0
        %1303 = vmatprep.subr.mxu0 0.0
        %1304 = vmatpush1.msra.mxu0 0.0
        %1305 = vmatprep.subr.mxu0 0.0
        %1306 = vmatpush1.msra.mxu0 0.0
        %1307 = vmatprep.subr.mxu0 0.0
        %1308 = vmatpush1.msra.mxu0 0.0
        %1309 = vmatprep.mubr.f32.mxu0 0.0
        %1310 = vmatmul.mubr.f32.gmra.mrb[0].mxu0 %v1241
        %v1311 = vpop.f32.mrb[0].mxu0
        %v1312 = vadd.f32 0.0, %v1311
        %v1313 = vpop.f32.mrb[0].mxu0
        %1314 = vdwg.mxu0
        %v1315 = vld [vmem:[%s7 + $0x10] sm:$0xff]
        %v1317 = vsel %vm639, %v1312, 0
        %1319 = vmatprep.subr.mxu0 0.0
        %1320 = vmatpush1.msra.mxu0 %v1315
        %1321 = vmatprep.subr.mxu0 0.0
        %1322 = vmatpush1.msra.mxu0 0.0
        %1323 = vmatprep.subr.mxu0 0.0
        %1324 = vmatpush1.msra.mxu0 0.0
        %1325 = vmatprep.subr.mxu0 0.0
        %1326 = vmatpush1.msra.mxu0 0.0
        %1327 = vmatprep.subr.mxu0 0.0
        %1328 = vmatpush1.msra.mxu0 0.0
        %1329 = vmatprep.subr.mxu0 0.0
        %1330 = vmatpush1.msra.mxu0 0.0
        %1331 = vmatprep.subr.mxu0 0.0
        %1332 = vmatpush1.msra.mxu0 0.0
        %1333 = vmatprep.subr.mxu0 0.0
        %1334 = vmatpush1.msra.mxu0 0.0
        %1335 = vmatprep.subr.mxu0 0.0
        %1336 = vmatpush1.msra.mxu0 0.0
        %1337 = vmatprep.subr.mxu0 0.0
        %1338 = vmatpush1.msra.mxu0 0.0
        %1339 = vmatprep.subr.mxu0 0.0
        %1340 = vmatpush1.msra.mxu0 0.0
        %1341 = vmatprep.subr.mxu0 0.0
        %1342 = vmatpush1.msra.mxu0 0.0
        %1343 = vmatprep.subr.mxu0 0.0
        %1344 = vmatpush1.msra.mxu0 0.0
        %1345 = vmatprep.subr.mxu0 0.0
        %1346 = vmatpush1.msra.mxu0 0.0
        %1347 = vmatprep.subr.mxu0 0.0
        %1348 = vmatpush1.msra.mxu0 0.0
        %1349 = vmatprep.subr.mxu0 0.0
        %1350 = vmatpush1.msra.mxu0 0.0
        %1351 = vmatprep.subr.mxu0 0.0
        %1352 = vmatpush1.msra.mxu0 0.0
        %1353 = vmatprep.subr.mxu0 0.0
        %1354 = vmatpush1.msra.mxu0 0.0
        %1355 = vmatprep.subr.mxu0 0.0
        %1356 = vmatpush1.msra.mxu0 0.0
        %1357 = vmatprep.subr.mxu0 0.0
        %1358 = vmatpush1.msra.mxu0 0.0
        %1359 = vmatprep.subr.mxu0 0.0
        %1360 = vmatpush1.msra.mxu0 0.0
        %1361 = vmatprep.subr.mxu0 0.0
        %1362 = vmatpush1.msra.mxu0 0.0
        %1363 = vmatprep.subr.mxu0 0.0
        %1364 = vmatpush1.msra.mxu0 0.0
        %1365 = vmatprep.subr.mxu0 0.0
        %1366 = vmatpush1.msra.mxu0 0.0
        %1367 = vmatprep.subr.mxu0 0.0
        %1368 = vmatpush1.msra.mxu0 0.0
        %1369 = vmatprep.subr.mxu0 0.0
        %1370 = vmatpush1.msra.mxu0 0.0
        %1371 = vmatprep.subr.mxu0 0.0
        %1372 = vmatpush1.msra.mxu0 0.0
        %1373 = vmatprep.subr.mxu0 0.0
        %1374 = vmatpush1.msra.mxu0 0.0
        %1375 = vmatprep.subr.mxu0 0.0
        %1376 = vmatpush1.msra.mxu0 0.0
        %1377 = vmatprep.subr.mxu0 0.0
        %1378 = vmatpush1.msra.mxu0 0.0
        %1379 = vmatprep.subr.mxu0 0.0
        %1380 = vmatpush1.msra.mxu0 0.0
        %1381 = vmatprep.subr.mxu0 0.0
        %1382 = vmatpush1.msra.mxu0 0.0
        %1383 = vmatprep.mubr.f32.mxu0 0.0
        %1384 = vmatmul.mubr.f32.gmra.mrb[0].mxu0 %v1317
        %v1385 = vpop.f32.mrb[0].mxu0
        %v1386 = vadd.f32 0.0, %v1385
        %v1387 = vpop.f32.mrb[0].mxu0
        %1388 = vdwg.mxu0
        %v1389 = vadd.f32 %v1136, %v1386
        %1390 = vrot.lane.b32.xlu0 %v638, 104
        %v1391 = vpop.permute.xlu0 %1390
        %1392 = vrot.lane.b32.xlu0 %v630, 104
        %v1393 = vpop.permute.xlu0 %1392
        %1394 = vrot.lane.b32.xlu0 %v635, 104
        %v1395 = vpop.permute.xlu0 %1394
        %v1396 = vsel %vm639, %v1391, 0
        %v1398 = vsel %vm639, %v1393, 0
        %v1400 = vsel %vm639, %v1395, 0
        %1402 = vmatprep.subr.mxu0 0.0
        %1403 = vmatpush1.xpose.msra.mxu0 %v1398
        %1404 = vmatprep.subr.mxu0 0.0
        %1405 = vmatpush1.xpose.msra.mxu0 %v1400
        %1406 = vmatprep.subr.mxu0 0.0
        %1407 = vmatpush1.xpose.msra.mxu0 0.0
        %1408 = vmatprep.subr.mxu0 0.0
        %1409 = vmatpush1.xpose.msra.mxu0 0.0
        %1410 = vmatprep.subr.mxu0 0.0
        %1411 = vmatpush1.xpose.msra.mxu0 0.0
        %1412 = vmatprep.subr.mxu0 0.0
        %1413 = vmatpush1.xpose.msra.mxu0 0.0
        %1414 = vmatprep.subr.mxu0 0.0
        %1415 = vmatpush1.xpose.msra.mxu0 0.0
        %1416 = vmatprep.subr.mxu0 0.0
        %1417 = vmatpush1.xpose.msra.mxu0 0.0
        %1418 = vmatprep.subr.mxu0 0.0
        %1419 = vmatpush1.xpose.msra.mxu0 0.0
        %1420 = vmatprep.subr.mxu0 0.0
        %1421 = vmatpush1.xpose.msra.mxu0 0.0
        %1422 = vmatprep.subr.mxu0 0.0
        %1423 = vmatpush1.xpose.msra.mxu0 0.0
        %1424 = vmatprep.subr.mxu0 0.0
        %1425 = vmatpush1.xpose.msra.mxu0 0.0
        %1426 = vmatprep.subr.mxu0 0.0
        %1427 = vmatpush1.xpose.msra.mxu0 0.0
        %1428 = vmatprep.subr.mxu0 0.0
        %1429 = vmatpush1.xpose.msra.mxu0 0.0
        %1430 = vmatprep.subr.mxu0 0.0
        %1431 = vmatpush1.xpose.msra.mxu0 0.0
        %1432 = vmatprep.subr.mxu0 0.0
        %1433 = vmatpush1.xpose.msra.mxu0 0.0
        %1434 = vmatprep.subr.mxu0 0.0
        %1435 = vmatpush1.xpose.msra.mxu0 0.0
        %1436 = vmatprep.subr.mxu0 0.0
        %1437 = vmatpush1.xpose.msra.mxu0 0.0
        %1438 = vmatprep.subr.mxu0 0.0
        %1439 = vmatpush1.xpose.msra.mxu0 0.0
        %1440 = vmatprep.subr.mxu0 0.0
        %1441 = vmatpush1.xpose.msra.mxu0 0.0
        %1442 = vmatprep.subr.mxu0 0.0
        %1443 = vmatpush1.xpose.msra.mxu0 0.0
        %1444 = vmatprep.subr.mxu0 0.0
        %1445 = vmatpush1.xpose.msra.mxu0 0.0
        %1446 = vmatprep.subr.mxu0 0.0
        %1447 = vmatpush1.xpose.msra.mxu0 0.0
        %1448 = vmatprep.subr.mxu0 0.0
        %1449 = vmatpush1.xpose.msra.mxu0 0.0
        %1450 = vmatprep.subr.mxu0 0.0
        %1451 = vmatpush1.xpose.msra.mxu0 0.0
        %1452 = vmatprep.subr.mxu0 0.0
        %1453 = vmatpush1.xpose.msra.mxu0 0.0
        %1454 = vmatprep.subr.mxu0 0.0
        %1455 = vmatpush1.xpose.msra.mxu0 0.0
        %1456 = vmatprep.subr.mxu0 0.0
        %1457 = vmatpush1.xpose.msra.mxu0 0.0
        %1458 = vmatprep.subr.mxu0 0.0
        %1459 = vmatpush1.xpose.msra.mxu0 0.0
        %1460 = vmatprep.subr.mxu0 0.0
        %1461 = vmatpush1.xpose.msra.mxu0 0.0
        %1462 = vmatprep.subr.mxu0 0.0
        %1463 = vmatpush1.xpose.msra.mxu0 0.0
        %1464 = vmatprep.subr.mxu0 0.0
        %1465 = vmatpush1.xpose.msra.mxu0 0.0
        %1466 = vmatprep.mubr.f32.mxu0 0.0
        %1467 = vmatmul.mubr.f32.gmra.mrb[0].mxu0 %v1396
        %v1468 = vpop.f32.mrb[0].mxu0
        %v1469 = vadd.f32 0.0, %v1468
        %v1470 = vpop.f32.mrb[0].mxu0
        %1471 = vdwg.mxu0
        %v1472 = vsel %vm719, %v1469, -1e+09
        %v1473 = vsel %vm721, %v1472, -inf
        %1474 = vmax.xlane.f32.xlu0 %v1473
        %v1475 = vpop.xlane.xlu0 %1474
        %v1476 = vsub.f32 %v1472, %v1475
        %v1477 = vmul.f32 %v1476, 1.442695
        %v1478 = vpow.pop %v1477
        %v1479 = vsel %vm721, %v1478, 0.0
        %1480 = vadd.xlane.f32.xlu0 %v1479
        %v1481 = vpop.xlane.xlu0 %1480
        %v1482 = vrcp.pop %v1481
        %v1483 = vmul.f32 %v1478, %v1482
        %s1484 = scalar_lea.vmem %s439, 24 [#allocation2]
        %1485 = vst.msk [vmem:[%s1484] sm:$0xff] %vm721, %v1483
        %1486 = vrot.lane.b32.xlu0 %v630, 72
        %v1487 = vpop.permute.xlu0 %1486
        %1488 = vrot.lane.b32.xlu0 %v635, 72
        %v1489 = vpop.permute.xlu0 %1488
        %v1492 = vsel %vm721, %v1483, 0
        %v1494 = vsel %vm742, %v1489, 0
        %1496 = vmatprep.subr.mxu0 0.0
        %1497 = vmatpush1.msra.mxu0 %v1487
        %1498 = vmatprep.subr.mxu0 0.0
        %1499 = vmatpush1.msra.mxu0 %v1494
        %1500 = vmatprep.subr.mxu0 0.0
        %1501 = vmatpush1.msra.mxu0 0.0
        %1502 = vmatprep.subr.mxu0 0.0
        %1503 = vmatpush1.msra.mxu0 0.0
        %1504 = vmatprep.subr.mxu0 0.0
        %1505 = vmatpush1.msra.mxu0 0.0
        %1506 = vmatprep.subr.mxu0 0.0
        %1507 = vmatpush1.msra.mxu0 0.0
        %1508 = vmatprep.subr.mxu0 0.0
        %1509 = vmatpush1.msra.mxu0 0.0
        %1510 = vmatprep.subr.mxu0 0.0
        %1511 = vmatpush1.msra.mxu0 0.0
        %1512 = vmatprep.subr.mxu0 0.0
        %1513 = vmatpush1.msra.mxu0 0.0
        %1514 = vmatprep.subr.mxu0 0.0
        %1515 = vmatpush1.msra.mxu0 0.0
        %1516 = vmatprep.subr.mxu0 0.0
        %1517 = vmatpush1.msra.mxu0 0.0
        %1518 = vmatprep.subr.mxu0 0.0
        %1519 = vmatpush1.msra.mxu0 0.0
        %1520 = vmatprep.subr.mxu0 0.0
        %1521 = vmatpush1.msra.mxu0 0.0
        %1522 = vmatprep.subr.mxu0 0.0
        %1523 = vmatpush1.msra.mxu0 0.0
        %1524 = vmatprep.subr.mxu0 0.0
        %1525 = vmatpush1.msra.mxu0 0.0
        %1526 = vmatprep.subr.mxu0 0.0
        %1527 = vmatpush1.msra.mxu0 0.0
        %1528 = vmatprep.subr.mxu0 0.0
        %1529 = vmatpush1.msra.mxu0 0.0
        %1530 = vmatprep.subr.mxu0 0.0
        %1531 = vmatpush1.msra.mxu0 0.0
        %1532 = vmatprep.subr.mxu0 0.0
        %1533 = vmatpush1.msra.mxu0 0.0
        %1534 = vmatprep.subr.mxu0 0.0
        %1535 = vmatpush1.msra.mxu0 0.0
        %1536 = vmatprep.subr.mxu0 0.0
        %1537 = vmatpush1.msra.mxu0 0.0
        %1538 = vmatprep.subr.mxu0 0.0
        %1539 = vmatpush1.msra.mxu0 0.0
        %1540 = vmatprep.subr.mxu0 0.0
        %1541 = vmatpush1.msra.mxu0 0.0
        %1542 = vmatprep.subr.mxu0 0.0
        %1543 = vmatpush1.msra.mxu0 0.0
        %1544 = vmatprep.subr.mxu0 0.0
        %1545 = vmatpush1.msra.mxu0 0.0
        %1546 = vmatprep.subr.mxu0 0.0
        %1547 = vmatpush1.msra.mxu0 0.0
        %1548 = vmatprep.subr.mxu0 0.0
        %1549 = vmatpush1.msra.mxu0 0.0
        %1550 = vmatprep.subr.mxu0 0.0
        %1551 = vmatpush1.msra.mxu0 0.0
        %1552 = vmatprep.subr.mxu0 0.0
        %1553 = vmatpush1.msra.mxu0 0.0
        %1554 = vmatprep.subr.mxu0 0.0
        %1555 = vmatpush1.msra.mxu0 0.0
        %1556 = vmatprep.subr.mxu0 0.0
        %1557 = vmatpush1.msra.mxu0 0.0
        %1558 = vmatprep.subr.mxu0 0.0
        %1559 = vmatpush1.msra.mxu0 0.0
        %1560 = vmatprep.mubr.f32.mxu0 0.0
        %1561 = vmatmul.mubr.f32.gmra.mrb[0].mxu0 %v1492
        %v1562 = vpop.f32.mrb[0].mxu0
        %v1563 = vadd.f32 0.0, %v1562
        %v1564 = vpop.f32.mrb[0].mxu0
        %1565 = vdwg.mxu0
        %v1566 = vld [vmem:[%s7 + $0x18] sm:$0xff]
        %v1568 = vsel %vm639, %v1563, 0
        %1570 = vmatprep.subr.mxu0 0.0
        %1571 = vmatpush1.msra.mxu0 %v1566
        %1572 = vmatprep.subr.mxu0 0.0
        %1573 = vmatpush1.msra.mxu0 0.0
        %1574 = vmatprep.subr.mxu0 0.0
        %1575 = vmatpush1.msra.mxu0 0.0
        %1576 = vmatprep.subr.mxu0 0.0
        %1577 = vmatpush1.msra.mxu0 0.0
        %1578 = vmatprep.subr.mxu0 0.0
        %1579 = vmatpush1.msra.mxu0 0.0
        %1580 = vmatprep.subr.mxu0 0.0
        %1581 = vmatpush1.msra.mxu0 0.0
        %1582 = vmatprep.subr.mxu0 0.0
        %1583 = vmatpush1.msra.mxu0 0.0
        %1584 = vmatprep.subr.mxu0 0.0
        %1585 = vmatpush1.msra.mxu0 0.0
        %1586 = vmatprep.subr.mxu0 0.0
        %1587 = vmatpush1.msra.mxu0 0.0
        %1588 = vmatprep.subr.mxu0 0.0
        %1589 = vmatpush1.msra.mxu0 0.0
        %1590 = vmatprep.subr.mxu0 0.0
        %1591 = vmatpush1.msra.mxu0 0.0
        %1592 = vmatprep.subr.mxu0 0.0
        %1593 = vmatpush1.msra.mxu0 0.0
        %1594 = vmatprep.subr.mxu0 0.0
        %1595 = vmatpush1.msra.mxu0 0.0
        %1596 = vmatprep.subr.mxu0 0.0
        %1597 = vmatpush1.msra.mxu0 0.0
        %1598 = vmatprep.subr.mxu0 0.0
        %1599 = vmatpush1.msra.mxu0 0.0
        %1600 = vmatprep.subr.mxu0 0.0
        %1601 = vmatpush1.msra.mxu0 0.0
        %1602 = vmatprep.subr.mxu0 0.0
        %1603 = vmatpush1.msra.mxu0 0.0
        %1604 = vmatprep.subr.mxu0 0.0
        %1605 = vmatpush1.msra.mxu0 0.0
        %1606 = vmatprep.subr.mxu0 0.0
        %1607 = vmatpush1.msra.mxu0 0.0
        %1608 = vmatprep.subr.mxu0 0.0
        %1609 = vmatpush1.msra.mxu0 0.0
        %1610 = vmatprep.subr.mxu0 0.0
        %1611 = vmatpush1.msra.mxu0 0.0
        %1612 = vmatprep.subr.mxu0 0.0
        %1613 = vmatpush1.msra.mxu0 0.0
        %1614 = vmatprep.subr.mxu0 0.0
        %1615 = vmatpush1.msra.mxu0 0.0
        %1616 = vmatprep.subr.mxu0 0.0
        %1617 = vmatpush1.msra.mxu0 0.0
        %1618 = vmatprep.subr.mxu0 0.0
        %1619 = vmatpush1.msra.mxu0 0.0
        %1620 = vmatprep.subr.mxu0 0.0
        %1621 = vmatpush1.msra.mxu0 0.0
        %1622 = vmatprep.subr.mxu0 0.0
        %1623 = vmatpush1.msra.mxu0 0.0
        %1624 = vmatprep.subr.mxu0 0.0
        %1625 = vmatpush1.msra.mxu0 0.0
        %1626 = vmatprep.subr.mxu0 0.0
        %1627 = vmatpush1.msra.mxu0 0.0
        %1628 = vmatprep.subr.mxu0 0.0
        %1629 = vmatpush1.msra.mxu0 0.0
        %1630 = vmatprep.subr.mxu0 0.0
        %1631 = vmatpush1.msra.mxu0 0.0
        %1632 = vmatprep.subr.mxu0 0.0
        %1633 = vmatpush1.msra.mxu0 0.0
        %1634 = vmatprep.mubr.f32.mxu0 0.0
        %1635 = vmatmul.mubr.f32.gmra.mrb[0].mxu0 %v1568
        %v1636 = vpop.f32.mrb[0].mxu0
        %v1637 = vadd.f32 0.0, %v1636
        %v1638 = vpop.f32.mrb[0].mxu0
        %1639 = vdwg.mxu0
        %v1640 = vadd.f32 %v1389, %v1637
        %v1641 = vld [vmem:[%s8] sm:$0x1]
        %v1643 = vlaneseq
        %v1644 = vshrl.u32 %v1643, 7
        %v1645 = vsub.s32 0, %v1644
        %v1646 = vrot.slane %v1641, %v1645
        %v1648 = vadd.f32 %v1640, %v1646
        %v1649 = vadd.f32 %v457, %v1648
        %v1650 = vsel %vm472, %v1649, 0.0
        %1651 = vadd.xlane.f32.xlu0 %v1650
        %v1652 = vpop.xlane.xlu0 %1651
        %v1653 = vrcp.pop 32.0
        %v1654 = vmul.f32 %v1652, %v1653
        %v1655 = vsub.f32 %v1649, %v1654
        %v1656 = vmul.f32 %v1655, %v1655
        %v1657 = vsel %vm472, %v1656, 0.0
        %1658 = vadd.xlane.f32.xlu0 %v1657
        %v1659 = vpop.xlane.xlu0 %1658
        %v1660 = vmul.f32 %v1659, %v1653
        %v1661 = vadd.f32 %v1660, 1e-05
        %v1662 = vrsqrt.pop %v1661
        %v1663 = vmul.f32 %v1655, %v1662
        %v1664 = vld [vmem:[%s9] sm:$0x1]
        %v1666 = vlaneseq
        %v1667 = vshrl.u32 %v1666, 7
        %v1668 = vsub.s32 0, %v1667
        %v1669 = vrot.slane %v1664, %v1668
        %v1671 = vmul.f32 %v1663, %v1669
        %v1672 = vld [vmem:[%s10] sm:$0x1]
        %v1674 = vlaneseq
        %v1675 = vshrl.u32 %v1674, 7
        %v1676 = vsub.s32 0, %v1675
        %v1677 = vrot.slane %v1672, %v1676
        %v1679 = vadd.f32 %v1671, %v1677
        %1680 = vst.msk [vmem:[%s456] sm:$0xff] %vm472, %v1679
        %p1681 = scmp.lt.s32.totalorder %s27, 1
        %s1682 = scalar_select %p1681, %s27, 1
        %s1683 = smul.addr %s1682, 8
        %s1684 = scalar_lea.vmem %s11, %s1683
        %s1685 = sand.u32 %s307, 1
        %s1686 = scalar_lea.sflag [#allocation3], %s1685
        %s1687 = sand.u32 %s307, 1
        %s1688 = smul.addr %s1687, 32
        %s1689 = scalar_lea.vmem [#allocation2], %s1688
        // Predicated region
        $region65: #{decoder_forward.10} parent=63 // pred_check
          %p1690 = pneg %p291
        $region66: #{decoder_forward.10} parent=63 // pred_check_branch
          %1692 = sbr.rel (%p1690) target = $region68
        $region67: #{decoder_forward.10} parent=63 // pred_region
          _
        $region68: #{decoder_forward.10} parent=63 // pred_fallthru
          _
        // Predicated region
        $region69: #{decoder_forward.10} parent=63 // pred_check
          %p1693 = pneg %p317
        $region70: #{decoder_forward.10} parent=63 // pred_check_branch
          %1695 = sbr.rel (%p1693) target = $region72
        $region71: #{decoder_forward.10} parent=63 // pred_region
          %s1697 = ssub.s32 512, 512
          %1698 = vsyncadd %s1686, %s1697
          %s1699 = smul.addr %s27, 4
          %s1700 = smul.addr %s1699, 128
          %s1701 = scalar_lea.hbm %s12, %s1700
          %s1702 = sshll.u32 %s1689, 4
          %s1703 = int_to_ptr.vmem [resolvable:$true] %s1702
          %1708 = dma.vmem_to_hbm [thread:$0]  %s1703, 512, %s1701, %s1686, 128, 128, 8
        $region72: #{decoder_forward.10} parent=63 // pred_fallthru
          _
      $region64: #{decoder_forward.10} parent=5 // pred_fallthru
        _
      %p1709 = scmp.le.s32.totalorder 2, %s22
      // Predicated region
      $region73: #{decoder_forward.10} parent=5 // pred_check
        %p1710 = pneg %p1709
      $region74: #{decoder_forward.10} parent=5 // pred_check_branch
        %1712 = sbr.rel (%p1710) target = $region76
      $region75: #{decoder_forward.10} parent=5 // pred_region
        %s1713 = ssub.s32 %s22, 2
        // Predicated region
        $region77: #{decoder_forward.10} parent=75 // pred_check
          %p1714 = pneg %p297
        $region78: #{decoder_forward.10} parent=75 // pred_check_branch
          %1716 = sbr.rel (%p1714) target = $region80
        $region79: #{decoder_forward.10} parent=75 // pred_region
          %p1717 = scmp.lt.s32.totalorder %s28, 1
          %s1718 = scalar_select %p1717, %s28, 1
          %s1719 = smul.addr %s1718, 8
          %s1720 = scalar_lea.vmem %s11, %s1719
        $region80: #{decoder_forward.10} parent=75 // pred_fallthru
          _
        // Predicated region
        $region81: #{decoder_forward.10} parent=75 // pred_check
          %p1721 = pneg %p323
        $region82: #{decoder_forward.10} parent=75 // pred_check_branch
          %1723 = sbr.rel (%p1721) target = $region84
        $region83: #{decoder_forward.10} parent=75 // pred_region
          %s1724 = sand.u32 %s308, 1
          %s1725 = scalar_lea.sflag [#allocation3], %s1724
          %s1726 = sand.u32 %s308, 1
          %s1727 = smul.addr %s1726, 32
          %s1728 = scalar_lea.vmem [#allocation2], %s1727
          %1729 = dma.done %s1725, 512
        $region84: #{decoder_forward.10} parent=75 // pred_fallthru
          _
      $region76: #{decoder_forward.10} parent=5 // pred_fallthru
        _
    $region6: #{decoder_forward.10} parent=1 // loop_footer
      %s26 = sadd.s32 1, %s22
    $region7: #{decoder_forward.10} parent=1 // loop_footer_branch
      %21 = sbr.rel target = $region3
    $region8: #{decoder_forward.10} parent=1 // loop_exit
      _
    %1730 = vsyncpa [#allocation3], 1
    %s1731 = scalar_lea.sflag [#allocation3], 1
    %1732 = vsyncpa %s1731, 1

</llo_original>
